<compile_context>
chip_gen: v6e
topology: v6e:2x2x1
jax: 0.10.0
libtpu: 0.0.40
codegen_flags: <defaults>
</compile_context>

<pallas_src>
import math

import jax
import jax.numpy as jnp
from jax.experimental import pallas as pl
from jax.experimental.pallas import tpu as pltpu

BN_EPS = 1e-5
ACT_DTYPE = jnp.bfloat16       # HBM activations / MXU operands (f32 accumulation)
LANE = 128


def _round_up(x, m):
    return (x + m - 1) // m * m


# ---------------------------------------------------------------------------
# Fused [concat ->] Conv2d('same', dilation) -> BN(folded) -> ReLU
#        [-> 1x1 Conv -> BN -> ReLU]  Pallas kernel
# ---------------------------------------------------------------------------
def fused_conv_bn_relu(xs, layer, *, out_dtype=ACT_DTYPE):
    """xs: list of input parts, each (N, H, W*Cin_p) lane-dense activation."""
    cins = layer["cin"]
    P = len(cins)
    assert len(xs) == P
    KH, rate, W, c1 = layer["k"], layer["rate"], layer["width"], layer["cout"]
    pad = rate * (KH - 1) // 2
    N, H, _ = xs[0].shape
    Hp = H + 2 * pad
    stage2 = "rhs2" in layer
    c_out = layer["cout2"] if stage2 else c1

    lane_w = [W * c for c in cins]
    for x, lw in zip(xs, lane_w):
        assert x.shape == (N, H, lw), (x.shape, (N, H, lw))
    # 128-aligned slots for each input part inside the staging scratch.
    base, off = [], 0
    for lw in lane_w:
        base.append(off)
        off = _round_up(off + lw, LANE)
    total_lanes = base[-1] + lane_w[-1]

    def kernel(*refs):
        x_refs = refs[:P]
        rhs_refs = refs[P:2 * P]
        s_ref, b_ref = refs[2 * P], refs[2 * P + 1]
        nxt = 2 * P + 2
        if stage2:
            rhs2_ref, s2_ref, b2_ref = refs[nxt:nxt + 3]
            nxt += 3
        o_ref, scratch = refs[nxt], refs[nxt + 1]

        # Stage the vertically zero-padded, channel-"concatenated" tile in VMEM
        # (horizontal padding is handled inside the banded weights, so each
        # part's write/read lane range starts 128-aligned).
        if pad > 0:
            scratch[...] = jnp.zeros(scratch.shape, scratch.dtype)
        for p in range(P):
            scratch[pad:pad + H, base[p]:base[p] + lane_w[p]] = (
                x_refs[p][0].astype(jnp.float32))

        # One wide MXU matmul per (vertical tap, input part):
        #   (H, W*Cin_p) @ (W*Cin_p, W*Cout) -> lane-dense f32 accumulator.
        acc = jnp.zeros((H, W * c1), jnp.float32)
        for kh in range(KH):
            r0 = kh * rate
            for p in range(P):
                lhs = scratch[r0:r0 + H, base[p]:base[p] + lane_w[p]]
                acc += jnp.dot(lhs.astype(ACT_DTYPE), rhs_refs[p][kh],
                               preferred_element_type=jnp.float32)

        # Folded (eval-mode) BatchNorm + ReLU, in f32, lane-dense.
        y = jnp.maximum(acc * s_ref[...] + b_ref[...], 0.0)

        if stage2:   # fused trailing 1x1 Conv+BN+ReLU (block-diagonal matmul)
            acc2 = jnp.dot(y.astype(ACT_DTYPE), rhs2_ref[...],
                           preferred_element_type=jnp.float32)
            y = jnp.maximum(acc2 * s2_ref[...] + b2_ref[...], 0.0)

        o_ref[0] = y.astype(o_ref.dtype)          # dense (H, W*Cout) store

    in_specs = [pl.BlockSpec((1, H, lw), lambda n: (n, 0, 0)) for lw in lane_w]
    in_specs += [pl.BlockSpec((KH, lane_w[p], W * c1), lambda n: (0, 0, 0))
                 for p in range(P)]
    in_specs += [pl.BlockSpec((1, W * c1), lambda n: (0, 0))] * 2
    args = list(xs) + list(layer["rhs"]) + [layer["scale"], layer["bias"]]
    if stage2:
        in_specs += [pl.BlockSpec((W * c1, W * c_out), lambda n: (0, 0)),
                     pl.BlockSpec((1, W * c_out), lambda n: (0, 0)),
                     pl.BlockSpec((1, W * c_out), lambda n: (0, 0))]
        args += [layer["rhs2"], layer["scale2"], layer["bias2"]]

    flops = 2 * N * H * (W * c1) * sum(lane_w) * KH
    if stage2:
        flops += 2 * N * H * (W * c1) * (W * c_out)
    bytes_accessed = (sum(int(a.size) * a.dtype.itemsize for a in args)
                      + N * H * W * c_out * jnp.dtype(out_dtype).itemsize)

    return pl.pallas_call(
        kernel,
        out_shape=jax.ShapeDtypeStruct((N, H, W * c_out), out_dtype),
        grid=(N,),
        in_specs=in_specs,
        out_specs=pl.BlockSpec((1, H, W * c_out), lambda n: (n, 0, 0)),
        scratch_shapes=[pltpu.VMEM((Hp, total_lanes), jnp.float32)],
        compiler_params=pltpu.CompilerParams(
            dimension_semantics=("parallel",)),
        cost_estimate=pl.CostEstimate(
            flops=flops, transcendentals=0, bytes_accessed=bytes_accessed),
    )(*args)


# ---------------------------------------------------------------------------
# Deterministic parameter initialization (synthetic, no checkpoints), laid out
# for the fused kernel: banded (block-Toeplitz) bf16 weights, folded BN.
# ---------------------------------------------------------------------------
def _banded_rhs(w, width, rate):
    """w: (KH, KW, Cin, Cout) -> (KH, width*Cin, width*Cout).

    R[kh, w_in*Cin+ci, w*Cout+co] = w[kh, kw, ci, co] where
    w_in = w + kw*rate - pad ('same' padding taps are simply dropped)."""
    KH, KW, cin, cout = w.shape
    pad = rate * (KW - 1) // 2
    w_in = jnp.arange(width)[:, None, None]
    w_out = jnp.arange(width)[None, :, None]
    kw = jnp.arange(KW)[None, None, :]
    mask = (w_in == w_out + kw * rate - pad).astype(w.dtype)      # (W, W, KW)
    r = jnp.einsum("iwk,hkco->hicwo", mask, w)                    # (KH,W,Cin,W,Cout)
    return r.reshape(KH, width * cin, width * cout)


def init_conv(key, cins, cout, k, rate, width, conv_bias=True):
    """Conv2d(sum(cins)->cout, k, dilation=rate, padding='same') + BN + ReLU."""
    cin_total = sum(cins)
    kw_, kb, kg, kbt, km, kv = jax.random.split(key, 6)
    fan_in = cin_total * k * k
    w = jax.random.normal(kw_, (k, k, cin_total, cout), jnp.float32) / math.sqrt(fan_in)
    b = (0.1 * jax.random.normal(kb, (cout,), jnp.float32)
         if conv_bias else jnp.zeros((cout,), jnp.float32))
    gamma = 1.0 + 0.1 * jax.random.normal(kg, (cout,), jnp.float32)
    beta = 0.1 * jax.random.normal(kbt, (cout,), jnp.float32)
    rmean = 0.1 * jax.random.normal(km, (cout,), jnp.float32)
    rvar = 1.0 + 0.5 * jax.random.uniform(kv, (cout,), jnp.float32)
    scale = gamma / jnp.sqrt(rvar + BN_EPS)
    bias = beta + (b - rmean) * scale                 # fold conv-bias + BN
    # conv over a channel concat == sum of per-part convs -> per-part banded RHS
    rhs, off = [], 0
    for c in cins:
        rhs.append(_banded_rhs(w[:, :, off:off + c, :], width, rate).astype(ACT_DTYPE))
        off += c
    return dict(k=k, rate=rate, width=width, cin=tuple(cins), cout=cout, rhs=rhs,
                scale=jnp.tile(scale, width).reshape(1, width * cout),
                bias=jnp.tile(bias, width).reshape(1, width * cout))


def fuse_pointwise(base_layer, pw_layer):
    """Fold a following 1x1 Conv+BN+ReLU into `base_layer` as an in-kernel epilogue."""
    assert pw_layer["k"] == 1 and pw_layer["cin"] == (base_layer["cout"],)
    out = dict(base_layer)
    out.update(rhs2=pw_layer["rhs"][0][0],            # (W*C1, W*C2) block-diagonal
               scale2=pw_layer["scale"], bias2=pw_layer["bias"],
               cout2=pw_layer["cout"])
    return out


def init_msa(key, c, width):
    ks = jax.random.split(key, 9)
    c2, c4 = c // 2, c // 4
    conv1_b = init_conv(ks[2], (c2,), c2, 3, 2, width)
    conv1_c = init_conv(ks[3], (c2,), c2, 1, 1, width)
    conv2_a = init_conv(ks[4], (c,), c4, 3, 1, width)
    conv2_b = init_conv(ks[5], (c4,), c4, 1, 1, width)
    return dict(
        conv=init_conv(ks[0], (c,), c, 3, 1, width),
        conv1_a=init_conv(ks[1], (c,), c2, 3, 1, width),
        conv1_bc=fuse_pointwise(conv1_b, conv1_c),     # 3x3(rate=2) + fused 1x1
        conv2_ab=fuse_pointwise(conv2_a, conv2_b),     # 3x3 + fused 1x1
        conv3=init_conv(ks[6], (c,), c4, 1, 1, width),
        comb=init_conv(ks[7], (c2, c4, c4), c, 1, 1, width),   # cat(x1,x2,x3) fused
        final=init_conv(ks[8], (c, c), c, 3, 2, width),        # cat(x, x_n) fused
    )


def init_decoder_block(key, in_ch, skip_ch, out_ch, width):
    k1, k2, k3 = jax.random.split(key, 3)
    cin1 = (in_ch, skip_ch) if skip_ch > 0 else (in_ch,)
    params = dict(
        conv1=init_conv(k1, cin1, out_ch, 3, 1, width, conv_bias=False),
        conv2=init_conv(k2, (out_ch,), out_ch, 3, 1, width, conv_bias=False),
    )
    if skip_ch > 0:
        params["msa"] = init_msa(k3, skip_ch, width)
    return params


# ---------------------------------------------------------------------------
# Forward passes (thin glue in JAX, all Conv+BN+ReLU compute in fused kernels)
# ---------------------------------------------------------------------------
def upsample2x_nearest(x_ld, channels):
    """Nearest-neighbor 2x upsample of a lane-dense (N, H, W*C) activation."""
    n, h, wc = x_ld.shape
    w = wc // channels
    x = x_ld.reshape(n, h, w, channels)
    x = jnp.repeat(jnp.repeat(x, 2, axis=1), 2, axis=2)
    return x.reshape(n, 2 * h, 2 * w * channels)


def msa_forward(p, x):
    x = fused_conv_bn_relu([x], p["conv"])
    x1 = fused_conv_bn_relu([fused_conv_bn_relu([x], p["conv1_a"])], p["conv1_bc"])
    x2 = fused_conv_bn_relu([x], p["conv2_ab"])
    x3 = fused_conv_bn_relu([x], p["conv3"])
    x_n = fused_conv_bn_relu([x1, x2, x3], p["comb"])   # torch.cat fused into kernel
    return fused_conv_bn_relu([x, x_n], p["final"])     # torch.cat fused into kernel


def decoder_block_forward(params, x_ld, skip_ld=None, i=None,
                          out_dtype=jnp.float32):
    in_ch = params["conv1"]["cin"][0]
    # F.interpolate(scale_factor=2, mode='nearest')
    x_up = upsample2x_nearest(x_ld, in_ch)
    parts = [x_up]
    if skip_ld is not None:
        if i is not None and i == 2:
            skip_ld = msa_forward(params["msa"], skip_ld)
        parts.append(skip_ld)        # torch.cat([x, skip]) fused into conv1 kernel
        # attention1 = Identity (attention_type=None)
    x = fused_conv_bn_relu(parts, params["conv1"])
    x = fused_conv_bn_relu([x], params["conv2"], out_dtype=out_dtype)
    # attention2 = Identity
    return x


# ---------------------------------------------------------------------------
if __name__ == "__main__":
    key = jax.random.PRNGKey(0)
    kx, ks, kp = jax.random.split(key, 3)

    N = 2
    in_ch, skip_ch, out_ch = 8, 8, 8
    H, W = 8, 8                                       # x spatial; skip/output are 2x

    # PyTorch-convention NCHW f32 inputs
    x_nchw = jax.random.normal(kx, (N, in_ch, H, W), jnp.float32)
    skip_nchw = jax.random.normal(ks, (N, skip_ch, 2 * H, 2 * W), jnp.float32)

    # All convolutions in this forward run at spatial width 2*W.
    params = init_decoder_block(kp, in_ch, skip_ch, out_ch, width=2 * W)

    # NCHW f32 -> lane-dense (N, H, W*C) bf16
    x_ld = (jnp.transpose(x_nchw, (0, 2, 3, 1))
            .reshape(N, H, W * in_ch).astype(ACT_DTYPE))
    skip_ld = (jnp.transpose(skip_nchw, (0, 2, 3, 1))
               .reshape(N, 2 * H, 2 * W * skip_ch).astype(ACT_DTYPE))

    fwd = jax.jit(lambda a, b: decoder_block_forward(params, a, b, i=2))
    out_ld = jax.block_until_ready(fwd(x_ld, skip_ld))   # (N, 2H, 2W*out_ch) f32

    out_nchw = jnp.transpose(out_ld.reshape(N, 2 * H, 2 * W, out_ch), (0, 3, 1, 2))
    out_nchw = jax.block_until_ready(out_nchw)

    assert out_nchw.shape == (N, out_ch, 2 * H, 2 * W), out_nchw.shape
    assert bool(jnp.all(out_nchw >= 0.0)), "ReLU output must be non-negative"
    assert bool(jnp.all(jnp.isfinite(out_nchw))), "output must be finite"
    print("KERNEL_OK")
</pallas_src>

<mosaic_0001>
module attributes {stable_mosaic.version = 11 : i64} {
  func.func @kernel(%arg0: i32, %arg1: memref<1x16x128xbf16, #tpu.memory_space<vmem>>, %arg2: memref<3x128x128xbf16, #tpu.memory_space<vmem>>, %arg3: memref<1x128xf32, #tpu.memory_space<vmem>>, %arg4: memref<1x128xf32, #tpu.memory_space<vmem>>, %arg5: memref<1x16x128xbf16, #tpu.memory_space<vmem>>, %arg6: memref<18x128xf32, #tpu.memory_space<vmem>>) attributes {dimension_semantics = [#tpu.dimension_semantics<parallel>], iteration_bounds = array<i64: 2>, scalar_prefetch = 0 : i64, scratch_operands = 1 : i64, tpu.core_type = #tpu.core_type<tc>, window_params = [{transform_indices = @transform_0, window_bounds = array<i64: 1, 16, 128>}, {pipeline_mode = #tpu.pipeline_mode<synchronous>, transform_indices = @transform_1, window_bounds = array<i64: 3, 128, 128>}, {pipeline_mode = #tpu.pipeline_mode<synchronous>, transform_indices = @transform_2, window_bounds = array<i64: 1, 128>}, {pipeline_mode = #tpu.pipeline_mode<synchronous>, transform_indices = @transform_3, window_bounds = array<i64: 1, 128>}, {transform_indices = @transform_4, window_bounds = array<i64: 1, 16, 128>}]} {
    %cst = arith.constant 0.000000e+00 : f32
    %0 = vector.broadcast %cst : f32 to vector<18x128xf32>
    %c0 = arith.constant 0 : index
    %c0_0 = arith.constant 0 : index
    %1 = vector.load %arg6[%c0, %c0_0] : memref<18x128xf32, #tpu.memory_space<vmem>>, vector<18x128xf32>
    tpu.vector_store %arg6[%c0, %c0_0], %0 {strides = array<i32>} : memref<18x128xf32, #tpu.memory_space<vmem>>, vector<18x128xf32>,
    %c0_1 = arith.constant 0 : index
    %c0_2 = arith.constant 0 : index
    %c0_3 = arith.constant 0 : index
    %2 = vector.load %arg1[%c0_1, %c0_2, %c0_3] : memref<1x16x128xbf16, #tpu.memory_space<vmem>>, vector<1x16x128xbf16>
    %3 = vector.shape_cast %2 : vector<1x16x128xbf16> to vector<16x128xbf16>
    %4 = arith.extf %3 : vector<16x128xbf16> to vector<16x128xf32>
    %c1 = arith.constant 1 : index
    %c0_4 = arith.constant 0 : index
    %5 = vector.load %arg6[%c1, %c0_4] : memref<18x128xf32, #tpu.memory_space<vmem>>, vector<16x128xf32>
    tpu.vector_store %arg6[%c1, %c0_4], %4 {strides = array<i32>} : memref<18x128xf32, #tpu.memory_space<vmem>>, vector<16x128xf32>,
    %cst_5 = arith.constant 0.000000e+00 : f32
    %6 = vector.broadcast %cst_5 : f32 to vector<16x128xf32>
    %c0_6 = arith.constant 0 : index
    %c0_7 = arith.constant 0 : index
    %7 = vector.load %arg6[%c0_6, %c0_7] : memref<18x128xf32, #tpu.memory_space<vmem>>, vector<16x128xf32>
    %8 = arith.truncf %7 : vector<16x128xf32> to vector<16x128xbf16>
    %c0_8 = arith.constant 0 : index
    %c0_9 = arith.constant 0 : index
    %c0_10 = arith.constant 0 : index
    %9 = vector.load %arg2[%c0_8, %c0_9, %c0_10] : memref<3x128x128xbf16, #tpu.memory_space<vmem>>, vector<1x128x128xbf16>
    %10 = vector.shape_cast %9 : vector<1x128x128xbf16> to vector<128x128xbf16>
    %cst_11 = arith.constant dense<0.000000e+00> : vector<16x128xf32>
    %11 = tpu.matmul %8, %10, %cst_11 {dimension_numbers = #tpu.dot_dimension_numbers<[1], [0], [0], [1], [0, 0, 1, 1], [], []>} : vector<16x128xbf16>, vector<128x128xbf16>, vector<16x128xf32> -> vector<16x128xf32>
    %12 = arith.addf %6, %11 : vector<16x128xf32>
    %c1_12 = arith.constant 1 : index
    %c0_13 = arith.constant 0 : index
    %13 = vector.load %arg6[%c1_12, %c0_13] : memref<18x128xf32, #tpu.memory_space<vmem>>, vector<16x128xf32>
    %14 = arith.truncf %13 : vector<16x128xf32> to vector<16x128xbf16>
    %c1_14 = arith.constant 1 : index
    %c0_15 = arith.constant 0 : index
    %c0_16 = arith.constant 0 : index
    %15 = vector.load %arg2[%c1_14, %c0_15, %c0_16] : memref<3x128x128xbf16, #tpu.memory_space<vmem>>, vector<1x128x128xbf16>
    %16 = vector.shape_cast %15 : vector<1x128x128xbf16> to vector<128x128xbf16>
    %cst_17 = arith.constant dense<0.000000e+00> : vector<16x128xf32>
    %17 = tpu.matmul %14, %16, %cst_17 {dimension_numbers = #tpu.dot_dimension_numbers<[1], [0], [0], [1], [0, 0, 1, 1], [], []>} : vector<16x128xbf16>, vector<128x128xbf16>, vector<16x128xf32> -> vector<16x128xf32>
    %18 = arith.addf %12, %17 : vector<16x128xf32>
    %c2 = arith.constant 2 : index
    %c0_18 = arith.constant 0 : index
    %19 = vector.load %arg6[%c2, %c0_18] : memref<18x128xf32, #tpu.memory_space<vmem>>, vector<16x128xf32>
    %20 = arith.truncf %19 : vector<16x128xf32> to vector<16x128xbf16>
    %c2_19 = arith.constant 2 : index
    %c0_20 = arith.constant 0 : index
    %c0_21 = arith.constant 0 : index
    %21 = vector.load %arg2[%c2_19, %c0_20, %c0_21] : memref<3x128x128xbf16, #tpu.memory_space<vmem>>, vector<1x128x128xbf16>
    %22 = vector.shape_cast %21 : vector<1x128x128xbf16> to vector<128x128xbf16>
    %cst_22 = arith.constant dense<0.000000e+00> : vector<16x128xf32>
    %23 = tpu.matmul %20, %22, %cst_22 {dimension_numbers = #tpu.dot_dimension_numbers<[1], [0], [0], [1], [0, 0, 1, 1], [], []>} : vector<16x128xbf16>, vector<128x128xbf16>, vector<16x128xf32> -> vector<16x128xf32>
    %24 = arith.addf %18, %23 : vector<16x128xf32>
    %c0_23 = arith.constant 0 : index
    %c0_24 = arith.constant 0 : index
    %25 = vector.load %arg3[%c0_23, %c0_24] : memref<1x128xf32, #tpu.memory_space<vmem>>, vector<1x128xf32>
    %26 = vector.broadcast %25 : vector<1x128xf32> to vector<16x128xf32>
    %27 = arith.mulf %24, %26 : vector<16x128xf32>
    %c0_25 = arith.constant 0 : index
    %c0_26 = arith.constant 0 : index
    %28 = vector.load %arg4[%c0_25, %c0_26] : memref<1x128xf32, #tpu.memory_space<vmem>>, vector<1x128xf32>
    %29 = vector.broadcast %28 : vector<1x128xf32> to vector<16x128xf32>
    %30 = arith.addf %27, %29 : vector<16x128xf32>
    %cst_27 = arith.constant 0.000000e+00 : f32
    %31 = vector.broadcast %cst_27 : f32 to vector<16x128xf32>
    %32 = arith.maximumf %30, %31 : vector<16x128xf32>
    %33 = arith.truncf %32 : vector<16x128xf32> to vector<16x128xbf16>
    %c0_28 = arith.constant 0 : index
    %c0_29 = arith.constant 0 : index
    %c0_30 = arith.constant 0 : index
    %34 = vector.load %arg5[%c0_28, %c0_29, %c0_30] : memref<1x16x128xbf16, #tpu.memory_space<vmem>>, vector<1x16x128xbf16>
    %35 = vector.shape_cast %34 : vector<1x16x128xbf16> to vector<16x128xbf16>
    %36 = vector.shape_cast %33 : vector<16x128xbf16> to vector<1x16x128xbf16>
    tpu.vector_store %arg5[%c0_28, %c0_29, %c0_30], %36 {strides = array<i32>} : memref<1x16x128xbf16, #tpu.memory_space<vmem>>, vector<1x16x128xbf16>,
    return
  }
  func.func @transform_0(%arg0: i32) -> (i32, i32, i32) {
    %c0_i32 = arith.constant 0 : i32
    %c0_i32_0 = arith.constant 0 : i32
    %c0_i32_1 = arith.constant 0 : i32
    return %arg0, %c0_i32, %c0_i32_0 : i32, i32, i32
  }
  func.func @transform_1(%arg0: i32) -> (i32, i32, i32) {
    %c0_i32 = arith.constant 0 : i32
    %c0_i32_0 = arith.constant 0 : i32
    %c0_i32_1 = arith.constant 0 : i32
    %c0_i32_2 = arith.constant 0 : i32
    return %c0_i32, %c0_i32_0, %c0_i32_1 : i32, i32, i32
  }
  func.func @transform_2(%arg0: i32) -> (i32, i32) {
    %c0_i32 = arith.constant 0 : i32
    %c0_i32_0 = arith.constant 0 : i32
    %c0_i32_1 = arith.constant 0 : i32
    return %c0_i32, %c0_i32_0 : i32, i32
  }
  func.func @transform_3(%arg0: i32) -> (i32, i32) {
    %c0_i32 = arith.constant 0 : i32
    %c0_i32_0 = arith.constant 0 : i32
    %c0_i32_1 = arith.constant 0 : i32
    return %c0_i32, %c0_i32_0 : i32, i32
  }
  func.func @transform_4(%arg0: i32) -> (i32, i32, i32) {
    %c0_i32 = arith.constant 0 : i32
    %c0_i32_0 = arith.constant 0 : i32
    %c0_i32_1 = arith.constant 0 : i32
    return %arg0, %c0_i32, %c0_i32_0 : i32, i32, i32
  }
}

module attributes {stable_mosaic.version = 11 : i64} {
  func.func @kernel(%arg0: i32, %arg1: memref<1x16x128xbf16, #tpu.memory_space<vmem>>, %arg2: memref<3x128x64xbf16, #tpu.memory_space<vmem>>, %arg3: memref<1x64xf32, #tpu.memory_space<vmem>>, %arg4: memref<1x64xf32, #tpu.memory_space<vmem>>, %arg5: memref<1x16x64xbf16, #tpu.memory_space<vmem>>, %arg6: memref<18x128xf32, #tpu.memory_space<vmem>>) attributes {dimension_semantics = [#tpu.dimension_semantics<parallel>], iteration_bounds = array<i64: 2>, scalar_prefetch = 0 : i64, scratch_operands = 1 : i64, tpu.core_type = #tpu.core_type<tc>, window_params = [{transform_indices = @transform_0, window_bounds = array<i64: 1, 16, 128>}, {pipeline_mode = #tpu.pipeline_mode<synchronous>, transform_indices = @transform_1, window_bounds = array<i64: 3, 128, 64>}, {pipeline_mode = #tpu.pipeline_mode<synchronous>, transform_indices = @transform_2, window_bounds = array<i64: 1, 64>}, {pipeline_mode = #tpu.pipeline_mode<synchronous>, transform_indices = @transform_3, window_bounds = array<i64: 1, 64>}, {transform_indices = @transform_4, window_bounds = array<i64: 1, 16, 64>}]} {
    %cst = arith.constant 0.000000e+00 : f32
    %0 = vector.broadcast %cst : f32 to vector<18x128xf32>
    %c0 = arith.constant 0 : index
    %c0_0 = arith.constant 0 : index
    %1 = vector.load %arg6[%c0, %c0_0] : memref<18x128xf32, #tpu.memory_space<vmem>>, vector<18x128xf32>
    tpu.vector_store %arg6[%c0, %c0_0], %0 {strides = array<i32>} : memref<18x128xf32, #tpu.memory_space<vmem>>, vector<18x128xf32>,
    %c0_1 = arith.constant 0 : index
    %c0_2 = arith.constant 0 : index
    %c0_3 = arith.constant 0 : index
    %2 = vector.load %arg1[%c0_1, %c0_2, %c0_3] : memref<1x16x128xbf16, #tpu.memory_space<vmem>>, vector<1x16x128xbf16>
    %3 = vector.shape_cast %2 : vector<1x16x128xbf16> to vector<16x128xbf16>
    %4 = arith.extf %3 : vector<16x128xbf16> to vector<16x128xf32>
    %c1 = arith.constant 1 : index
    %c0_4 = arith.constant 0 : index
    %5 = vector.load %arg6[%c1, %c0_4] : memref<18x128xf32, #tpu.memory_space<vmem>>, vector<16x128xf32>
    tpu.vector_store %arg6[%c1, %c0_4], %4 {strides = array<i32>} : memref<18x128xf32, #tpu.memory_space<vmem>>, vector<16x128xf32>,
    %cst_5 = arith.constant 0.000000e+00 : f32
    %6 = vector.broadcast %cst_5 : f32 to vector<16x64xf32>
    %c0_6 = arith.constant 0 : index
    %c0_7 = arith.constant 0 : index
    %7 = vector.load %arg6[%c0_6, %c0_7] : memref<18x128xf32, #tpu.memory_space<vmem>>, vector<16x128xf32>
    %8 = arith.truncf %7 : vector<16x128xf32> to vector<16x128xbf16>
    %c0_8 = arith.constant 0 : index
    %c0_9 = arith.constant 0 : index
    %c0_10 = arith.constant 0 : index
    %9 = vector.load %arg2[%c0_8, %c0_9, %c0_10] : memref<3x128x64xbf16, #tpu.memory_space<vmem>>, vector<1x128x64xbf16>
    %10 = vector.shape_cast %9 : vector<1x128x64xbf16> to vector<128x64xbf16>
    %cst_11 = arith.constant dense<0.000000e+00> : vector<16x64xf32>
    %11 = tpu.matmul %8, %10, %cst_11 {dimension_numbers = #tpu.dot_dimension_numbers<[1], [0], [0], [1], [0, 0, 1, 1], [], []>} : vector<16x128xbf16>, vector<128x64xbf16>, vector<16x64xf32> -> vector<16x64xf32>
    %12 = arith.addf %6, %11 : vector<16x64xf32>
    %c1_12 = arith.constant 1 : index
    %c0_13 = arith.constant 0 : index
    %13 = vector.load %arg6[%c1_12, %c0_13] : memref<18x128xf32, #tpu.memory_space<vmem>>, vector<16x128xf32>
    %14 = arith.truncf %13 : vector<16x128xf32> to vector<16x128xbf16>
    %c1_14 = arith.constant 1 : index
    %c0_15 = arith.constant 0 : index
    %c0_16 = arith.constant 0 : index
    %15 = vector.load %arg2[%c1_14, %c0_15, %c0_16] : memref<3x128x64xbf16, #tpu.memory_space<vmem>>, vector<1x128x64xbf16>
    %16 = vector.shape_cast %15 : vector<1x128x64xbf16> to vector<128x64xbf16>
    %cst_17 = arith.constant dense<0.000000e+00> : vector<16x64xf32>
    %17 = tpu.matmul %14, %16, %cst_17 {dimension_numbers = #tpu.dot_dimension_numbers<[1], [0], [0], [1], [0, 0, 1, 1], [], []>} : vector<16x128xbf16>, vector<128x64xbf16>, vector<16x64xf32> -> vector<16x64xf32>
    %18 = arith.addf %12, %17 : vector<16x64xf32>
    %c2 = arith.constant 2 : index
    %c0_18 = arith.constant 0 : index
    %19 = vector.load %arg6[%c2, %c0_18] : memref<18x128xf32, #tpu.memory_space<vmem>>, vector<16x128xf32>
    %20 = arith.truncf %19 : vector<16x128xf32> to vector<16x128xbf16>
    %c2_19 = arith.constant 2 : index
    %c0_20 = arith.constant 0 : index
    %c0_21 = arith.constant 0 : index
    %21 = vector.load %arg2[%c2_19, %c0_20, %c0_21] : memref<3x128x64xbf16, #tpu.memory_space<vmem>>, vector<1x128x64xbf16>
    %22 = vector.shape_cast %21 : vector<1x128x64xbf16> to vector<128x64xbf16>
    %cst_22 = arith.constant dense<0.000000e+00> : vector<16x64xf32>
    %23 = tpu.matmul %20, %22, %cst_22 {dimension_numbers = #tpu.dot_dimension_numbers<[1], [0], [0], [1], [0, 0, 1, 1], [], []>} : vector<16x128xbf16>, vector<128x64xbf16>, vector<16x64xf32> -> vector<16x64xf32>
    %24 = arith.addf %18, %23 : vector<16x64xf32>
    %c0_23 = arith.constant 0 : index
    %c0_24 = arith.constant 0 : index
    %25 = vector.load %arg3[%c0_23, %c0_24] : memref<1x64xf32, #tpu.memory_space<vmem>>, vector<1x64xf32>
    %26 = vector.broadcast %25 : vector<1x64xf32> to vector<16x64xf32>
    %27 = arith.mulf %24, %26 : vector<16x64xf32>
    %c0_25 = arith.constant 0 : index
    %c0_26 = arith.constant 0 : index
    %28 = vector.load %arg4[%c0_25, %c0_26] : memref<1x64xf32, #tpu.memory_space<vmem>>, vector<1x64xf32>
    %29 = vector.broadcast %28 : vector<1x64xf32> to vector<16x64xf32>
    %30 = arith.addf %27, %29 : vector<16x64xf32>
    %cst_27 = arith.constant 0.000000e+00 : f32
    %31 = vector.broadcast %cst_27 : f32 to vector<16x64xf32>
    %32 = arith.maximumf %30, %31 : vector<16x64xf32>
    %33 = arith.truncf %32 : vector<16x64xf32> to vector<16x64xbf16>
    %c0_28 = arith.constant 0 : index
    %c0_29 = arith.constant 0 : index
    %c0_30 = arith.constant 0 : index
    %34 = vector.load %arg5[%c0_28, %c0_29, %c0_30] : memref<1x16x64xbf16, #tpu.memory_space<vmem>>, vector<1x16x64xbf16>
    %35 = vector.shape_cast %34 : vector<1x16x64xbf16> to vector<16x64xbf16>
    %36 = vector.shape_cast %33 : vector<16x64xbf16> to vector<1x16x64xbf16>
    tpu.vector_store %arg5[%c0_28, %c0_29, %c0_30], %36 {strides = array<i32>} : memref<1x16x64xbf16, #tpu.memory_space<vmem>>, vector<1x16x64xbf16>,
    return
  }
  func.func @transform_0(%arg0: i32) -> (i32, i32, i32) {
    %c0_i32 = arith.constant 0 : i32
    %c0_i32_0 = arith.constant 0 : i32
    %c0_i32_1 = arith.constant 0 : i32
    return %arg0, %c0_i32, %c0_i32_0 : i32, i32, i32
  }
  func.func @transform_1(%arg0: i32) -> (i32, i32, i32) {
    %c0_i32 = arith.constant 0 : i32
    %c0_i32_0 = arith.constant 0 : i32
    %c0_i32_1 = arith.constant 0 : i32
    %c0_i32_2 = arith.constant 0 : i32
    return %c0_i32, %c0_i32_0, %c0_i32_1 : i32, i32, i32
  }
  func.func @transform_2(%arg0: i32) -> (i32, i32) {
    %c0_i32 = arith.constant 0 : i32
    %c0_i32_0 = arith.constant 0 : i32
    %c0_i32_1 = arith.constant 0 : i32
    return %c0_i32, %c0_i32_0 : i32, i32
  }
  func.func @transform_3(%arg0: i32) -> (i32, i32) {
    %c0_i32 = arith.constant 0 : i32
    %c0_i32_0 = arith.constant 0 : i32
    %c0_i32_1 = arith.constant 0 : i32
    return %c0_i32, %c0_i32_0 : i32, i32
  }
  func.func @transform_4(%arg0: i32) -> (i32, i32, i32) {
    %c0_i32 = arith.constant 0 : i32
    %c0_i32_0 = arith.constant 0 : i32
    %c0_i32_1 = arith.constant 0 : i32
    return %arg0, %c0_i32, %c0_i32_0 : i32, i32, i32
  }
}

module attributes {stable_mosaic.version = 11 : i64} {
  func.func @kernel(%arg0: i32, %arg1: memref<1x16x64xbf16, #tpu.memory_space<vmem>>, %arg2: memref<3x64x64xbf16, #tpu.memory_space<vmem>>, %arg3: memref<1x64xf32, #tpu.memory_space<vmem>>, %arg4: memref<1x64xf32, #tpu.memory_space<vmem>>, %arg5: memref<64x64xbf16, #tpu.memory_space<vmem>>, %arg6: memref<1x64xf32, #tpu.memory_space<vmem>>, %arg7: memref<1x64xf32, #tpu.memory_space<vmem>>, %arg8: memref<1x16x64xbf16, #tpu.memory_space<vmem>>, %arg9: memref<20x64xf32, #tpu.memory_space<vmem>>) attributes {dimension_semantics = [#tpu.dimension_semantics<parallel>], iteration_bounds = array<i64: 2>, scalar_prefetch = 0 : i64, scratch_operands = 1 : i64, tpu.core_type = #tpu.core_type<tc>, window_params = [{transform_indices = @transform_0, window_bounds = array<i64: 1, 16, 64>}, {pipeline_mode = #tpu.pipeline_mode<synchronous>, transform_indices = @transform_1, window_bounds = array<i64: 3, 64, 64>}, {pipeline_mode = #tpu.pipeline_mode<synchronous>, transform_indices = @transform_2, window_bounds = array<i64: 1, 64>}, {pipeline_mode = #tpu.pipeline_mode<synchronous>, transform_indices = @transform_3, window_bounds = array<i64: 1, 64>}, {pipeline_mode = #tpu.pipeline_mode<synchronous>, transform_indices = @transform_4, window_bounds = array<i64: 64, 64>}, {pipeline_mode = #tpu.pipeline_mode<synchronous>, transform_indices = @transform_5, window_bounds = array<i64: 1, 64>}, {pipeline_mode = #tpu.pipeline_mode<synchronous>, transform_indices = @transform_6, window_bounds = array<i64: 1, 64>}, {transform_indices = @transform_7, window_bounds = array<i64: 1, 16, 64>}]} {
    %cst = arith.constant 0.000000e+00 : f32
    %0 = vector.broadcast %cst : f32 to vector<20x64xf32>
    %c0 = arith.constant 0 : index
    %c0_0 = arith.constant 0 : index
    %1 = vector.load %arg9[%c0, %c0_0] : memref<20x64xf32, #tpu.memory_space<vmem>>, vector<20x64xf32>
    tpu.vector_store %arg9[%c0, %c0_0], %0 {strides = array<i32>} : memref<20x64xf32, #tpu.memory_space<vmem>>, vector<20x64xf32>,
    %c0_1 = arith.constant 0 : index
    %c0_2 = arith.constant 0 : index
    %c0_3 = arith.constant 0 : index
    %2 = vector.load %arg1[%c0_1, %c0_2, %c0_3] : memref<1x16x64xbf16, #tpu.memory_space<vmem>>, vector<1x16x64xbf16>
    %3 = vector.shape_cast %2 : vector<1x16x64xbf16> to vector<16x64xbf16>
    %4 = arith.extf %3 : vector<16x64xbf16> to vector<16x64xf32>
    %c2 = arith.constant 2 : index
    %c0_4 = arith.constant 0 : index
    %5 = vector.load %arg9[%c2, %c0_4] : memref<20x64xf32, #tpu.memory_space<vmem>>, vector<16x64xf32>
    tpu.vector_store %arg9[%c2, %c0_4], %4 {strides = array<i32>} : memref<20x64xf32, #tpu.memory_space<vmem>>, vector<16x64xf32>,
    %cst_5 = arith.constant 0.000000e+00 : f32
    %6 = vector.broadcast %cst_5 : f32 to vector<16x64xf32>
    %c0_6 = arith.constant 0 : index
    %c0_7 = arith.constant 0 : index
    %7 = vector.load %arg9[%c0_6, %c0_7] : memref<20x64xf32, #tpu.memory_space<vmem>>, vector<16x64xf32>
    %8 = arith.truncf %7 : vector<16x64xf32> to vector<16x64xbf16>
    %c0_8 = arith.constant 0 : index
    %c0_9 = arith.constant 0 : index
    %c0_10 = arith.constant 0 : index
    %9 = vector.load %arg2[%c0_8, %c0_9, %c0_10] : memref<3x64x64xbf16, #tpu.memory_space<vmem>>, vector<1x64x64xbf16>
    %10 = vector.shape_cast %9 : vector<1x64x64xbf16> to vector<64x64xbf16>
    %cst_11 = arith.constant dense<0.000000e+00> : vector<16x64xf32>
    %11 = tpu.matmul %8, %10, %cst_11 {dimension_numbers = #tpu.dot_dimension_numbers<[1], [0], [0], [1], [0, 0, 1, 1], [], []>} : vector<16x64xbf16>, vector<64x64xbf16>, vector<16x64xf32> -> vector<16x64xf32>
    %12 = arith.addf %6, %11 : vector<16x64xf32>
    %c2_12 = arith.constant 2 : index
    %c0_13 = arith.constant 0 : index
    %13 = vector.load %arg9[%c2_12, %c0_13] : memref<20x64xf32, #tpu.memory_space<vmem>>, vector<16x64xf32>
    %14 = arith.truncf %13 : vector<16x64xf32> to vector<16x64xbf16>
    %c1 = arith.constant 1 : index
    %c0_14 = arith.constant 0 : index
    %c0_15 = arith.constant 0 : index
    %15 = vector.load %arg2[%c1, %c0_14, %c0_15] : memref<3x64x64xbf16, #tpu.memory_space<vmem>>, vector<1x64x64xbf16>
    %16 = vector.shape_cast %15 : vector<1x64x64xbf16> to vector<64x64xbf16>
    %cst_16 = arith.constant dense<0.000000e+00> : vector<16x64xf32>
    %17 = tpu.matmul %14, %16, %cst_16 {dimension_numbers = #tpu.dot_dimension_numbers<[1], [0], [0], [1], [0, 0, 1, 1], [], []>} : vector<16x64xbf16>, vector<64x64xbf16>, vector<16x64xf32> -> vector<16x64xf32>
    %18 = arith.addf %12, %17 : vector<16x64xf32>
    %c4 = arith.constant 4 : index
    %c0_17 = arith.constant 0 : index
    %19 = vector.load %arg9[%c4, %c0_17] : memref<20x64xf32, #tpu.memory_space<vmem>>, vector<16x64xf32>
    %20 = arith.truncf %19 : vector<16x64xf32> to vector<16x64xbf16>
    %c2_18 = arith.constant 2 : index
    %c0_19 = arith.constant 0 : index
    %c0_20 = arith.constant 0 : index
    %21 = vector.load %arg2[%c2_18, %c0_19, %c0_20] : memref<3x64x64xbf16, #tpu.memory_space<vmem>>, vector<1x64x64xbf16>
    %22 = vector.shape_cast %21 : vector<1x64x64xbf16> to vector<64x64xbf16>
    %cst_21 = arith.constant dense<0.000000e+00> : vector<16x64xf32>
    %23 = tpu.matmul %20, %22, %cst_21 {dimension_numbers = #tpu.dot_dimension_numbers<[1], [0], [0], [1], [0, 0, 1, 1], [], []>} : vector<16x64xbf16>, vector<64x64xbf16>, vector<16x64xf32> -> vector<16x64xf32>
    %24 = arith.addf %18, %23 : vector<16x64xf32>
    %c0_22 = arith.constant 0 : index
    %c0_23 = arith.constant 0 : index
    %25 = vector.load %arg3[%c0_22, %c0_23] : memref<1x64xf32, #tpu.memory_space<vmem>>, vector<1x64xf32>
    %26 = vector.broadcast %25 : vector<1x64xf32> to vector<16x64xf32>
    %27 = arith.mulf %24, %26 : vector<16x64xf32>
    %c0_24 = arith.constant 0 : index
    %c0_25 = arith.constant 0 : index
    %28 = vector.load %arg4[%c0_24, %c0_25] : memref<1x64xf32, #tpu.memory_space<vmem>>, vector<1x64xf32>
    %29 = vector.broadcast %28 : vector<1x64xf32> to vector<16x64xf32>
    %30 = arith.addf %27, %29 : vector<16x64xf32>
    %cst_26 = arith.constant 0.000000e+00 : f32
    %31 = vector.broadcast %cst_26 : f32 to vector<16x64xf32>
    %32 = arith.maximumf %30, %31 : vector<16x64xf32>
    %33 = arith.truncf %32 : vector<16x64xf32> to vector<16x64xbf16>
    %c0_27 = arith.constant 0 : index
    %c0_28 = arith.constant 0 : index
    %34 = vector.load %arg5[%c0_27, %c0_28] : memref<64x64xbf16, #tpu.memory_space<vmem>>, vector<64x64xbf16>
    %cst_29 = arith.constant dense<0.000000e+00> : vector<16x64xf32>
    %35 = tpu.matmul %33, %34, %cst_29 {dimension_numbers = #tpu.dot_dimension_numbers<[1], [0], [0], [1], [0, 0, 1, 1], [], []>} : vector<16x64xbf16>, vector<64x64xbf16>, vector<16x64xf32> -> vector<16x64xf32>
    %c0_30 = arith.constant 0 : index
    %c0_31 = arith.constant 0 : index
    %36 = vector.load %arg6[%c0_30, %c0_31] : memref<1x64xf32, #tpu.memory_space<vmem>>, vector<1x64xf32>
    %37 = vector.broadcast %36 : vector<1x64xf32> to vector<16x64xf32>
    %38 = arith.mulf %35, %37 : vector<16x64xf32>
    %c0_32 = arith.constant 0 : index
    %c0_33 = arith.constant 0 : index
    %39 = vector.load %arg7[%c0_32, %c0_33] : memref<1x64xf32, #tpu.memory_space<vmem>>, vector<1x64xf32>
    %40 = vector.broadcast %39 : vector<1x64xf32> to vector<16x64xf32>
    %41 = arith.addf %38, %40 : vector<16x64xf32>
    %cst_34 = arith.constant 0.000000e+00 : f32
    %42 = vector.broadcast %cst_34 : f32 to vector<16x64xf32>
    %43 = arith.maximumf %41, %42 : vector<16x64xf32>
    %44 = arith.truncf %43 : vector<16x64xf32> to vector<16x64xbf16>
    %c0_35 = arith.constant 0 : index
    %c0_36 = arith.constant 0 : index
    %c0_37 = arith.constant 0 : index
    %45 = vector.load %arg8[%c0_35, %c0_36, %c0_37] : memref<1x16x64xbf16, #tpu.memory_space<vmem>>, vector<1x16x64xbf16>
    %46 = vector.shape_cast %45 : vector<1x16x64xbf16> to vector<16x64xbf16>
    %47 = vector.shape_cast %44 : vector<16x64xbf16> to vector<1x16x64xbf16>
    tpu.vector_store %arg8[%c0_35, %c0_36, %c0_37], %47 {strides = array<i32>} : memref<1x16x64xbf16, #tpu.memory_space<vmem>>, vector<1x16x64xbf16>,
    return
  }
  func.func @transform_0(%arg0: i32) -> (i32, i32, i32) {
    %c0_i32 = arith.constant 0 : i32
    %c0_i32_0 = arith.constant 0 : i32
    %c0_i32_1 = arith.constant 0 : i32
    return %arg0, %c0_i32, %c0_i32_0 : i32, i32, i32
  }
  func.func @transform_1(%arg0: i32) -> (i32, i32, i32) {
    %c0_i32 = arith.constant 0 : i32
    %c0_i32_0 = arith.constant 0 : i32
    %c0_i32_1 = arith.constant 0 : i32
    %c0_i32_2 = arith.constant 0 : i32
    return %c0_i32, %c0_i32_0, %c0_i32_1 : i32, i32, i32
  }
  func.func @transform_2(%arg0: i32) -> (i32, i32) {
    %c0_i32 = arith.constant 0 : i32
    %c0_i32_0 = arith.constant 0 : i32
    %c0_i32_1 = arith.constant 0 : i32
    return %c0_i32, %c0_i32_0 : i32, i32
  }
  func.func @transform_3(%arg0: i32) -> (i32, i32) {
    %c0_i32 = arith.constant 0 : i32
    %c0_i32_0 = arith.constant 0 : i32
    %c0_i32_1 = arith.constant 0 : i32
    return %c0_i32, %c0_i32_0 : i32, i32
  }
  func.func @transform_4(%arg0: i32) -> (i32, i32) {
    %c0_i32 = arith.constant 0 : i32
    %c0_i32_0 = arith.constant 0 : i32
    %c0_i32_1 = arith.constant 0 : i32
    return %c0_i32, %c0_i32_0 : i32, i32
  }
  func.func @transform_5(%arg0: i32) -> (i32, i32) {
    %c0_i32 = arith.constant 0 : i32
    %c0_i32_0 = arith.constant 0 : i32
    %c0_i32_1 = arith.constant 0 : i32
    return %c0_i32, %c0_i32_0 : i32, i32
  }
  func.func @transform_6(%arg0: i32) -> (i32, i32) {
    %c0_i32 = arith.constant 0 : i32
    %c0_i32_0 = arith.constant 0 : i32
    %c0_i32_1 = arith.constant 0 : i32
    return %c0_i32, %c0_i32_0 : i32, i32
  }
  func.func @transform_7(%arg0: i32) -> (i32, i32, i32) {
    %c0_i32 = arith.constant 0 : i32
    %c0_i32_0 = arith.constant 0 : i32
    %c0_i32_1 = arith.constant 0 : i32
    return %arg0, %c0_i32, %c0_i32_0 : i32, i32, i32
  }
}

module attributes {stable_mosaic.version = 11 : i64} {
  func.func @kernel(%arg0: i32, %arg1: memref<1x16x128xbf16, #tpu.memory_space<vmem>>, %arg2: memref<3x128x32xbf16, #tpu.memory_space<vmem>>, %arg3: memref<1x32xf32, #tpu.memory_space<vmem>>, %arg4: memref<1x32xf32, #tpu.memory_space<vmem>>, %arg5: memref<32x32xbf16, #tpu.memory_space<vmem>>, %arg6: memref<1x32xf32, #tpu.memory_space<vmem>>, %arg7: memref<1x32xf32, #tpu.memory_space<vmem>>, %arg8: memref<1x16x32xbf16, #tpu.memory_space<vmem>>, %arg9: memref<18x128xf32, #tpu.memory_space<vmem>>) attributes {dimension_semantics = [#tpu.dimension_semantics<parallel>], iteration_bounds = array<i64: 2>, scalar_prefetch = 0 : i64, scratch_operands = 1 : i64, tpu.core_type = #tpu.core_type<tc>, window_params = [{transform_indices = @transform_0, window_bounds = array<i64: 1, 16, 128>}, {pipeline_mode = #tpu.pipeline_mode<synchronous>, transform_indices = @transform_1, window_bounds = array<i64: 3, 128, 32>}, {pipeline_mode = #tpu.pipeline_mode<synchronous>, transform_indices = @transform_2, window_bounds = array<i64: 1, 32>}, {pipeline_mode = #tpu.pipeline_mode<synchronous>, transform_indices = @transform_3, window_bounds = array<i64: 1, 32>}, {pipeline_mode = #tpu.pipeline_mode<synchronous>, transform_indices = @transform_4, window_bounds = array<i64: 32, 32>}, {pipeline_mode = #tpu.pipeline_mode<synchronous>, transform_indices = @transform_5, window_bounds = array<i64: 1, 32>}, {pipeline_mode = #tpu.pipeline_mode<synchronous>, transform_indices = @transform_6, window_bounds = array<i64: 1, 32>}, {transform_indices = @transform_7, window_bounds = array<i64: 1, 16, 32>}]} {
    %cst = arith.constant 0.000000e+00 : f32
    %0 = vector.broadcast %cst : f32 to vector<18x128xf32>
    %c0 = arith.constant 0 : index
    %c0_0 = arith.constant 0 : index
    %1 = vector.load %arg9[%c0, %c0_0] : memref<18x128xf32, #tpu.memory_space<vmem>>, vector<18x128xf32>
    tpu.vector_store %arg9[%c0, %c0_0], %0 {strides = array<i32>} : memref<18x128xf32, #tpu.memory_space<vmem>>, vector<18x128xf32>,
    %c0_1 = arith.constant 0 : index
    %c0_2 = arith.constant 0 : index
    %c0_3 = arith.constant 0 : index
    %2 = vector.load %arg1[%c0_1, %c0_2, %c0_3] : memref<1x16x128xbf16, #tpu.memory_space<vmem>>, vector<1x16x128xbf16>
    %3 = vector.shape_cast %2 : vector<1x16x128xbf16> to vector<16x128xbf16>
    %4 = arith.extf %3 : vector<16x128xbf16> to vector<16x128xf32>
    %c1 = arith.constant 1 : index
    %c0_4 = arith.constant 0 : index
    %5 = vector.load %arg9[%c1, %c0_4] : memref<18x128xf32, #tpu.memory_space<vmem>>, vector<16x128xf32>
    tpu.vector_store %arg9[%c1, %c0_4], %4 {strides = array<i32>} : memref<18x128xf32, #tpu.memory_space<vmem>>, vector<16x128xf32>,
    %cst_5 = arith.constant 0.000000e+00 : f32
    %6 = vector.broadcast %cst_5 : f32 to vector<16x32xf32>
    %c0_6 = arith.constant 0 : index
    %c0_7 = arith.constant 0 : index
    %7 = vector.load %arg9[%c0_6, %c0_7] : memref<18x128xf32, #tpu.memory_space<vmem>>, vector<16x128xf32>
    %8 = arith.truncf %7 : vector<16x128xf32> to vector<16x128xbf16>
    %c0_8 = arith.constant 0 : index
    %c0_9 = arith.constant 0 : index
    %c0_10 = arith.constant 0 : index
    %9 = vector.load %arg2[%c0_8, %c0_9, %c0_10] : memref<3x128x32xbf16, #tpu.memory_space<vmem>>, vector<1x128x32xbf16>
    %10 = vector.shape_cast %9 : vector<1x128x32xbf16> to vector<128x32xbf16>
    %cst_11 = arith.constant dense<0.000000e+00> : vector<16x32xf32>
    %11 = tpu.matmul %8, %10, %cst_11 {dimension_numbers = #tpu.dot_dimension_numbers<[1], [0], [0], [1], [0, 0, 1, 1], [], []>} : vector<16x128xbf16>, vector<128x32xbf16>, vector<16x32xf32> -> vector<16x32xf32>
    %12 = arith.addf %6, %11 : vector<16x32xf32>
    %c1_12 = arith.constant 1 : index
    %c0_13 = arith.constant 0 : index
    %13 = vector.load %arg9[%c1_12, %c0_13] : memref<18x128xf32, #tpu.memory_space<vmem>>, vector<16x128xf32>
    %14 = arith.truncf %13 : vector<16x128xf32> to vector<16x128xbf16>
    %c1_14 = arith.constant 1 : index
    %c0_15 = arith.constant 0 : index
    %c0_16 = arith.constant 0 : index
    %15 = vector.load %arg2[%c1_14, %c0_15, %c0_16] : memref<3x128x32xbf16, #tpu.memory_space<vmem>>, vector<1x128x32xbf16>
    %16 = vector.shape_cast %15 : vector<1x128x32xbf16> to vector<128x32xbf16>
    %cst_17 = arith.constant dense<0.000000e+00> : vector<16x32xf32>
    %17 = tpu.matmul %14, %16, %cst_17 {dimension_numbers = #tpu.dot_dimension_numbers<[1], [0], [0], [1], [0, 0, 1, 1], [], []>} : vector<16x128xbf16>, vector<128x32xbf16>, vector<16x32xf32> -> vector<16x32xf32>
    %18 = arith.addf %12, %17 : vector<16x32xf32>
    %c2 = arith.constant 2 : index
    %c0_18 = arith.constant 0 : index
    %19 = vector.load %arg9[%c2, %c0_18] : memref<18x128xf32, #tpu.memory_space<vmem>>, vector<16x128xf32>
    %20 = arith.truncf %19 : vector<16x128xf32> to vector<16x128xbf16>
    %c2_19 = arith.constant 2 : index
    %c0_20 = arith.constant 0 : index
    %c0_21 = arith.constant 0 : index
    %21 = vector.load %arg2[%c2_19, %c0_20, %c0_21] : memref<3x128x32xbf16, #tpu.memory_space<vmem>>, vector<1x128x32xbf16>
    %22 = vector.shape_cast %21 : vector<1x128x32xbf16> to vector<128x32xbf16>
    %cst_22 = arith.constant dense<0.000000e+00> : vector<16x32xf32>
    %23 = tpu.matmul %20, %22, %cst_22 {dimension_numbers = #tpu.dot_dimension_numbers<[1], [0], [0], [1], [0, 0, 1, 1], [], []>} : vector<16x128xbf16>, vector<128x32xbf16>, vector<16x32xf32> -> vector<16x32xf32>
    %24 = arith.addf %18, %23 : vector<16x32xf32>
    %c0_23 = arith.constant 0 : index
    %c0_24 = arith.constant 0 : index
    %25 = vector.load %arg3[%c0_23, %c0_24] : memref<1x32xf32, #tpu.memory_space<vmem>>, vector<1x32xf32>
    %26 = vector.broadcast %25 : vector<1x32xf32> to vector<16x32xf32>
    %27 = arith.mulf %24, %26 : vector<16x32xf32>
    %c0_25 = arith.constant 0 : index
    %c0_26 = arith.constant 0 : index
    %28 = vector.load %arg4[%c0_25, %c0_26] : memref<1x32xf32, #tpu.memory_space<vmem>>, vector<1x32xf32>
    %29 = vector.broadcast %28 : vector<1x32xf32> to vector<16x32xf32>
    %30 = arith.addf %27, %29 : vector<16x32xf32>
    %cst_27 = arith.constant 0.000000e+00 : f32
    %31 = vector.broadcast %cst_27 : f32 to vector<16x32xf32>
    %32 = arith.maximumf %30, %31 : vector<16x32xf32>
    %33 = arith.truncf %32 : vector<16x32xf32> to vector<16x32xbf16>
    %c0_28 = arith.constant 0 : index
    %c0_29 = arith.constant 0 : index
    %34 = vector.load %arg5[%c0_28, %c0_29] : memref<32x32xbf16, #tpu.memory_space<vmem>>, vector<32x32xbf16>
    %cst_30 = arith.constant dense<0.000000e+00> : vector<16x32xf32>
    %35 = tpu.matmul %33, %34, %cst_30 {dimension_numbers = #tpu.dot_dimension_numbers<[1], [0], [0], [1], [0, 0, 1, 1], [], []>} : vector<16x32xbf16>, vector<32x32xbf16>, vector<16x32xf32> -> vector<16x32xf32>
    %c0_31 = arith.constant 0 : index
    %c0_32 = arith.constant 0 : index
    %36 = vector.load %arg6[%c0_31, %c0_32] : memref<1x32xf32, #tpu.memory_space<vmem>>, vector<1x32xf32>
    %37 = vector.broadcast %36 : vector<1x32xf32> to vector<16x32xf32>
    %38 = arith.mulf %35, %37 : vector<16x32xf32>
    %c0_33 = arith.constant 0 : index
    %c0_34 = arith.constant 0 : index
    %39 = vector.load %arg7[%c0_33, %c0_34] : memref<1x32xf32, #tpu.memory_space<vmem>>, vector<1x32xf32>
    %40 = vector.broadcast %39 : vector<1x32xf32> to vector<16x32xf32>
    %41 = arith.addf %38, %40 : vector<16x32xf32>
    %cst_35 = arith.constant 0.000000e+00 : f32
    %42 = vector.broadcast %cst_35 : f32 to vector<16x32xf32>
    %43 = arith.maximumf %41, %42 : vector<16x32xf32>
    %44 = arith.truncf %43 : vector<16x32xf32> to vector<16x32xbf16>
    %c0_36 = arith.constant 0 : index
    %c0_37 = arith.constant 0 : index
    %c0_38 = arith.constant 0 : index
    %45 = vector.load %arg8[%c0_36, %c0_37, %c0_38] : memref<1x16x32xbf16, #tpu.memory_space<vmem>>, vector<1x16x32xbf16>
    %46 = vector.shape_cast %45 : vector<1x16x32xbf16> to vector<16x32xbf16>
    %47 = vector.shape_cast %44 : vector<16x32xbf16> to vector<1x16x32xbf16>
    tpu.vector_store %arg8[%c0_36, %c0_37, %c0_38], %47 {strides = array<i32>} : memref<1x16x32xbf16, #tpu.memory_space<vmem>>, vector<1x16x32xbf16>,
    return
  }
  func.func @transform_0(%arg0: i32) -> (i32, i32, i32) {
    %c0_i32 = arith.constant 0 : i32
    %c0_i32_0 = arith.constant 0 : i32
    %c0_i32_1 = arith.constant 0 : i32
    return %arg0, %c0_i32, %c0_i32_0 : i32, i32, i32
  }
  func.func @transform_1(%arg0: i32) -> (i32, i32, i32) {
    %c0_i32 = arith.constant 0 : i32
    %c0_i32_0 = arith.constant 0 : i32
    %c0_i32_1 = arith.constant 0 : i32
    %c0_i32_2 = arith.constant 0 : i32
    return %c0_i32, %c0_i32_0, %c0_i32_1 : i32, i32, i32
  }
  func.func @transform_2(%arg0: i32) -> (i32, i32) {
    %c0_i32 = arith.constant 0 : i32
    %c0_i32_0 = arith.constant 0 : i32
    %c0_i32_1 = arith.constant 0 : i32
    return %c0_i32, %c0_i32_0 : i32, i32
  }
  func.func @transform_3(%arg0: i32) -> (i32, i32) {
    %c0_i32 = arith.constant 0 : i32
    %c0_i32_0 = arith.constant 0 : i32
    %c0_i32_1 = arith.constant 0 : i32
    return %c0_i32, %c0_i32_0 : i32, i32
  }
  func.func @transform_4(%arg0: i32) -> (i32, i32) {
    %c0_i32 = arith.constant 0 : i32
    %c0_i32_0 = arith.constant 0 : i32
    %c0_i32_1 = arith.constant 0 : i32
    return %c0_i32, %c0_i32_0 : i32, i32
  }
  func.func @transform_5(%arg0: i32) -> (i32, i32) {
    %c0_i32 = arith.constant 0 : i32
    %c0_i32_0 = arith.constant 0 : i32
    %c0_i32_1 = arith.constant 0 : i32
    return %c0_i32, %c0_i32_0 : i32, i32
  }
  func.func @transform_6(%arg0: i32) -> (i32, i32) {
    %c0_i32 = arith.constant 0 : i32
    %c0_i32_0 = arith.constant 0 : i32
    %c0_i32_1 = arith.constant 0 : i32
    return %c0_i32, %c0_i32_0 : i32, i32
  }
  func.func @transform_7(%arg0: i32) -> (i32, i32, i32) {
    %c0_i32 = arith.constant 0 : i32
    %c0_i32_0 = arith.constant 0 : i32
    %c0_i32_1 = arith.constant 0 : i32
    return %arg0, %c0_i32, %c0_i32_0 : i32, i32, i32
  }
}

module attributes {stable_mosaic.version = 11 : i64} {
  func.func @kernel(%arg0: i32, %arg1: memref<1x16x128xbf16, #tpu.memory_space<vmem>>, %arg2: memref<1x128x32xbf16, #tpu.memory_space<vmem>>, %arg3: memref<1x32xf32, #tpu.memory_space<vmem>>, %arg4: memref<1x32xf32, #tpu.memory_space<vmem>>, %arg5: memref<1x16x32xbf16, #tpu.memory_space<vmem>>, %arg6: memref<16x128xf32, #tpu.memory_space<vmem>>) attributes {dimension_semantics = [#tpu.dimension_semantics<parallel>], iteration_bounds = array<i64: 2>, scalar_prefetch = 0 : i64, scratch_operands = 1 : i64, tpu.core_type = #tpu.core_type<tc>, window_params = [{transform_indices = @transform_0, window_bounds = array<i64: 1, 16, 128>}, {pipeline_mode = #tpu.pipeline_mode<synchronous>, transform_indices = @transform_1, window_bounds = array<i64: 1, 128, 32>}, {pipeline_mode = #tpu.pipeline_mode<synchronous>, transform_indices = @transform_2, window_bounds = array<i64: 1, 32>}, {pipeline_mode = #tpu.pipeline_mode<synchronous>, transform_indices = @transform_3, window_bounds = array<i64: 1, 32>}, {transform_indices = @transform_4, window_bounds = array<i64: 1, 16, 32>}]} {
    %c0 = arith.constant 0 : index
    %c0_0 = arith.constant 0 : index
    %c0_1 = arith.constant 0 : index
    %0 = vector.load %arg1[%c0, %c0_0, %c0_1] : memref<1x16x128xbf16, #tpu.memory_space<vmem>>, vector<1x16x128xbf16>
    %1 = vector.shape_cast %0 : vector<1x16x128xbf16> to vector<16x128xbf16>
    %2 = arith.extf %1 : vector<16x128xbf16> to vector<16x128xf32>
    %c0_2 = arith.constant 0 : index
    %c0_3 = arith.constant 0 : index
    %3 = vector.load %arg6[%c0_2, %c0_3] : memref<16x128xf32, #tpu.memory_space<vmem>>, vector<16x128xf32>
    tpu.vector_store %arg6[%c0_2, %c0_3], %2 {strides = array<i32>} : memref<16x128xf32, #tpu.memory_space<vmem>>, vector<16x128xf32>,
    %cst = arith.constant 0.000000e+00 : f32
    %4 = vector.broadcast %cst : f32 to vector<16x32xf32>
    %c0_4 = arith.constant 0 : index
    %c0_5 = arith.constant 0 : index
    %5 = vector.load %arg6[%c0_4, %c0_5] : memref<16x128xf32, #tpu.memory_space<vmem>>, vector<16x128xf32>
    %6 = arith.truncf %5 : vector<16x128xf32> to vector<16x128xbf16>
    %c0_6 = arith.constant 0 : index
    %c0_7 = arith.constant 0 : index
    %c0_8 = arith.constant 0 : index
    %7 = vector.load %arg2[%c0_6, %c0_7, %c0_8] : memref<1x128x32xbf16, #tpu.memory_space<vmem>>, vector<1x128x32xbf16>
    %8 = vector.shape_cast %7 : vector<1x128x32xbf16> to vector<128x32xbf16>
    %cst_9 = arith.constant dense<0.000000e+00> : vector<16x32xf32>
    %9 = tpu.matmul %6, %8, %cst_9 {dimension_numbers = #tpu.dot_dimension_numbers<[1], [0], [0], [1], [0, 0, 1, 1], [], []>} : vector<16x128xbf16>, vector<128x32xbf16>, vector<16x32xf32> -> vector<16x32xf32>
    %10 = arith.addf %4, %9 : vector<16x32xf32>
    %c0_10 = arith.constant 0 : index
    %c0_11 = arith.constant 0 : index
    %11 = vector.load %arg3[%c0_10, %c0_11] : memref<1x32xf32, #tpu.memory_space<vmem>>, vector<1x32xf32>
    %12 = vector.broadcast %11 : vector<1x32xf32> to vector<16x32xf32>
    %13 = arith.mulf %10, %12 : vector<16x32xf32>
    %c0_12 = arith.constant 0 : index
    %c0_13 = arith.constant 0 : index
    %14 = vector.load %arg4[%c0_12, %c0_13] : memref<1x32xf32, #tpu.memory_space<vmem>>, vector<1x32xf32>
    %15 = vector.broadcast %14 : vector<1x32xf32> to vector<16x32xf32>
    %16 = arith.addf %13, %15 : vector<16x32xf32>
    %cst_14 = arith.constant 0.000000e+00 : f32
    %17 = vector.broadcast %cst_14 : f32 to vector<16x32xf32>
    %18 = arith.maximumf %16, %17 : vector<16x32xf32>
    %19 = arith.truncf %18 : vector<16x32xf32> to vector<16x32xbf16>
    %c0_15 = arith.constant 0 : index
    %c0_16 = arith.constant 0 : index
    %c0_17 = arith.constant 0 : index
    %20 = vector.load %arg5[%c0_15, %c0_16, %c0_17] : memref<1x16x32xbf16, #tpu.memory_space<vmem>>, vector<1x16x32xbf16>
    %21 = vector.shape_cast %20 : vector<1x16x32xbf16> to vector<16x32xbf16>
    %22 = vector.shape_cast %19 : vector<16x32xbf16> to vector<1x16x32xbf16>
    tpu.vector_store %arg5[%c0_15, %c0_16, %c0_17], %22 {strides = array<i32>} : memref<1x16x32xbf16, #tpu.memory_space<vmem>>, vector<1x16x32xbf16>,
    return
  }
  func.func @transform_0(%arg0: i32) -> (i32, i32, i32) {
    %c0_i32 = arith.constant 0 : i32
    %c0_i32_0 = arith.constant 0 : i32
    %c0_i32_1 = arith.constant 0 : i32
    return %arg0, %c0_i32, %c0_i32_0 : i32, i32, i32
  }
  func.func @transform_1(%arg0: i32) -> (i32, i32, i32) {
    %c0_i32 = arith.constant 0 : i32
    %c0_i32_0 = arith.constant 0 : i32
    %c0_i32_1 = arith.constant 0 : i32
    %c0_i32_2 = arith.constant 0 : i32
    return %c0_i32, %c0_i32_0, %c0_i32_1 : i32, i32, i32
  }
  func.func @transform_2(%arg0: i32) -> (i32, i32) {
    %c0_i32 = arith.constant 0 : i32
    %c0_i32_0 = arith.constant 0 : i32
    %c0_i32_1 = arith.constant 0 : i32
    return %c0_i32, %c0_i32_0 : i32, i32
  }
  func.func @transform_3(%arg0: i32) -> (i32, i32) {
    %c0_i32 = arith.constant 0 : i32
    %c0_i32_0 = arith.constant 0 : i32
    %c0_i32_1 = arith.constant 0 : i32
    return %c0_i32, %c0_i32_0 : i32, i32
  }
  func.func @transform_4(%arg0: i32) -> (i32, i32, i32) {
    %c0_i32 = arith.constant 0 : i32
    %c0_i32_0 = arith.constant 0 : i32
    %c0_i32_1 = arith.constant 0 : i32
    return %arg0, %c0_i32, %c0_i32_0 : i32, i32, i32
  }
}

module attributes {stable_mosaic.version = 11 : i64} {
  func.func @kernel(%arg0: i32, %arg1: memref<1x16x64xbf16, #tpu.memory_space<vmem>>, %arg2: memref<1x16x32xbf16, #tpu.memory_space<vmem>>, %arg3: memref<1x16x32xbf16, #tpu.memory_space<vmem>>, %arg4: memref<1x64x128xbf16, #tpu.memory_space<vmem>>, %arg5: memref<1x32x128xbf16, #tpu.memory_space<vmem>>, %arg6: memref<1x32x128xbf16, #tpu.memory_space<vmem>>, %arg7: memref<1x128xf32, #tpu.memory_space<vmem>>, %arg8: memref<1x128xf32, #tpu.memory_space<vmem>>, %arg9: memref<1x16x128xbf16, #tpu.memory_space<vmem>>, %arg10: memref<16x288xf32, #tpu.memory_space<vmem>>) attributes {dimension_semantics = [#tpu.dimension_semantics<parallel>], iteration_bounds = array<i64: 2>, scalar_prefetch = 0 : i64, scratch_operands = 1 : i64, tpu.core_type = #tpu.core_type<tc>, window_params = [{transform_indices = @transform_0, window_bounds = array<i64: 1, 16, 64>}, {transform_indices = @transform_1, window_bounds = array<i64: 1, 16, 32>}, {transform_indices = @transform_2, window_bounds = array<i64: 1, 16, 32>}, {pipeline_mode = #tpu.pipeline_mode<synchronous>, transform_indices = @transform_3, window_bounds = array<i64: 1, 64, 128>}, {pipeline_mode = #tpu.pipeline_mode<synchronous>, transform_indices = @transform_4, window_bounds = array<i64: 1, 32, 128>}, {pipeline_mode = #tpu.pipeline_mode<synchronous>, transform_indices = @transform_5, window_bounds = array<i64: 1, 32, 128>}, {pipeline_mode = #tpu.pipeline_mode<synchronous>, transform_indices = @transform_6, window_bounds = array<i64: 1, 128>}, {pipeline_mode = #tpu.pipeline_mode<synchronous>, transform_indices = @transform_7, window_bounds = array<i64: 1, 128>}, {transform_indices = @transform_8, window_bounds = array<i64: 1, 16, 128>}]} {
    %c0 = arith.constant 0 : index
    %c0_0 = arith.constant 0 : index
    %c0_1 = arith.constant 0 : index
    %0 = vector.load %arg1[%c0, %c0_0, %c0_1] : memref<1x16x64xbf16, #tpu.memory_space<vmem>>, vector<1x16x64xbf16>
    %1 = vector.shape_cast %0 : vector<1x16x64xbf16> to vector<16x64xbf16>
    %2 = arith.extf %1 : vector<16x64xbf16> to vector<16x64xf32>
    %c0_2 = arith.constant 0 : index
    %c0_3 = arith.constant 0 : index
    %3 = vector.load %arg10[%c0_2, %c0_3] : memref<16x288xf32, #tpu.memory_space<vmem>>, vector<16x64xf32>
    tpu.vector_store %arg10[%c0_2, %c0_3], %2 {strides = array<i32>} : memref<16x288xf32, #tpu.memory_space<vmem>>, vector<16x64xf32>,
    %c0_4 = arith.constant 0 : index
    %c0_5 = arith.constant 0 : index
    %c0_6 = arith.constant 0 : index
    %4 = vector.load %arg2[%c0_4, %c0_5, %c0_6] : memref<1x16x32xbf16, #tpu.memory_space<vmem>>, vector<1x16x32xbf16>
    %5 = vector.shape_cast %4 : vector<1x16x32xbf16> to vector<16x32xbf16>
    %6 = arith.extf %5 : vector<16x32xbf16> to vector<16x32xf32>
    %c0_7 = arith.constant 0 : index
    %c128 = arith.constant 128 : index
    %7 = vector.load %arg10[%c0_7, %c128] : memref<16x288xf32, #tpu.memory_space<vmem>>, vector<16x32xf32>
    tpu.vector_store %arg10[%c0_7, %c128], %6 {strides = array<i32>} : memref<16x288xf32, #tpu.memory_space<vmem>>, vector<16x32xf32>,
    %c0_8 = arith.constant 0 : index
    %c0_9 = arith.constant 0 : index
    %c0_10 = arith.constant 0 : index
    %8 = vector.load %arg3[%c0_8, %c0_9, %c0_10] : memref<1x16x32xbf16, #tpu.memory_space<vmem>>, vector<1x16x32xbf16>
    %9 = vector.shape_cast %8 : vector<1x16x32xbf16> to vector<16x32xbf16>
    %10 = arith.extf %9 : vector<16x32xbf16> to vector<16x32xf32>
    %c0_11 = arith.constant 0 : index
    %c256 = arith.constant 256 : index
    %11 = vector.load %arg10[%c0_11, %c256] : memref<16x288xf32, #tpu.memory_space<vmem>>, vector<16x32xf32>
    tpu.vector_store %arg10[%c0_11, %c256], %10 {strides = array<i32>} : memref<16x288xf32, #tpu.memory_space<vmem>>, vector<16x32xf32>,
    %cst = arith.constant 0.000000e+00 : f32
    %12 = vector.broadcast %cst : f32 to vector<16x128xf32>
    %c0_12 = arith.constant 0 : index
    %c0_13 = arith.constant 0 : index
    %13 = vector.load %arg10[%c0_12, %c0_13] : memref<16x288xf32, #tpu.memory_space<vmem>>, vector<16x64xf32>
    %14 = arith.truncf %13 : vector<16x64xf32> to vector<16x64xbf16>
    %c0_14 = arith.constant 0 : index
    %c0_15 = arith.constant 0 : index
    %c0_16 = arith.constant 0 : index
    %15 = vector.load %arg4[%c0_14, %c0_15, %c0_16] : memref<1x64x128xbf16, #tpu.memory_space<vmem>>, vector<1x64x128xbf16>
    %16 = vector.shape_cast %15 : vector<1x64x128xbf16> to vector<64x128xbf16>
    %cst_17 = arith.constant dense<0.000000e+00> : vector<16x128xf32>
    %17 = tpu.matmul %14, %16, %cst_17 {dimension_numbers = #tpu.dot_dimension_numbers<[1], [0], [0], [1], [0, 0, 1, 1], [], []>} : vector<16x64xbf16>, vector<64x128xbf16>, vector<16x128xf32> -> vector<16x128xf32>
    %18 = arith.addf %12, %17 : vector<16x128xf32>
    %c0_18 = arith.constant 0 : index
    %c128_19 = arith.constant 128 : index
    %19 = vector.load %arg10[%c0_18, %c128_19] : memref<16x288xf32, #tpu.memory_space<vmem>>, vector<16x32xf32>
    %20 = arith.truncf %19 : vector<16x32xf32> to vector<16x32xbf16>
    %c0_20 = arith.constant 0 : index
    %c0_21 = arith.constant 0 : index
    %c0_22 = arith.constant 0 : index
    %21 = vector.load %arg5[%c0_20, %c0_21, %c0_22] : memref<1x32x128xbf16, #tpu.memory_space<vmem>>, vector<1x32x128xbf16>
    %22 = vector.shape_cast %21 : vector<1x32x128xbf16> to vector<32x128xbf16>
    %cst_23 = arith.constant dense<0.000000e+00> : vector<16x128xf32>
    %23 = tpu.matmul %20, %22, %cst_23 {dimension_numbers = #tpu.dot_dimension_numbers<[1], [0], [0], [1], [0, 0, 1, 1], [], []>} : vector<16x32xbf16>, vector<32x128xbf16>, vector<16x128xf32> -> vector<16x128xf32>
    %24 = arith.addf %18, %23 : vector<16x128xf32>
    %c0_24 = arith.constant 0 : index
    %c256_25 = arith.constant 256 : index
    %25 = vector.load %arg10[%c0_24, %c256_25] : memref<16x288xf32, #tpu.memory_space<vmem>>, vector<16x32xf32>
    %26 = arith.truncf %25 : vector<16x32xf32> to vector<16x32xbf16>
    %c0_26 = arith.constant 0 : index
    %c0_27 = arith.constant 0 : index
    %c0_28 = arith.constant 0 : index
    %27 = vector.load %arg6[%c0_26, %c0_27, %c0_28] : memref<1x32x128xbf16, #tpu.memory_space<vmem>>, vector<1x32x128xbf16>
    %28 = vector.shape_cast %27 : vector<1x32x128xbf16> to vector<32x128xbf16>
    %cst_29 = arith.constant dense<0.000000e+00> : vector<16x128xf32>
    %29 = tpu.matmul %26, %28, %cst_29 {dimension_numbers = #tpu.dot_dimension_numbers<[1], [0], [0], [1], [0, 0, 1, 1], [], []>} : vector<16x32xbf16>, vector<32x128xbf16>, vector<16x128xf32> -> vector<16x128xf32>
    %30 = arith.addf %24, %29 : vector<16x128xf32>
    %c0_30 = arith.constant 0 : index
    %c0_31 = arith.constant 0 : index
    %31 = vector.load %arg7[%c0_30, %c0_31] : memref<1x128xf32, #tpu.memory_space<vmem>>, vector<1x128xf32>
    %32 = vector.broadcast %31 : vector<1x128xf32> to vector<16x128xf32>
    %33 = arith.mulf %30, %32 : vector<16x128xf32>
    %c0_32 = arith.constant 0 : index
    %c0_33 = arith.constant 0 : index
    %34 = vector.load %arg8[%c0_32, %c0_33] : memref<1x128xf32, #tpu.memory_space<vmem>>, vector<1x128xf32>
    %35 = vector.broadcast %34 : vector<1x128xf32> to vector<16x128xf32>
    %36 = arith.addf %33, %35 : vector<16x128xf32>
    %cst_34 = arith.constant 0.000000e+00 : f32
    %37 = vector.broadcast %cst_34 : f32 to vector<16x128xf32>
    %38 = arith.maximumf %36, %37 : vector<16x128xf32>
    %39 = arith.truncf %38 : vector<16x128xf32> to vector<16x128xbf16>
    %c0_35 = arith.constant 0 : index
    %c0_36 = arith.constant 0 : index
    %c0_37 = arith.constant 0 : index
    %40 = vector.load %arg9[%c0_35, %c0_36, %c0_37] : memref<1x16x128xbf16, #tpu.memory_space<vmem>>, vector<1x16x128xbf16>
    %41 = vector.shape_cast %40 : vector<1x16x128xbf16> to vector<16x128xbf16>
    %42 = vector.shape_cast %39 : vector<16x128xbf16> to vector<1x16x128xbf16>
    tpu.vector_store %arg9[%c0_35, %c0_36, %c0_37], %42 {strides = array<i32>} : memref<1x16x128xbf16, #tpu.memory_space<vmem>>, vector<1x16x128xbf16>,
    return
  }
  func.func @transform_0(%arg0: i32) -> (i32, i32, i32) {
    %c0_i32 = arith.constant 0 : i32
    %c0_i32_0 = arith.constant 0 : i32
    %c0_i32_1 = arith.constant 0 : i32
    return %arg0, %c0_i32, %c0_i32_0 : i32, i32, i32
  }
  func.func @transform_1(%arg0: i32) -> (i32, i32, i32) {
    %c0_i32 = arith.constant 0 : i32
    %c0_i32_0 = arith.constant 0 : i32
    %c0_i32_1 = arith.constant 0 : i32
    return %arg0, %c0_i32, %c0_i32_0 : i32, i32, i32
  }
  func.func @transform_2(%arg0: i32) -> (i32, i32, i32) {
    %c0_i32 = arith.constant 0 : i32
    %c0_i32_0 = arith.constant 0 : i32
    %c0_i32_1 = arith.constant 0 : i32
    return %arg0, %c0_i32, %c0_i32_0 : i32, i32, i32
  }
  func.func @transform_3(%arg0: i32) -> (i32, i32, i32) {
    %c0_i32 = arith.constant 0 : i32
    %c0_i32_0 = arith.constant 0 : i32
    %c0_i32_1 = arith.constant 0 : i32
    %c0_i32_2 = arith.constant 0 : i32
    return %c0_i32, %c0_i32_0, %c0_i32_1 : i32, i32, i32
  }
  func.func @transform_4(%arg0: i32) -> (i32, i32, i32) {
    %c0_i32 = arith.constant 0 : i32
    %c0_i32_0 = arith.constant 0 : i32
    %c0_i32_1 = arith.constant 0 : i32
    %c0_i32_2 = arith.constant 0 : i32
    return %c0_i32, %c0_i32_0, %c0_i32_1 : i32, i32, i32
  }
  func.func @transform_5(%arg0: i32) -> (i32, i32, i32) {
    %c0_i32 = arith.constant 0 : i32
    %c0_i32_0 = arith.constant 0 : i32
    %c0_i32_1 = arith.constant 0 : i32
    %c0_i32_2 = arith.constant 0 : i32
    return %c0_i32, %c0_i32_0, %c0_i32_1 : i32, i32, i32
  }
  func.func @transform_6(%arg0: i32) -> (i32, i32) {
    %c0_i32 = arith.constant 0 : i32
    %c0_i32_0 = arith.constant 0 : i32
    %c0_i32_1 = arith.constant 0 : i32
    return %c0_i32, %c0_i32_0 : i32, i32
  }
  func.func @transform_7(%arg0: i32) -> (i32, i32) {
    %c0_i32 = arith.constant 0 : i32
    %c0_i32_0 = arith.constant 0 : i32
    %c0_i32_1 = arith.constant 0 : i32
    return %c0_i32, %c0_i32_0 : i32, i32
  }
  func.func @transform_8(%arg0: i32) -> (i32, i32, i32) {
    %c0_i32 = arith.constant 0 : i32
    %c0_i32_0 = arith.constant 0 : i32
    %c0_i32_1 = arith.constant 0 : i32
    return %arg0, %c0_i32, %c0_i32_0 : i32, i32, i32
  }
}

module attributes {stable_mosaic.version = 11 : i64} {
  func.func @kernel(%arg0: i32, %arg1: memref<1x16x128xbf16, #tpu.memory_space<vmem>>, %arg2: memref<1x16x128xbf16, #tpu.memory_space<vmem>>, %arg3: memref<3x128x128xbf16, #tpu.memory_space<vmem>>, %arg4: memref<3x128x128xbf16, #tpu.memory_space<vmem>>, %arg5: memref<1x128xf32, #tpu.memory_space<vmem>>, %arg6: memref<1x128xf32, #tpu.memory_space<vmem>>, %arg7: memref<1x16x128xbf16, #tpu.memory_space<vmem>>, %arg8: memref<20x256xf32, #tpu.memory_space<vmem>>) attributes {dimension_semantics = [#tpu.dimension_semantics<parallel>], iteration_bounds = array<i64: 2>, scalar_prefetch = 0 : i64, scratch_operands = 1 : i64, tpu.core_type = #tpu.core_type<tc>, window_params = [{transform_indices = @transform_0, window_bounds = array<i64: 1, 16, 128>}, {transform_indices = @transform_1, window_bounds = array<i64: 1, 16, 128>}, {pipeline_mode = #tpu.pipeline_mode<synchronous>, transform_indices = @transform_2, window_bounds = array<i64: 3, 128, 128>}, {pipeline_mode = #tpu.pipeline_mode<synchronous>, transform_indices = @transform_3, window_bounds = array<i64: 3, 128, 128>}, {pipeline_mode = #tpu.pipeline_mode<synchronous>, transform_indices = @transform_4, window_bounds = array<i64: 1, 128>}, {pipeline_mode = #tpu.pipeline_mode<synchronous>, transform_indices = @transform_5, window_bounds = array<i64: 1, 128>}, {transform_indices = @transform_6, window_bounds = array<i64: 1, 16, 128>}]} {
    %cst = arith.constant 0.000000e+00 : f32
    %0 = vector.broadcast %cst : f32 to vector<20x256xf32>
    %c0 = arith.constant 0 : index
    %c0_0 = arith.constant 0 : index
    %1 = vector.load %arg8[%c0, %c0_0] : memref<20x256xf32, #tpu.memory_space<vmem>>, vector<20x256xf32>
    tpu.vector_store %arg8[%c0, %c0_0], %0 {strides = array<i32>} : memref<20x256xf32, #tpu.memory_space<vmem>>, vector<20x256xf32>,
    %c0_1 = arith.constant 0 : index
    %c0_2 = arith.constant 0 : index
    %c0_3 = arith.constant 0 : index
    %2 = vector.load %arg1[%c0_1, %c0_2, %c0_3] : memref<1x16x128xbf16, #tpu.memory_space<vmem>>, vector<1x16x128xbf16>
    %3 = vector.shape_cast %2 : vector<1x16x128xbf16> to vector<16x128xbf16>
    %4 = arith.extf %3 : vector<16x128xbf16> to vector<16x128xf32>
    %c2 = arith.constant 2 : index
    %c0_4 = arith.constant 0 : index
    %5 = vector.load %arg8[%c2, %c0_4] : memref<20x256xf32, #tpu.memory_space<vmem>>, vector<16x128xf32>
    tpu.vector_store %arg8[%c2, %c0_4], %4 {strides = array<i32>} : memref<20x256xf32, #tpu.memory_space<vmem>>, vector<16x128xf32>,
    %c0_5 = arith.constant 0 : index
    %c0_6 = arith.constant 0 : index
    %c0_7 = arith.constant 0 : index
    %6 = vector.load %arg2[%c0_5, %c0_6, %c0_7] : memref<1x16x128xbf16, #tpu.memory_space<vmem>>, vector<1x16x128xbf16>
    %7 = vector.shape_cast %6 : vector<1x16x128xbf16> to vector<16x128xbf16>
    %8 = arith.extf %7 : vector<16x128xbf16> to vector<16x128xf32>
    %c2_8 = arith.constant 2 : index
    %c128 = arith.constant 128 : index
    %9 = vector.load %arg8[%c2_8, %c128] : memref<20x256xf32, #tpu.memory_space<vmem>>, vector<16x128xf32>
    tpu.vector_store %arg8[%c2_8, %c128], %8 {strides = array<i32>} : memref<20x256xf32, #tpu.memory_space<vmem>>, vector<16x128xf32>,
    %cst_9 = arith.constant 0.000000e+00 : f32
    %10 = vector.broadcast %cst_9 : f32 to vector<16x128xf32>
    %c0_10 = arith.constant 0 : index
    %c0_11 = arith.constant 0 : index
    %11 = vector.load %arg8[%c0_10, %c0_11] : memref<20x256xf32, #tpu.memory_space<vmem>>, vector<16x128xf32>
    %12 = arith.truncf %11 : vector<16x128xf32> to vector<16x128xbf16>
    %c0_12 = arith.constant 0 : index
    %c0_13 = arith.constant 0 : index
    %c0_14 = arith.constant 0 : index
    %13 = vector.load %arg3[%c0_12, %c0_13, %c0_14] : memref<3x128x128xbf16, #tpu.memory_space<vmem>>, vector<1x128x128xbf16>
    %14 = vector.shape_cast %13 : vector<1x128x128xbf16> to vector<128x128xbf16>
    %cst_15 = arith.constant dense<0.000000e+00> : vector<16x128xf32>
    %15 = tpu.matmul %12, %14, %cst_15 {dimension_numbers = #tpu.dot_dimension_numbers<[1], [0], [0], [1], [0, 0, 1, 1], [], []>} : vector<16x128xbf16>, vector<128x128xbf16>, vector<16x128xf32> -> vector<16x128xf32>
    %16 = arith.addf %10, %15 : vector<16x128xf32>
    %c0_16 = arith.constant 0 : index
    %c128_17 = arith.constant 128 : index
    %17 = vector.load %arg8[%c0_16, %c128_17] : memref<20x256xf32, #tpu.memory_space<vmem>>, vector<16x128xf32>
    %18 = arith.truncf %17 : vector<16x128xf32> to vector<16x128xbf16>
    %c0_18 = arith.constant 0 : index
    %c0_19 = arith.constant 0 : index
    %c0_20 = arith.constant 0 : index
    %19 = vector.load %arg4[%c0_18, %c0_19, %c0_20] : memref<3x128x128xbf16, #tpu.memory_space<vmem>>, vector<1x128x128xbf16>
    %20 = vector.shape_cast %19 : vector<1x128x128xbf16> to vector<128x128xbf16>
    %cst_21 = arith.constant dense<0.000000e+00> : vector<16x128xf32>
    %21 = tpu.matmul %18, %20, %cst_21 {dimension_numbers = #tpu.dot_dimension_numbers<[1], [0], [0], [1], [0, 0, 1, 1], [], []>} : vector<16x128xbf16>, vector<128x128xbf16>, vector<16x128xf32> -> vector<16x128xf32>
    %22 = arith.addf %16, %21 : vector<16x128xf32>
    %c2_22 = arith.constant 2 : index
    %c0_23 = arith.constant 0 : index
    %23 = vector.load %arg8[%c2_22, %c0_23] : memref<20x256xf32, #tpu.memory_space<vmem>>, vector<16x128xf32>
    %24 = arith.truncf %23 : vector<16x128xf32> to vector<16x128xbf16>
    %c1 = arith.constant 1 : index
    %c0_24 = arith.constant 0 : index
    %c0_25 = arith.constant 0 : index
    %25 = vector.load %arg3[%c1, %c0_24, %c0_25] : memref<3x128x128xbf16, #tpu.memory_space<vmem>>, vector<1x128x128xbf16>
    %26 = vector.shape_cast %25 : vector<1x128x128xbf16> to vector<128x128xbf16>
    %cst_26 = arith.constant dense<0.000000e+00> : vector<16x128xf32>
    %27 = tpu.matmul %24, %26, %cst_26 {dimension_numbers = #tpu.dot_dimension_numbers<[1], [0], [0], [1], [0, 0, 1, 1], [], []>} : vector<16x128xbf16>, vector<128x128xbf16>, vector<16x128xf32> -> vector<16x128xf32>
    %28 = arith.addf %22, %27 : vector<16x128xf32>
    %c2_27 = arith.constant 2 : index
    %c128_28 = arith.constant 128 : index
    %29 = vector.load %arg8[%c2_27, %c128_28] : memref<20x256xf32, #tpu.memory_space<vmem>>, vector<16x128xf32>
    %30 = arith.truncf %29 : vector<16x128xf32> to vector<16x128xbf16>
    %c1_29 = arith.constant 1 : index
    %c0_30 = arith.constant 0 : index
    %c0_31 = arith.constant 0 : index
    %31 = vector.load %arg4[%c1_29, %c0_30, %c0_31] : memref<3x128x128xbf16, #tpu.memory_space<vmem>>, vector<1x128x128xbf16>
    %32 = vector.shape_cast %31 : vector<1x128x128xbf16> to vector<128x128xbf16>
    %cst_32 = arith.constant dense<0.000000e+00> : vector<16x128xf32>
    %33 = tpu.matmul %30, %32, %cst_32 {dimension_numbers = #tpu.dot_dimension_numbers<[1], [0], [0], [1], [0, 0, 1, 1], [], []>} : vector<16x128xbf16>, vector<128x128xbf16>, vector<16x128xf32> -> vector<16x128xf32>
    %34 = arith.addf %28, %33 : vector<16x128xf32>
    %c4 = arith.constant 4 : index
    %c0_33 = arith.constant 0 : index
    %35 = vector.load %arg8[%c4, %c0_33] : memref<20x256xf32, #tpu.memory_space<vmem>>, vector<16x128xf32>
    %36 = arith.truncf %35 : vector<16x128xf32> to vector<16x128xbf16>
    %c2_34 = arith.constant 2 : index
    %c0_35 = arith.constant 0 : index
    %c0_36 = arith.constant 0 : index
    %37 = vector.load %arg3[%c2_34, %c0_35, %c0_36] : memref<3x128x128xbf16, #tpu.memory_space<vmem>>, vector<1x128x128xbf16>
    %38 = vector.shape_cast %37 : vector<1x128x128xbf16> to vector<128x128xbf16>
    %cst_37 = arith.constant dense<0.000000e+00> : vector<16x128xf32>
    %39 = tpu.matmul %36, %38, %cst_37 {dimension_numbers = #tpu.dot_dimension_numbers<[1], [0], [0], [1], [0, 0, 1, 1], [], []>} : vector<16x128xbf16>, vector<128x128xbf16>, vector<16x128xf32> -> vector<16x128xf32>
    %40 = arith.addf %34, %39 : vector<16x128xf32>
    %c4_38 = arith.constant 4 : index
    %c128_39 = arith.constant 128 : index
    %41 = vector.load %arg8[%c4_38, %c128_39] : memref<20x256xf32, #tpu.memory_space<vmem>>, vector<16x128xf32>
    %42 = arith.truncf %41 : vector<16x128xf32> to vector<16x128xbf16>
    %c2_40 = arith.constant 2 : index
    %c0_41 = arith.constant 0 : index
    %c0_42 = arith.constant 0 : index
    %43 = vector.load %arg4[%c2_40, %c0_41, %c0_42] : memref<3x128x128xbf16, #tpu.memory_space<vmem>>, vector<1x128x128xbf16>
    %44 = vector.shape_cast %43 : vector<1x128x128xbf16> to vector<128x128xbf16>
    %cst_43 = arith.constant dense<0.000000e+00> : vector<16x128xf32>
    %45 = tpu.matmul %42, %44, %cst_43 {dimension_numbers = #tpu.dot_dimension_numbers<[1], [0], [0], [1], [0, 0, 1, 1], [], []>} : vector<16x128xbf16>, vector<128x128xbf16>, vector<16x128xf32> -> vector<16x128xf32>
    %46 = arith.addf %40, %45 : vector<16x128xf32>
    %c0_44 = arith.constant 0 : index
    %c0_45 = arith.constant 0 : index
    %47 = vector.load %arg5[%c0_44, %c0_45] : memref<1x128xf32, #tpu.memory_space<vmem>>, vector<1x128xf32>
    %48 = vector.broadcast %47 : vector<1x128xf32> to vector<16x128xf32>
    %49 = arith.mulf %46, %48 : vector<16x128xf32>
    %c0_46 = arith.constant 0 : index
    %c0_47 = arith.constant 0 : index
    %50 = vector.load %arg6[%c0_46, %c0_47] : memref<1x128xf32, #tpu.memory_space<vmem>>, vector<1x128xf32>
    %51 = vector.broadcast %50 : vector<1x128xf32> to vector<16x128xf32>
    %52 = arith.addf %49, %51 : vector<16x128xf32>
    %cst_48 = arith.constant 0.000000e+00 : f32
    %53 = vector.broadcast %cst_48 : f32 to vector<16x128xf32>
    %54 = arith.maximumf %52, %53 : vector<16x128xf32>
    %55 = arith.truncf %54 : vector<16x128xf32> to vector<16x128xbf16>
    %c0_49 = arith.constant 0 : index
    %c0_50 = arith.constant 0 : index
    %c0_51 = arith.constant 0 : index
    %56 = vector.load %arg7[%c0_49, %c0_50, %c0_51] : memref<1x16x128xbf16, #tpu.memory_space<vmem>>, vector<1x16x128xbf16>
    %57 = vector.shape_cast %56 : vector<1x16x128xbf16> to vector<16x128xbf16>
    %58 = vector.shape_cast %55 : vector<16x128xbf16> to vector<1x16x128xbf16>
    tpu.vector_store %arg7[%c0_49, %c0_50, %c0_51], %58 {strides = array<i32>} : memref<1x16x128xbf16, #tpu.memory_space<vmem>>, vector<1x16x128xbf16>,
    return
  }
  func.func @transform_0(%arg0: i32) -> (i32, i32, i32) {
    %c0_i32 = arith.constant 0 : i32
    %c0_i32_0 = arith.constant 0 : i32
    %c0_i32_1 = arith.constant 0 : i32
    return %arg0, %c0_i32, %c0_i32_0 : i32, i32, i32
  }
  func.func @transform_1(%arg0: i32) -> (i32, i32, i32) {
    %c0_i32 = arith.constant 0 : i32
    %c0_i32_0 = arith.constant 0 : i32
    %c0_i32_1 = arith.constant 0 : i32
    return %arg0, %c0_i32, %c0_i32_0 : i32, i32, i32
  }
  func.func @transform_2(%arg0: i32) -> (i32, i32, i32) {
    %c0_i32 = arith.constant 0 : i32
    %c0_i32_0 = arith.constant 0 : i32
    %c0_i32_1 = arith.constant 0 : i32
    %c0_i32_2 = arith.constant 0 : i32
    return %c0_i32, %c0_i32_0, %c0_i32_1 : i32, i32, i32
  }
  func.func @transform_3(%arg0: i32) -> (i32, i32, i32) {
    %c0_i32 = arith.constant 0 : i32
    %c0_i32_0 = arith.constant 0 : i32
    %c0_i32_1 = arith.constant 0 : i32
    %c0_i32_2 = arith.constant 0 : i32
    return %c0_i32, %c0_i32_0, %c0_i32_1 : i32, i32, i32
  }
  func.func @transform_4(%arg0: i32) -> (i32, i32) {
    %c0_i32 = arith.constant 0 : i32
    %c0_i32_0 = arith.constant 0 : i32
    %c0_i32_1 = arith.constant 0 : i32
    return %c0_i32, %c0_i32_0 : i32, i32
  }
  func.func @transform_5(%arg0: i32) -> (i32, i32) {
    %c0_i32 = arith.constant 0 : i32
    %c0_i32_0 = arith.constant 0 : i32
    %c0_i32_1 = arith.constant 0 : i32
    return %c0_i32, %c0_i32_0 : i32, i32
  }
  func.func @transform_6(%arg0: i32) -> (i32, i32, i32) {
    %c0_i32 = arith.constant 0 : i32
    %c0_i32_0 = arith.constant 0 : i32
    %c0_i32_1 = arith.constant 0 : i32
    return %arg0, %c0_i32, %c0_i32_0 : i32, i32, i32
  }
}

module attributes {stable_mosaic.version = 11 : i64} {
  func.func @kernel(%arg0: i32, %arg1: memref<1x16x128xbf16, #tpu.memory_space<vmem>>, %arg2: memref<1x16x128xbf16, #tpu.memory_space<vmem>>, %arg3: memref<3x128x128xbf16, #tpu.memory_space<vmem>>, %arg4: memref<3x128x128xbf16, #tpu.memory_space<vmem>>, %arg5: memref<1x128xf32, #tpu.memory_space<vmem>>, %arg6: memref<1x128xf32, #tpu.memory_space<vmem>>, %arg7: memref<1x16x128xbf16, #tpu.memory_space<vmem>>, %arg8: memref<18x256xf32, #tpu.memory_space<vmem>>) attributes {dimension_semantics = [#tpu.dimension_semantics<parallel>], iteration_bounds = array<i64: 2>, scalar_prefetch = 0 : i64, scratch_operands = 1 : i64, tpu.core_type = #tpu.core_type<tc>, window_params = [{transform_indices = @transform_0, window_bounds = array<i64: 1, 16, 128>}, {transform_indices = @transform_1, window_bounds = array<i64: 1, 16, 128>}, {pipeline_mode = #tpu.pipeline_mode<synchronous>, transform_indices = @transform_2, window_bounds = array<i64: 3, 128, 128>}, {pipeline_mode = #tpu.pipeline_mode<synchronous>, transform_indices = @transform_3, window_bounds = array<i64: 3, 128, 128>}, {pipeline_mode = #tpu.pipeline_mode<synchronous>, transform_indices = @transform_4, window_bounds = array<i64: 1, 128>}, {pipeline_mode = #tpu.pipeline_mode<synchronous>, transform_indices = @transform_5, window_bounds = array<i64: 1, 128>}, {transform_indices = @transform_6, window_bounds = array<i64: 1, 16, 128>}]} {
    %cst = arith.constant 0.000000e+00 : f32
    %0 = vector.broadcast %cst : f32 to vector<18x256xf32>
    %c0 = arith.constant 0 : index
    %c0_0 = arith.constant 0 : index
    %1 = vector.load %arg8[%c0, %c0_0] : memref<18x256xf32, #tpu.memory_space<vmem>>, vector<18x256xf32>
    tpu.vector_store %arg8[%c0, %c0_0], %0 {strides = array<i32>} : memref<18x256xf32, #tpu.memory_space<vmem>>, vector<18x256xf32>,
    %c0_1 = arith.constant 0 : index
    %c0_2 = arith.constant 0 : index
    %c0_3 = arith.constant 0 : index
    %2 = vector.load %arg1[%c0_1, %c0_2, %c0_3] : memref<1x16x128xbf16, #tpu.memory_space<vmem>>, vector<1x16x128xbf16>
    %3 = vector.shape_cast %2 : vector<1x16x128xbf16> to vector<16x128xbf16>
    %4 = arith.extf %3 : vector<16x128xbf16> to vector<16x128xf32>
    %c1 = arith.constant 1 : index
    %c0_4 = arith.constant 0 : index
    %5 = vector.load %arg8[%c1, %c0_4] : memref<18x256xf32, #tpu.memory_space<vmem>>, vector<16x128xf32>
    tpu.vector_store %arg8[%c1, %c0_4], %4 {strides = array<i32>} : memref<18x256xf32, #tpu.memory_space<vmem>>, vector<16x128xf32>,
    %c0_5 = arith.constant 0 : index
    %c0_6 = arith.constant 0 : index
    %c0_7 = arith.constant 0 : index
    %6 = vector.load %arg2[%c0_5, %c0_6, %c0_7] : memref<1x16x128xbf16, #tpu.memory_space<vmem>>, vector<1x16x128xbf16>
    %7 = vector.shape_cast %6 : vector<1x16x128xbf16> to vector<16x128xbf16>
    %8 = arith.extf %7 : vector<16x128xbf16> to vector<16x128xf32>
    %c1_8 = arith.constant 1 : index
    %c128 = arith.constant 128 : index
    %9 = vector.load %arg8[%c1_8, %c128] : memref<18x256xf32, #tpu.memory_space<vmem>>, vector<16x128xf32>
    tpu.vector_store %arg8[%c1_8, %c128], %8 {strides = array<i32>} : memref<18x256xf32, #tpu.memory_space<vmem>>, vector<16x128xf32>,
    %cst_9 = arith.constant 0.000000e+00 : f32
    %10 = vector.broadcast %cst_9 : f32 to vector<16x128xf32>
    %c0_10 = arith.constant 0 : index
    %c0_11 = arith.constant 0 : index
    %11 = vector.load %arg8[%c0_10, %c0_11] : memref<18x256xf32, #tpu.memory_space<vmem>>, vector<16x128xf32>
    %12 = arith.truncf %11 : vector<16x128xf32> to vector<16x128xbf16>
    %c0_12 = arith.constant 0 : index
    %c0_13 = arith.constant 0 : index
    %c0_14 = arith.constant 0 : index
    %13 = vector.load %arg3[%c0_12, %c0_13, %c0_14] : memref<3x128x128xbf16, #tpu.memory_space<vmem>>, vector<1x128x128xbf16>
    %14 = vector.shape_cast %13 : vector<1x128x128xbf16> to vector<128x128xbf16>
    %cst_15 = arith.constant dense<0.000000e+00> : vector<16x128xf32>
    %15 = tpu.matmul %12, %14, %cst_15 {dimension_numbers = #tpu.dot_dimension_numbers<[1], [0], [0], [1], [0, 0, 1, 1], [], []>} : vector<16x128xbf16>, vector<128x128xbf16>, vector<16x128xf32> -> vector<16x128xf32>
    %16 = arith.addf %10, %15 : vector<16x128xf32>
    %c0_16 = arith.constant 0 : index
    %c128_17 = arith.constant 128 : index
    %17 = vector.load %arg8[%c0_16, %c128_17] : memref<18x256xf32, #tpu.memory_space<vmem>>, vector<16x128xf32>
    %18 = arith.truncf %17 : vector<16x128xf32> to vector<16x128xbf16>
    %c0_18 = arith.constant 0 : index
    %c0_19 = arith.constant 0 : index
    %c0_20 = arith.constant 0 : index
    %19 = vector.load %arg4[%c0_18, %c0_19, %c0_20] : memref<3x128x128xbf16, #tpu.memory_space<vmem>>, vector<1x128x128xbf16>
    %20 = vector.shape_cast %19 : vector<1x128x128xbf16> to vector<128x128xbf16>
    %cst_21 = arith.constant dense<0.000000e+00> : vector<16x128xf32>
    %21 = tpu.matmul %18, %20, %cst_21 {dimension_numbers = #tpu.dot_dimension_numbers<[1], [0], [0], [1], [0, 0, 1, 1], [], []>} : vector<16x128xbf16>, vector<128x128xbf16>, vector<16x128xf32> -> vector<16x128xf32>
    %22 = arith.addf %16, %21 : vector<16x128xf32>
    %c1_22 = arith.constant 1 : index
    %c0_23 = arith.constant 0 : index
    %23 = vector.load %arg8[%c1_22, %c0_23] : memref<18x256xf32, #tpu.memory_space<vmem>>, vector<16x128xf32>
    %24 = arith.truncf %23 : vector<16x128xf32> to vector<16x128xbf16>
    %c1_24 = arith.constant 1 : index
    %c0_25 = arith.constant 0 : index
    %c0_26 = arith.constant 0 : index
    %25 = vector.load %arg3[%c1_24, %c0_25, %c0_26] : memref<3x128x128xbf16, #tpu.memory_space<vmem>>, vector<1x128x128xbf16>
    %26 = vector.shape_cast %25 : vector<1x128x128xbf16> to vector<128x128xbf16>
    %cst_27 = arith.constant dense<0.000000e+00> : vector<16x128xf32>
    %27 = tpu.matmul %24, %26, %cst_27 {dimension_numbers = #tpu.dot_dimension_numbers<[1], [0], [0], [1], [0, 0, 1, 1], [], []>} : vector<16x128xbf16>, vector<128x128xbf16>, vector<16x128xf32> -> vector<16x128xf32>
    %28 = arith.addf %22, %27 : vector<16x128xf32>
    %c1_28 = arith.constant 1 : index
    %c128_29 = arith.constant 128 : index
    %29 = vector.load %arg8[%c1_28, %c128_29] : memref<18x256xf32, #tpu.memory_space<vmem>>, vector<16x128xf32>
    %30 = arith.truncf %29 : vector<16x128xf32> to vector<16x128xbf16>
    %c1_30 = arith.constant 1 : index
    %c0_31 = arith.constant 0 : index
    %c0_32 = arith.constant 0 : index
    %31 = vector.load %arg4[%c1_30, %c0_31, %c0_32] : memref<3x128x128xbf16, #tpu.memory_space<vmem>>, vector<1x128x128xbf16>
    %32 = vector.shape_cast %31 : vector<1x128x128xbf16> to vector<128x128xbf16>
    %cst_33 = arith.constant dense<0.000000e+00> : vector<16x128xf32>
    %33 = tpu.matmul %30, %32, %cst_33 {dimension_numbers = #tpu.dot_dimension_numbers<[1], [0], [0], [1], [0, 0, 1, 1], [], []>} : vector<16x128xbf16>, vector<128x128xbf16>, vector<16x128xf32> -> vector<16x128xf32>
    %34 = arith.addf %28, %33 : vector<16x128xf32>
    %c2 = arith.constant 2 : index
    %c0_34 = arith.constant 0 : index
    %35 = vector.load %arg8[%c2, %c0_34] : memref<18x256xf32, #tpu.memory_space<vmem>>, vector<16x128xf32>
    %36 = arith.truncf %35 : vector<16x128xf32> to vector<16x128xbf16>
    %c2_35 = arith.constant 2 : index
    %c0_36 = arith.constant 0 : index
    %c0_37 = arith.constant 0 : index
    %37 = vector.load %arg3[%c2_35, %c0_36, %c0_37] : memref<3x128x128xbf16, #tpu.memory_space<vmem>>, vector<1x128x128xbf16>
    %38 = vector.shape_cast %37 : vector<1x128x128xbf16> to vector<128x128xbf16>
    %cst_38 = arith.constant dense<0.000000e+00> : vector<16x128xf32>
    %39 = tpu.matmul %36, %38, %cst_38 {dimension_numbers = #tpu.dot_dimension_numbers<[1], [0], [0], [1], [0, 0, 1, 1], [], []>} : vector<16x128xbf16>, vector<128x128xbf16>, vector<16x128xf32> -> vector<16x128xf32>
    %40 = arith.addf %34, %39 : vector<16x128xf32>
    %c2_39 = arith.constant 2 : index
    %c128_40 = arith.constant 128 : index
    %41 = vector.load %arg8[%c2_39, %c128_40] : memref<18x256xf32, #tpu.memory_space<vmem>>, vector<16x128xf32>
    %42 = arith.truncf %41 : vector<16x128xf32> to vector<16x128xbf16>
    %c2_41 = arith.constant 2 : index
    %c0_42 = arith.constant 0 : index
    %c0_43 = arith.constant 0 : index
    %43 = vector.load %arg4[%c2_41, %c0_42, %c0_43] : memref<3x128x128xbf16, #tpu.memory_space<vmem>>, vector<1x128x128xbf16>
    %44 = vector.shape_cast %43 : vector<1x128x128xbf16> to vector<128x128xbf16>
    %cst_44 = arith.constant dense<0.000000e+00> : vector<16x128xf32>
    %45 = tpu.matmul %42, %44, %cst_44 {dimension_numbers = #tpu.dot_dimension_numbers<[1], [0], [0], [1], [0, 0, 1, 1], [], []>} : vector<16x128xbf16>, vector<128x128xbf16>, vector<16x128xf32> -> vector<16x128xf32>
    %46 = arith.addf %40, %45 : vector<16x128xf32>
    %c0_45 = arith.constant 0 : index
    %c0_46 = arith.constant 0 : index
    %47 = vector.load %arg5[%c0_45, %c0_46] : memref<1x128xf32, #tpu.memory_space<vmem>>, vector<1x128xf32>
    %48 = vector.broadcast %47 : vector<1x128xf32> to vector<16x128xf32>
    %49 = arith.mulf %46, %48 : vector<16x128xf32>
    %c0_47 = arith.constant 0 : index
    %c0_48 = arith.constant 0 : index
    %50 = vector.load %arg6[%c0_47, %c0_48] : memref<1x128xf32, #tpu.memory_space<vmem>>, vector<1x128xf32>
    %51 = vector.broadcast %50 : vector<1x128xf32> to vector<16x128xf32>
    %52 = arith.addf %49, %51 : vector<16x128xf32>
    %cst_49 = arith.constant 0.000000e+00 : f32
    %53 = vector.broadcast %cst_49 : f32 to vector<16x128xf32>
    %54 = arith.maximumf %52, %53 : vector<16x128xf32>
    %55 = arith.truncf %54 : vector<16x128xf32> to vector<16x128xbf16>
    %c0_50 = arith.constant 0 : index
    %c0_51 = arith.constant 0 : index
    %c0_52 = arith.constant 0 : index
    %56 = vector.load %arg7[%c0_50, %c0_51, %c0_52] : memref<1x16x128xbf16, #tpu.memory_space<vmem>>, vector<1x16x128xbf16>
    %57 = vector.shape_cast %56 : vector<1x16x128xbf16> to vector<16x128xbf16>
    %58 = vector.shape_cast %55 : vector<16x128xbf16> to vector<1x16x128xbf16>
    tpu.vector_store %arg7[%c0_50, %c0_51, %c0_52], %58 {strides = array<i32>} : memref<1x16x128xbf16, #tpu.memory_space<vmem>>, vector<1x16x128xbf16>,
    return
  }
  func.func @transform_0(%arg0: i32) -> (i32, i32, i32) {
    %c0_i32 = arith.constant 0 : i32
    %c0_i32_0 = arith.constant 0 : i32
    %c0_i32_1 = arith.constant 0 : i32
    return %arg0, %c0_i32, %c0_i32_0 : i32, i32, i32
  }
  func.func @transform_1(%arg0: i32) -> (i32, i32, i32) {
    %c0_i32 = arith.constant 0 : i32
    %c0_i32_0 = arith.constant 0 : i32
    %c0_i32_1 = arith.constant 0 : i32
    return %arg0, %c0_i32, %c0_i32_0 : i32, i32, i32
  }
  func.func @transform_2(%arg0: i32) -> (i32, i32, i32) {
    %c0_i32 = arith.constant 0 : i32
    %c0_i32_0 = arith.constant 0 : i32
    %c0_i32_1 = arith.constant 0 : i32
    %c0_i32_2 = arith.constant 0 : i32
    return %c0_i32, %c0_i32_0, %c0_i32_1 : i32, i32, i32
  }
  func.func @transform_3(%arg0: i32) -> (i32, i32, i32) {
    %c0_i32 = arith.constant 0 : i32
    %c0_i32_0 = arith.constant 0 : i32
    %c0_i32_1 = arith.constant 0 : i32
    %c0_i32_2 = arith.constant 0 : i32
    return %c0_i32, %c0_i32_0, %c0_i32_1 : i32, i32, i32
  }
  func.func @transform_4(%arg0: i32) -> (i32, i32) {
    %c0_i32 = arith.constant 0 : i32
    %c0_i32_0 = arith.constant 0 : i32
    %c0_i32_1 = arith.constant 0 : i32
    return %c0_i32, %c0_i32_0 : i32, i32
  }
  func.func @transform_5(%arg0: i32) -> (i32, i32) {
    %c0_i32 = arith.constant 0 : i32
    %c0_i32_0 = arith.constant 0 : i32
    %c0_i32_1 = arith.constant 0 : i32
    return %c0_i32, %c0_i32_0 : i32, i32
  }
  func.func @transform_6(%arg0: i32) -> (i32, i32, i32) {
    %c0_i32 = arith.constant 0 : i32
    %c0_i32_0 = arith.constant 0 : i32
    %c0_i32_1 = arith.constant 0 : i32
    return %arg0, %c0_i32, %c0_i32_0 : i32, i32, i32
  }
}

module attributes {stable_mosaic.version = 11 : i64} {
  func.func @kernel(%arg0: i32, %arg1: memref<1x16x128xbf16, #tpu.memory_space<vmem>>, %arg2: memref<3x128x128xbf16, #tpu.memory_space<vmem>>, %arg3: memref<1x128xf32, #tpu.memory_space<vmem>>, %arg4: memref<1x128xf32, #tpu.memory_space<vmem>>, %arg5: memref<1x16x128xf32, #tpu.memory_space<vmem>>, %arg6: memref<18x128xf32, #tpu.memory_space<vmem>>) attributes {dimension_semantics = [#tpu.dimension_semantics<parallel>], iteration_bounds = array<i64: 2>, scalar_prefetch = 0 : i64, scratch_operands = 1 : i64, tpu.core_type = #tpu.core_type<tc>, window_params = [{transform_indices = @transform_0, window_bounds = array<i64: 1, 16, 128>}, {pipeline_mode = #tpu.pipeline_mode<synchronous>, transform_indices = @transform_1, window_bounds = array<i64: 3, 128, 128>}, {pipeline_mode = #tpu.pipeline_mode<synchronous>, transform_indices = @transform_2, window_bounds = array<i64: 1, 128>}, {pipeline_mode = #tpu.pipeline_mode<synchronous>, transform_indices = @transform_3, window_bounds = array<i64: 1, 128>}, {transform_indices = @transform_4, window_bounds = array<i64: 1, 16, 128>}]} {
    %cst = arith.constant 0.000000e+00 : f32
    %0 = vector.broadcast %cst : f32 to vector<18x128xf32>
    %c0 = arith.constant 0 : index
    %c0_0 = arith.constant 0 : index
    %1 = vector.load %arg6[%c0, %c0_0] : memref<18x128xf32, #tpu.memory_space<vmem>>, vector<18x128xf32>
    tpu.vector_store %arg6[%c0, %c0_0], %0 {strides = array<i32>} : memref<18x128xf32, #tpu.memory_space<vmem>>, vector<18x128xf32>,
    %c0_1 = arith.constant 0 : index
    %c0_2 = arith.constant 0 : index
    %c0_3 = arith.constant 0 : index
    %2 = vector.load %arg1[%c0_1, %c0_2, %c0_3] : memref<1x16x128xbf16, #tpu.memory_space<vmem>>, vector<1x16x128xbf16>
    %3 = vector.shape_cast %2 : vector<1x16x128xbf16> to vector<16x128xbf16>
    %4 = arith.extf %3 : vector<16x128xbf16> to vector<16x128xf32>
    %c1 = arith.constant 1 : index
    %c0_4 = arith.constant 0 : index
    %5 = vector.load %arg6[%c1, %c0_4] : memref<18x128xf32, #tpu.memory_space<vmem>>, vector<16x128xf32>
    tpu.vector_store %arg6[%c1, %c0_4], %4 {strides = array<i32>} : memref<18x128xf32, #tpu.memory_space<vmem>>, vector<16x128xf32>,
    %cst_5 = arith.constant 0.000000e+00 : f32
    %6 = vector.broadcast %cst_5 : f32 to vector<16x128xf32>
    %c0_6 = arith.constant 0 : index
    %c0_7 = arith.constant 0 : index
    %7 = vector.load %arg6[%c0_6, %c0_7] : memref<18x128xf32, #tpu.memory_space<vmem>>, vector<16x128xf32>
    %8 = arith.truncf %7 : vector<16x128xf32> to vector<16x128xbf16>
    %c0_8 = arith.constant 0 : index
    %c0_9 = arith.constant 0 : index
    %c0_10 = arith.constant 0 : index
    %9 = vector.load %arg2[%c0_8, %c0_9, %c0_10] : memref<3x128x128xbf16, #tpu.memory_space<vmem>>, vector<1x128x128xbf16>
    %10 = vector.shape_cast %9 : vector<1x128x128xbf16> to vector<128x128xbf16>
    %cst_11 = arith.constant dense<0.000000e+00> : vector<16x128xf32>
    %11 = tpu.matmul %8, %10, %cst_11 {dimension_numbers = #tpu.dot_dimension_numbers<[1], [0], [0], [1], [0, 0, 1, 1], [], []>} : vector<16x128xbf16>, vector<128x128xbf16>, vector<16x128xf32> -> vector<16x128xf32>
    %12 = arith.addf %6, %11 : vector<16x128xf32>
    %c1_12 = arith.constant 1 : index
    %c0_13 = arith.constant 0 : index
    %13 = vector.load %arg6[%c1_12, %c0_13] : memref<18x128xf32, #tpu.memory_space<vmem>>, vector<16x128xf32>
    %14 = arith.truncf %13 : vector<16x128xf32> to vector<16x128xbf16>
    %c1_14 = arith.constant 1 : index
    %c0_15 = arith.constant 0 : index
    %c0_16 = arith.constant 0 : index
    %15 = vector.load %arg2[%c1_14, %c0_15, %c0_16] : memref<3x128x128xbf16, #tpu.memory_space<vmem>>, vector<1x128x128xbf16>
    %16 = vector.shape_cast %15 : vector<1x128x128xbf16> to vector<128x128xbf16>
    %cst_17 = arith.constant dense<0.000000e+00> : vector<16x128xf32>
    %17 = tpu.matmul %14, %16, %cst_17 {dimension_numbers = #tpu.dot_dimension_numbers<[1], [0], [0], [1], [0, 0, 1, 1], [], []>} : vector<16x128xbf16>, vector<128x128xbf16>, vector<16x128xf32> -> vector<16x128xf32>
    %18 = arith.addf %12, %17 : vector<16x128xf32>
    %c2 = arith.constant 2 : index
    %c0_18 = arith.constant 0 : index
    %19 = vector.load %arg6[%c2, %c0_18] : memref<18x128xf32, #tpu.memory_space<vmem>>, vector<16x128xf32>
    %20 = arith.truncf %19 : vector<16x128xf32> to vector<16x128xbf16>
    %c2_19 = arith.constant 2 : index
    %c0_20 = arith.constant 0 : index
    %c0_21 = arith.constant 0 : index
    %21 = vector.load %arg2[%c2_19, %c0_20, %c0_21] : memref<3x128x128xbf16, #tpu.memory_space<vmem>>, vector<1x128x128xbf16>
    %22 = vector.shape_cast %21 : vector<1x128x128xbf16> to vector<128x128xbf16>
    %cst_22 = arith.constant dense<0.000000e+00> : vector<16x128xf32>
    %23 = tpu.matmul %20, %22, %cst_22 {dimension_numbers = #tpu.dot_dimension_numbers<[1], [0], [0], [1], [0, 0, 1, 1], [], []>} : vector<16x128xbf16>, vector<128x128xbf16>, vector<16x128xf32> -> vector<16x128xf32>
    %24 = arith.addf %18, %23 : vector<16x128xf32>
    %c0_23 = arith.constant 0 : index
    %c0_24 = arith.constant 0 : index
    %25 = vector.load %arg3[%c0_23, %c0_24] : memref<1x128xf32, #tpu.memory_space<vmem>>, vector<1x128xf32>
    %26 = vector.broadcast %25 : vector<1x128xf32> to vector<16x128xf32>
    %27 = arith.mulf %24, %26 : vector<16x128xf32>
    %c0_25 = arith.constant 0 : index
    %c0_26 = arith.constant 0 : index
    %28 = vector.load %arg4[%c0_25, %c0_26] : memref<1x128xf32, #tpu.memory_space<vmem>>, vector<1x128xf32>
    %29 = vector.broadcast %28 : vector<1x128xf32> to vector<16x128xf32>
    %30 = arith.addf %27, %29 : vector<16x128xf32>
    %cst_27 = arith.constant 0.000000e+00 : f32
    %31 = vector.broadcast %cst_27 : f32 to vector<16x128xf32>
    %32 = arith.maximumf %30, %31 : vector<16x128xf32>
    %c0_28 = arith.constant 0 : index
    %c0_29 = arith.constant 0 : index
    %c0_30 = arith.constant 0 : index
    %33 = vector.load %arg5[%c0_28, %c0_29, %c0_30] : memref<1x16x128xf32, #tpu.memory_space<vmem>>, vector<1x16x128xf32>
    %34 = vector.shape_cast %33 : vector<1x16x128xf32> to vector<16x128xf32>
    %35 = vector.shape_cast %32 : vector<16x128xf32> to vector<1x16x128xf32>
    tpu.vector_store %arg5[%c0_28, %c0_29, %c0_30], %35 {strides = array<i32>} : memref<1x16x128xf32, #tpu.memory_space<vmem>>, vector<1x16x128xf32>,
    return
  }
  func.func @transform_0(%arg0: i32) -> (i32, i32, i32) {
    %c0_i32 = arith.constant 0 : i32
    %c0_i32_0 = arith.constant 0 : i32
    %c0_i32_1 = arith.constant 0 : i32
    return %arg0, %c0_i32, %c0_i32_0 : i32, i32, i32
  }
  func.func @transform_1(%arg0: i32) -> (i32, i32, i32) {
    %c0_i32 = arith.constant 0 : i32
    %c0_i32_0 = arith.constant 0 : i32
    %c0_i32_1 = arith.constant 0 : i32
    %c0_i32_2 = arith.constant 0 : i32
    return %c0_i32, %c0_i32_0, %c0_i32_1 : i32, i32, i32
  }
  func.func @transform_2(%arg0: i32) -> (i32, i32) {
    %c0_i32 = arith.constant 0 : i32
    %c0_i32_0 = arith.constant 0 : i32
    %c0_i32_1 = arith.constant 0 : i32
    return %c0_i32, %c0_i32_0 : i32, i32
  }
  func.func @transform_3(%arg0: i32) -> (i32, i32) {
    %c0_i32 = arith.constant 0 : i32
    %c0_i32_0 = arith.constant 0 : i32
    %c0_i32_1 = arith.constant 0 : i32
    return %c0_i32, %c0_i32_0 : i32, i32
  }
  func.func @transform_4(%arg0: i32) -> (i32, i32, i32) {
    %c0_i32 = arith.constant 0 : i32
    %c0_i32_0 = arith.constant 0 : i32
    %c0_i32_1 = arith.constant 0 : i32
    return %arg0, %c0_i32, %c0_i32_0 : i32, i32, i32
  }
}

</mosaic_0001>

<llo_original>
// kernel: _lambda_.10
$region0: #{_lambda_.10}
  #allocation0 [shape = 'u32[]', space=smem, size = 0x4, offset = 0x4, fixed_abs, tag = 'smem constant byte address 0x4 - core index']
  #allocation1 [shape = 'u32[144,128]{1,0:T(1,128)}', space=vmem, size = 0x12000, scoped, tag = 'internal scratch']
  #allocation2 [shape = 'f32[18,128]{1,0:T(8,128)}', space=vmem, size = 0x3000, scoped, tag = 'scratch operand']
  %s0 = inlined_call_operand.vmem [shape: bf16[2,16,128], index: 0, kind: input, shape index: {}]
  %s1 = inlined_call_operand.vmem [shape: bf16[3,128,64], index: 1, kind: input, shape index: {}]
  %s2 = inlined_call_operand.vmem [shape: f32[1,64], index: 2, kind: input, shape index: {}]
  %s3 = inlined_call_operand.vmem [shape: f32[1,64], index: 3, kind: input, shape index: {}]
  %s4 = inlined_call_operand.vmem [shape: bf16[2,16,64], index: 4, kind: output, shape index: {}]
  %s5 = sld [smem:[#allocation0]]
  $region49: #{_lambda_.10} parent=0
    _
  %s7 = ssub.s32 1, %s5
  %s8 = scalar_select 0, %s7, %s5
  loop: start=0, step=1, limit=4
  $region2: #{_lambda_.10} parent=0 // loop_pre_header
    _
  $region3: #{_lambda_.10} parent=0 // loop_header
    %s10 = sphi 0, %s14
    %p11 = scmp.ge.s32.totalorder %s10, 4
    %s20 = sphi 0, %s22
    %s23 = sphi 0, %s20
    %s24 = sphi 0, %s23
    %s40 = sphi 0, %s24
    %s44 = sphi 0, %s44
    %s46 = sphi 0, %s44
    %s47 = sphi 0, %s46
    %s61 = sphi 0, %s47
    %s65 = sphi 0, %s65
    %s67 = sphi 0, %s65
    %s68 = sphi 0, %s67
    %s82 = sphi 0, %s68
    %s86 = sphi 0, %s86
    %s88 = sphi 0, %s86
    %s89 = sphi 0, %s88
    %s103 = sphi 0, %s89
    %s109 = sphi 0, %s111
    %s112 = sphi 0, %s109
    %s113 = sphi 0, %s112
    %s129 = sphi 0, %s113
  $region4: #{_lambda_.10} parent=0 // loop_header_branch
    %13 = sbr.rel (%p11) target = $region8
  $region5: #{_lambda_.10} parent=0 // loop_body
    %s15 = ssub.s32 %s10, 1
    %s16 = ssub.s32 %s10, 2
    %s17 = sadd.s32 %s10, 1
    %s18 = ssub.s32 %s10, %s17
    %p19 = scmp.eq.s32.totalorder %s18, 0
    %s21 = sadd.s32 %s20, 1
    %s22 = scalar_select %p19, %s20, %s21
    %p25 = pneg %p19
    %p26 = scmp.eq.s32.totalorder %s10, 1
    %p27 = por %p25, %p26
    %p28 = scmp.ne.s32.totalorder %s20, %s23
    %p29 = scmp.eq.s32.totalorder %s10, 0
    %p30 = por %p28, %p29
    %p31 = scmp.ne.s32.totalorder %s20, %s23
    %p32 = scmp.eq.s32.totalorder %s15, 1
    %p33 = por %p31, %p32
    %p34 = scmp.ne.s32.totalorder %s23, %s24
    %p35 = scmp.eq.s32.totalorder %s15, 0
    %p36 = por %p34, %p35
    %p37 = scmp.ne.s32.totalorder %s23, %s24
    %p38 = scmp.eq.s32.totalorder %s16, 1
    %p39 = por %p37, %p38
    %p41 = scmp.ne.s32.totalorder %s24, %s40
    %p42 = scmp.eq.s32.totalorder %s16, 0
    %p43 = por %p41, %p42
    %s45 = sadd.s32 %s44, 1
    %p48 = scmp.eq.s32.totalorder %s10, 1
    %p49 = scmp.ne.s32.totalorder %s44, %s46
    %p50 = scmp.eq.s32.totalorder %s10, 0
    %p51 = por %p49, %p50
    %p52 = scmp.ne.s32.totalorder %s44, %s46
    %p53 = scmp.eq.s32.totalorder %s15, 1
    %p54 = por %p52, %p53
    %p55 = scmp.ne.s32.totalorder %s46, %s47
    %p56 = scmp.eq.s32.totalorder %s15, 0
    %p57 = por %p55, %p56
    %p58 = scmp.ne.s32.totalorder %s46, %s47
    %p59 = scmp.eq.s32.totalorder %s16, 1
    %p60 = por %p58, %p59
    %p62 = scmp.ne.s32.totalorder %s47, %s61
    %p63 = scmp.eq.s32.totalorder %s16, 0
    %p64 = por %p62, %p63
    %s66 = sadd.s32 %s65, 1
    %p69 = scmp.eq.s32.totalorder %s10, 1
    %p70 = scmp.ne.s32.totalorder %s65, %s67
    %p71 = scmp.eq.s32.totalorder %s10, 0
    %p72 = por %p70, %p71
    %p73 = scmp.ne.s32.totalorder %s65, %s67
    %p74 = scmp.eq.s32.totalorder %s15, 1
    %p75 = por %p73, %p74
    %p76 = scmp.ne.s32.totalorder %s67, %s68
    %p77 = scmp.eq.s32.totalorder %s15, 0
    %p78 = por %p76, %p77
    %p79 = scmp.ne.s32.totalorder %s67, %s68
    %p80 = scmp.eq.s32.totalorder %s16, 1
    %p81 = por %p79, %p80
    %p83 = scmp.ne.s32.totalorder %s68, %s82
    %p84 = scmp.eq.s32.totalorder %s16, 0
    %p85 = por %p83, %p84
    %s87 = sadd.s32 %s86, 1
    %p90 = scmp.eq.s32.totalorder %s10, 1
    %p91 = scmp.ne.s32.totalorder %s86, %s88
    %p92 = scmp.eq.s32.totalorder %s10, 0
    %p93 = por %p91, %p92
    %p94 = scmp.ne.s32.totalorder %s86, %s88
    %p95 = scmp.eq.s32.totalorder %s15, 1
    %p96 = por %p94, %p95
    %p97 = scmp.ne.s32.totalorder %s88, %s89
    %p98 = scmp.eq.s32.totalorder %s15, 0
    %p99 = por %p97, %p98
    %p100 = scmp.ne.s32.totalorder %s88, %s89
    %p101 = scmp.eq.s32.totalorder %s16, 1
    %p102 = por %p100, %p101
    %p104 = scmp.ne.s32.totalorder %s89, %s103
    %p105 = scmp.eq.s32.totalorder %s16, 0
    %p106 = por %p104, %p105
    %s107 = ssub.s32 %s10, %s17
    %p108 = scmp.eq.s32.totalorder %s107, 0
    %s110 = sadd.s32 %s109, 1
    %s111 = scalar_select %p108, %s109, %s110
    %p114 = pneg %p108
    %p115 = scmp.eq.s32.totalorder %s10, 1
    %p116 = por %p114, %p115
    %p117 = scmp.ne.s32.totalorder %s109, %s112
    %p118 = scmp.eq.s32.totalorder %s10, 0
    %p119 = por %p117, %p118
    %p120 = scmp.ne.s32.totalorder %s109, %s112
    %p121 = scmp.eq.s32.totalorder %s15, 1
    %p122 = por %p120, %p121
    %p123 = scmp.ne.s32.totalorder %s112, %s113
    %p124 = scmp.eq.s32.totalorder %s15, 0
    %p125 = por %p123, %p124
    %p126 = scmp.ne.s32.totalorder %s112, %s113
    %p127 = scmp.eq.s32.totalorder %s16, 1
    %p128 = por %p126, %p127
    %p130 = scmp.ne.s32.totalorder %s113, %s129
    %p131 = scmp.eq.s32.totalorder %s16, 0
    %p132 = por %p130, %p131
    %p133 = scmp.le.s32.totalorder 1, %s10
    %p134 = scmp.lt.s32.totalorder %s10, 3
    %p135 = pnand %p133, %p134
    %p136 = pneg %p135
    // Predicated region
    $region9: #{_lambda_.10} parent=5 // pred_check
      _
    $region10: #{_lambda_.10} parent=5 // pred_check_branch
      %138 = sbr.rel (%p135) target = $region12
    $region11: #{_lambda_.10} parent=5 // pred_region
      %s139 = ssub.s32 %s10, 1
      // Predicated region
      $region13: #{_lambda_.10} parent=11 // pred_check
        %p140 = pneg %p57
      $region14: #{_lambda_.10} parent=11 // pred_check_branch
        %142 = sbr.rel (%p140) target = $region16
      $region15: #{_lambda_.10} parent=11 // pred_region
        _
      $region16: #{_lambda_.10} parent=11 // pred_fallthru
        _
      // Predicated region
      $region17: #{_lambda_.10} parent=11 // pred_check
        %p143 = pneg %p78
      $region18: #{_lambda_.10} parent=11 // pred_check_branch
        %145 = sbr.rel (%p143) target = $region20
      $region19: #{_lambda_.10} parent=11 // pred_region
        _
      $region20: #{_lambda_.10} parent=11 // pred_fallthru
        _
      // Predicated region
      $region21: #{_lambda_.10} parent=11 // pred_check
        %p146 = pneg %p99
      $region22: #{_lambda_.10} parent=11 // pred_check_branch
        %148 = sbr.rel (%p146) target = $region24
      $region23: #{_lambda_.10} parent=11 // pred_region
        _
      $region24: #{_lambda_.10} parent=11 // pred_fallthru
        _
    $region12: #{_lambda_.10} parent=5 // pred_fallthru
      _
    %p149 = scmp.lt.s32.totalorder %s10, 2
    // Predicated region
    $region25: #{_lambda_.10} parent=5 // pred_check
      %p150 = pneg %p149
    $region26: #{_lambda_.10} parent=5 // pred_check_branch
      %152 = sbr.rel (%p150) target = $region28
    $region27: #{_lambda_.10} parent=5 // pred_region
      // Predicated region
      $region29: #{_lambda_.10} parent=27 // pred_check
        %p153 = pneg %p30
      $region30: #{_lambda_.10} parent=27 // pred_check_branch
        %155 = sbr.rel (%p153) target = $region32
      $region31: #{_lambda_.10} parent=27 // pred_region
        %p156 = scmp.lt.s32.totalorder %s10, 1
        %s157 = scalar_select %p156, %s10, 1
        %s158 = smul.addr %s157, 2
        %s159 = smul.addr %s158, 4
        %s160 = scalar_lea.vmem %s0, %s159
      $region32: #{_lambda_.10} parent=27 // pred_fallthru
        _
    $region28: #{_lambda_.10} parent=5 // pred_fallthru
      _
    %p161 = scmp.le.s32.totalorder 1, %s10
    %p162 = scmp.lt.s32.totalorder %s10, 3
    %p163 = pnand %p161, %p162
    %p164 = pneg %p163
    // Predicated region
    $region33: #{_lambda_.10} parent=5 // pred_check
      _
    $region34: #{_lambda_.10} parent=5 // pred_check_branch
      %166 = sbr.rel (%p163) target = $region36
    $region35: #{_lambda_.10} parent=5 // pred_region
      %s167 = ssub.s32 %s10, 1
      %p168 = scmp.lt.s32.totalorder %s15, 1
      %s169 = scalar_select %p168, %s15, 1
      %s170 = smul.addr %s169, 2
      %s171 = smul.addr %s170, 4
      %s172 = scalar_lea.vmem %s0, %s171
      %p173 = pneg %p36
      %p174 = pneg %p33
      %p175 = pneg %p57
      %p176 = pneg %p54
      %p177 = pneg %p78
      %p178 = pneg %p75
      %p179 = pneg %p99
      %p180 = pneg %p96
      %p181 = pneg %p125
      %p182 = pneg %p122
      %p183 = scmp.lt.s32.totalorder %s15, 1
      %s184 = scalar_select %p183, %s15, 1
      %s185 = smul.addr %s184, 2
      %s186 = smul.addr %s185, 4
      %s187 = scalar_lea.vmem %s4, %s186
      %p188 = scmp.lt.s32.totalorder %s15, 1
      %s189 = scalar_select %p188, %s15, 1
      %s190 = smul.addr %s189, 2
      %s191 = smul.addr %s190, 4
      %s192 = scalar_lea.vmem %s0, %s191
      %p193 = scmp.lt.s32.totalorder %s15, 1
      %s194 = scalar_select %p193, %s15, 1
      %s195 = smul.addr %s194, 2
      %s196 = smul.addr %s195, 4
      %s197 = scalar_lea.vmem %s4, %s196
      %199 = vst [vmem:[#allocation2] sm:$0xff] 0.0
      %200 = vst [vmem:[#allocation2 + $0x8] sm:$0xff] 0.0
      %201 = vst [vmem:[#allocation2 + $0x10] sm:$0x3] 0.0
      %v202 = vld [vmem:[%s192] sm:$0xf]
      %v203 = vld [vmem:[%s192 + $0x4] sm:$0xf]
      %v204 = vunpack.c.l.bf16 %v202
      %v205 = vunpack.c.l.bf16 %v203
      %206 = vst [vmem:[#allocation2 + $0x1] sm:$0xff] %v204
      %207 = vst [vmem:[#allocation2 + $0x9] sm:$0xff] %v205
      %v208 = vld [vmem:[#allocation2] sm:$0xff]
      %v209 = vld [vmem:[#allocation2 + $0x8] sm:$0xff]
      %v210 = vpack.c.bf16 %v209, %v208
      %v211 = vld [vmem:[%s1] sm:$0xf]
      %v212 = vld [vmem:[%s1 + $0x4] sm:$0xf]
      %v213 = vld [vmem:[%s1 + $0x8] sm:$0xf]
      %v214 = vld [vmem:[%s1 + $0xc] sm:$0xf]
      %v215 = vld [vmem:[%s1 + $0x10] sm:$0xf]
      %v216 = vld [vmem:[%s1 + $0x14] sm:$0xf]
      %v217 = vld [vmem:[%s1 + $0x18] sm:$0xf]
      %v218 = vld [vmem:[%s1 + $0x1c] sm:$0xf]
      %v219 = vld [vmem:[%s1 + $0x20] sm:$0xf]
      %v220 = vld [vmem:[%s1 + $0x24] sm:$0xf]
      %v221 = vld [vmem:[%s1 + $0x28] sm:$0xf]
      %v222 = vld [vmem:[%s1 + $0x2c] sm:$0xf]
      %v223 = vld [vmem:[%s1 + $0x30] sm:$0xf]
      %v224 = vld [vmem:[%s1 + $0x34] sm:$0xf]
      %v225 = vld [vmem:[%s1 + $0x38] sm:$0xf]
      %v226 = vld [vmem:[%s1 + $0x3c] sm:$0xf]
      %v227 = vld [vmem:[#allocation2 + $0x1] sm:$0xff]
      %v228 = vld [vmem:[#allocation2 + $0x9] sm:$0xff]
      %v229 = vpack.c.bf16 %v228, %v227
      %s230 = scalar_lea.vmem %s1, 64
      %v231 = vld [vmem:[%s230] sm:$0xf]
      %v232 = vld [vmem:[%s230 + $0x4] sm:$0xf]
      %v233 = vld [vmem:[%s230 + $0x8] sm:$0xf]
      %v234 = vld [vmem:[%s230 + $0xc] sm:$0xf]
      %v235 = vld [vmem:[%s230 + $0x10] sm:$0xf]
      %v236 = vld [vmem:[%s230 + $0x14] sm:$0xf]
      %v237 = vld [vmem:[%s230 + $0x18] sm:$0xf]
      %v238 = vld [vmem:[%s230 + $0x1c] sm:$0xf]
      %v239 = vld [vmem:[%s230 + $0x20] sm:$0xf]
      %v240 = vld [vmem:[%s230 + $0x24] sm:$0xf]
      %v241 = vld [vmem:[%s230 + $0x28] sm:$0xf]
      %v242 = vld [vmem:[%s230 + $0x2c] sm:$0xf]
      %v243 = vld [vmem:[%s230 + $0x30] sm:$0xf]
      %v244 = vld [vmem:[%s230 + $0x34] sm:$0xf]
      %v245 = vld [vmem:[%s230 + $0x38] sm:$0xf]
      %v246 = vld [vmem:[%s230 + $0x3c] sm:$0xf]
      %v263 = vunpack.c.l.b16 %v231
      %v264 = vunpack.c.l.b16 %v232
      %v265 = vunpack.c.l.b16 %v233
      %v266 = vunpack.c.l.b16 %v234
      %v267 = vunpack.c.l.b16 %v235
      %v268 = vunpack.c.l.b16 %v236
      %v269 = vunpack.c.l.b16 %v237
      %v270 = vunpack.c.l.b16 %v238
      %v271 = vunpack.c.l.b16 %v239
      %v272 = vunpack.c.l.b16 %v240
      %v273 = vunpack.c.l.b16 %v241
      %v274 = vunpack.c.l.b16 %v242
      %v275 = vunpack.c.l.b16 %v243
      %v276 = vunpack.c.l.b16 %v244
      %v277 = vunpack.c.l.b16 %v245
      %v278 = vunpack.c.l.b16 %v246
      %v279 = vpack.c.b16 %v264, %v263
      %v280 = vpack.c.b16 %v266, %v265
      %v281 = vpack.c.b16 %v268, %v267
      %v282 = vpack.c.b16 %v270, %v269
      %v283 = vpack.c.b16 %v272, %v271
      %v284 = vpack.c.b16 %v274, %v273
      %v285 = vpack.c.b16 %v276, %v275
      %v286 = vpack.c.b16 %v278, %v277
      %295 = vmatprep.subr.bf16.mxu0 0
      %296 = vmatpush1.bf16.msra.mxu0 %v286
      %297 = vmatprep.subr.bf16.mxu0 0
      %298 = vmatpush1.bf16.msra.mxu0 %v285
      %299 = vmatprep.subr.bf16.mxu0 0
      %300 = vmatpush1.bf16.msra.mxu0 %v284
      %301 = vmatprep.subr.bf16.mxu0 0
      %302 = vmatpush1.bf16.msra.mxu0 %v283
      %303 = vmatprep.subr.bf16.mxu0 0
      %304 = vmatpush1.bf16.msra.mxu0 %v282
      %305 = vmatprep.subr.bf16.mxu0 0
      %306 = vmatpush1.bf16.msra.mxu0 %v281
      %307 = vmatprep.subr.bf16.mxu0 0
      %308 = vmatpush1.bf16.msra.mxu0 %v280
      %309 = vmatprep.subr.bf16.mxu0 0
      %310 = vmatpush1.bf16.msra.mxu0 %v279
      %311 = vmatprep.subr.bf16.mxu0 0
      %312 = vmatpush2.bf16.msra.mxu0 0
      %313 = vmatprep.subr.bf16.mxu0 0
      %314 = vmatpush2.bf16.msra.mxu0 0
      %315 = vmatprep.subr.bf16.mxu0 0
      %316 = vmatpush2.bf16.msra.mxu0 0
      %317 = vmatprep.subr.bf16.mxu0 0
      %318 = vmatpush2.bf16.msra.mxu0 0
      %319 = vmatprep.subr.bf16.mxu0 0
      %320 = vmatpush2.bf16.msra.mxu0 0
      %321 = vmatprep.subr.bf16.mxu0 0
      %322 = vmatpush2.bf16.msra.mxu0 0
      %323 = vmatprep.subr.bf16.mxu0 0
      %324 = vmatpush2.bf16.msra.mxu0 0
      %325 = vmatprep.subr.bf16.mxu0 0
      %326 = vmatpush2.bf16.msra.mxu0 0
      %327 = vmatprep.mubr.bf16.mxu0 0
      %328 = vmatmul.mubr.bf16.gmra.mxu0 %v229
      %v329 = vpop.f32.mrf.mxu0
      %v330 = vadd.f32 0.0, %v329
      %v331 = vpop.f32.mrf.mxu0
      %v332 = vpop.f32.mrf.mxu0
      %v333 = vadd.f32 0.0, %v332
      %v334 = vpop.f32.mrf.mxu0
      %335 = vdwg.mxu0
      %v352 = vunpack.c.l.b16 %v211
      %v353 = vunpack.c.l.b16 %v212
      %v354 = vunpack.c.l.b16 %v213
      %v355 = vunpack.c.l.b16 %v214
      %v356 = vunpack.c.l.b16 %v215
      %v357 = vunpack.c.l.b16 %v216
      %v358 = vunpack.c.l.b16 %v217
      %v359 = vunpack.c.l.b16 %v218
      %v360 = vunpack.c.l.b16 %v219
      %v361 = vunpack.c.l.b16 %v220
      %v362 = vunpack.c.l.b16 %v221
      %v363 = vunpack.c.l.b16 %v222
      %v364 = vunpack.c.l.b16 %v223
      %v365 = vunpack.c.l.b16 %v224
      %v366 = vunpack.c.l.b16 %v225
      %v367 = vunpack.c.l.b16 %v226
      %v368 = vpack.c.b16 %v353, %v352
      %v369 = vpack.c.b16 %v355, %v354
      %v370 = vpack.c.b16 %v357, %v356
      %v371 = vpack.c.b16 %v359, %v358
      %v372 = vpack.c.b16 %v361, %v360
      %v373 = vpack.c.b16 %v363, %v362
      %v374 = vpack.c.b16 %v365, %v364
      %v375 = vpack.c.b16 %v367, %v366
      %384 = vmatprep.subr.bf16.mxu0 0
      %385 = vmatpush1.bf16.msra.mxu0 %v375
      %386 = vmatprep.subr.bf16.mxu0 0
      %387 = vmatpush1.bf16.msra.mxu0 %v374
      %388 = vmatprep.subr.bf16.mxu0 0
      %389 = vmatpush1.bf16.msra.mxu0 %v373
      %390 = vmatprep.subr.bf16.mxu0 0
      %391 = vmatpush1.bf16.msra.mxu0 %v372
      %392 = vmatprep.subr.bf16.mxu0 0
      %393 = vmatpush1.bf16.msra.mxu0 %v371
      %394 = vmatprep.subr.bf16.mxu0 0
      %395 = vmatpush1.bf16.msra.mxu0 %v370
      %396 = vmatprep.subr.bf16.mxu0 0
      %397 = vmatpush1.bf16.msra.mxu0 %v369
      %398 = vmatprep.subr.bf16.mxu0 0
      %399 = vmatpush1.bf16.msra.mxu0 %v368
      %400 = vmatprep.subr.bf16.mxu0 0
      %401 = vmatpush2.bf16.msra.mxu0 0
      %402 = vmatprep.subr.bf16.mxu0 0
      %403 = vmatpush2.bf16.msra.mxu0 0
      %404 = vmatprep.subr.bf16.mxu0 0
      %405 = vmatpush2.bf16.msra.mxu0 0
      %406 = vmatprep.subr.bf16.mxu0 0
      %407 = vmatpush2.bf16.msra.mxu0 0
      %408 = vmatprep.subr.bf16.mxu0 0
      %409 = vmatpush2.bf16.msra.mxu0 0
      %410 = vmatprep.subr.bf16.mxu0 0
      %411 = vmatpush2.bf16.msra.mxu0 0
      %412 = vmatprep.subr.bf16.mxu0 0
      %413 = vmatpush2.bf16.msra.mxu0 0
      %414 = vmatprep.subr.bf16.mxu0 0
      %415 = vmatpush2.bf16.msra.mxu0 0
      %416 = vmatprep.mubr.bf16.mxu0 0
      %417 = vmatmul.mubr.bf16.gmra.mxu0 %v210
      %v418 = vpop.f32.mrf.mxu0
      %v419 = vadd.f32 %v330, %v418
      %v420 = vpop.f32.mrf.mxu0
      %v421 = vpop.f32.mrf.mxu0
      %v422 = vadd.f32 %v333, %v421
      %v423 = vpop.f32.mrf.mxu0
      %424 = vdwg.mxu0
      %v425 = vld [vmem:[#allocation2 + $0x2] sm:$0xff]
      %v426 = vld [vmem:[#allocation2 + $0xa] sm:$0xff]
      %v427 = vpack.c.bf16 %v426, %v425
      %s428 = scalar_lea.vmem %s1, 128
      %v429 = vld [vmem:[%s428] sm:$0xf]
      %v430 = vld [vmem:[%s428 + $0x4] sm:$0xf]
      %v431 = vld [vmem:[%s428 + $0x8] sm:$0xf]
      %v432 = vld [vmem:[%s428 + $0xc] sm:$0xf]
      %v433 = vld [vmem:[%s428 + $0x10] sm:$0xf]
      %v434 = vld [vmem:[%s428 + $0x14] sm:$0xf]
      %v435 = vld [vmem:[%s428 + $0x18] sm:$0xf]
      %v436 = vld [vmem:[%s428 + $0x1c] sm:$0xf]
      %v437 = vld [vmem:[%s428 + $0x20] sm:$0xf]
      %v438 = vld [vmem:[%s428 + $0x24] sm:$0xf]
      %v439 = vld [vmem:[%s428 + $0x28] sm:$0xf]
      %v440 = vld [vmem:[%s428 + $0x2c] sm:$0xf]
      %v441 = vld [vmem:[%s428 + $0x30] sm:$0xf]
      %v442 = vld [vmem:[%s428 + $0x34] sm:$0xf]
      %v443 = vld [vmem:[%s428 + $0x38] sm:$0xf]
      %v444 = vld [vmem:[%s428 + $0x3c] sm:$0xf]
      %v461 = vunpack.c.l.b16 %v429
      %v462 = vunpack.c.l.b16 %v430
      %v463 = vunpack.c.l.b16 %v431
      %v464 = vunpack.c.l.b16 %v432
      %v465 = vunpack.c.l.b16 %v433
      %v466 = vunpack.c.l.b16 %v434
      %v467 = vunpack.c.l.b16 %v435
      %v468 = vunpack.c.l.b16 %v436
      %v469 = vunpack.c.l.b16 %v437
      %v470 = vunpack.c.l.b16 %v438
      %v471 = vunpack.c.l.b16 %v439
      %v472 = vunpack.c.l.b16 %v440
      %v473 = vunpack.c.l.b16 %v441
      %v474 = vunpack.c.l.b16 %v442
      %v475 = vunpack.c.l.b16 %v443
      %v476 = vunpack.c.l.b16 %v444
      %v477 = vpack.c.b16 %v462, %v461
      %v478 = vpack.c.b16 %v464, %v463
      %v479 = vpack.c.b16 %v466, %v465
      %v480 = vpack.c.b16 %v468, %v467
      %v481 = vpack.c.b16 %v470, %v469
      %v482 = vpack.c.b16 %v472, %v471
      %v483 = vpack.c.b16 %v474, %v473
      %v484 = vpack.c.b16 %v476, %v475
      %493 = vmatprep.subr.bf16.mxu0 0
      %494 = vmatpush1.bf16.msra.mxu0 %v484
      %495 = vmatprep.subr.bf16.mxu0 0
      %496 = vmatpush1.bf16.msra.mxu0 %v483
      %497 = vmatprep.subr.bf16.mxu0 0
      %498 = vmatpush1.bf16.msra.mxu0 %v482
      %499 = vmatprep.subr.bf16.mxu0 0
      %500 = vmatpush1.bf16.msra.mxu0 %v481
      %501 = vmatprep.subr.bf16.mxu0 0
      %502 = vmatpush1.bf16.msra.mxu0 %v480
      %503 = vmatprep.subr.bf16.mxu0 0
      %504 = vmatpush1.bf16.msra.mxu0 %v479
      %505 = vmatprep.subr.bf16.mxu0 0
      %506 = vmatpush1.bf16.msra.mxu0 %v478
      %507 = vmatprep.subr.bf16.mxu0 0
      %508 = vmatpush1.bf16.msra.mxu0 %v477
      %509 = vmatprep.subr.bf16.mxu0 0
      %510 = vmatpush2.bf16.msra.mxu0 0
      %511 = vmatprep.subr.bf16.mxu0 0
      %512 = vmatpush2.bf16.msra.mxu0 0
      %513 = vmatprep.subr.bf16.mxu0 0
      %514 = vmatpush2.bf16.msra.mxu0 0
      %515 = vmatprep.subr.bf16.mxu0 0
      %516 = vmatpush2.bf16.msra.mxu0 0
      %517 = vmatprep.subr.bf16.mxu0 0
      %518 = vmatpush2.bf16.msra.mxu0 0
      %519 = vmatprep.subr.bf16.mxu0 0
      %520 = vmatpush2.bf16.msra.mxu0 0
      %521 = vmatprep.subr.bf16.mxu0 0
      %522 = vmatpush2.bf16.msra.mxu0 0
      %523 = vmatprep.subr.bf16.mxu0 0
      %524 = vmatpush2.bf16.msra.mxu0 0
      %525 = vmatprep.mubr.bf16.mxu0 0
      %526 = vmatmul.mubr.bf16.gmra.mxu0 %v427
      %v527 = vpop.f32.mrf.mxu0
      %v528 = vadd.f32 0.0, %v527
      %v529 = vpop.f32.mrf.mxu0
      %v530 = vpop.f32.mrf.mxu0
      %v531 = vadd.f32 0.0, %v530
      %v532 = vpop.f32.mrf.mxu0
      %533 = vdwg.mxu0
      %v534 = vadd.f32 %v419, %v528
      %v535 = vadd.f32 %v422, %v531
      %v536 = vld [vmem:[%s2] sm:$0x1]
      %v538 = vlaneseq
      %v539 = vshrl.u32 %v538, 7
      %v540 = vsub.s32 0, %v539
      %v541 = vrot.slane %v536, %v540
      %v543 = vmul.f32 %v534, %v541
      %v544 = vmul.f32 %v535, %v541
      %v545 = vld [vmem:[%s3] sm:$0x1]
      %v547 = vlaneseq
      %v548 = vshrl.u32 %v547, 7
      %v549 = vsub.s32 0, %v548
      %v550 = vrot.slane %v545, %v549
      %v552 = vadd.f32 %v543, %v550
      %v553 = vadd.f32 %v544, %v550
      %v554 = vmax.f32 %v552, 0.0
      %v555 = vmax.f32 %v553, 0.0
      %v556 = vpack.c.bf16 %v555, %v554
      %v558 = vunpack.c.l.b16 %v556
      %v559 = vunpack.c.h.b16 %v556
      %v560 = vpack.c.b16 %v558, %v558
      %v561 = vpack.c.b16 %v559, %v559
      %vm564 = vcmask 519168
      %565 = vst.msk [vmem:[%s197] sm:$0xf] %vm564, %v560
      %566 = vst.msk [vmem:[%s197 + $0x4] sm:$0xf] %vm564, %v561
      %p567 = scmp.lt.s32.totalorder %s15, 1
      %s568 = scalar_select %p567, %s15, 1
      %s569 = smul.addr %s568, 2
      %s570 = smul.addr %s569, 4
      %s571 = scalar_lea.vmem %s4, %s570
      // Predicated region
      $region37: #{_lambda_.10} parent=35 // pred_check
        %p572 = pneg %p122
      $region38: #{_lambda_.10} parent=35 // pred_check_branch
        %574 = sbr.rel (%p572) target = $region40
      $region39: #{_lambda_.10} parent=35 // pred_region
        _
      $region40: #{_lambda_.10} parent=35 // pred_fallthru
        _
    $region36: #{_lambda_.10} parent=5 // pred_fallthru
      _
    %p575 = scmp.le.s32.totalorder 2, %s10
    // Predicated region
    $region41: #{_lambda_.10} parent=5 // pred_check
      %p576 = pneg %p575
    $region42: #{_lambda_.10} parent=5 // pred_check_branch
      %578 = sbr.rel (%p576) target = $region44
    $region43: #{_lambda_.10} parent=5 // pred_region
      %s579 = ssub.s32 %s10, 2
      // Predicated region
      $region45: #{_lambda_.10} parent=43 // pred_check
        %p580 = pneg %p128
      $region46: #{_lambda_.10} parent=43 // pred_check_branch
        %582 = sbr.rel (%p580) target = $region48
      $region47: #{_lambda_.10} parent=43 // pred_region
        %p583 = scmp.lt.s32.totalorder %s16, 1
        %s584 = scalar_select %p583, %s16, 1
        %s585 = smul.addr %s584, 2
        %s586 = smul.addr %s585, 4
        %s587 = scalar_lea.vmem %s4, %s586
      $region48: #{_lambda_.10} parent=43 // pred_fallthru
        _
    $region44: #{_lambda_.10} parent=5 // pred_fallthru
      _
  $region6: #{_lambda_.10} parent=0 // loop_footer
    %s14 = sadd.s32 1, %s10
  $region7: #{_lambda_.10} parent=0 // loop_footer_branch
    %9 = sbr.rel target = $region3
  $region8: #{_lambda_.10} parent=0 // loop_exit
    _

// kernel: _lambda_.12
$region0: #{_lambda_.12}
  #allocation0 [shape = 'u32[]', space=smem, size = 0x4, offset = 0x4, fixed_abs, tag = 'smem constant byte address 0x4 - core index']
  #allocation1 [shape = 'u32[144,128]{1,0:T(1,128)}', space=vmem, size = 0x12000, scoped, tag = 'internal scratch']
  #allocation2 [shape = 'f32[18,128]{1,0:T(8,128)}', space=vmem, size = 0x3000, scoped, tag = 'scratch operand']
  %s0 = inlined_call_operand.vmem [shape: bf16[2,16,128], index: 0, kind: input, shape index: {}]
  %s1 = inlined_call_operand.vmem [shape: bf16[3,128,32], index: 1, kind: input, shape index: {}]
  %s2 = inlined_call_operand.vmem [shape: f32[1,32], index: 2, kind: input, shape index: {}]
  %s3 = inlined_call_operand.vmem [shape: f32[1,32], index: 3, kind: input, shape index: {}]
  %s4 = inlined_call_operand.vmem [shape: bf16[32,32], index: 4, kind: input, shape index: {}]
  %s5 = inlined_call_operand.vmem [shape: f32[1,32], index: 5, kind: input, shape index: {}]
  %s6 = inlined_call_operand.vmem [shape: f32[1,32], index: 6, kind: input, shape index: {}]
  %s7 = inlined_call_operand.vmem [shape: bf16[2,16,32], index: 7, kind: output, shape index: {}]
  %s8 = sld [smem:[#allocation0]]
  $region61: #{_lambda_.12} parent=0
    _
  %s10 = ssub.s32 1, %s8
  %s11 = scalar_select 0, %s10, %s8
  loop: start=0, step=1, limit=4
  $region2: #{_lambda_.12} parent=0 // loop_pre_header
    _
  $region3: #{_lambda_.12} parent=0 // loop_header
    %s13 = sphi 0, %s17
    %p14 = scmp.ge.s32.totalorder %s13, 4
    %s23 = sphi 0, %s25
    %s26 = sphi 0, %s23
    %s27 = sphi 0, %s26
    %s43 = sphi 0, %s27
    %s47 = sphi 0, %s47
    %s49 = sphi 0, %s47
    %s50 = sphi 0, %s49
    %s64 = sphi 0, %s50
    %s68 = sphi 0, %s68
    %s70 = sphi 0, %s68
    %s71 = sphi 0, %s70
    %s85 = sphi 0, %s71
    %s89 = sphi 0, %s89
    %s91 = sphi 0, %s89
    %s92 = sphi 0, %s91
    %s106 = sphi 0, %s92
    %s110 = sphi 0, %s110
    %s112 = sphi 0, %s110
    %s113 = sphi 0, %s112
    %s127 = sphi 0, %s113
    %s131 = sphi 0, %s131
    %s133 = sphi 0, %s131
    %s134 = sphi 0, %s133
    %s148 = sphi 0, %s134
    %s152 = sphi 0, %s152
    %s154 = sphi 0, %s152
    %s155 = sphi 0, %s154
    %s169 = sphi 0, %s155
    %s175 = sphi 0, %s177
    %s178 = sphi 0, %s175
    %s179 = sphi 0, %s178
    %s195 = sphi 0, %s179
  $region4: #{_lambda_.12} parent=0 // loop_header_branch
    %16 = sbr.rel (%p14) target = $region8
  $region5: #{_lambda_.12} parent=0 // loop_body
    %s18 = ssub.s32 %s13, 1
    %s19 = ssub.s32 %s13, 2
    %s20 = sadd.s32 %s13, 1
    %s21 = ssub.s32 %s13, %s20
    %p22 = scmp.eq.s32.totalorder %s21, 0
    %s24 = sadd.s32 %s23, 1
    %s25 = scalar_select %p22, %s23, %s24
    %p28 = pneg %p22
    %p29 = scmp.eq.s32.totalorder %s13, 1
    %p30 = por %p28, %p29
    %p31 = scmp.ne.s32.totalorder %s23, %s26
    %p32 = scmp.eq.s32.totalorder %s13, 0
    %p33 = por %p31, %p32
    %p34 = scmp.ne.s32.totalorder %s23, %s26
    %p35 = scmp.eq.s32.totalorder %s18, 1
    %p36 = por %p34, %p35
    %p37 = scmp.ne.s32.totalorder %s26, %s27
    %p38 = scmp.eq.s32.totalorder %s18, 0
    %p39 = por %p37, %p38
    %p40 = scmp.ne.s32.totalorder %s26, %s27
    %p41 = scmp.eq.s32.totalorder %s19, 1
    %p42 = por %p40, %p41
    %p44 = scmp.ne.s32.totalorder %s27, %s43
    %p45 = scmp.eq.s32.totalorder %s19, 0
    %p46 = por %p44, %p45
    %s48 = sadd.s32 %s47, 1
    %p51 = scmp.eq.s32.totalorder %s13, 1
    %p52 = scmp.ne.s32.totalorder %s47, %s49
    %p53 = scmp.eq.s32.totalorder %s13, 0
    %p54 = por %p52, %p53
    %p55 = scmp.ne.s32.totalorder %s47, %s49
    %p56 = scmp.eq.s32.totalorder %s18, 1
    %p57 = por %p55, %p56
    %p58 = scmp.ne.s32.totalorder %s49, %s50
    %p59 = scmp.eq.s32.totalorder %s18, 0
    %p60 = por %p58, %p59
    %p61 = scmp.ne.s32.totalorder %s49, %s50
    %p62 = scmp.eq.s32.totalorder %s19, 1
    %p63 = por %p61, %p62
    %p65 = scmp.ne.s32.totalorder %s50, %s64
    %p66 = scmp.eq.s32.totalorder %s19, 0
    %p67 = por %p65, %p66
    %s69 = sadd.s32 %s68, 1
    %p72 = scmp.eq.s32.totalorder %s13, 1
    %p73 = scmp.ne.s32.totalorder %s68, %s70
    %p74 = scmp.eq.s32.totalorder %s13, 0
    %p75 = por %p73, %p74
    %p76 = scmp.ne.s32.totalorder %s68, %s70
    %p77 = scmp.eq.s32.totalorder %s18, 1
    %p78 = por %p76, %p77
    %p79 = scmp.ne.s32.totalorder %s70, %s71
    %p80 = scmp.eq.s32.totalorder %s18, 0
    %p81 = por %p79, %p80
    %p82 = scmp.ne.s32.totalorder %s70, %s71
    %p83 = scmp.eq.s32.totalorder %s19, 1
    %p84 = por %p82, %p83
    %p86 = scmp.ne.s32.totalorder %s71, %s85
    %p87 = scmp.eq.s32.totalorder %s19, 0
    %p88 = por %p86, %p87
    %s90 = sadd.s32 %s89, 1
    %p93 = scmp.eq.s32.totalorder %s13, 1
    %p94 = scmp.ne.s32.totalorder %s89, %s91
    %p95 = scmp.eq.s32.totalorder %s13, 0
    %p96 = por %p94, %p95
    %p97 = scmp.ne.s32.totalorder %s89, %s91
    %p98 = scmp.eq.s32.totalorder %s18, 1
    %p99 = por %p97, %p98
    %p100 = scmp.ne.s32.totalorder %s91, %s92
    %p101 = scmp.eq.s32.totalorder %s18, 0
    %p102 = por %p100, %p101
    %p103 = scmp.ne.s32.totalorder %s91, %s92
    %p104 = scmp.eq.s32.totalorder %s19, 1
    %p105 = por %p103, %p104
    %p107 = scmp.ne.s32.totalorder %s92, %s106
    %p108 = scmp.eq.s32.totalorder %s19, 0
    %p109 = por %p107, %p108
    %s111 = sadd.s32 %s110, 1
    %p114 = scmp.eq.s32.totalorder %s13, 1
    %p115 = scmp.ne.s32.totalorder %s110, %s112
    %p116 = scmp.eq.s32.totalorder %s13, 0
    %p117 = por %p115, %p116
    %p118 = scmp.ne.s32.totalorder %s110, %s112
    %p119 = scmp.eq.s32.totalorder %s18, 1
    %p120 = por %p118, %p119
    %p121 = scmp.ne.s32.totalorder %s112, %s113
    %p122 = scmp.eq.s32.totalorder %s18, 0
    %p123 = por %p121, %p122
    %p124 = scmp.ne.s32.totalorder %s112, %s113
    %p125 = scmp.eq.s32.totalorder %s19, 1
    %p126 = por %p124, %p125
    %p128 = scmp.ne.s32.totalorder %s113, %s127
    %p129 = scmp.eq.s32.totalorder %s19, 0
    %p130 = por %p128, %p129
    %s132 = sadd.s32 %s131, 1
    %p135 = scmp.eq.s32.totalorder %s13, 1
    %p136 = scmp.ne.s32.totalorder %s131, %s133
    %p137 = scmp.eq.s32.totalorder %s13, 0
    %p138 = por %p136, %p137
    %p139 = scmp.ne.s32.totalorder %s131, %s133
    %p140 = scmp.eq.s32.totalorder %s18, 1
    %p141 = por %p139, %p140
    %p142 = scmp.ne.s32.totalorder %s133, %s134
    %p143 = scmp.eq.s32.totalorder %s18, 0
    %p144 = por %p142, %p143
    %p145 = scmp.ne.s32.totalorder %s133, %s134
    %p146 = scmp.eq.s32.totalorder %s19, 1
    %p147 = por %p145, %p146
    %p149 = scmp.ne.s32.totalorder %s134, %s148
    %p150 = scmp.eq.s32.totalorder %s19, 0
    %p151 = por %p149, %p150
    %s153 = sadd.s32 %s152, 1
    %p156 = scmp.eq.s32.totalorder %s13, 1
    %p157 = scmp.ne.s32.totalorder %s152, %s154
    %p158 = scmp.eq.s32.totalorder %s13, 0
    %p159 = por %p157, %p158
    %p160 = scmp.ne.s32.totalorder %s152, %s154
    %p161 = scmp.eq.s32.totalorder %s18, 1
    %p162 = por %p160, %p161
    %p163 = scmp.ne.s32.totalorder %s154, %s155
    %p164 = scmp.eq.s32.totalorder %s18, 0
    %p165 = por %p163, %p164
    %p166 = scmp.ne.s32.totalorder %s154, %s155
    %p167 = scmp.eq.s32.totalorder %s19, 1
    %p168 = por %p166, %p167
    %p170 = scmp.ne.s32.totalorder %s155, %s169
    %p171 = scmp.eq.s32.totalorder %s19, 0
    %p172 = por %p170, %p171
    %s173 = ssub.s32 %s13, %s20
    %p174 = scmp.eq.s32.totalorder %s173, 0
    %s176 = sadd.s32 %s175, 1
    %s177 = scalar_select %p174, %s175, %s176
    %p180 = pneg %p174
    %p181 = scmp.eq.s32.totalorder %s13, 1
    %p182 = por %p180, %p181
    %p183 = scmp.ne.s32.totalorder %s175, %s178
    %p184 = scmp.eq.s32.totalorder %s13, 0
    %p185 = por %p183, %p184
    %p186 = scmp.ne.s32.totalorder %s175, %s178
    %p187 = scmp.eq.s32.totalorder %s18, 1
    %p188 = por %p186, %p187
    %p189 = scmp.ne.s32.totalorder %s178, %s179
    %p190 = scmp.eq.s32.totalorder %s18, 0
    %p191 = por %p189, %p190
    %p192 = scmp.ne.s32.totalorder %s178, %s179
    %p193 = scmp.eq.s32.totalorder %s19, 1
    %p194 = por %p192, %p193
    %p196 = scmp.ne.s32.totalorder %s179, %s195
    %p197 = scmp.eq.s32.totalorder %s19, 0
    %p198 = por %p196, %p197
    %p199 = scmp.le.s32.totalorder 1, %s13
    %p200 = scmp.lt.s32.totalorder %s13, 3
    %p201 = pnand %p199, %p200
    %p202 = pneg %p201
    // Predicated region
    $region9: #{_lambda_.12} parent=5 // pred_check
      _
    $region10: #{_lambda_.12} parent=5 // pred_check_branch
      %204 = sbr.rel (%p201) target = $region12
    $region11: #{_lambda_.12} parent=5 // pred_region
      %s205 = ssub.s32 %s13, 1
      // Predicated region
      $region13: #{_lambda_.12} parent=11 // pred_check
        %p206 = pneg %p60
      $region14: #{_lambda_.12} parent=11 // pred_check_branch
        %208 = sbr.rel (%p206) target = $region16
      $region15: #{_lambda_.12} parent=11 // pred_region
        _
      $region16: #{_lambda_.12} parent=11 // pred_fallthru
        _
      // Predicated region
      $region17: #{_lambda_.12} parent=11 // pred_check
        %p209 = pneg %p81
      $region18: #{_lambda_.12} parent=11 // pred_check_branch
        %211 = sbr.rel (%p209) target = $region20
      $region19: #{_lambda_.12} parent=11 // pred_region
        _
      $region20: #{_lambda_.12} parent=11 // pred_fallthru
        _
      // Predicated region
      $region21: #{_lambda_.12} parent=11 // pred_check
        %p212 = pneg %p102
      $region22: #{_lambda_.12} parent=11 // pred_check_branch
        %214 = sbr.rel (%p212) target = $region24
      $region23: #{_lambda_.12} parent=11 // pred_region
        _
      $region24: #{_lambda_.12} parent=11 // pred_fallthru
        _
      // Predicated region
      $region25: #{_lambda_.12} parent=11 // pred_check
        %p215 = pneg %p123
      $region26: #{_lambda_.12} parent=11 // pred_check_branch
        %217 = sbr.rel (%p215) target = $region28
      $region27: #{_lambda_.12} parent=11 // pred_region
        _
      $region28: #{_lambda_.12} parent=11 // pred_fallthru
        _
      // Predicated region
      $region29: #{_lambda_.12} parent=11 // pred_check
        %p218 = pneg %p144
      $region30: #{_lambda_.12} parent=11 // pred_check_branch
        %220 = sbr.rel (%p218) target = $region32
      $region31: #{_lambda_.12} parent=11 // pred_region
        _
      $region32: #{_lambda_.12} parent=11 // pred_fallthru
        _
      // Predicated region
      $region33: #{_lambda_.12} parent=11 // pred_check
        %p221 = pneg %p165
      $region34: #{_lambda_.12} parent=11 // pred_check_branch
        %223 = sbr.rel (%p221) target = $region36
      $region35: #{_lambda_.12} parent=11 // pred_region
        _
      $region36: #{_lambda_.12} parent=11 // pred_fallthru
        _
    $region12: #{_lambda_.12} parent=5 // pred_fallthru
      _
    %p224 = scmp.lt.s32.totalorder %s13, 2
    // Predicated region
    $region37: #{_lambda_.12} parent=5 // pred_check
      %p225 = pneg %p224
    $region38: #{_lambda_.12} parent=5 // pred_check_branch
      %227 = sbr.rel (%p225) target = $region40
    $region39: #{_lambda_.12} parent=5 // pred_region
      // Predicated region
      $region41: #{_lambda_.12} parent=39 // pred_check
        %p228 = pneg %p33
      $region42: #{_lambda_.12} parent=39 // pred_check_branch
        %230 = sbr.rel (%p228) target = $region44
      $region43: #{_lambda_.12} parent=39 // pred_region
        %p231 = scmp.lt.s32.totalorder %s13, 1
        %s232 = scalar_select %p231, %s13, 1
        %s233 = smul.addr %s232, 2
        %s234 = smul.addr %s233, 4
        %s235 = scalar_lea.vmem %s0, %s234
      $region44: #{_lambda_.12} parent=39 // pred_fallthru
        _
    $region40: #{_lambda_.12} parent=5 // pred_fallthru
      _
    %p236 = scmp.le.s32.totalorder 1, %s13
    %p237 = scmp.lt.s32.totalorder %s13, 3
    %p238 = pnand %p236, %p237
    %p239 = pneg %p238
    // Predicated region
    $region45: #{_lambda_.12} parent=5 // pred_check
      _
    $region46: #{_lambda_.12} parent=5 // pred_check_branch
      %241 = sbr.rel (%p238) target = $region48
    $region47: #{_lambda_.12} parent=5 // pred_region
      %s242 = ssub.s32 %s13, 1
      %p243 = scmp.lt.s32.totalorder %s18, 1
      %s244 = scalar_select %p243, %s18, 1
      %s245 = smul.addr %s244, 2
      %s246 = smul.addr %s245, 4
      %s247 = scalar_lea.vmem %s0, %s246
      %p248 = pneg %p39
      %p249 = pneg %p36
      %p250 = pneg %p60
      %p251 = pneg %p57
      %p252 = pneg %p81
      %p253 = pneg %p78
      %p254 = pneg %p102
      %p255 = pneg %p99
      %p256 = pneg %p123
      %p257 = pneg %p120
      %p258 = pneg %p144
      %p259 = pneg %p141
      %p260 = pneg %p165
      %p261 = pneg %p162
      %p262 = pneg %p191
      %p263 = pneg %p188
      %p264 = scmp.lt.s32.totalorder %s18, 1
      %s265 = scalar_select %p264, %s18, 1
      %s266 = smul.addr %s265, 2
      %s267 = smul.addr %s266, 4
      %s268 = scalar_lea.vmem %s7, %s267
      %p269 = scmp.lt.s32.totalorder %s18, 1
      %s270 = scalar_select %p269, %s18, 1
      %s271 = smul.addr %s270, 2
      %s272 = smul.addr %s271, 4
      %s273 = scalar_lea.vmem %s0, %s272
      %p274 = scmp.lt.s32.totalorder %s18, 1
      %s275 = scalar_select %p274, %s18, 1
      %s276 = smul.addr %s275, 2
      %s277 = smul.addr %s276, 4
      %s278 = scalar_lea.vmem %s7, %s277
      %280 = vst [vmem:[#allocation2] sm:$0xff] 0.0
      %281 = vst [vmem:[#allocation2 + $0x8] sm:$0xff] 0.0
      %282 = vst [vmem:[#allocation2 + $0x10] sm:$0x3] 0.0
      %v283 = vld [vmem:[%s273] sm:$0xf]
      %v284 = vld [vmem:[%s273 + $0x4] sm:$0xf]
      %v285 = vunpack.c.l.bf16 %v283
      %v286 = vunpack.c.l.bf16 %v284
      %287 = vst [vmem:[#allocation2 + $0x1] sm:$0xff] %v285
      %288 = vst [vmem:[#allocation2 + $0x9] sm:$0xff] %v286
      %v289 = vld [vmem:[#allocation2] sm:$0xff]
      %v290 = vld [vmem:[#allocation2 + $0x8] sm:$0xff]
      %v291 = vpack.c.bf16 %v290, %v289
      %v292 = vld [vmem:[%s1] sm:$0xf]
      %v293 = vld [vmem:[%s1 + $0x4] sm:$0xf]
      %v294 = vld [vmem:[%s1 + $0x8] sm:$0xf]
      %v295 = vld [vmem:[%s1 + $0xc] sm:$0xf]
      %v296 = vld [vmem:[%s1 + $0x10] sm:$0xf]
      %v297 = vld [vmem:[%s1 + $0x14] sm:$0xf]
      %v298 = vld [vmem:[%s1 + $0x18] sm:$0xf]
      %v299 = vld [vmem:[%s1 + $0x1c] sm:$0xf]
      %v300 = vld [vmem:[%s1 + $0x20] sm:$0xf]
      %v301 = vld [vmem:[%s1 + $0x24] sm:$0xf]
      %v302 = vld [vmem:[%s1 + $0x28] sm:$0xf]
      %v303 = vld [vmem:[%s1 + $0x2c] sm:$0xf]
      %v304 = vld [vmem:[%s1 + $0x30] sm:$0xf]
      %v305 = vld [vmem:[%s1 + $0x34] sm:$0xf]
      %v306 = vld [vmem:[%s1 + $0x38] sm:$0xf]
      %v307 = vld [vmem:[%s1 + $0x3c] sm:$0xf]
      %v308 = vld [vmem:[#allocation2 + $0x1] sm:$0xff]
      %v309 = vld [vmem:[#allocation2 + $0x9] sm:$0xff]
      %v310 = vpack.c.bf16 %v309, %v308
      %s311 = scalar_lea.vmem %s1, 64
      %v312 = vld [vmem:[%s311] sm:$0xf]
      %v313 = vld [vmem:[%s311 + $0x4] sm:$0xf]
      %v314 = vld [vmem:[%s311 + $0x8] sm:$0xf]
      %v315 = vld [vmem:[%s311 + $0xc] sm:$0xf]
      %v316 = vld [vmem:[%s311 + $0x10] sm:$0xf]
      %v317 = vld [vmem:[%s311 + $0x14] sm:$0xf]
      %v318 = vld [vmem:[%s311 + $0x18] sm:$0xf]
      %v319 = vld [vmem:[%s311 + $0x1c] sm:$0xf]
      %v320 = vld [vmem:[%s311 + $0x20] sm:$0xf]
      %v321 = vld [vmem:[%s311 + $0x24] sm:$0xf]
      %v322 = vld [vmem:[%s311 + $0x28] sm:$0xf]
      %v323 = vld [vmem:[%s311 + $0x2c] sm:$0xf]
      %v324 = vld [vmem:[%s311 + $0x30] sm:$0xf]
      %v325 = vld [vmem:[%s311 + $0x34] sm:$0xf]
      %v326 = vld [vmem:[%s311 + $0x38] sm:$0xf]
      %v327 = vld [vmem:[%s311 + $0x3c] sm:$0xf]
      %v344 = vunpack.c.l.b16 %v312
      %v345 = vunpack.c.l.b16 %v313
      %v346 = vunpack.c.l.b16 %v314
      %v347 = vunpack.c.l.b16 %v315
      %v348 = vunpack.c.l.b16 %v316
      %v349 = vunpack.c.l.b16 %v317
      %v350 = vunpack.c.l.b16 %v318
      %v351 = vunpack.c.l.b16 %v319
      %v352 = vunpack.c.l.b16 %v320
      %v353 = vunpack.c.l.b16 %v321
      %v354 = vunpack.c.l.b16 %v322
      %v355 = vunpack.c.l.b16 %v323
      %v356 = vunpack.c.l.b16 %v324
      %v357 = vunpack.c.l.b16 %v325
      %v358 = vunpack.c.l.b16 %v326
      %v359 = vunpack.c.l.b16 %v327
      %v360 = vpack.c.b16 %v345, %v344
      %v361 = vpack.c.b16 %v347, %v346
      %v362 = vpack.c.b16 %v349, %v348
      %v363 = vpack.c.b16 %v351, %v350
      %v364 = vpack.c.b16 %v353, %v352
      %v365 = vpack.c.b16 %v355, %v354
      %v366 = vpack.c.b16 %v357, %v356
      %v367 = vpack.c.b16 %v359, %v358
      %376 = vmatprep.subr.bf16.mxu0 0
      %377 = vmatpush1.bf16.msra.mxu0 %v367
      %378 = vmatprep.subr.bf16.mxu0 0
      %379 = vmatpush1.bf16.msra.mxu0 %v366
      %380 = vmatprep.subr.bf16.mxu0 0
      %381 = vmatpush1.bf16.msra.mxu0 %v365
      %382 = vmatprep.subr.bf16.mxu0 0
      %383 = vmatpush1.bf16.msra.mxu0 %v364
      %384 = vmatprep.subr.bf16.mxu0 0
      %385 = vmatpush1.bf16.msra.mxu0 %v363
      %386 = vmatprep.subr.bf16.mxu0 0
      %387 = vmatpush1.bf16.msra.mxu0 %v362
      %388 = vmatprep.subr.bf16.mxu0 0
      %389 = vmatpush1.bf16.msra.mxu0 %v361
      %390 = vmatprep.subr.bf16.mxu0 0
      %391 = vmatpush1.bf16.msra.mxu0 %v360
      %392 = vmatprep.subr.bf16.mxu0 0
      %393 = vmatpush2.bf16.msra.mxu0 0
      %394 = vmatprep.subr.bf16.mxu0 0
      %395 = vmatpush2.bf16.msra.mxu0 0
      %396 = vmatprep.subr.bf16.mxu0 0
      %397 = vmatpush2.bf16.msra.mxu0 0
      %398 = vmatprep.subr.bf16.mxu0 0
      %399 = vmatpush2.bf16.msra.mxu0 0
      %400 = vmatprep.subr.bf16.mxu0 0
      %401 = vmatpush2.bf16.msra.mxu0 0
      %402 = vmatprep.subr.bf16.mxu0 0
      %403 = vmatpush2.bf16.msra.mxu0 0
      %404 = vmatprep.subr.bf16.mxu0 0
      %405 = vmatpush2.bf16.msra.mxu0 0
      %406 = vmatprep.subr.bf16.mxu0 0
      %407 = vmatpush2.bf16.msra.mxu0 0
      %408 = vmatprep.mubr.bf16.mxu0 0
      %409 = vmatmul.mubr.bf16.gmra.mxu0 %v310
      %v410 = vpop.f32.mrf.mxu0
      %v411 = vadd.f32 0.0, %v410
      %v412 = vpop.f32.mrf.mxu0
      %v413 = vpop.f32.mrf.mxu0
      %v414 = vadd.f32 0.0, %v413
      %v415 = vpop.f32.mrf.mxu0
      %416 = vdwg.mxu0
      %v433 = vunpack.c.l.b16 %v292
      %v434 = vunpack.c.l.b16 %v293
      %v435 = vunpack.c.l.b16 %v294
      %v436 = vunpack.c.l.b16 %v295
      %v437 = vunpack.c.l.b16 %v296
      %v438 = vunpack.c.l.b16 %v297
      %v439 = vunpack.c.l.b16 %v298
      %v440 = vunpack.c.l.b16 %v299
      %v441 = vunpack.c.l.b16 %v300
      %v442 = vunpack.c.l.b16 %v301
      %v443 = vunpack.c.l.b16 %v302
      %v444 = vunpack.c.l.b16 %v303
      %v445 = vunpack.c.l.b16 %v304
      %v446 = vunpack.c.l.b16 %v305
      %v447 = vunpack.c.l.b16 %v306
      %v448 = vunpack.c.l.b16 %v307
      %v449 = vpack.c.b16 %v434, %v433
      %v450 = vpack.c.b16 %v436, %v435
      %v451 = vpack.c.b16 %v438, %v437
      %v452 = vpack.c.b16 %v440, %v439
      %v453 = vpack.c.b16 %v442, %v441
      %v454 = vpack.c.b16 %v444, %v443
      %v455 = vpack.c.b16 %v446, %v445
      %v456 = vpack.c.b16 %v448, %v447
      %465 = vmatprep.subr.bf16.mxu0 0
      %466 = vmatpush1.bf16.msra.mxu0 %v456
      %467 = vmatprep.subr.bf16.mxu0 0
      %468 = vmatpush1.bf16.msra.mxu0 %v455
      %469 = vmatprep.subr.bf16.mxu0 0
      %470 = vmatpush1.bf16.msra.mxu0 %v454
      %471 = vmatprep.subr.bf16.mxu0 0
      %472 = vmatpush1.bf16.msra.mxu0 %v453
      %473 = vmatprep.subr.bf16.mxu0 0
      %474 = vmatpush1.bf16.msra.mxu0 %v452
      %475 = vmatprep.subr.bf16.mxu0 0
      %476 = vmatpush1.bf16.msra.mxu0 %v451
      %477 = vmatprep.subr.bf16.mxu0 0
      %478 = vmatpush1.bf16.msra.mxu0 %v450
      %479 = vmatprep.subr.bf16.mxu0 0
      %480 = vmatpush1.bf16.msra.mxu0 %v449
      %481 = vmatprep.subr.bf16.mxu0 0
      %482 = vmatpush2.bf16.msra.mxu0 0
      %483 = vmatprep.subr.bf16.mxu0 0
      %484 = vmatpush2.bf16.msra.mxu0 0
      %485 = vmatprep.subr.bf16.mxu0 0
      %486 = vmatpush2.bf16.msra.mxu0 0
      %487 = vmatprep.subr.bf16.mxu0 0
      %488 = vmatpush2.bf16.msra.mxu0 0
      %489 = vmatprep.subr.bf16.mxu0 0
      %490 = vmatpush2.bf16.msra.mxu0 0
      %491 = vmatprep.subr.bf16.mxu0 0
      %492 = vmatpush2.bf16.msra.mxu0 0
      %493 = vmatprep.subr.bf16.mxu0 0
      %494 = vmatpush2.bf16.msra.mxu0 0
      %495 = vmatprep.subr.bf16.mxu0 0
      %496 = vmatpush2.bf16.msra.mxu0 0
      %497 = vmatprep.mubr.bf16.mxu0 0
      %498 = vmatmul.mubr.bf16.gmra.mxu0 %v291
      %v499 = vpop.f32.mrf.mxu0
      %v500 = vadd.f32 %v411, %v499
      %v501 = vpop.f32.mrf.mxu0
      %v502 = vpop.f32.mrf.mxu0
      %v503 = vadd.f32 %v414, %v502
      %v504 = vpop.f32.mrf.mxu0
      %505 = vdwg.mxu0
      %v506 = vld [vmem:[#allocation2 + $0x2] sm:$0xff]
      %v507 = vld [vmem:[#allocation2 + $0xa] sm:$0xff]
      %v508 = vpack.c.bf16 %v507, %v506
      %s509 = scalar_lea.vmem %s1, 128
      %v510 = vld [vmem:[%s509] sm:$0xf]
      %v511 = vld [vmem:[%s509 + $0x4] sm:$0xf]
      %v512 = vld [vmem:[%s509 + $0x8] sm:$0xf]
      %v513 = vld [vmem:[%s509 + $0xc] sm:$0xf]
      %v514 = vld [vmem:[%s509 + $0x10] sm:$0xf]
      %v515 = vld [vmem:[%s509 + $0x14] sm:$0xf]
      %v516 = vld [vmem:[%s509 + $0x18] sm:$0xf]
      %v517 = vld [vmem:[%s509 + $0x1c] sm:$0xf]
      %v518 = vld [vmem:[%s509 + $0x20] sm:$0xf]
      %v519 = vld [vmem:[%s509 + $0x24] sm:$0xf]
      %v520 = vld [vmem:[%s509 + $0x28] sm:$0xf]
      %v521 = vld [vmem:[%s509 + $0x2c] sm:$0xf]
      %v522 = vld [vmem:[%s509 + $0x30] sm:$0xf]
      %v523 = vld [vmem:[%s509 + $0x34] sm:$0xf]
      %v524 = vld [vmem:[%s509 + $0x38] sm:$0xf]
      %v525 = vld [vmem:[%s509 + $0x3c] sm:$0xf]
      %v542 = vunpack.c.l.b16 %v510
      %v543 = vunpack.c.l.b16 %v511
      %v544 = vunpack.c.l.b16 %v512
      %v545 = vunpack.c.l.b16 %v513
      %v546 = vunpack.c.l.b16 %v514
      %v547 = vunpack.c.l.b16 %v515
      %v548 = vunpack.c.l.b16 %v516
      %v549 = vunpack.c.l.b16 %v517
      %v550 = vunpack.c.l.b16 %v518
      %v551 = vunpack.c.l.b16 %v519
      %v552 = vunpack.c.l.b16 %v520
      %v553 = vunpack.c.l.b16 %v521
      %v554 = vunpack.c.l.b16 %v522
      %v555 = vunpack.c.l.b16 %v523
      %v556 = vunpack.c.l.b16 %v524
      %v557 = vunpack.c.l.b16 %v525
      %v558 = vpack.c.b16 %v543, %v542
      %v559 = vpack.c.b16 %v545, %v544
      %v560 = vpack.c.b16 %v547, %v546
      %v561 = vpack.c.b16 %v549, %v548
      %v562 = vpack.c.b16 %v551, %v550
      %v563 = vpack.c.b16 %v553, %v552
      %v564 = vpack.c.b16 %v555, %v554
      %v565 = vpack.c.b16 %v557, %v556
      %574 = vmatprep.subr.bf16.mxu0 0
      %575 = vmatpush1.bf16.msra.mxu0 %v565
      %576 = vmatprep.subr.bf16.mxu0 0
      %577 = vmatpush1.bf16.msra.mxu0 %v564
      %578 = vmatprep.subr.bf16.mxu0 0
      %579 = vmatpush1.bf16.msra.mxu0 %v563
      %580 = vmatprep.subr.bf16.mxu0 0
      %581 = vmatpush1.bf16.msra.mxu0 %v562
      %582 = vmatprep.subr.bf16.mxu0 0
      %583 = vmatpush1.bf16.msra.mxu0 %v561
      %584 = vmatprep.subr.bf16.mxu0 0
      %585 = vmatpush1.bf16.msra.mxu0 %v560
      %586 = vmatprep.subr.bf16.mxu0 0
      %587 = vmatpush1.bf16.msra.mxu0 %v559
      %588 = vmatprep.subr.bf16.mxu0 0
      %589 = vmatpush1.bf16.msra.mxu0 %v558
      %590 = vmatprep.subr.bf16.mxu0 0
      %591 = vmatpush2.bf16.msra.mxu0 0
      %592 = vmatprep.subr.bf16.mxu0 0
      %593 = vmatpush2.bf16.msra.mxu0 0
      %594 = vmatprep.subr.bf16.mxu0 0
      %595 = vmatpush2.bf16.msra.mxu0 0
      %596 = vmatprep.subr.bf16.mxu0 0
      %597 = vmatpush2.bf16.msra.mxu0 0
      %598 = vmatprep.subr.bf16.mxu0 0
      %599 = vmatpush2.bf16.msra.mxu0 0
      %600 = vmatprep.subr.bf16.mxu0 0
      %601 = vmatpush2.bf16.msra.mxu0 0
      %602 = vmatprep.subr.bf16.mxu0 0
      %603 = vmatpush2.bf16.msra.mxu0 0
      %604 = vmatprep.subr.bf16.mxu0 0
      %605 = vmatpush2.bf16.msra.mxu0 0
      %606 = vmatprep.mubr.bf16.mxu0 0
      %607 = vmatmul.mubr.bf16.gmra.mxu0 %v508
      %v608 = vpop.f32.mrf.mxu0
      %v609 = vadd.f32 0.0, %v608
      %v610 = vpop.f32.mrf.mxu0
      %v611 = vpop.f32.mrf.mxu0
      %v612 = vadd.f32 0.0, %v611
      %v613 = vpop.f32.mrf.mxu0
      %614 = vdwg.mxu0
      %v615 = vadd.f32 %v500, %v609
      %v616 = vadd.f32 %v503, %v612
      %v617 = vld [vmem:[%s2] sm:$0x1]
      %v619 = vlaneseq
      %v620 = vshrl.u32 %v619, 7
      %v621 = vsub.s32 0, %v620
      %v622 = vrot.slane %v617, %v621
      %v624 = vmul.f32 %v615, %v622
      %v625 = vmul.f32 %v616, %v622
      %v626 = vld [vmem:[%s3] sm:$0x1]
      %v628 = vlaneseq
      %v629 = vshrl.u32 %v628, 7
      %v630 = vsub.s32 0, %v629
      %v631 = vrot.slane %v626, %v630
      %v633 = vadd.f32 %v624, %v631
      %v634 = vadd.f32 %v625, %v631
      %v635 = vmax.f32 %v633, 0.0
      %v636 = vmax.f32 %v634, 0.0
      %v637 = vpack.c.bf16 %v636, %v635
      %v638 = vld [vmem:[%s4] sm:$0xf]
      %v639 = vld [vmem:[%s4 + $0x4] sm:$0xf]
      %v640 = vld [vmem:[%s4 + $0x8] sm:$0xf]
      %v641 = vld [vmem:[%s4 + $0xc] sm:$0xf]
      %v646 = vunpack.c.l.b16 %v638
      %v647 = vunpack.c.l.b16 %v639
      %v648 = vunpack.c.l.b16 %v640
      %v649 = vunpack.c.l.b16 %v641
      %v650 = vpack.c.b16 %v647, %v646
      %v651 = vpack.c.b16 %v649, %v648
      %vm654 = vcmask 261120
      %v656 = vsel %vm654, %v637, 0
      %658 = vmatprep.subr.bf16.mxu0 0
      %659 = vmatpush1.bf16.msra.mxu0 0
      %660 = vmatprep.subr.bf16.mxu0 0
      %661 = vmatpush1.bf16.msra.mxu0 0
      %662 = vmatprep.subr.bf16.mxu0 0
      %663 = vmatpush1.bf16.msra.mxu0 0
      %664 = vmatprep.subr.bf16.mxu0 0
      %665 = vmatpush1.bf16.msra.mxu0 0
      %666 = vmatprep.subr.bf16.mxu0 0
      %667 = vmatpush1.bf16.msra.mxu0 0
      %668 = vmatprep.subr.bf16.mxu0 0
      %669 = vmatpush1.bf16.msra.mxu0 0
      %670 = vmatprep.subr.bf16.mxu0 0
      %671 = vmatpush1.bf16.msra.mxu0 %v651
      %672 = vmatprep.subr.bf16.mxu0 0
      %673 = vmatpush1.bf16.msra.mxu0 %v650
      %674 = vmatprep.subr.bf16.mxu0 0
      %675 = vmatpush2.bf16.msra.mxu0 0
      %676 = vmatprep.subr.bf16.mxu0 0
      %677 = vmatpush2.bf16.msra.mxu0 0
      %678 = vmatprep.subr.bf16.mxu0 0
      %679 = vmatpush2.bf16.msra.mxu0 0
      %680 = vmatprep.subr.bf16.mxu0 0
      %681 = vmatpush2.bf16.msra.mxu0 0
      %682 = vmatprep.subr.bf16.mxu0 0
      %683 = vmatpush2.bf16.msra.mxu0 0
      %684 = vmatprep.subr.bf16.mxu0 0
      %685 = vmatpush2.bf16.msra.mxu0 0
      %686 = vmatprep.subr.bf16.mxu0 0
      %687 = vmatpush2.bf16.msra.mxu0 0
      %688 = vmatprep.subr.bf16.mxu0 0
      %689 = vmatpush2.bf16.msra.mxu0 0
      %690 = vmatprep.mubr.bf16.mxu0 0
      %691 = vmatmul.mubr.bf16.gmra.mxu0 %v656
      %v692 = vpop.f32.mrf.mxu0
      %v693 = vadd.f32 0.0, %v692
      %v694 = vpop.f32.mrf.mxu0
      %v695 = vpop.f32.mrf.mxu0
      %v696 = vadd.f32 0.0, %v695
      %v697 = vpop.f32.mrf.mxu0
      %698 = vdwg.mxu0
      %v699 = vld [vmem:[%s5] sm:$0x1]
      %v701 = vlaneseq
      %v702 = vshrl.u32 %v701, 7
      %v703 = vsub.s32 0, %v702
      %v704 = vrot.slane %v699, %v703
      %v706 = vmul.f32 %v693, %v704
      %v707 = vmul.f32 %v696, %v704
      %v708 = vld [vmem:[%s6] sm:$0x1]
      %v710 = vlaneseq
      %v711 = vshrl.u32 %v710, 7
      %v712 = vsub.s32 0, %v711
      %v713 = vrot.slane %v708, %v712
      %v715 = vadd.f32 %v706, %v713
      %v716 = vadd.f32 %v707, %v713
      %v717 = vmax.f32 %v715, 0.0
      %v718 = vmax.f32 %v716, 0.0
      %v719 = vpack.c.bf16 %v718, %v717
      %v721 = vunpack.c.l.b16 %v719
      %v722 = vunpack.c.h.b16 %v719
      %v723 = vpack.c.b16 %v721, %v721
      %v724 = vpack.c.b16 %v722, %v722
      %vm727 = vcmask 257024
      %728 = vst.msk [vmem:[%s278] sm:$0xf] %vm727, %v723
      %729 = vst.msk [vmem:[%s278 + $0x4] sm:$0xf] %vm727, %v724
      %p730 = scmp.lt.s32.totalorder %s18, 1
      %s731 = scalar_select %p730, %s18, 1
      %s732 = smul.addr %s731, 2
      %s733 = smul.addr %s732, 4
      %s734 = scalar_lea.vmem %s7, %s733
      // Predicated region
      $region49: #{_lambda_.12} parent=47 // pred_check
        %p735 = pneg %p188
      $region50: #{_lambda_.12} parent=47 // pred_check_branch
        %737 = sbr.rel (%p735) target = $region52
      $region51: #{_lambda_.12} parent=47 // pred_region
        _
      $region52: #{_lambda_.12} parent=47 // pred_fallthru
        _
    $region48: #{_lambda_.12} parent=5 // pred_fallthru
      _
    %p738 = scmp.le.s32.totalorder 2, %s13
    // Predicated region
    $region53: #{_lambda_.12} parent=5 // pred_check
      %p739 = pneg %p738
    $region54: #{_lambda_.12} parent=5 // pred_check_branch
      %741 = sbr.rel (%p739) target = $region56
    $region55: #{_lambda_.12} parent=5 // pred_region
      %s742 = ssub.s32 %s13, 2
      // Predicated region
      $region57: #{_lambda_.12} parent=55 // pred_check
        %p743 = pneg %p194
      $region58: #{_lambda_.12} parent=55 // pred_check_branch
        %745 = sbr.rel (%p743) target = $region60
      $region59: #{_lambda_.12} parent=55 // pred_region
        %p746 = scmp.lt.s32.totalorder %s19, 1
        %s747 = scalar_select %p746, %s19, 1
        %s748 = smul.addr %s747, 2
        %s749 = smul.addr %s748, 4
        %s750 = scalar_lea.vmem %s7, %s749
      $region60: #{_lambda_.12} parent=55 // pred_fallthru
        _
    $region56: #{_lambda_.12} parent=5 // pred_fallthru
      _
  $region6: #{_lambda_.12} parent=0 // loop_footer
    %s17 = sadd.s32 1, %s13
  $region7: #{_lambda_.12} parent=0 // loop_footer_branch
    %12 = sbr.rel target = $region3
  $region8: #{_lambda_.12} parent=0 // loop_exit
    _

// kernel: _lambda_.9
$region0: #{_lambda_.9}
  #allocation0 [shape = 'u32[]', space=smem, size = 0x4, offset = 0x4, fixed_abs, tag = 'smem constant byte address 0x4 - core index']
  #allocation1 [shape = 'u32[144,128]{1,0:T(1,128)}', space=vmem, size = 0x12000, scoped, tag = 'internal scratch']
  #allocation2 [shape = 'f32[18,128]{1,0:T(8,128)}', space=vmem, size = 0x3000, scoped, tag = 'scratch operand']
  %s0 = inlined_call_operand.vmem [shape: bf16[2,16,128], index: 0, kind: input, shape index: {}]
  %s1 = inlined_call_operand.vmem [shape: bf16[3,128,128], index: 1, kind: input, shape index: {}]
  %s2 = inlined_call_operand.vmem [shape: f32[1,128], index: 2, kind: input, shape index: {}]
  %s3 = inlined_call_operand.vmem [shape: f32[1,128], index: 3, kind: input, shape index: {}]
  %s4 = inlined_call_operand.vmem [shape: bf16[2,16,128], index: 4, kind: output, shape index: {}]
  %s5 = sld [smem:[#allocation0]]
  $region49: #{_lambda_.9} parent=0
    _
  %s7 = ssub.s32 1, %s5
  %s8 = scalar_select 0, %s7, %s5
  loop: start=0, step=1, limit=4
  $region2: #{_lambda_.9} parent=0 // loop_pre_header
    _
  $region3: #{_lambda_.9} parent=0 // loop_header
    %s10 = sphi 0, %s14
    %p11 = scmp.ge.s32.totalorder %s10, 4
    %s20 = sphi 0, %s22
    %s23 = sphi 0, %s20
    %s24 = sphi 0, %s23
    %s40 = sphi 0, %s24
    %s44 = sphi 0, %s44
    %s46 = sphi 0, %s44
    %s47 = sphi 0, %s46
    %s61 = sphi 0, %s47
    %s65 = sphi 0, %s65
    %s67 = sphi 0, %s65
    %s68 = sphi 0, %s67
    %s82 = sphi 0, %s68
    %s86 = sphi 0, %s86
    %s88 = sphi 0, %s86
    %s89 = sphi 0, %s88
    %s103 = sphi 0, %s89
    %s109 = sphi 0, %s111
    %s112 = sphi 0, %s109
    %s113 = sphi 0, %s112
    %s129 = sphi 0, %s113
  $region4: #{_lambda_.9} parent=0 // loop_header_branch
    %13 = sbr.rel (%p11) target = $region8
  $region5: #{_lambda_.9} parent=0 // loop_body
    %s15 = ssub.s32 %s10, 1
    %s16 = ssub.s32 %s10, 2
    %s17 = sadd.s32 %s10, 1
    %s18 = ssub.s32 %s10, %s17
    %p19 = scmp.eq.s32.totalorder %s18, 0
    %s21 = sadd.s32 %s20, 1
    %s22 = scalar_select %p19, %s20, %s21
    %p25 = pneg %p19
    %p26 = scmp.eq.s32.totalorder %s10, 1
    %p27 = por %p25, %p26
    %p28 = scmp.ne.s32.totalorder %s20, %s23
    %p29 = scmp.eq.s32.totalorder %s10, 0
    %p30 = por %p28, %p29
    %p31 = scmp.ne.s32.totalorder %s20, %s23
    %p32 = scmp.eq.s32.totalorder %s15, 1
    %p33 = por %p31, %p32
    %p34 = scmp.ne.s32.totalorder %s23, %s24
    %p35 = scmp.eq.s32.totalorder %s15, 0
    %p36 = por %p34, %p35
    %p37 = scmp.ne.s32.totalorder %s23, %s24
    %p38 = scmp.eq.s32.totalorder %s16, 1
    %p39 = por %p37, %p38
    %p41 = scmp.ne.s32.totalorder %s24, %s40
    %p42 = scmp.eq.s32.totalorder %s16, 0
    %p43 = por %p41, %p42
    %s45 = sadd.s32 %s44, 1
    %p48 = scmp.eq.s32.totalorder %s10, 1
    %p49 = scmp.ne.s32.totalorder %s44, %s46
    %p50 = scmp.eq.s32.totalorder %s10, 0
    %p51 = por %p49, %p50
    %p52 = scmp.ne.s32.totalorder %s44, %s46
    %p53 = scmp.eq.s32.totalorder %s15, 1
    %p54 = por %p52, %p53
    %p55 = scmp.ne.s32.totalorder %s46, %s47
    %p56 = scmp.eq.s32.totalorder %s15, 0
    %p57 = por %p55, %p56
    %p58 = scmp.ne.s32.totalorder %s46, %s47
    %p59 = scmp.eq.s32.totalorder %s16, 1
    %p60 = por %p58, %p59
    %p62 = scmp.ne.s32.totalorder %s47, %s61
    %p63 = scmp.eq.s32.totalorder %s16, 0
    %p64 = por %p62, %p63
    %s66 = sadd.s32 %s65, 1
    %p69 = scmp.eq.s32.totalorder %s10, 1
    %p70 = scmp.ne.s32.totalorder %s65, %s67
    %p71 = scmp.eq.s32.totalorder %s10, 0
    %p72 = por %p70, %p71
    %p73 = scmp.ne.s32.totalorder %s65, %s67
    %p74 = scmp.eq.s32.totalorder %s15, 1
    %p75 = por %p73, %p74
    %p76 = scmp.ne.s32.totalorder %s67, %s68
    %p77 = scmp.eq.s32.totalorder %s15, 0
    %p78 = por %p76, %p77
    %p79 = scmp.ne.s32.totalorder %s67, %s68
    %p80 = scmp.eq.s32.totalorder %s16, 1
    %p81 = por %p79, %p80
    %p83 = scmp.ne.s32.totalorder %s68, %s82
    %p84 = scmp.eq.s32.totalorder %s16, 0
    %p85 = por %p83, %p84
    %s87 = sadd.s32 %s86, 1
    %p90 = scmp.eq.s32.totalorder %s10, 1
    %p91 = scmp.ne.s32.totalorder %s86, %s88
    %p92 = scmp.eq.s32.totalorder %s10, 0
    %p93 = por %p91, %p92
    %p94 = scmp.ne.s32.totalorder %s86, %s88
    %p95 = scmp.eq.s32.totalorder %s15, 1
    %p96 = por %p94, %p95
    %p97 = scmp.ne.s32.totalorder %s88, %s89
    %p98 = scmp.eq.s32.totalorder %s15, 0
    %p99 = por %p97, %p98
    %p100 = scmp.ne.s32.totalorder %s88, %s89
    %p101 = scmp.eq.s32.totalorder %s16, 1
    %p102 = por %p100, %p101
    %p104 = scmp.ne.s32.totalorder %s89, %s103
    %p105 = scmp.eq.s32.totalorder %s16, 0
    %p106 = por %p104, %p105
    %s107 = ssub.s32 %s10, %s17
    %p108 = scmp.eq.s32.totalorder %s107, 0
    %s110 = sadd.s32 %s109, 1
    %s111 = scalar_select %p108, %s109, %s110
    %p114 = pneg %p108
    %p115 = scmp.eq.s32.totalorder %s10, 1
    %p116 = por %p114, %p115
    %p117 = scmp.ne.s32.totalorder %s109, %s112
    %p118 = scmp.eq.s32.totalorder %s10, 0
    %p119 = por %p117, %p118
    %p120 = scmp.ne.s32.totalorder %s109, %s112
    %p121 = scmp.eq.s32.totalorder %s15, 1
    %p122 = por %p120, %p121
    %p123 = scmp.ne.s32.totalorder %s112, %s113
    %p124 = scmp.eq.s32.totalorder %s15, 0
    %p125 = por %p123, %p124
    %p126 = scmp.ne.s32.totalorder %s112, %s113
    %p127 = scmp.eq.s32.totalorder %s16, 1
    %p128 = por %p126, %p127
    %p130 = scmp.ne.s32.totalorder %s113, %s129
    %p131 = scmp.eq.s32.totalorder %s16, 0
    %p132 = por %p130, %p131
    %p133 = scmp.le.s32.totalorder 1, %s10
    %p134 = scmp.lt.s32.totalorder %s10, 3
    %p135 = pnand %p133, %p134
    %p136 = pneg %p135
    // Predicated region
    $region9: #{_lambda_.9} parent=5 // pred_check
      _
    $region10: #{_lambda_.9} parent=5 // pred_check_branch
      %138 = sbr.rel (%p135) target = $region12
    $region11: #{_lambda_.9} parent=5 // pred_region
      %s139 = ssub.s32 %s10, 1
      // Predicated region
      $region13: #{_lambda_.9} parent=11 // pred_check
        %p140 = pneg %p57
      $region14: #{_lambda_.9} parent=11 // pred_check_branch
        %142 = sbr.rel (%p140) target = $region16
      $region15: #{_lambda_.9} parent=11 // pred_region
        _
      $region16: #{_lambda_.9} parent=11 // pred_fallthru
        _
      // Predicated region
      $region17: #{_lambda_.9} parent=11 // pred_check
        %p143 = pneg %p78
      $region18: #{_lambda_.9} parent=11 // pred_check_branch
        %145 = sbr.rel (%p143) target = $region20
      $region19: #{_lambda_.9} parent=11 // pred_region
        _
      $region20: #{_lambda_.9} parent=11 // pred_fallthru
        _
      // Predicated region
      $region21: #{_lambda_.9} parent=11 // pred_check
        %p146 = pneg %p99
      $region22: #{_lambda_.9} parent=11 // pred_check_branch
        %148 = sbr.rel (%p146) target = $region24
      $region23: #{_lambda_.9} parent=11 // pred_region
        _
      $region24: #{_lambda_.9} parent=11 // pred_fallthru
        _
    $region12: #{_lambda_.9} parent=5 // pred_fallthru
      _
    %p149 = scmp.lt.s32.totalorder %s10, 2
    // Predicated region
    $region25: #{_lambda_.9} parent=5 // pred_check
      %p150 = pneg %p149
    $region26: #{_lambda_.9} parent=5 // pred_check_branch
      %152 = sbr.rel (%p150) target = $region28
    $region27: #{_lambda_.9} parent=5 // pred_region
      // Predicated region
      $region29: #{_lambda_.9} parent=27 // pred_check
        %p153 = pneg %p30
      $region30: #{_lambda_.9} parent=27 // pred_check_branch
        %155 = sbr.rel (%p153) target = $region32
      $region31: #{_lambda_.9} parent=27 // pred_region
        %p156 = scmp.lt.s32.totalorder %s10, 1
        %s157 = scalar_select %p156, %s10, 1
        %s158 = smul.addr %s157, 2
        %s159 = smul.addr %s158, 4
        %s160 = scalar_lea.vmem %s0, %s159
      $region32: #{_lambda_.9} parent=27 // pred_fallthru
        _
    $region28: #{_lambda_.9} parent=5 // pred_fallthru
      _
    %p161 = scmp.le.s32.totalorder 1, %s10
    %p162 = scmp.lt.s32.totalorder %s10, 3
    %p163 = pnand %p161, %p162
    %p164 = pneg %p163
    // Predicated region
    $region33: #{_lambda_.9} parent=5 // pred_check
      _
    $region34: #{_lambda_.9} parent=5 // pred_check_branch
      %166 = sbr.rel (%p163) target = $region36
    $region35: #{_lambda_.9} parent=5 // pred_region
      %s167 = ssub.s32 %s10, 1
      %p168 = scmp.lt.s32.totalorder %s15, 1
      %s169 = scalar_select %p168, %s15, 1
      %s170 = smul.addr %s169, 2
      %s171 = smul.addr %s170, 4
      %s172 = scalar_lea.vmem %s0, %s171
      %p173 = pneg %p36
      %p174 = pneg %p33
      %p175 = pneg %p57
      %p176 = pneg %p54
      %p177 = pneg %p78
      %p178 = pneg %p75
      %p179 = pneg %p99
      %p180 = pneg %p96
      %p181 = pneg %p125
      %p182 = pneg %p122
      %p183 = scmp.lt.s32.totalorder %s15, 1
      %s184 = scalar_select %p183, %s15, 1
      %s185 = smul.addr %s184, 2
      %s186 = smul.addr %s185, 4
      %s187 = scalar_lea.vmem %s4, %s186
      %p188 = scmp.lt.s32.totalorder %s15, 1
      %s189 = scalar_select %p188, %s15, 1
      %s190 = smul.addr %s189, 2
      %s191 = smul.addr %s190, 4
      %s192 = scalar_lea.vmem %s0, %s191
      %p193 = scmp.lt.s32.totalorder %s15, 1
      %s194 = scalar_select %p193, %s15, 1
      %s195 = smul.addr %s194, 2
      %s196 = smul.addr %s195, 4
      %s197 = scalar_lea.vmem %s4, %s196
      %199 = vst [vmem:[#allocation2] sm:$0xff] 0.0
      %200 = vst [vmem:[#allocation2 + $0x8] sm:$0xff] 0.0
      %201 = vst [vmem:[#allocation2 + $0x10] sm:$0x3] 0.0
      %v202 = vld [vmem:[%s192] sm:$0xf]
      %v203 = vld [vmem:[%s192 + $0x4] sm:$0xf]
      %v204 = vunpack.c.l.bf16 %v202
      %v205 = vunpack.c.l.bf16 %v203
      %206 = vst [vmem:[#allocation2 + $0x1] sm:$0xff] %v204
      %207 = vst [vmem:[#allocation2 + $0x9] sm:$0xff] %v205
      %v208 = vld [vmem:[#allocation2] sm:$0xff]
      %v209 = vld [vmem:[#allocation2 + $0x8] sm:$0xff]
      %v210 = vpack.c.bf16 %v209, %v208
      %v211 = vld [vmem:[%s1] sm:$0xf]
      %v212 = vld [vmem:[%s1 + $0x4] sm:$0xf]
      %v213 = vld [vmem:[%s1 + $0x8] sm:$0xf]
      %v214 = vld [vmem:[%s1 + $0xc] sm:$0xf]
      %v215 = vld [vmem:[%s1 + $0x10] sm:$0xf]
      %v216 = vld [vmem:[%s1 + $0x14] sm:$0xf]
      %v217 = vld [vmem:[%s1 + $0x18] sm:$0xf]
      %v218 = vld [vmem:[%s1 + $0x1c] sm:$0xf]
      %v219 = vld [vmem:[%s1 + $0x20] sm:$0xf]
      %v220 = vld [vmem:[%s1 + $0x24] sm:$0xf]
      %v221 = vld [vmem:[%s1 + $0x28] sm:$0xf]
      %v222 = vld [vmem:[%s1 + $0x2c] sm:$0xf]
      %v223 = vld [vmem:[%s1 + $0x30] sm:$0xf]
      %v224 = vld [vmem:[%s1 + $0x34] sm:$0xf]
      %v225 = vld [vmem:[%s1 + $0x38] sm:$0xf]
      %v226 = vld [vmem:[%s1 + $0x3c] sm:$0xf]
      %v227 = vld [vmem:[#allocation2 + $0x1] sm:$0xff]
      %v228 = vld [vmem:[#allocation2 + $0x9] sm:$0xff]
      %v229 = vpack.c.bf16 %v228, %v227
      %s230 = scalar_lea.vmem %s1, 64
      %v231 = vld [vmem:[%s230] sm:$0xf]
      %v232 = vld [vmem:[%s230 + $0x4] sm:$0xf]
      %v233 = vld [vmem:[%s230 + $0x8] sm:$0xf]
      %v234 = vld [vmem:[%s230 + $0xc] sm:$0xf]
      %v235 = vld [vmem:[%s230 + $0x10] sm:$0xf]
      %v236 = vld [vmem:[%s230 + $0x14] sm:$0xf]
      %v237 = vld [vmem:[%s230 + $0x18] sm:$0xf]
      %v238 = vld [vmem:[%s230 + $0x1c] sm:$0xf]
      %v239 = vld [vmem:[%s230 + $0x20] sm:$0xf]
      %v240 = vld [vmem:[%s230 + $0x24] sm:$0xf]
      %v241 = vld [vmem:[%s230 + $0x28] sm:$0xf]
      %v242 = vld [vmem:[%s230 + $0x2c] sm:$0xf]
      %v243 = vld [vmem:[%s230 + $0x30] sm:$0xf]
      %v244 = vld [vmem:[%s230 + $0x34] sm:$0xf]
      %v245 = vld [vmem:[%s230 + $0x38] sm:$0xf]
      %v246 = vld [vmem:[%s230 + $0x3c] sm:$0xf]
      %v263 = vunpack.c.l.b16 %v231
      %v264 = vunpack.c.l.b16 %v232
      %v265 = vunpack.c.l.b16 %v233
      %v266 = vunpack.c.l.b16 %v234
      %v267 = vunpack.c.l.b16 %v235
      %v268 = vunpack.c.l.b16 %v236
      %v269 = vunpack.c.l.b16 %v237
      %v270 = vunpack.c.l.b16 %v238
      %v271 = vunpack.c.l.b16 %v239
      %v272 = vunpack.c.l.b16 %v240
      %v273 = vunpack.c.l.b16 %v241
      %v274 = vunpack.c.l.b16 %v242
      %v275 = vunpack.c.l.b16 %v243
      %v276 = vunpack.c.l.b16 %v244
      %v277 = vunpack.c.l.b16 %v245
      %v278 = vunpack.c.l.b16 %v246
      %v279 = vpack.c.b16 %v264, %v263
      %v280 = vpack.c.b16 %v266, %v265
      %v281 = vpack.c.b16 %v268, %v267
      %v282 = vpack.c.b16 %v270, %v269
      %v283 = vpack.c.b16 %v272, %v271
      %v284 = vpack.c.b16 %v274, %v273
      %v285 = vpack.c.b16 %v276, %v275
      %v286 = vpack.c.b16 %v278, %v277
      %295 = vmatprep.subr.bf16.mxu0 0
      %296 = vmatpush1.bf16.msra.mxu0 %v286
      %297 = vmatprep.subr.bf16.mxu0 0
      %298 = vmatpush1.bf16.msra.mxu0 %v285
      %299 = vmatprep.subr.bf16.mxu0 0
      %300 = vmatpush1.bf16.msra.mxu0 %v284
      %301 = vmatprep.subr.bf16.mxu0 0
      %302 = vmatpush1.bf16.msra.mxu0 %v283
      %303 = vmatprep.subr.bf16.mxu0 0
      %304 = vmatpush1.bf16.msra.mxu0 %v282
      %305 = vmatprep.subr.bf16.mxu0 0
      %306 = vmatpush1.bf16.msra.mxu0 %v281
      %307 = vmatprep.subr.bf16.mxu0 0
      %308 = vmatpush1.bf16.msra.mxu0 %v280
      %309 = vmatprep.subr.bf16.mxu0 0
      %310 = vmatpush1.bf16.msra.mxu0 %v279
      %311 = vmatprep.subr.bf16.mxu0 0
      %312 = vmatpush2.bf16.msra.mxu0 0
      %313 = vmatprep.subr.bf16.mxu0 0
      %314 = vmatpush2.bf16.msra.mxu0 0
      %315 = vmatprep.subr.bf16.mxu0 0
      %316 = vmatpush2.bf16.msra.mxu0 0
      %317 = vmatprep.subr.bf16.mxu0 0
      %318 = vmatpush2.bf16.msra.mxu0 0
      %319 = vmatprep.subr.bf16.mxu0 0
      %320 = vmatpush2.bf16.msra.mxu0 0
      %321 = vmatprep.subr.bf16.mxu0 0
      %322 = vmatpush2.bf16.msra.mxu0 0
      %323 = vmatprep.subr.bf16.mxu0 0
      %324 = vmatpush2.bf16.msra.mxu0 0
      %325 = vmatprep.subr.bf16.mxu0 0
      %326 = vmatpush2.bf16.msra.mxu0 0
      %327 = vmatprep.mubr.bf16.mxu0 0
      %328 = vmatmul.mubr.bf16.gmra.mxu0 %v229
      %v329 = vpop.f32.mrf.mxu0
      %v330 = vadd.f32 0.0, %v329
      %v331 = vpop.f32.mrf.mxu0
      %v332 = vpop.f32.mrf.mxu0
      %v333 = vadd.f32 0.0, %v332
      %v334 = vpop.f32.mrf.mxu0
      %335 = vdwg.mxu0
      %v352 = vunpack.c.l.b16 %v211
      %v353 = vunpack.c.l.b16 %v212
      %v354 = vunpack.c.l.b16 %v213
      %v355 = vunpack.c.l.b16 %v214
      %v356 = vunpack.c.l.b16 %v215
      %v357 = vunpack.c.l.b16 %v216
      %v358 = vunpack.c.l.b16 %v217
      %v359 = vunpack.c.l.b16 %v218
      %v360 = vunpack.c.l.b16 %v219
      %v361 = vunpack.c.l.b16 %v220
      %v362 = vunpack.c.l.b16 %v221
      %v363 = vunpack.c.l.b16 %v222
      %v364 = vunpack.c.l.b16 %v223
      %v365 = vunpack.c.l.b16 %v224
      %v366 = vunpack.c.l.b16 %v225
      %v367 = vunpack.c.l.b16 %v226
      %v368 = vpack.c.b16 %v353, %v352
      %v369 = vpack.c.b16 %v355, %v354
      %v370 = vpack.c.b16 %v357, %v356
      %v371 = vpack.c.b16 %v359, %v358
      %v372 = vpack.c.b16 %v361, %v360
      %v373 = vpack.c.b16 %v363, %v362
      %v374 = vpack.c.b16 %v365, %v364
      %v375 = vpack.c.b16 %v367, %v366
      %384 = vmatprep.subr.bf16.mxu0 0
      %385 = vmatpush1.bf16.msra.mxu0 %v375
      %386 = vmatprep.subr.bf16.mxu0 0
      %387 = vmatpush1.bf16.msra.mxu0 %v374
      %388 = vmatprep.subr.bf16.mxu0 0
      %389 = vmatpush1.bf16.msra.mxu0 %v373
      %390 = vmatprep.subr.bf16.mxu0 0
      %391 = vmatpush1.bf16.msra.mxu0 %v372
      %392 = vmatprep.subr.bf16.mxu0 0
      %393 = vmatpush1.bf16.msra.mxu0 %v371
      %394 = vmatprep.subr.bf16.mxu0 0
      %395 = vmatpush1.bf16.msra.mxu0 %v370
      %396 = vmatprep.subr.bf16.mxu0 0
      %397 = vmatpush1.bf16.msra.mxu0 %v369
      %398 = vmatprep.subr.bf16.mxu0 0
      %399 = vmatpush1.bf16.msra.mxu0 %v368
      %400 = vmatprep.subr.bf16.mxu0 0
      %401 = vmatpush2.bf16.msra.mxu0 0
      %402 = vmatprep.subr.bf16.mxu0 0
      %403 = vmatpush2.bf16.msra.mxu0 0
      %404 = vmatprep.subr.bf16.mxu0 0
      %405 = vmatpush2.bf16.msra.mxu0 0
      %406 = vmatprep.subr.bf16.mxu0 0
      %407 = vmatpush2.bf16.msra.mxu0 0
      %408 = vmatprep.subr.bf16.mxu0 0
      %409 = vmatpush2.bf16.msra.mxu0 0
      %410 = vmatprep.subr.bf16.mxu0 0
      %411 = vmatpush2.bf16.msra.mxu0 0
      %412 = vmatprep.subr.bf16.mxu0 0
      %413 = vmatpush2.bf16.msra.mxu0 0
      %414 = vmatprep.subr.bf16.mxu0 0
      %415 = vmatpush2.bf16.msra.mxu0 0
      %416 = vmatprep.mubr.bf16.mxu0 0
      %417 = vmatmul.mubr.bf16.gmra.mxu0 %v210
      %v418 = vpop.f32.mrf.mxu0
      %v419 = vadd.f32 %v330, %v418
      %v420 = vpop.f32.mrf.mxu0
      %v421 = vpop.f32.mrf.mxu0
      %v422 = vadd.f32 %v333, %v421
      %v423 = vpop.f32.mrf.mxu0
      %424 = vdwg.mxu0
      %v425 = vld [vmem:[#allocation2 + $0x2] sm:$0xff]
      %v426 = vld [vmem:[#allocation2 + $0xa] sm:$0xff]
      %v427 = vpack.c.bf16 %v426, %v425
      %s428 = scalar_lea.vmem %s1, 128
      %v429 = vld [vmem:[%s428] sm:$0xf]
      %v430 = vld [vmem:[%s428 + $0x4] sm:$0xf]
      %v431 = vld [vmem:[%s428 + $0x8] sm:$0xf]
      %v432 = vld [vmem:[%s428 + $0xc] sm:$0xf]
      %v433 = vld [vmem:[%s428 + $0x10] sm:$0xf]
      %v434 = vld [vmem:[%s428 + $0x14] sm:$0xf]
      %v435 = vld [vmem:[%s428 + $0x18] sm:$0xf]
      %v436 = vld [vmem:[%s428 + $0x1c] sm:$0xf]
      %v437 = vld [vmem:[%s428 + $0x20] sm:$0xf]
      %v438 = vld [vmem:[%s428 + $0x24] sm:$0xf]
      %v439 = vld [vmem:[%s428 + $0x28] sm:$0xf]
      %v440 = vld [vmem:[%s428 + $0x2c] sm:$0xf]
      %v441 = vld [vmem:[%s428 + $0x30] sm:$0xf]
      %v442 = vld [vmem:[%s428 + $0x34] sm:$0xf]
      %v443 = vld [vmem:[%s428 + $0x38] sm:$0xf]
      %v444 = vld [vmem:[%s428 + $0x3c] sm:$0xf]
      %v461 = vunpack.c.l.b16 %v429
      %v462 = vunpack.c.l.b16 %v430
      %v463 = vunpack.c.l.b16 %v431
      %v464 = vunpack.c.l.b16 %v432
      %v465 = vunpack.c.l.b16 %v433
      %v466 = vunpack.c.l.b16 %v434
      %v467 = vunpack.c.l.b16 %v435
      %v468 = vunpack.c.l.b16 %v436
      %v469 = vunpack.c.l.b16 %v437
      %v470 = vunpack.c.l.b16 %v438
      %v471 = vunpack.c.l.b16 %v439
      %v472 = vunpack.c.l.b16 %v440
      %v473 = vunpack.c.l.b16 %v441
      %v474 = vunpack.c.l.b16 %v442
      %v475 = vunpack.c.l.b16 %v443
      %v476 = vunpack.c.l.b16 %v444
      %v477 = vpack.c.b16 %v462, %v461
      %v478 = vpack.c.b16 %v464, %v463
      %v479 = vpack.c.b16 %v466, %v465
      %v480 = vpack.c.b16 %v468, %v467
      %v481 = vpack.c.b16 %v470, %v469
      %v482 = vpack.c.b16 %v472, %v471
      %v483 = vpack.c.b16 %v474, %v473
      %v484 = vpack.c.b16 %v476, %v475
      %493 = vmatprep.subr.bf16.mxu0 0
      %494 = vmatpush1.bf16.msra.mxu0 %v484
      %495 = vmatprep.subr.bf16.mxu0 0
      %496 = vmatpush1.bf16.msra.mxu0 %v483
      %497 = vmatprep.subr.bf16.mxu0 0
      %498 = vmatpush1.bf16.msra.mxu0 %v482
      %499 = vmatprep.subr.bf16.mxu0 0
      %500 = vmatpush1.bf16.msra.mxu0 %v481
      %501 = vmatprep.subr.bf16.mxu0 0
      %502 = vmatpush1.bf16.msra.mxu0 %v480
      %503 = vmatprep.subr.bf16.mxu0 0
      %504 = vmatpush1.bf16.msra.mxu0 %v479
      %505 = vmatprep.subr.bf16.mxu0 0
      %506 = vmatpush1.bf16.msra.mxu0 %v478
      %507 = vmatprep.subr.bf16.mxu0 0
      %508 = vmatpush1.bf16.msra.mxu0 %v477
      %509 = vmatprep.subr.bf16.mxu0 0
      %510 = vmatpush2.bf16.msra.mxu0 0
      %511 = vmatprep.subr.bf16.mxu0 0
      %512 = vmatpush2.bf16.msra.mxu0 0
      %513 = vmatprep.subr.bf16.mxu0 0
      %514 = vmatpush2.bf16.msra.mxu0 0
      %515 = vmatprep.subr.bf16.mxu0 0
      %516 = vmatpush2.bf16.msra.mxu0 0
      %517 = vmatprep.subr.bf16.mxu0 0
      %518 = vmatpush2.bf16.msra.mxu0 0
      %519 = vmatprep.subr.bf16.mxu0 0
      %520 = vmatpush2.bf16.msra.mxu0 0
      %521 = vmatprep.subr.bf16.mxu0 0
      %522 = vmatpush2.bf16.msra.mxu0 0
      %523 = vmatprep.subr.bf16.mxu0 0
      %524 = vmatpush2.bf16.msra.mxu0 0
      %525 = vmatprep.mubr.bf16.mxu0 0
      %526 = vmatmul.mubr.bf16.gmra.mxu0 %v427
      %v527 = vpop.f32.mrf.mxu0
      %v528 = vadd.f32 0.0, %v527
      %v529 = vpop.f32.mrf.mxu0
      %v530 = vpop.f32.mrf.mxu0
      %v531 = vadd.f32 0.0, %v530
      %v532 = vpop.f32.mrf.mxu0
      %533 = vdwg.mxu0
      %v534 = vadd.f32 %v419, %v528
      %v535 = vadd.f32 %v422, %v531
      %v536 = vld [vmem:[%s2] sm:$0x1]
      %v538 = vlaneseq
      %v539 = vshrl.u32 %v538, 7
      %v540 = vsub.s32 0, %v539
      %v541 = vrot.slane %v536, %v540
      %v543 = vmul.f32 %v534, %v541
      %v544 = vmul.f32 %v535, %v541
      %v545 = vld [vmem:[%s3] sm:$0x1]
      %v547 = vlaneseq
      %v548 = vshrl.u32 %v547, 7
      %v549 = vsub.s32 0, %v548
      %v550 = vrot.slane %v545, %v549
      %v552 = vadd.f32 %v543, %v550
      %v553 = vadd.f32 %v544, %v550
      %v554 = vmax.f32 %v552, 0.0
      %v555 = vmax.f32 %v553, 0.0
      %v556 = vpack.c.bf16 %v555, %v554
      %v558 = vunpack.c.l.b16 %v556
      %v559 = vunpack.c.h.b16 %v556
      %v560 = vpack.c.b16 %v558, %v558
      %v561 = vpack.c.b16 %v559, %v559
      %564 = vst [vmem:[%s197] sm:$0xf] %v560
      %565 = vst [vmem:[%s197 + $0x4] sm:$0xf] %v561
      %p566 = scmp.lt.s32.totalorder %s15, 1
      %s567 = scalar_select %p566, %s15, 1
      %s568 = smul.addr %s567, 2
      %s569 = smul.addr %s568, 4
      %s570 = scalar_lea.vmem %s4, %s569
      // Predicated region
      $region37: #{_lambda_.9} parent=35 // pred_check
        %p571 = pneg %p122
      $region38: #{_lambda_.9} parent=35 // pred_check_branch
        %573 = sbr.rel (%p571) target = $region40
      $region39: #{_lambda_.9} parent=35 // pred_region
        _
      $region40: #{_lambda_.9} parent=35 // pred_fallthru
        _
    $region36: #{_lambda_.9} parent=5 // pred_fallthru
      _
    %p574 = scmp.le.s32.totalorder 2, %s10
    // Predicated region
    $region41: #{_lambda_.9} parent=5 // pred_check
      %p575 = pneg %p574
    $region42: #{_lambda_.9} parent=5 // pred_check_branch
      %577 = sbr.rel (%p575) target = $region44
    $region43: #{_lambda_.9} parent=5 // pred_region
      %s578 = ssub.s32 %s10, 2
      // Predicated region
      $region45: #{_lambda_.9} parent=43 // pred_check
        %p579 = pneg %p128
      $region46: #{_lambda_.9} parent=43 // pred_check_branch
        %581 = sbr.rel (%p579) target = $region48
      $region47: #{_lambda_.9} parent=43 // pred_region
        %p582 = scmp.lt.s32.totalorder %s16, 1
        %s583 = scalar_select %p582, %s16, 1
        %s584 = smul.addr %s583, 2
        %s585 = smul.addr %s584, 4
        %s586 = scalar_lea.vmem %s4, %s585
      $region48: #{_lambda_.9} parent=43 // pred_fallthru
        _
    $region44: #{_lambda_.9} parent=5 // pred_fallthru
      _
  $region6: #{_lambda_.9} parent=0 // loop_footer
    %s14 = sadd.s32 1, %s10
  $region7: #{_lambda_.9} parent=0 // loop_footer_branch
    %9 = sbr.rel target = $region3
  $region8: #{_lambda_.9} parent=0 // loop_exit
    _

// kernel: _lambda_.11
$region0: #{_lambda_.11}
  #allocation0 [shape = 'u32[]', space=smem, size = 0x4, offset = 0x4, fixed_abs, tag = 'smem constant byte address 0x4 - core index']
  #allocation1 [shape = 'u32[144,128]{1,0:T(1,128)}', space=vmem, size = 0x12000, scoped, tag = 'internal scratch']
  #allocation2 [shape = 'f32[20,64]{1,0:T(8,128)}', space=vmem, size = 0x3000, scoped, tag = 'scratch operand']
  %s0 = inlined_call_operand.vmem [shape: bf16[2,16,64], index: 0, kind: input, shape index: {}]
  %s1 = inlined_call_operand.vmem [shape: bf16[3,64,64], index: 1, kind: input, shape index: {}]
  %s2 = inlined_call_operand.vmem [shape: f32[1,64], index: 2, kind: input, shape index: {}]
  %s3 = inlined_call_operand.vmem [shape: f32[1,64], index: 3, kind: input, shape index: {}]
  %s4 = inlined_call_operand.vmem [shape: bf16[64,64], index: 4, kind: input, shape index: {}]
  %s5 = inlined_call_operand.vmem [shape: f32[1,64], index: 5, kind: input, shape index: {}]
  %s6 = inlined_call_operand.vmem [shape: f32[1,64], index: 6, kind: input, shape index: {}]
  %s7 = inlined_call_operand.vmem [shape: bf16[2,16,64], index: 7, kind: output, shape index: {}]
  %s8 = sld [smem:[#allocation0]]
  $region61: #{_lambda_.11} parent=0
    _
  %s10 = ssub.s32 1, %s8
  %s11 = scalar_select 0, %s10, %s8
  loop: start=0, step=1, limit=4
  $region2: #{_lambda_.11} parent=0 // loop_pre_header
    _
  $region3: #{_lambda_.11} parent=0 // loop_header
    %s13 = sphi 0, %s17
    %p14 = scmp.ge.s32.totalorder %s13, 4
    %s23 = sphi 0, %s25
    %s26 = sphi 0, %s23
    %s27 = sphi 0, %s26
    %s43 = sphi 0, %s27
    %s47 = sphi 0, %s47
    %s49 = sphi 0, %s47
    %s50 = sphi 0, %s49
    %s64 = sphi 0, %s50
    %s68 = sphi 0, %s68
    %s70 = sphi 0, %s68
    %s71 = sphi 0, %s70
    %s85 = sphi 0, %s71
    %s89 = sphi 0, %s89
    %s91 = sphi 0, %s89
    %s92 = sphi 0, %s91
    %s106 = sphi 0, %s92
    %s110 = sphi 0, %s110
    %s112 = sphi 0, %s110
    %s113 = sphi 0, %s112
    %s127 = sphi 0, %s113
    %s131 = sphi 0, %s131
    %s133 = sphi 0, %s131
    %s134 = sphi 0, %s133
    %s148 = sphi 0, %s134
    %s152 = sphi 0, %s152
    %s154 = sphi 0, %s152
    %s155 = sphi 0, %s154
    %s169 = sphi 0, %s155
    %s175 = sphi 0, %s177
    %s178 = sphi 0, %s175
    %s179 = sphi 0, %s178
    %s195 = sphi 0, %s179
  $region4: #{_lambda_.11} parent=0 // loop_header_branch
    %16 = sbr.rel (%p14) target = $region8
  $region5: #{_lambda_.11} parent=0 // loop_body
    %s18 = ssub.s32 %s13, 1
    %s19 = ssub.s32 %s13, 2
    %s20 = sadd.s32 %s13, 1
    %s21 = ssub.s32 %s13, %s20
    %p22 = scmp.eq.s32.totalorder %s21, 0
    %s24 = sadd.s32 %s23, 1
    %s25 = scalar_select %p22, %s23, %s24
    %p28 = pneg %p22
    %p29 = scmp.eq.s32.totalorder %s13, 1
    %p30 = por %p28, %p29
    %p31 = scmp.ne.s32.totalorder %s23, %s26
    %p32 = scmp.eq.s32.totalorder %s13, 0
    %p33 = por %p31, %p32
    %p34 = scmp.ne.s32.totalorder %s23, %s26
    %p35 = scmp.eq.s32.totalorder %s18, 1
    %p36 = por %p34, %p35
    %p37 = scmp.ne.s32.totalorder %s26, %s27
    %p38 = scmp.eq.s32.totalorder %s18, 0
    %p39 = por %p37, %p38
    %p40 = scmp.ne.s32.totalorder %s26, %s27
    %p41 = scmp.eq.s32.totalorder %s19, 1
    %p42 = por %p40, %p41
    %p44 = scmp.ne.s32.totalorder %s27, %s43
    %p45 = scmp.eq.s32.totalorder %s19, 0
    %p46 = por %p44, %p45
    %s48 = sadd.s32 %s47, 1
    %p51 = scmp.eq.s32.totalorder %s13, 1
    %p52 = scmp.ne.s32.totalorder %s47, %s49
    %p53 = scmp.eq.s32.totalorder %s13, 0
    %p54 = por %p52, %p53
    %p55 = scmp.ne.s32.totalorder %s47, %s49
    %p56 = scmp.eq.s32.totalorder %s18, 1
    %p57 = por %p55, %p56
    %p58 = scmp.ne.s32.totalorder %s49, %s50
    %p59 = scmp.eq.s32.totalorder %s18, 0
    %p60 = por %p58, %p59
    %p61 = scmp.ne.s32.totalorder %s49, %s50
    %p62 = scmp.eq.s32.totalorder %s19, 1
    %p63 = por %p61, %p62
    %p65 = scmp.ne.s32.totalorder %s50, %s64
    %p66 = scmp.eq.s32.totalorder %s19, 0
    %p67 = por %p65, %p66
    %s69 = sadd.s32 %s68, 1
    %p72 = scmp.eq.s32.totalorder %s13, 1
    %p73 = scmp.ne.s32.totalorder %s68, %s70
    %p74 = scmp.eq.s32.totalorder %s13, 0
    %p75 = por %p73, %p74
    %p76 = scmp.ne.s32.totalorder %s68, %s70
    %p77 = scmp.eq.s32.totalorder %s18, 1
    %p78 = por %p76, %p77
    %p79 = scmp.ne.s32.totalorder %s70, %s71
    %p80 = scmp.eq.s32.totalorder %s18, 0
    %p81 = por %p79, %p80
    %p82 = scmp.ne.s32.totalorder %s70, %s71
    %p83 = scmp.eq.s32.totalorder %s19, 1
    %p84 = por %p82, %p83
    %p86 = scmp.ne.s32.totalorder %s71, %s85
    %p87 = scmp.eq.s32.totalorder %s19, 0
    %p88 = por %p86, %p87
    %s90 = sadd.s32 %s89, 1
    %p93 = scmp.eq.s32.totalorder %s13, 1
    %p94 = scmp.ne.s32.totalorder %s89, %s91
    %p95 = scmp.eq.s32.totalorder %s13, 0
    %p96 = por %p94, %p95
    %p97 = scmp.ne.s32.totalorder %s89, %s91
    %p98 = scmp.eq.s32.totalorder %s18, 1
    %p99 = por %p97, %p98
    %p100 = scmp.ne.s32.totalorder %s91, %s92
    %p101 = scmp.eq.s32.totalorder %s18, 0
    %p102 = por %p100, %p101
    %p103 = scmp.ne.s32.totalorder %s91, %s92
    %p104 = scmp.eq.s32.totalorder %s19, 1
    %p105 = por %p103, %p104
    %p107 = scmp.ne.s32.totalorder %s92, %s106
    %p108 = scmp.eq.s32.totalorder %s19, 0
    %p109 = por %p107, %p108
    %s111 = sadd.s32 %s110, 1
    %p114 = scmp.eq.s32.totalorder %s13, 1
    %p115 = scmp.ne.s32.totalorder %s110, %s112
    %p116 = scmp.eq.s32.totalorder %s13, 0
    %p117 = por %p115, %p116
    %p118 = scmp.ne.s32.totalorder %s110, %s112
    %p119 = scmp.eq.s32.totalorder %s18, 1
    %p120 = por %p118, %p119
    %p121 = scmp.ne.s32.totalorder %s112, %s113
    %p122 = scmp.eq.s32.totalorder %s18, 0
    %p123 = por %p121, %p122
    %p124 = scmp.ne.s32.totalorder %s112, %s113
    %p125 = scmp.eq.s32.totalorder %s19, 1
    %p126 = por %p124, %p125
    %p128 = scmp.ne.s32.totalorder %s113, %s127
    %p129 = scmp.eq.s32.totalorder %s19, 0
    %p130 = por %p128, %p129
    %s132 = sadd.s32 %s131, 1
    %p135 = scmp.eq.s32.totalorder %s13, 1
    %p136 = scmp.ne.s32.totalorder %s131, %s133
    %p137 = scmp.eq.s32.totalorder %s13, 0
    %p138 = por %p136, %p137
    %p139 = scmp.ne.s32.totalorder %s131, %s133
    %p140 = scmp.eq.s32.totalorder %s18, 1
    %p141 = por %p139, %p140
    %p142 = scmp.ne.s32.totalorder %s133, %s134
    %p143 = scmp.eq.s32.totalorder %s18, 0
    %p144 = por %p142, %p143
    %p145 = scmp.ne.s32.totalorder %s133, %s134
    %p146 = scmp.eq.s32.totalorder %s19, 1
    %p147 = por %p145, %p146
    %p149 = scmp.ne.s32.totalorder %s134, %s148
    %p150 = scmp.eq.s32.totalorder %s19, 0
    %p151 = por %p149, %p150
    %s153 = sadd.s32 %s152, 1
    %p156 = scmp.eq.s32.totalorder %s13, 1
    %p157 = scmp.ne.s32.totalorder %s152, %s154
    %p158 = scmp.eq.s32.totalorder %s13, 0
    %p159 = por %p157, %p158
    %p160 = scmp.ne.s32.totalorder %s152, %s154
    %p161 = scmp.eq.s32.totalorder %s18, 1
    %p162 = por %p160, %p161
    %p163 = scmp.ne.s32.totalorder %s154, %s155
    %p164 = scmp.eq.s32.totalorder %s18, 0
    %p165 = por %p163, %p164
    %p166 = scmp.ne.s32.totalorder %s154, %s155
    %p167 = scmp.eq.s32.totalorder %s19, 1
    %p168 = por %p166, %p167
    %p170 = scmp.ne.s32.totalorder %s155, %s169
    %p171 = scmp.eq.s32.totalorder %s19, 0
    %p172 = por %p170, %p171
    %s173 = ssub.s32 %s13, %s20
    %p174 = scmp.eq.s32.totalorder %s173, 0
    %s176 = sadd.s32 %s175, 1
    %s177 = scalar_select %p174, %s175, %s176
    %p180 = pneg %p174
    %p181 = scmp.eq.s32.totalorder %s13, 1
    %p182 = por %p180, %p181
    %p183 = scmp.ne.s32.totalorder %s175, %s178
    %p184 = scmp.eq.s32.totalorder %s13, 0
    %p185 = por %p183, %p184
    %p186 = scmp.ne.s32.totalorder %s175, %s178
    %p187 = scmp.eq.s32.totalorder %s18, 1
    %p188 = por %p186, %p187
    %p189 = scmp.ne.s32.totalorder %s178, %s179
    %p190 = scmp.eq.s32.totalorder %s18, 0
    %p191 = por %p189, %p190
    %p192 = scmp.ne.s32.totalorder %s178, %s179
    %p193 = scmp.eq.s32.totalorder %s19, 1
    %p194 = por %p192, %p193
    %p196 = scmp.ne.s32.totalorder %s179, %s195
    %p197 = scmp.eq.s32.totalorder %s19, 0
    %p198 = por %p196, %p197
    %p199 = scmp.le.s32.totalorder 1, %s13
    %p200 = scmp.lt.s32.totalorder %s13, 3
    %p201 = pnand %p199, %p200
    %p202 = pneg %p201
    // Predicated region
    $region9: #{_lambda_.11} parent=5 // pred_check
      _
    $region10: #{_lambda_.11} parent=5 // pred_check_branch
      %204 = sbr.rel (%p201) target = $region12
    $region11: #{_lambda_.11} parent=5 // pred_region
      %s205 = ssub.s32 %s13, 1
      // Predicated region
      $region13: #{_lambda_.11} parent=11 // pred_check
        %p206 = pneg %p60
      $region14: #{_lambda_.11} parent=11 // pred_check_branch
        %208 = sbr.rel (%p206) target = $region16
      $region15: #{_lambda_.11} parent=11 // pred_region
        _
      $region16: #{_lambda_.11} parent=11 // pred_fallthru
        _
      // Predicated region
      $region17: #{_lambda_.11} parent=11 // pred_check
        %p209 = pneg %p81
      $region18: #{_lambda_.11} parent=11 // pred_check_branch
        %211 = sbr.rel (%p209) target = $region20
      $region19: #{_lambda_.11} parent=11 // pred_region
        _
      $region20: #{_lambda_.11} parent=11 // pred_fallthru
        _
      // Predicated region
      $region21: #{_lambda_.11} parent=11 // pred_check
        %p212 = pneg %p102
      $region22: #{_lambda_.11} parent=11 // pred_check_branch
        %214 = sbr.rel (%p212) target = $region24
      $region23: #{_lambda_.11} parent=11 // pred_region
        _
      $region24: #{_lambda_.11} parent=11 // pred_fallthru
        _
      // Predicated region
      $region25: #{_lambda_.11} parent=11 // pred_check
        %p215 = pneg %p123
      $region26: #{_lambda_.11} parent=11 // pred_check_branch
        %217 = sbr.rel (%p215) target = $region28
      $region27: #{_lambda_.11} parent=11 // pred_region
        _
      $region28: #{_lambda_.11} parent=11 // pred_fallthru
        _
      // Predicated region
      $region29: #{_lambda_.11} parent=11 // pred_check
        %p218 = pneg %p144
      $region30: #{_lambda_.11} parent=11 // pred_check_branch
        %220 = sbr.rel (%p218) target = $region32
      $region31: #{_lambda_.11} parent=11 // pred_region
        _
      $region32: #{_lambda_.11} parent=11 // pred_fallthru
        _
      // Predicated region
      $region33: #{_lambda_.11} parent=11 // pred_check
        %p221 = pneg %p165
      $region34: #{_lambda_.11} parent=11 // pred_check_branch
        %223 = sbr.rel (%p221) target = $region36
      $region35: #{_lambda_.11} parent=11 // pred_region
        _
      $region36: #{_lambda_.11} parent=11 // pred_fallthru
        _
    $region12: #{_lambda_.11} parent=5 // pred_fallthru
      _
    %p224 = scmp.lt.s32.totalorder %s13, 2
    // Predicated region
    $region37: #{_lambda_.11} parent=5 // pred_check
      %p225 = pneg %p224
    $region38: #{_lambda_.11} parent=5 // pred_check_branch
      %227 = sbr.rel (%p225) target = $region40
    $region39: #{_lambda_.11} parent=5 // pred_region
      // Predicated region
      $region41: #{_lambda_.11} parent=39 // pred_check
        %p228 = pneg %p33
      $region42: #{_lambda_.11} parent=39 // pred_check_branch
        %230 = sbr.rel (%p228) target = $region44
      $region43: #{_lambda_.11} parent=39 // pred_region
        %p231 = scmp.lt.s32.totalorder %s13, 1
        %s232 = scalar_select %p231, %s13, 1
        %s233 = smul.addr %s232, 2
        %s234 = smul.addr %s233, 4
        %s235 = scalar_lea.vmem %s0, %s234
      $region44: #{_lambda_.11} parent=39 // pred_fallthru
        _
    $region40: #{_lambda_.11} parent=5 // pred_fallthru
      _
    %p236 = scmp.le.s32.totalorder 1, %s13
    %p237 = scmp.lt.s32.totalorder %s13, 3
    %p238 = pnand %p236, %p237
    %p239 = pneg %p238
    // Predicated region
    $region45: #{_lambda_.11} parent=5 // pred_check
      _
    $region46: #{_lambda_.11} parent=5 // pred_check_branch
      %241 = sbr.rel (%p238) target = $region48
    $region47: #{_lambda_.11} parent=5 // pred_region
      %s242 = ssub.s32 %s13, 1
      %p243 = scmp.lt.s32.totalorder %s18, 1
      %s244 = scalar_select %p243, %s18, 1
      %s245 = smul.addr %s244, 2
      %s246 = smul.addr %s245, 4
      %s247 = scalar_lea.vmem %s0, %s246
      %p248 = pneg %p39
      %p249 = pneg %p36
      %p250 = pneg %p60
      %p251 = pneg %p57
      %p252 = pneg %p81
      %p253 = pneg %p78
      %p254 = pneg %p102
      %p255 = pneg %p99
      %p256 = pneg %p123
      %p257 = pneg %p120
      %p258 = pneg %p144
      %p259 = pneg %p141
      %p260 = pneg %p165
      %p261 = pneg %p162
      %p262 = pneg %p191
      %p263 = pneg %p188
      %p264 = scmp.lt.s32.totalorder %s18, 1
      %s265 = scalar_select %p264, %s18, 1
      %s266 = smul.addr %s265, 2
      %s267 = smul.addr %s266, 4
      %s268 = scalar_lea.vmem %s7, %s267
      %p269 = scmp.lt.s32.totalorder %s18, 1
      %s270 = scalar_select %p269, %s18, 1
      %s271 = smul.addr %s270, 2
      %s272 = smul.addr %s271, 4
      %s273 = scalar_lea.vmem %s0, %s272
      %p274 = scmp.lt.s32.totalorder %s18, 1
      %s275 = scalar_select %p274, %s18, 1
      %s276 = smul.addr %s275, 2
      %s277 = smul.addr %s276, 4
      %s278 = scalar_lea.vmem %s7, %s277
      %vm280 = vcmask 523264
      %281 = vst.msk [vmem:[#allocation2] sm:$0xff] %vm280, 0.0
      %282 = vst.msk [vmem:[#allocation2 + $0x8] sm:$0xff] %vm280, 0.0
      %vm283 = vcmask 519168
      %284 = vst.msk [vmem:[#allocation2 + $0x10] sm:$0xf] %vm283, 0.0
      %v285 = vld [vmem:[%s273] sm:$0xf]
      %v286 = vld [vmem:[%s273 + $0x4] sm:$0xf]
      %v287 = vunpack.c.l.bf16 %v285
      %v288 = vunpack.c.l.bf16 %v286
      %289 = vst.msk [vmem:[#allocation2 + $0x2] sm:$0xff] %vm280, %v287
      %290 = vst.msk [vmem:[#allocation2 + $0xa] sm:$0xff] %vm280, %v288
      %v291 = vld [vmem:[#allocation2] sm:$0xff]
      %v292 = vld [vmem:[#allocation2 + $0x8] sm:$0xff]
      %v293 = vpack.c.bf16 %v292, %v291
      %v294 = vld [vmem:[%s1] sm:$0xf]
      %v295 = vld [vmem:[%s1 + $0x4] sm:$0xf]
      %v296 = vld [vmem:[%s1 + $0x8] sm:$0xf]
      %v297 = vld [vmem:[%s1 + $0xc] sm:$0xf]
      %v298 = vld [vmem:[%s1 + $0x10] sm:$0xf]
      %v299 = vld [vmem:[%s1 + $0x14] sm:$0xf]
      %v300 = vld [vmem:[%s1 + $0x18] sm:$0xf]
      %v301 = vld [vmem:[%s1 + $0x1c] sm:$0xf]
      %v302 = vld [vmem:[#allocation2 + $0x2] sm:$0xff]
      %v303 = vld [vmem:[#allocation2 + $0xa] sm:$0xff]
      %v304 = vpack.c.bf16 %v303, %v302
      %s305 = scalar_lea.vmem %s1, 32
      %v306 = vld [vmem:[%s305] sm:$0xf]
      %v307 = vld [vmem:[%s305 + $0x4] sm:$0xf]
      %v308 = vld [vmem:[%s305 + $0x8] sm:$0xf]
      %v309 = vld [vmem:[%s305 + $0xc] sm:$0xf]
      %v310 = vld [vmem:[%s305 + $0x10] sm:$0xf]
      %v311 = vld [vmem:[%s305 + $0x14] sm:$0xf]
      %v312 = vld [vmem:[%s305 + $0x18] sm:$0xf]
      %v313 = vld [vmem:[%s305 + $0x1c] sm:$0xf]
      %v322 = vunpack.c.l.b16 %v306
      %v323 = vunpack.c.l.b16 %v307
      %v324 = vunpack.c.l.b16 %v308
      %v325 = vunpack.c.l.b16 %v309
      %v326 = vunpack.c.l.b16 %v310
      %v327 = vunpack.c.l.b16 %v311
      %v328 = vunpack.c.l.b16 %v312
      %v329 = vunpack.c.l.b16 %v313
      %v330 = vpack.c.b16 %v323, %v322
      %v331 = vpack.c.b16 %v325, %v324
      %v332 = vpack.c.b16 %v327, %v326
      %v333 = vpack.c.b16 %v329, %v328
      %v339 = vsel %vm280, %v304, 0
      %341 = vmatprep.subr.bf16.mxu0 0
      %342 = vmatpush1.bf16.msra.mxu0 0
      %343 = vmatprep.subr.bf16.mxu0 0
      %344 = vmatpush1.bf16.msra.mxu0 0
      %345 = vmatprep.subr.bf16.mxu0 0
      %346 = vmatpush1.bf16.msra.mxu0 0
      %347 = vmatprep.subr.bf16.mxu0 0
      %348 = vmatpush1.bf16.msra.mxu0 0
      %349 = vmatprep.subr.bf16.mxu0 0
      %350 = vmatpush1.bf16.msra.mxu0 %v333
      %351 = vmatprep.subr.bf16.mxu0 0
      %352 = vmatpush1.bf16.msra.mxu0 %v332
      %353 = vmatprep.subr.bf16.mxu0 0
      %354 = vmatpush1.bf16.msra.mxu0 %v331
      %355 = vmatprep.subr.bf16.mxu0 0
      %356 = vmatpush1.bf16.msra.mxu0 %v330
      %357 = vmatprep.subr.bf16.mxu0 0
      %358 = vmatpush2.bf16.msra.mxu0 0
      %359 = vmatprep.subr.bf16.mxu0 0
      %360 = vmatpush2.bf16.msra.mxu0 0
      %361 = vmatprep.subr.bf16.mxu0 0
      %362 = vmatpush2.bf16.msra.mxu0 0
      %363 = vmatprep.subr.bf16.mxu0 0
      %364 = vmatpush2.bf16.msra.mxu0 0
      %365 = vmatprep.subr.bf16.mxu0 0
      %366 = vmatpush2.bf16.msra.mxu0 0
      %367 = vmatprep.subr.bf16.mxu0 0
      %368 = vmatpush2.bf16.msra.mxu0 0
      %369 = vmatprep.subr.bf16.mxu0 0
      %370 = vmatpush2.bf16.msra.mxu0 0
      %371 = vmatprep.subr.bf16.mxu0 0
      %372 = vmatpush2.bf16.msra.mxu0 0
      %373 = vmatprep.mubr.bf16.mxu0 0
      %374 = vmatmul.mubr.bf16.gmra.mxu0 %v339
      %v375 = vpop.f32.mrf.mxu0
      %v376 = vadd.f32 0.0, %v375
      %v377 = vpop.f32.mrf.mxu0
      %v378 = vpop.f32.mrf.mxu0
      %v379 = vadd.f32 0.0, %v378
      %v380 = vpop.f32.mrf.mxu0
      %381 = vdwg.mxu0
      %v390 = vunpack.c.l.b16 %v294
      %v391 = vunpack.c.l.b16 %v295
      %v392 = vunpack.c.l.b16 %v296
      %v393 = vunpack.c.l.b16 %v297
      %v394 = vunpack.c.l.b16 %v298
      %v395 = vunpack.c.l.b16 %v299
      %v396 = vunpack.c.l.b16 %v300
      %v397 = vunpack.c.l.b16 %v301
      %v398 = vpack.c.b16 %v391, %v390
      %v399 = vpack.c.b16 %v393, %v392
      %v400 = vpack.c.b16 %v395, %v394
      %v401 = vpack.c.b16 %v397, %v396
      %v407 = vsel %vm280, %v293, 0
      %409 = vmatprep.subr.bf16.mxu0 0
      %410 = vmatpush1.bf16.msra.mxu0 0
      %411 = vmatprep.subr.bf16.mxu0 0
      %412 = vmatpush1.bf16.msra.mxu0 0
      %413 = vmatprep.subr.bf16.mxu0 0
      %414 = vmatpush1.bf16.msra.mxu0 0
      %415 = vmatprep.subr.bf16.mxu0 0
      %416 = vmatpush1.bf16.msra.mxu0 0
      %417 = vmatprep.subr.bf16.mxu0 0
      %418 = vmatpush1.bf16.msra.mxu0 %v401
      %419 = vmatprep.subr.bf16.mxu0 0
      %420 = vmatpush1.bf16.msra.mxu0 %v400
      %421 = vmatprep.subr.bf16.mxu0 0
      %422 = vmatpush1.bf16.msra.mxu0 %v399
      %423 = vmatprep.subr.bf16.mxu0 0
      %424 = vmatpush1.bf16.msra.mxu0 %v398
      %425 = vmatprep.subr.bf16.mxu0 0
      %426 = vmatpush2.bf16.msra.mxu0 0
      %427 = vmatprep.subr.bf16.mxu0 0
      %428 = vmatpush2.bf16.msra.mxu0 0
      %429 = vmatprep.subr.bf16.mxu0 0
      %430 = vmatpush2.bf16.msra.mxu0 0
      %431 = vmatprep.subr.bf16.mxu0 0
      %432 = vmatpush2.bf16.msra.mxu0 0
      %433 = vmatprep.subr.bf16.mxu0 0
      %434 = vmatpush2.bf16.msra.mxu0 0
      %435 = vmatprep.subr.bf16.mxu0 0
      %436 = vmatpush2.bf16.msra.mxu0 0
      %437 = vmatprep.subr.bf16.mxu0 0
      %438 = vmatpush2.bf16.msra.mxu0 0
      %439 = vmatprep.subr.bf16.mxu0 0
      %440 = vmatpush2.bf16.msra.mxu0 0
      %441 = vmatprep.mubr.bf16.mxu0 0
      %442 = vmatmul.mubr.bf16.gmra.mxu0 %v407
      %v443 = vpop.f32.mrf.mxu0
      %v444 = vadd.f32 %v376, %v443
      %v445 = vpop.f32.mrf.mxu0
      %v446 = vpop.f32.mrf.mxu0
      %v447 = vadd.f32 %v379, %v446
      %v448 = vpop.f32.mrf.mxu0
      %449 = vdwg.mxu0
      %v450 = vld [vmem:[#allocation2 + $0x4] sm:$0xff]
      %v451 = vld [vmem:[#allocation2 + $0xc] sm:$0xff]
      %v452 = vpack.c.bf16 %v451, %v450
      %s453 = scalar_lea.vmem %s1, 64
      %v454 = vld [vmem:[%s453] sm:$0xf]
      %v455 = vld [vmem:[%s453 + $0x4] sm:$0xf]
      %v456 = vld [vmem:[%s453 + $0x8] sm:$0xf]
      %v457 = vld [vmem:[%s453 + $0xc] sm:$0xf]
      %v458 = vld [vmem:[%s453 + $0x10] sm:$0xf]
      %v459 = vld [vmem:[%s453 + $0x14] sm:$0xf]
      %v460 = vld [vmem:[%s453 + $0x18] sm:$0xf]
      %v461 = vld [vmem:[%s453 + $0x1c] sm:$0xf]
      %v470 = vunpack.c.l.b16 %v454
      %v471 = vunpack.c.l.b16 %v455
      %v472 = vunpack.c.l.b16 %v456
      %v473 = vunpack.c.l.b16 %v457
      %v474 = vunpack.c.l.b16 %v458
      %v475 = vunpack.c.l.b16 %v459
      %v476 = vunpack.c.l.b16 %v460
      %v477 = vunpack.c.l.b16 %v461
      %v478 = vpack.c.b16 %v471, %v470
      %v479 = vpack.c.b16 %v473, %v472
      %v480 = vpack.c.b16 %v475, %v474
      %v481 = vpack.c.b16 %v477, %v476
      %v487 = vsel %vm280, %v452, 0
      %489 = vmatprep.subr.bf16.mxu0 0
      %490 = vmatpush1.bf16.msra.mxu0 0
      %491 = vmatprep.subr.bf16.mxu0 0
      %492 = vmatpush1.bf16.msra.mxu0 0
      %493 = vmatprep.subr.bf16.mxu0 0
      %494 = vmatpush1.bf16.msra.mxu0 0
      %495 = vmatprep.subr.bf16.mxu0 0
      %496 = vmatpush1.bf16.msra.mxu0 0
      %497 = vmatprep.subr.bf16.mxu0 0
      %498 = vmatpush1.bf16.msra.mxu0 %v481
      %499 = vmatprep.subr.bf16.mxu0 0
      %500 = vmatpush1.bf16.msra.mxu0 %v480
      %501 = vmatprep.subr.bf16.mxu0 0
      %502 = vmatpush1.bf16.msra.mxu0 %v479
      %503 = vmatprep.subr.bf16.mxu0 0
      %504 = vmatpush1.bf16.msra.mxu0 %v478
      %505 = vmatprep.subr.bf16.mxu0 0
      %506 = vmatpush2.bf16.msra.mxu0 0
      %507 = vmatprep.subr.bf16.mxu0 0
      %508 = vmatpush2.bf16.msra.mxu0 0
      %509 = vmatprep.subr.bf16.mxu0 0
      %510 = vmatpush2.bf16.msra.mxu0 0
      %511 = vmatprep.subr.bf16.mxu0 0
      %512 = vmatpush2.bf16.msra.mxu0 0
      %513 = vmatprep.subr.bf16.mxu0 0
      %514 = vmatpush2.bf16.msra.mxu0 0
      %515 = vmatprep.subr.bf16.mxu0 0
      %516 = vmatpush2.bf16.msra.mxu0 0
      %517 = vmatprep.subr.bf16.mxu0 0
      %518 = vmatpush2.bf16.msra.mxu0 0
      %519 = vmatprep.subr.bf16.mxu0 0
      %520 = vmatpush2.bf16.msra.mxu0 0
      %521 = vmatprep.mubr.bf16.mxu0 0
      %522 = vmatmul.mubr.bf16.gmra.mxu0 %v487
      %v523 = vpop.f32.mrf.mxu0
      %v524 = vadd.f32 0.0, %v523
      %v525 = vpop.f32.mrf.mxu0
      %v526 = vpop.f32.mrf.mxu0
      %v527 = vadd.f32 0.0, %v526
      %v528 = vpop.f32.mrf.mxu0
      %529 = vdwg.mxu0
      %v530 = vadd.f32 %v444, %v524
      %v531 = vadd.f32 %v447, %v527
      %v532 = vld [vmem:[%s2] sm:$0x1]
      %v534 = vlaneseq
      %v535 = vshrl.u32 %v534, 7
      %v536 = vsub.s32 0, %v535
      %v537 = vrot.slane %v532, %v536
      %v539 = vmul.f32 %v530, %v537
      %v540 = vmul.f32 %v531, %v537
      %v541 = vld [vmem:[%s3] sm:$0x1]
      %v543 = vlaneseq
      %v544 = vshrl.u32 %v543, 7
      %v545 = vsub.s32 0, %v544
      %v546 = vrot.slane %v541, %v545
      %v548 = vadd.f32 %v539, %v546
      %v549 = vadd.f32 %v540, %v546
      %v550 = vmax.f32 %v548, 0.0
      %v551 = vmax.f32 %v549, 0.0
      %v552 = vpack.c.bf16 %v551, %v550
      %v553 = vld [vmem:[%s4] sm:$0xf]
      %v554 = vld [vmem:[%s4 + $0x4] sm:$0xf]
      %v555 = vld [vmem:[%s4 + $0x8] sm:$0xf]
      %v556 = vld [vmem:[%s4 + $0xc] sm:$0xf]
      %v557 = vld [vmem:[%s4 + $0x10] sm:$0xf]
      %v558 = vld [vmem:[%s4 + $0x14] sm:$0xf]
      %v559 = vld [vmem:[%s4 + $0x18] sm:$0xf]
      %v560 = vld [vmem:[%s4 + $0x1c] sm:$0xf]
      %v569 = vunpack.c.l.b16 %v553
      %v570 = vunpack.c.l.b16 %v554
      %v571 = vunpack.c.l.b16 %v555
      %v572 = vunpack.c.l.b16 %v556
      %v573 = vunpack.c.l.b16 %v557
      %v574 = vunpack.c.l.b16 %v558
      %v575 = vunpack.c.l.b16 %v559
      %v576 = vunpack.c.l.b16 %v560
      %v577 = vpack.c.b16 %v570, %v569
      %v578 = vpack.c.b16 %v572, %v571
      %v579 = vpack.c.b16 %v574, %v573
      %v580 = vpack.c.b16 %v576, %v575
      %v586 = vsel %vm280, %v552, 0
      %588 = vmatprep.subr.bf16.mxu0 0
      %589 = vmatpush1.bf16.msra.mxu0 0
      %590 = vmatprep.subr.bf16.mxu0 0
      %591 = vmatpush1.bf16.msra.mxu0 0
      %592 = vmatprep.subr.bf16.mxu0 0
      %593 = vmatpush1.bf16.msra.mxu0 0
      %594 = vmatprep.subr.bf16.mxu0 0
      %595 = vmatpush1.bf16.msra.mxu0 0
      %596 = vmatprep.subr.bf16.mxu0 0
      %597 = vmatpush1.bf16.msra.mxu0 %v580
      %598 = vmatprep.subr.bf16.mxu0 0
      %599 = vmatpush1.bf16.msra.mxu0 %v579
      %600 = vmatprep.subr.bf16.mxu0 0
      %601 = vmatpush1.bf16.msra.mxu0 %v578
      %602 = vmatprep.subr.bf16.mxu0 0
      %603 = vmatpush1.bf16.msra.mxu0 %v577
      %604 = vmatprep.subr.bf16.mxu0 0
      %605 = vmatpush2.bf16.msra.mxu0 0
      %606 = vmatprep.subr.bf16.mxu0 0
      %607 = vmatpush2.bf16.msra.mxu0 0
      %608 = vmatprep.subr.bf16.mxu0 0
      %609 = vmatpush2.bf16.msra.mxu0 0
      %610 = vmatprep.subr.bf16.mxu0 0
      %611 = vmatpush2.bf16.msra.mxu0 0
      %612 = vmatprep.subr.bf16.mxu0 0
      %613 = vmatpush2.bf16.msra.mxu0 0
      %614 = vmatprep.subr.bf16.mxu0 0
      %615 = vmatpush2.bf16.msra.mxu0 0
      %616 = vmatprep.subr.bf16.mxu0 0
      %617 = vmatpush2.bf16.msra.mxu0 0
      %618 = vmatprep.subr.bf16.mxu0 0
      %619 = vmatpush2.bf16.msra.mxu0 0
      %620 = vmatprep.mubr.bf16.mxu0 0
      %621 = vmatmul.mubr.bf16.gmra.mxu0 %v586
      %v622 = vpop.f32.mrf.mxu0
      %v623 = vadd.f32 0.0, %v622
      %v624 = vpop.f32.mrf.mxu0
      %v625 = vpop.f32.mrf.mxu0
      %v626 = vadd.f32 0.0, %v625
      %v627 = vpop.f32.mrf.mxu0
      %628 = vdwg.mxu0
      %v629 = vld [vmem:[%s5] sm:$0x1]
      %v631 = vlaneseq
      %v632 = vshrl.u32 %v631, 7
      %v633 = vsub.s32 0, %v632
      %v634 = vrot.slane %v629, %v633
      %v636 = vmul.f32 %v623, %v634
      %v637 = vmul.f32 %v626, %v634
      %v638 = vld [vmem:[%s6] sm:$0x1]
      %v640 = vlaneseq
      %v641 = vshrl.u32 %v640, 7
      %v642 = vsub.s32 0, %v641
      %v643 = vrot.slane %v638, %v642
      %v645 = vadd.f32 %v636, %v643
      %v646 = vadd.f32 %v637, %v643
      %v647 = vmax.f32 %v645, 0.0
      %v648 = vmax.f32 %v646, 0.0
      %v649 = vpack.c.bf16 %v648, %v647
      %v651 = vunpack.c.l.b16 %v649
      %v652 = vunpack.c.h.b16 %v649
      %v653 = vpack.c.b16 %v651, %v651
      %v654 = vpack.c.b16 %v652, %v652
      %657 = vst.msk [vmem:[%s278] sm:$0xf] %vm283, %v653
      %658 = vst.msk [vmem:[%s278 + $0x4] sm:$0xf] %vm283, %v654
      %p659 = scmp.lt.s32.totalorder %s18, 1
      %s660 = scalar_select %p659, %s18, 1
      %s661 = smul.addr %s660, 2
      %s662 = smul.addr %s661, 4
      %s663 = scalar_lea.vmem %s7, %s662
      // Predicated region
      $region49: #{_lambda_.11} parent=47 // pred_check
        %p664 = pneg %p188
      $region50: #{_lambda_.11} parent=47 // pred_check_branch
        %666 = sbr.rel (%p664) target = $region52
      $region51: #{_lambda_.11} parent=47 // pred_region
        _
      $region52: #{_lambda_.11} parent=47 // pred_fallthru
        _
    $region48: #{_lambda_.11} parent=5 // pred_fallthru
      _
    %p667 = scmp.le.s32.totalorder 2, %s13
    // Predicated region
    $region53: #{_lambda_.11} parent=5 // pred_check
      %p668 = pneg %p667
    $region54: #{_lambda_.11} parent=5 // pred_check_branch
      %670 = sbr.rel (%p668) target = $region56
    $region55: #{_lambda_.11} parent=5 // pred_region
      %s671 = ssub.s32 %s13, 2
      // Predicated region
      $region57: #{_lambda_.11} parent=55 // pred_check
        %p672 = pneg %p194
      $region58: #{_lambda_.11} parent=55 // pred_check_branch
        %674 = sbr.rel (%p672) target = $region60
      $region59: #{_lambda_.11} parent=55 // pred_region
        %p675 = scmp.lt.s32.totalorder %s19, 1
        %s676 = scalar_select %p675, %s19, 1
        %s677 = smul.addr %s676, 2
        %s678 = smul.addr %s677, 4
        %s679 = scalar_lea.vmem %s7, %s678
      $region60: #{_lambda_.11} parent=55 // pred_fallthru
        _
    $region56: #{_lambda_.11} parent=5 // pred_fallthru
      _
  $region6: #{_lambda_.11} parent=0 // loop_footer
    %s17 = sadd.s32 1, %s13
  $region7: #{_lambda_.11} parent=0 // loop_footer_branch
    %12 = sbr.rel target = $region3
  $region8: #{_lambda_.11} parent=0 // loop_exit
    _

// kernel: _lambda_.13
$region0: #{_lambda_.13}
  #allocation0 [shape = 'u32[]', space=smem, size = 0x4, offset = 0x4, fixed_abs, tag = 'smem constant byte address 0x4 - core index']
  #allocation1 [shape = 'u32[144,128]{1,0:T(1,128)}', space=vmem, size = 0x12000, scoped, tag = 'internal scratch']
  #allocation2 [shape = 'f32[16,128]{1,0:T(8,128)}', space=vmem, size = 0x2000, scoped, tag = 'scratch operand']
  %s0 = inlined_call_operand.vmem [shape: bf16[2,16,128], index: 0, kind: input, shape index: {}]
  %s1 = inlined_call_operand.vmem [shape: bf16[1,128,32], index: 1, kind: input, shape index: {}]
  %s2 = inlined_call_operand.vmem [shape: f32[1,32], index: 2, kind: input, shape index: {}]
  %s3 = inlined_call_operand.vmem [shape: f32[1,32], index: 3, kind: input, shape index: {}]
  %s4 = inlined_call_operand.vmem [shape: bf16[2,16,32], index: 4, kind: output, shape index: {}]
  %s5 = sld [smem:[#allocation0]]
  $region49: #{_lambda_.13} parent=0
    _
  %s7 = ssub.s32 1, %s5
  %s8 = scalar_select 0, %s7, %s5
  loop: start=0, step=1, limit=4
  $region2: #{_lambda_.13} parent=0 // loop_pre_header
    _
  $region3: #{_lambda_.13} parent=0 // loop_header
    %s10 = sphi 0, %s14
    %p11 = scmp.ge.s32.totalorder %s10, 4
    %s20 = sphi 0, %s22
    %s23 = sphi 0, %s20
    %s24 = sphi 0, %s23
    %s40 = sphi 0, %s24
    %s44 = sphi 0, %s44
    %s46 = sphi 0, %s44
    %s47 = sphi 0, %s46
    %s61 = sphi 0, %s47
    %s65 = sphi 0, %s65
    %s67 = sphi 0, %s65
    %s68 = sphi 0, %s67
    %s82 = sphi 0, %s68
    %s86 = sphi 0, %s86
    %s88 = sphi 0, %s86
    %s89 = sphi 0, %s88
    %s103 = sphi 0, %s89
    %s109 = sphi 0, %s111
    %s112 = sphi 0, %s109
    %s113 = sphi 0, %s112
    %s129 = sphi 0, %s113
  $region4: #{_lambda_.13} parent=0 // loop_header_branch
    %13 = sbr.rel (%p11) target = $region8
  $region5: #{_lambda_.13} parent=0 // loop_body
    %s15 = ssub.s32 %s10, 1
    %s16 = ssub.s32 %s10, 2
    %s17 = sadd.s32 %s10, 1
    %s18 = ssub.s32 %s10, %s17
    %p19 = scmp.eq.s32.totalorder %s18, 0
    %s21 = sadd.s32 %s20, 1
    %s22 = scalar_select %p19, %s20, %s21
    %p25 = pneg %p19
    %p26 = scmp.eq.s32.totalorder %s10, 1
    %p27 = por %p25, %p26
    %p28 = scmp.ne.s32.totalorder %s20, %s23
    %p29 = scmp.eq.s32.totalorder %s10, 0
    %p30 = por %p28, %p29
    %p31 = scmp.ne.s32.totalorder %s20, %s23
    %p32 = scmp.eq.s32.totalorder %s15, 1
    %p33 = por %p31, %p32
    %p34 = scmp.ne.s32.totalorder %s23, %s24
    %p35 = scmp.eq.s32.totalorder %s15, 0
    %p36 = por %p34, %p35
    %p37 = scmp.ne.s32.totalorder %s23, %s24
    %p38 = scmp.eq.s32.totalorder %s16, 1
    %p39 = por %p37, %p38
    %p41 = scmp.ne.s32.totalorder %s24, %s40
    %p42 = scmp.eq.s32.totalorder %s16, 0
    %p43 = por %p41, %p42
    %s45 = sadd.s32 %s44, 1
    %p48 = scmp.eq.s32.totalorder %s10, 1
    %p49 = scmp.ne.s32.totalorder %s44, %s46
    %p50 = scmp.eq.s32.totalorder %s10, 0
    %p51 = por %p49, %p50
    %p52 = scmp.ne.s32.totalorder %s44, %s46
    %p53 = scmp.eq.s32.totalorder %s15, 1
    %p54 = por %p52, %p53
    %p55 = scmp.ne.s32.totalorder %s46, %s47
    %p56 = scmp.eq.s32.totalorder %s15, 0
    %p57 = por %p55, %p56
    %p58 = scmp.ne.s32.totalorder %s46, %s47
    %p59 = scmp.eq.s32.totalorder %s16, 1
    %p60 = por %p58, %p59
    %p62 = scmp.ne.s32.totalorder %s47, %s61
    %p63 = scmp.eq.s32.totalorder %s16, 0
    %p64 = por %p62, %p63
    %s66 = sadd.s32 %s65, 1
    %p69 = scmp.eq.s32.totalorder %s10, 1
    %p70 = scmp.ne.s32.totalorder %s65, %s67
    %p71 = scmp.eq.s32.totalorder %s10, 0
    %p72 = por %p70, %p71
    %p73 = scmp.ne.s32.totalorder %s65, %s67
    %p74 = scmp.eq.s32.totalorder %s15, 1
    %p75 = por %p73, %p74
    %p76 = scmp.ne.s32.totalorder %s67, %s68
    %p77 = scmp.eq.s32.totalorder %s15, 0
    %p78 = por %p76, %p77
    %p79 = scmp.ne.s32.totalorder %s67, %s68
    %p80 = scmp.eq.s32.totalorder %s16, 1
    %p81 = por %p79, %p80
    %p83 = scmp.ne.s32.totalorder %s68, %s82
    %p84 = scmp.eq.s32.totalorder %s16, 0
    %p85 = por %p83, %p84
    %s87 = sadd.s32 %s86, 1
    %p90 = scmp.eq.s32.totalorder %s10, 1
    %p91 = scmp.ne.s32.totalorder %s86, %s88
    %p92 = scmp.eq.s32.totalorder %s10, 0
    %p93 = por %p91, %p92
    %p94 = scmp.ne.s32.totalorder %s86, %s88
    %p95 = scmp.eq.s32.totalorder %s15, 1
    %p96 = por %p94, %p95
    %p97 = scmp.ne.s32.totalorder %s88, %s89
    %p98 = scmp.eq.s32.totalorder %s15, 0
    %p99 = por %p97, %p98
    %p100 = scmp.ne.s32.totalorder %s88, %s89
    %p101 = scmp.eq.s32.totalorder %s16, 1
    %p102 = por %p100, %p101
    %p104 = scmp.ne.s32.totalorder %s89, %s103
    %p105 = scmp.eq.s32.totalorder %s16, 0
    %p106 = por %p104, %p105
    %s107 = ssub.s32 %s10, %s17
    %p108 = scmp.eq.s32.totalorder %s107, 0
    %s110 = sadd.s32 %s109, 1
    %s111 = scalar_select %p108, %s109, %s110
    %p114 = pneg %p108
    %p115 = scmp.eq.s32.totalorder %s10, 1
    %p116 = por %p114, %p115
    %p117 = scmp.ne.s32.totalorder %s109, %s112
    %p118 = scmp.eq.s32.totalorder %s10, 0
    %p119 = por %p117, %p118
    %p120 = scmp.ne.s32.totalorder %s109, %s112
    %p121 = scmp.eq.s32.totalorder %s15, 1
    %p122 = por %p120, %p121
    %p123 = scmp.ne.s32.totalorder %s112, %s113
    %p124 = scmp.eq.s32.totalorder %s15, 0
    %p125 = por %p123, %p124
    %p126 = scmp.ne.s32.totalorder %s112, %s113
    %p127 = scmp.eq.s32.totalorder %s16, 1
    %p128 = por %p126, %p127
    %p130 = scmp.ne.s32.totalorder %s113, %s129
    %p131 = scmp.eq.s32.totalorder %s16, 0
    %p132 = por %p130, %p131
    %p133 = scmp.le.s32.totalorder 1, %s10
    %p134 = scmp.lt.s32.totalorder %s10, 3
    %p135 = pnand %p133, %p134
    %p136 = pneg %p135
    // Predicated region
    $region9: #{_lambda_.13} parent=5 // pred_check
      _
    $region10: #{_lambda_.13} parent=5 // pred_check_branch
      %138 = sbr.rel (%p135) target = $region12
    $region11: #{_lambda_.13} parent=5 // pred_region
      %s139 = ssub.s32 %s10, 1
      // Predicated region
      $region13: #{_lambda_.13} parent=11 // pred_check
        %p140 = pneg %p57
      $region14: #{_lambda_.13} parent=11 // pred_check_branch
        %142 = sbr.rel (%p140) target = $region16
      $region15: #{_lambda_.13} parent=11 // pred_region
        _
      $region16: #{_lambda_.13} parent=11 // pred_fallthru
        _
      // Predicated region
      $region17: #{_lambda_.13} parent=11 // pred_check
        %p143 = pneg %p78
      $region18: #{_lambda_.13} parent=11 // pred_check_branch
        %145 = sbr.rel (%p143) target = $region20
      $region19: #{_lambda_.13} parent=11 // pred_region
        _
      $region20: #{_lambda_.13} parent=11 // pred_fallthru
        _
      // Predicated region
      $region21: #{_lambda_.13} parent=11 // pred_check
        %p146 = pneg %p99
      $region22: #{_lambda_.13} parent=11 // pred_check_branch
        %148 = sbr.rel (%p146) target = $region24
      $region23: #{_lambda_.13} parent=11 // pred_region
        _
      $region24: #{_lambda_.13} parent=11 // pred_fallthru
        _
    $region12: #{_lambda_.13} parent=5 // pred_fallthru
      _
    %p149 = scmp.lt.s32.totalorder %s10, 2
    // Predicated region
    $region25: #{_lambda_.13} parent=5 // pred_check
      %p150 = pneg %p149
    $region26: #{_lambda_.13} parent=5 // pred_check_branch
      %152 = sbr.rel (%p150) target = $region28
    $region27: #{_lambda_.13} parent=5 // pred_region
      // Predicated region
      $region29: #{_lambda_.13} parent=27 // pred_check
        %p153 = pneg %p30
      $region30: #{_lambda_.13} parent=27 // pred_check_branch
        %155 = sbr.rel (%p153) target = $region32
      $region31: #{_lambda_.13} parent=27 // pred_region
        %p156 = scmp.lt.s32.totalorder %s10, 1
        %s157 = scalar_select %p156, %s10, 1
        %s158 = smul.addr %s157, 2
        %s159 = smul.addr %s158, 4
        %s160 = scalar_lea.vmem %s0, %s159
      $region32: #{_lambda_.13} parent=27 // pred_fallthru
        _
    $region28: #{_lambda_.13} parent=5 // pred_fallthru
      _
    %p161 = scmp.le.s32.totalorder 1, %s10
    %p162 = scmp.lt.s32.totalorder %s10, 3
    %p163 = pnand %p161, %p162
    %p164 = pneg %p163
    // Predicated region
    $region33: #{_lambda_.13} parent=5 // pred_check
      _
    $region34: #{_lambda_.13} parent=5 // pred_check_branch
      %166 = sbr.rel (%p163) target = $region36
    $region35: #{_lambda_.13} parent=5 // pred_region
      %s167 = ssub.s32 %s10, 1
      %p168 = scmp.lt.s32.totalorder %s15, 1
      %s169 = scalar_select %p168, %s15, 1
      %s170 = smul.addr %s169, 2
      %s171 = smul.addr %s170, 4
      %s172 = scalar_lea.vmem %s0, %s171
      %p173 = pneg %p36
      %p174 = pneg %p33
      %p175 = pneg %p57
      %p176 = pneg %p54
      %p177 = pneg %p78
      %p178 = pneg %p75
      %p179 = pneg %p99
      %p180 = pneg %p96
      %p181 = pneg %p125
      %p182 = pneg %p122
      %p183 = scmp.lt.s32.totalorder %s15, 1
      %s184 = scalar_select %p183, %s15, 1
      %s185 = smul.addr %s184, 2
      %s186 = smul.addr %s185, 4
      %s187 = scalar_lea.vmem %s4, %s186
      %p188 = scmp.lt.s32.totalorder %s15, 1
      %s189 = scalar_select %p188, %s15, 1
      %s190 = smul.addr %s189, 2
      %s191 = smul.addr %s190, 4
      %s192 = scalar_lea.vmem %s0, %s191
      %p193 = scmp.lt.s32.totalorder %s15, 1
      %s194 = scalar_select %p193, %s15, 1
      %s195 = smul.addr %s194, 2
      %s196 = smul.addr %s195, 4
      %s197 = scalar_lea.vmem %s4, %s196
      %v199 = vld [vmem:[%s192] sm:$0xf]
      %v200 = vld [vmem:[%s192 + $0x4] sm:$0xf]
      %v201 = vunpack.c.l.bf16 %v199
      %v202 = vunpack.c.l.bf16 %v200
      %203 = vst [vmem:[#allocation2] sm:$0xff] %v201
      %204 = vst [vmem:[#allocation2 + $0x8] sm:$0xff] %v202
      %v205 = vld [vmem:[#allocation2] sm:$0xff]
      %v206 = vld [vmem:[#allocation2 + $0x8] sm:$0xff]
      %v207 = vpack.c.bf16 %v206, %v205
      %v208 = vld [vmem:[%s1] sm:$0xf]
      %v209 = vld [vmem:[%s1 + $0x4] sm:$0xf]
      %v210 = vld [vmem:[%s1 + $0x8] sm:$0xf]
      %v211 = vld [vmem:[%s1 + $0xc] sm:$0xf]
      %v212 = vld [vmem:[%s1 + $0x10] sm:$0xf]
      %v213 = vld [vmem:[%s1 + $0x14] sm:$0xf]
      %v214 = vld [vmem:[%s1 + $0x18] sm:$0xf]
      %v215 = vld [vmem:[%s1 + $0x1c] sm:$0xf]
      %v216 = vld [vmem:[%s1 + $0x20] sm:$0xf]
      %v217 = vld [vmem:[%s1 + $0x24] sm:$0xf]
      %v218 = vld [vmem:[%s1 + $0x28] sm:$0xf]
      %v219 = vld [vmem:[%s1 + $0x2c] sm:$0xf]
      %v220 = vld [vmem:[%s1 + $0x30] sm:$0xf]
      %v221 = vld [vmem:[%s1 + $0x34] sm:$0xf]
      %v222 = vld [vmem:[%s1 + $0x38] sm:$0xf]
      %v223 = vld [vmem:[%s1 + $0x3c] sm:$0xf]
      %v240 = vunpack.c.l.b16 %v208
      %v241 = vunpack.c.l.b16 %v209
      %v242 = vunpack.c.l.b16 %v210
      %v243 = vunpack.c.l.b16 %v211
      %v244 = vunpack.c.l.b16 %v212
      %v245 = vunpack.c.l.b16 %v213
      %v246 = vunpack.c.l.b16 %v214
      %v247 = vunpack.c.l.b16 %v215
      %v248 = vunpack.c.l.b16 %v216
      %v249 = vunpack.c.l.b16 %v217
      %v250 = vunpack.c.l.b16 %v218
      %v251 = vunpack.c.l.b16 %v219
      %v252 = vunpack.c.l.b16 %v220
      %v253 = vunpack.c.l.b16 %v221
      %v254 = vunpack.c.l.b16 %v222
      %v255 = vunpack.c.l.b16 %v223
      %v256 = vpack.c.b16 %v241, %v240
      %v257 = vpack.c.b16 %v243, %v242
      %v258 = vpack.c.b16 %v245, %v244
      %v259 = vpack.c.b16 %v247, %v246
      %v260 = vpack.c.b16 %v249, %v248
      %v261 = vpack.c.b16 %v251, %v250
      %v262 = vpack.c.b16 %v253, %v252
      %v263 = vpack.c.b16 %v255, %v254
      %272 = vmatprep.subr.bf16.mxu0 0
      %273 = vmatpush1.bf16.msra.mxu0 %v263
      %274 = vmatprep.subr.bf16.mxu0 0
      %275 = vmatpush1.bf16.msra.mxu0 %v262
      %276 = vmatprep.subr.bf16.mxu0 0
      %277 = vmatpush1.bf16.msra.mxu0 %v261
      %278 = vmatprep.subr.bf16.mxu0 0
      %279 = vmatpush1.bf16.msra.mxu0 %v260
      %280 = vmatprep.subr.bf16.mxu0 0
      %281 = vmatpush1.bf16.msra.mxu0 %v259
      %282 = vmatprep.subr.bf16.mxu0 0
      %283 = vmatpush1.bf16.msra.mxu0 %v258
      %284 = vmatprep.subr.bf16.mxu0 0
      %285 = vmatpush1.bf16.msra.mxu0 %v257
      %286 = vmatprep.subr.bf16.mxu0 0
      %287 = vmatpush1.bf16.msra.mxu0 %v256
      %288 = vmatprep.subr.bf16.mxu0 0
      %289 = vmatpush2.bf16.msra.mxu0 0
      %290 = vmatprep.subr.bf16.mxu0 0
      %291 = vmatpush2.bf16.msra.mxu0 0
      %292 = vmatprep.subr.bf16.mxu0 0
      %293 = vmatpush2.bf16.msra.mxu0 0
      %294 = vmatprep.subr.bf16.mxu0 0
      %295 = vmatpush2.bf16.msra.mxu0 0
      %296 = vmatprep.subr.bf16.mxu0 0
      %297 = vmatpush2.bf16.msra.mxu0 0
      %298 = vmatprep.subr.bf16.mxu0 0
      %299 = vmatpush2.bf16.msra.mxu0 0
      %300 = vmatprep.subr.bf16.mxu0 0
      %301 = vmatpush2.bf16.msra.mxu0 0
      %302 = vmatprep.subr.bf16.mxu0 0
      %303 = vmatpush2.bf16.msra.mxu0 0
      %304 = vmatprep.mubr.bf16.mxu0 0
      %305 = vmatmul.mubr.bf16.gmra.mxu0 %v207
      %v306 = vpop.f32.mrf.mxu0
      %v307 = vadd.f32 0.0, %v306
      %v308 = vpop.f32.mrf.mxu0
      %v309 = vpop.f32.mrf.mxu0
      %v310 = vadd.f32 0.0, %v309
      %v311 = vpop.f32.mrf.mxu0
      %312 = vdwg.mxu0
      %v313 = vld [vmem:[%s2] sm:$0x1]
      %v315 = vlaneseq
      %v316 = vshrl.u32 %v315, 7
      %v317 = vsub.s32 0, %v316
      %v318 = vrot.slane %v313, %v317
      %v320 = vmul.f32 %v307, %v318
      %v321 = vmul.f32 %v310, %v318
      %v322 = vld [vmem:[%s3] sm:$0x1]
      %v324 = vlaneseq
      %v325 = vshrl.u32 %v324, 7
      %v326 = vsub.s32 0, %v325
      %v327 = vrot.slane %v322, %v326
      %v329 = vadd.f32 %v320, %v327
      %v330 = vadd.f32 %v321, %v327
      %v331 = vmax.f32 %v329, 0.0
      %v332 = vmax.f32 %v330, 0.0
      %v333 = vpack.c.bf16 %v332, %v331
      %v335 = vunpack.c.l.b16 %v333
      %v336 = vunpack.c.h.b16 %v333
      %v337 = vpack.c.b16 %v335, %v335
      %v338 = vpack.c.b16 %v336, %v336
      %vm341 = vcmask 257024
      %342 = vst.msk [vmem:[%s197] sm:$0xf] %vm341, %v337
      %343 = vst.msk [vmem:[%s197 + $0x4] sm:$0xf] %vm341, %v338
      %p344 = scmp.lt.s32.totalorder %s15, 1
      %s345 = scalar_select %p344, %s15, 1
      %s346 = smul.addr %s345, 2
      %s347 = smul.addr %s346, 4
      %s348 = scalar_lea.vmem %s4, %s347
      // Predicated region
      $region37: #{_lambda_.13} parent=35 // pred_check
        %p349 = pneg %p122
      $region38: #{_lambda_.13} parent=35 // pred_check_branch
        %351 = sbr.rel (%p349) target = $region40
      $region39: #{_lambda_.13} parent=35 // pred_region
        _
      $region40: #{_lambda_.13} parent=35 // pred_fallthru
        _
    $region36: #{_lambda_.13} parent=5 // pred_fallthru
      _
    %p352 = scmp.le.s32.totalorder 2, %s10
    // Predicated region
    $region41: #{_lambda_.13} parent=5 // pred_check
      %p353 = pneg %p352
    $region42: #{_lambda_.13} parent=5 // pred_check_branch
      %355 = sbr.rel (%p353) target = $region44
    $region43: #{_lambda_.13} parent=5 // pred_region
      %s356 = ssub.s32 %s10, 2
      // Predicated region
      $region45: #{_lambda_.13} parent=43 // pred_check
        %p357 = pneg %p128
      $region46: #{_lambda_.13} parent=43 // pred_check_branch
        %359 = sbr.rel (%p357) target = $region48
      $region47: #{_lambda_.13} parent=43 // pred_region
        %p360 = scmp.lt.s32.totalorder %s16, 1
        %s361 = scalar_select %p360, %s16, 1
        %s362 = smul.addr %s361, 2
        %s363 = smul.addr %s362, 4
        %s364 = scalar_lea.vmem %s4, %s363
      $region48: #{_lambda_.13} parent=43 // pred_fallthru
        _
    $region44: #{_lambda_.13} parent=5 // pred_fallthru
      _
  $region6: #{_lambda_.13} parent=0 // loop_footer
    %s14 = sadd.s32 1, %s10
  $region7: #{_lambda_.13} parent=0 // loop_footer_branch
    %9 = sbr.rel target = $region3
  $region8: #{_lambda_.13} parent=0 // loop_exit
    _

// kernel: _lambda_.14
$region0: #{_lambda_.14}
  #allocation0 [shape = 'u32[]', space=smem, size = 0x4, offset = 0x4, fixed_abs, tag = 'smem constant byte address 0x4 - core index']
  #allocation1 [shape = 'u32[144,128]{1,0:T(1,128)}', space=vmem, size = 0x12000, scoped, tag = 'internal scratch']
  #allocation2 [shape = 'f32[16,288]{1,0:T(8,128)}', space=vmem, size = 0x6000, scoped, tag = 'scratch operand']
  %s0 = inlined_call_operand.vmem [shape: bf16[2,16,64], index: 0, kind: input, shape index: {}]
  %s1 = inlined_call_operand.vmem [shape: bf16[2,16,32], index: 1, kind: input, shape index: {}]
  %s2 = inlined_call_operand.vmem [shape: bf16[2,16,32], index: 2, kind: input, shape index: {}]
  %s3 = inlined_call_operand.vmem [shape: bf16[1,64,128], index: 3, kind: input, shape index: {}]
  %s4 = inlined_call_operand.vmem [shape: bf16[1,32,128], index: 4, kind: input, shape index: {}]
  %s5 = inlined_call_operand.vmem [shape: bf16[1,32,128], index: 5, kind: input, shape index: {}]
  %s6 = inlined_call_operand.vmem [shape: f32[1,128], index: 6, kind: input, shape index: {}]
  %s7 = inlined_call_operand.vmem [shape: f32[1,128], index: 7, kind: input, shape index: {}]
  %s8 = inlined_call_operand.vmem [shape: bf16[2,16,128], index: 8, kind: output, shape index: {}]
  %s9 = sld [smem:[#allocation0]]
  $region65: #{_lambda_.14} parent=0
    _
  %s11 = ssub.s32 1, %s9
  %s12 = scalar_select 0, %s11, %s9
  loop: start=0, step=1, limit=4
  $region2: #{_lambda_.14} parent=0 // loop_pre_header
    _
  $region3: #{_lambda_.14} parent=0 // loop_header
    %s14 = sphi 0, %s18
    %p15 = scmp.ge.s32.totalorder %s14, 4
    %s24 = sphi 0, %s26
    %s27 = sphi 0, %s24
    %s28 = sphi 0, %s27
    %s44 = sphi 0, %s28
    %s50 = sphi 0, %s52
    %s53 = sphi 0, %s50
    %s54 = sphi 0, %s53
    %s70 = sphi 0, %s54
    %s76 = sphi 0, %s78
    %s79 = sphi 0, %s76
    %s80 = sphi 0, %s79
    %s96 = sphi 0, %s80
    %s100 = sphi 0, %s100
    %s102 = sphi 0, %s100
    %s103 = sphi 0, %s102
    %s117 = sphi 0, %s103
    %s121 = sphi 0, %s121
    %s123 = sphi 0, %s121
    %s124 = sphi 0, %s123
    %s138 = sphi 0, %s124
    %s142 = sphi 0, %s142
    %s144 = sphi 0, %s142
    %s145 = sphi 0, %s144
    %s159 = sphi 0, %s145
    %s163 = sphi 0, %s163
    %s165 = sphi 0, %s163
    %s166 = sphi 0, %s165
    %s180 = sphi 0, %s166
    %s184 = sphi 0, %s184
    %s186 = sphi 0, %s184
    %s187 = sphi 0, %s186
    %s201 = sphi 0, %s187
    %s207 = sphi 0, %s209
    %s210 = sphi 0, %s207
    %s211 = sphi 0, %s210
    %s227 = sphi 0, %s211
  $region4: #{_lambda_.14} parent=0 // loop_header_branch
    %17 = sbr.rel (%p15) target = $region8
  $region5: #{_lambda_.14} parent=0 // loop_body
    %s19 = ssub.s32 %s14, 1
    %s20 = ssub.s32 %s14, 2
    %s21 = sadd.s32 %s14, 1
    %s22 = ssub.s32 %s14, %s21
    %p23 = scmp.eq.s32.totalorder %s22, 0
    %s25 = sadd.s32 %s24, 1
    %s26 = scalar_select %p23, %s24, %s25
    %p29 = pneg %p23
    %p30 = scmp.eq.s32.totalorder %s14, 1
    %p31 = por %p29, %p30
    %p32 = scmp.ne.s32.totalorder %s24, %s27
    %p33 = scmp.eq.s32.totalorder %s14, 0
    %p34 = por %p32, %p33
    %p35 = scmp.ne.s32.totalorder %s24, %s27
    %p36 = scmp.eq.s32.totalorder %s19, 1
    %p37 = por %p35, %p36
    %p38 = scmp.ne.s32.totalorder %s27, %s28
    %p39 = scmp.eq.s32.totalorder %s19, 0
    %p40 = por %p38, %p39
    %p41 = scmp.ne.s32.totalorder %s27, %s28
    %p42 = scmp.eq.s32.totalorder %s20, 1
    %p43 = por %p41, %p42
    %p45 = scmp.ne.s32.totalorder %s28, %s44
    %p46 = scmp.eq.s32.totalorder %s20, 0
    %p47 = por %p45, %p46
    %s48 = ssub.s32 %s14, %s21
    %p49 = scmp.eq.s32.totalorder %s48, 0
    %s51 = sadd.s32 %s50, 1
    %s52 = scalar_select %p49, %s50, %s51
    %p55 = pneg %p49
    %p56 = scmp.eq.s32.totalorder %s14, 1
    %p57 = por %p55, %p56
    %p58 = scmp.ne.s32.totalorder %s50, %s53
    %p59 = scmp.eq.s32.totalorder %s14, 0
    %p60 = por %p58, %p59
    %p61 = scmp.ne.s32.totalorder %s50, %s53
    %p62 = scmp.eq.s32.totalorder %s19, 1
    %p63 = por %p61, %p62
    %p64 = scmp.ne.s32.totalorder %s53, %s54
    %p65 = scmp.eq.s32.totalorder %s19, 0
    %p66 = por %p64, %p65
    %p67 = scmp.ne.s32.totalorder %s53, %s54
    %p68 = scmp.eq.s32.totalorder %s20, 1
    %p69 = por %p67, %p68
    %p71 = scmp.ne.s32.totalorder %s54, %s70
    %p72 = scmp.eq.s32.totalorder %s20, 0
    %p73 = por %p71, %p72
    %s74 = ssub.s32 %s14, %s21
    %p75 = scmp.eq.s32.totalorder %s74, 0
    %s77 = sadd.s32 %s76, 1
    %s78 = scalar_select %p75, %s76, %s77
    %p81 = pneg %p75
    %p82 = scmp.eq.s32.totalorder %s14, 1
    %p83 = por %p81, %p82
    %p84 = scmp.ne.s32.totalorder %s76, %s79
    %p85 = scmp.eq.s32.totalorder %s14, 0
    %p86 = por %p84, %p85
    %p87 = scmp.ne.s32.totalorder %s76, %s79
    %p88 = scmp.eq.s32.totalorder %s19, 1
    %p89 = por %p87, %p88
    %p90 = scmp.ne.s32.totalorder %s79, %s80
    %p91 = scmp.eq.s32.totalorder %s19, 0
    %p92 = por %p90, %p91
    %p93 = scmp.ne.s32.totalorder %s79, %s80
    %p94 = scmp.eq.s32.totalorder %s20, 1
    %p95 = por %p93, %p94
    %p97 = scmp.ne.s32.totalorder %s80, %s96
    %p98 = scmp.eq.s32.totalorder %s20, 0
    %p99 = por %p97, %p98
    %s101 = sadd.s32 %s100, 1
    %p104 = scmp.eq.s32.totalorder %s14, 1
    %p105 = scmp.ne.s32.totalorder %s100, %s102
    %p106 = scmp.eq.s32.totalorder %s14, 0
    %p107 = por %p105, %p106
    %p108 = scmp.ne.s32.totalorder %s100, %s102
    %p109 = scmp.eq.s32.totalorder %s19, 1
    %p110 = por %p108, %p109
    %p111 = scmp.ne.s32.totalorder %s102, %s103
    %p112 = scmp.eq.s32.totalorder %s19, 0
    %p113 = por %p111, %p112
    %p114 = scmp.ne.s32.totalorder %s102, %s103
    %p115 = scmp.eq.s32.totalorder %s20, 1
    %p116 = por %p114, %p115
    %p118 = scmp.ne.s32.totalorder %s103, %s117
    %p119 = scmp.eq.s32.totalorder %s20, 0
    %p120 = por %p118, %p119
    %s122 = sadd.s32 %s121, 1
    %p125 = scmp.eq.s32.totalorder %s14, 1
    %p126 = scmp.ne.s32.totalorder %s121, %s123
    %p127 = scmp.eq.s32.totalorder %s14, 0
    %p128 = por %p126, %p127
    %p129 = scmp.ne.s32.totalorder %s121, %s123
    %p130 = scmp.eq.s32.totalorder %s19, 1
    %p131 = por %p129, %p130
    %p132 = scmp.ne.s32.totalorder %s123, %s124
    %p133 = scmp.eq.s32.totalorder %s19, 0
    %p134 = por %p132, %p133
    %p135 = scmp.ne.s32.totalorder %s123, %s124
    %p136 = scmp.eq.s32.totalorder %s20, 1
    %p137 = por %p135, %p136
    %p139 = scmp.ne.s32.totalorder %s124, %s138
    %p140 = scmp.eq.s32.totalorder %s20, 0
    %p141 = por %p139, %p140
    %s143 = sadd.s32 %s142, 1
    %p146 = scmp.eq.s32.totalorder %s14, 1
    %p147 = scmp.ne.s32.totalorder %s142, %s144
    %p148 = scmp.eq.s32.totalorder %s14, 0
    %p149 = por %p147, %p148
    %p150 = scmp.ne.s32.totalorder %s142, %s144
    %p151 = scmp.eq.s32.totalorder %s19, 1
    %p152 = por %p150, %p151
    %p153 = scmp.ne.s32.totalorder %s144, %s145
    %p154 = scmp.eq.s32.totalorder %s19, 0
    %p155 = por %p153, %p154
    %p156 = scmp.ne.s32.totalorder %s144, %s145
    %p157 = scmp.eq.s32.totalorder %s20, 1
    %p158 = por %p156, %p157
    %p160 = scmp.ne.s32.totalorder %s145, %s159
    %p161 = scmp.eq.s32.totalorder %s20, 0
    %p162 = por %p160, %p161
    %s164 = sadd.s32 %s163, 1
    %p167 = scmp.eq.s32.totalorder %s14, 1
    %p168 = scmp.ne.s32.totalorder %s163, %s165
    %p169 = scmp.eq.s32.totalorder %s14, 0
    %p170 = por %p168, %p169
    %p171 = scmp.ne.s32.totalorder %s163, %s165
    %p172 = scmp.eq.s32.totalorder %s19, 1
    %p173 = por %p171, %p172
    %p174 = scmp.ne.s32.totalorder %s165, %s166
    %p175 = scmp.eq.s32.totalorder %s19, 0
    %p176 = por %p174, %p175
    %p177 = scmp.ne.s32.totalorder %s165, %s166
    %p178 = scmp.eq.s32.totalorder %s20, 1
    %p179 = por %p177, %p178
    %p181 = scmp.ne.s32.totalorder %s166, %s180
    %p182 = scmp.eq.s32.totalorder %s20, 0
    %p183 = por %p181, %p182
    %s185 = sadd.s32 %s184, 1
    %p188 = scmp.eq.s32.totalorder %s14, 1
    %p189 = scmp.ne.s32.totalorder %s184, %s186
    %p190 = scmp.eq.s32.totalorder %s14, 0
    %p191 = por %p189, %p190
    %p192 = scmp.ne.s32.totalorder %s184, %s186
    %p193 = scmp.eq.s32.totalorder %s19, 1
    %p194 = por %p192, %p193
    %p195 = scmp.ne.s32.totalorder %s186, %s187
    %p196 = scmp.eq.s32.totalorder %s19, 0
    %p197 = por %p195, %p196
    %p198 = scmp.ne.s32.totalorder %s186, %s187
    %p199 = scmp.eq.s32.totalorder %s20, 1
    %p200 = por %p198, %p199
    %p202 = scmp.ne.s32.totalorder %s187, %s201
    %p203 = scmp.eq.s32.totalorder %s20, 0
    %p204 = por %p202, %p203
    %s205 = ssub.s32 %s14, %s21
    %p206 = scmp.eq.s32.totalorder %s205, 0
    %s208 = sadd.s32 %s207, 1
    %s209 = scalar_select %p206, %s207, %s208
    %p212 = pneg %p206
    %p213 = scmp.eq.s32.totalorder %s14, 1
    %p214 = por %p212, %p213
    %p215 = scmp.ne.s32.totalorder %s207, %s210
    %p216 = scmp.eq.s32.totalorder %s14, 0
    %p217 = por %p215, %p216
    %p218 = scmp.ne.s32.totalorder %s207, %s210
    %p219 = scmp.eq.s32.totalorder %s19, 1
    %p220 = por %p218, %p219
    %p221 = scmp.ne.s32.totalorder %s210, %s211
    %p222 = scmp.eq.s32.totalorder %s19, 0
    %p223 = por %p221, %p222
    %p224 = scmp.ne.s32.totalorder %s210, %s211
    %p225 = scmp.eq.s32.totalorder %s20, 1
    %p226 = por %p224, %p225
    %p228 = scmp.ne.s32.totalorder %s211, %s227
    %p229 = scmp.eq.s32.totalorder %s20, 0
    %p230 = por %p228, %p229
    %p231 = scmp.le.s32.totalorder 1, %s14
    %p232 = scmp.lt.s32.totalorder %s14, 3
    %p233 = pnand %p231, %p232
    %p234 = pneg %p233
    // Predicated region
    $region9: #{_lambda_.14} parent=5 // pred_check
      _
    $region10: #{_lambda_.14} parent=5 // pred_check_branch
      %236 = sbr.rel (%p233) target = $region12
    $region11: #{_lambda_.14} parent=5 // pred_region
      %s237 = ssub.s32 %s14, 1
      // Predicated region
      $region13: #{_lambda_.14} parent=11 // pred_check
        %p238 = pneg %p113
      $region14: #{_lambda_.14} parent=11 // pred_check_branch
        %240 = sbr.rel (%p238) target = $region16
      $region15: #{_lambda_.14} parent=11 // pred_region
        _
      $region16: #{_lambda_.14} parent=11 // pred_fallthru
        _
      // Predicated region
      $region17: #{_lambda_.14} parent=11 // pred_check
        %p241 = pneg %p134
      $region18: #{_lambda_.14} parent=11 // pred_check_branch
        %243 = sbr.rel (%p241) target = $region20
      $region19: #{_lambda_.14} parent=11 // pred_region
        _
      $region20: #{_lambda_.14} parent=11 // pred_fallthru
        _
      // Predicated region
      $region21: #{_lambda_.14} parent=11 // pred_check
        %p244 = pneg %p155
      $region22: #{_lambda_.14} parent=11 // pred_check_branch
        %246 = sbr.rel (%p244) target = $region24
      $region23: #{_lambda_.14} parent=11 // pred_region
        _
      $region24: #{_lambda_.14} parent=11 // pred_fallthru
        _
      // Predicated region
      $region25: #{_lambda_.14} parent=11 // pred_check
        %p247 = pneg %p176
      $region26: #{_lambda_.14} parent=11 // pred_check_branch
        %249 = sbr.rel (%p247) target = $region28
      $region27: #{_lambda_.14} parent=11 // pred_region
        _
      $region28: #{_lambda_.14} parent=11 // pred_fallthru
        _
      // Predicated region
      $region29: #{_lambda_.14} parent=11 // pred_check
        %p250 = pneg %p197
      $region30: #{_lambda_.14} parent=11 // pred_check_branch
        %252 = sbr.rel (%p250) target = $region32
      $region31: #{_lambda_.14} parent=11 // pred_region
        _
      $region32: #{_lambda_.14} parent=11 // pred_fallthru
        _
    $region12: #{_lambda_.14} parent=5 // pred_fallthru
      _
    %p253 = scmp.lt.s32.totalorder %s14, 2
    // Predicated region
    $region33: #{_lambda_.14} parent=5 // pred_check
      %p254 = pneg %p253
    $region34: #{_lambda_.14} parent=5 // pred_check_branch
      %256 = sbr.rel (%p254) target = $region36
    $region35: #{_lambda_.14} parent=5 // pred_region
      // Predicated region
      $region37: #{_lambda_.14} parent=35 // pred_check
        %p257 = pneg %p34
      $region38: #{_lambda_.14} parent=35 // pred_check_branch
        %259 = sbr.rel (%p257) target = $region40
      $region39: #{_lambda_.14} parent=35 // pred_region
        %p260 = scmp.lt.s32.totalorder %s14, 1
        %s261 = scalar_select %p260, %s14, 1
        %s262 = smul.addr %s261, 2
        %s263 = smul.addr %s262, 4
        %s264 = scalar_lea.vmem %s0, %s263
      $region40: #{_lambda_.14} parent=35 // pred_fallthru
        _
      // Predicated region
      $region41: #{_lambda_.14} parent=35 // pred_check
        %p265 = pneg %p60
      $region42: #{_lambda_.14} parent=35 // pred_check_branch
        %267 = sbr.rel (%p265) target = $region44
      $region43: #{_lambda_.14} parent=35 // pred_region
        %p268 = scmp.lt.s32.totalorder %s14, 1
        %s269 = scalar_select %p268, %s14, 1
        %s270 = smul.addr %s269, 2
        %s271 = smul.addr %s270, 4
        %s272 = scalar_lea.vmem %s1, %s271
      $region44: #{_lambda_.14} parent=35 // pred_fallthru
        _
      // Predicated region
      $region45: #{_lambda_.14} parent=35 // pred_check
        %p273 = pneg %p86
      $region46: #{_lambda_.14} parent=35 // pred_check_branch
        %275 = sbr.rel (%p273) target = $region48
      $region47: #{_lambda_.14} parent=35 // pred_region
        %p276 = scmp.lt.s32.totalorder %s14, 1
        %s277 = scalar_select %p276, %s14, 1
        %s278 = smul.addr %s277, 2
        %s279 = smul.addr %s278, 4
        %s280 = scalar_lea.vmem %s2, %s279
      $region48: #{_lambda_.14} parent=35 // pred_fallthru
        _
    $region36: #{_lambda_.14} parent=5 // pred_fallthru
      _
    %p281 = scmp.le.s32.totalorder 1, %s14
    %p282 = scmp.lt.s32.totalorder %s14, 3
    %p283 = pnand %p281, %p282
    %p284 = pneg %p283
    // Predicated region
    $region49: #{_lambda_.14} parent=5 // pred_check
      _
    $region50: #{_lambda_.14} parent=5 // pred_check_branch
      %286 = sbr.rel (%p283) target = $region52
    $region51: #{_lambda_.14} parent=5 // pred_region
      %s287 = ssub.s32 %s14, 1
      %p288 = scmp.lt.s32.totalorder %s19, 1
      %s289 = scalar_select %p288, %s19, 1
      %s290 = smul.addr %s289, 2
      %s291 = smul.addr %s290, 4
      %s292 = scalar_lea.vmem %s0, %s291
      %p293 = pneg %p40
      %p294 = pneg %p37
      %p295 = scmp.lt.s32.totalorder %s19, 1
      %s296 = scalar_select %p295, %s19, 1
      %s297 = smul.addr %s296, 2
      %s298 = smul.addr %s297, 4
      %s299 = scalar_lea.vmem %s1, %s298
      %p300 = pneg %p66
      %p301 = pneg %p63
      %p302 = scmp.lt.s32.totalorder %s19, 1
      %s303 = scalar_select %p302, %s19, 1
      %s304 = smul.addr %s303, 2
      %s305 = smul.addr %s304, 4
      %s306 = scalar_lea.vmem %s2, %s305
      %p307 = pneg %p92
      %p308 = pneg %p89
      %p309 = pneg %p113
      %p310 = pneg %p110
      %p311 = pneg %p134
      %p312 = pneg %p131
      %p313 = pneg %p155
      %p314 = pneg %p152
      %p315 = pneg %p176
      %p316 = pneg %p173
      %p317 = pneg %p197
      %p318 = pneg %p194
      %p319 = pneg %p223
      %p320 = pneg %p220
      %p321 = scmp.lt.s32.totalorder %s19, 1
      %s322 = scalar_select %p321, %s19, 1
      %s323 = smul.addr %s322, 2
      %s324 = smul.addr %s323, 4
      %s325 = scalar_lea.vmem %s8, %s324
      %p326 = scmp.lt.s32.totalorder %s19, 1
      %s327 = scalar_select %p326, %s19, 1
      %s328 = smul.addr %s327, 2
      %s329 = smul.addr %s328, 4
      %s330 = scalar_lea.vmem %s0, %s329
      %p331 = scmp.lt.s32.totalorder %s19, 1
      %s332 = scalar_select %p331, %s19, 1
      %s333 = smul.addr %s332, 2
      %s334 = smul.addr %s333, 4
      %s335 = scalar_lea.vmem %s1, %s334
      %p336 = scmp.lt.s32.totalorder %s19, 1
      %s337 = scalar_select %p336, %s19, 1
      %s338 = smul.addr %s337, 2
      %s339 = smul.addr %s338, 4
      %s340 = scalar_lea.vmem %s2, %s339
      %p341 = scmp.lt.s32.totalorder %s19, 1
      %s342 = scalar_select %p341, %s19, 1
      %s343 = smul.addr %s342, 2
      %s344 = smul.addr %s343, 4
      %s345 = scalar_lea.vmem %s8, %s344
      %v347 = vld [vmem:[%s330] sm:$0xf]
      %v348 = vld [vmem:[%s330 + $0x4] sm:$0xf]
      %v349 = vunpack.c.l.bf16 %v347
      %v350 = vunpack.c.l.bf16 %v348
      %vm351 = vcmask 523264
      %352 = vst.msk [vmem:[#allocation2] sm:$0xff] %vm351, %v349
      %353 = vst.msk [vmem:[#allocation2 + $0x18] sm:$0xff] %vm351, %v350
      %v354 = vld [vmem:[%s335] sm:$0xf]
      %v355 = vld [vmem:[%s335 + $0x4] sm:$0xf]
      %v356 = vunpack.c.l.bf16 %v354
      %v357 = vunpack.c.l.bf16 %v355
      %vm358 = vcmask 261120
      %359 = vst.msk [vmem:[#allocation2 + $0x8] sm:$0xff] %vm358, %v356
      %360 = vst.msk [vmem:[#allocation2 + $0x20] sm:$0xff] %vm358, %v357
      %v361 = vld [vmem:[%s340] sm:$0xf]
      %v362 = vld [vmem:[%s340 + $0x4] sm:$0xf]
      %v363 = vunpack.c.l.bf16 %v361
      %v364 = vunpack.c.l.bf16 %v362
      %365 = vst.msk [vmem:[#allocation2 + $0x10] sm:$0xff] %vm358, %v363
      %366 = vst.msk [vmem:[#allocation2 + $0x28] sm:$0xff] %vm358, %v364
      %v367 = vld [vmem:[#allocation2] sm:$0xff]
      %v368 = vld [vmem:[#allocation2 + $0x18] sm:$0xff]
      %v369 = vpack.c.bf16 %v368, %v367
      %v370 = vld [vmem:[%s3] sm:$0xf]
      %v371 = vld [vmem:[%s3 + $0x4] sm:$0xf]
      %v372 = vld [vmem:[%s3 + $0x8] sm:$0xf]
      %v373 = vld [vmem:[%s3 + $0xc] sm:$0xf]
      %v374 = vld [vmem:[%s3 + $0x10] sm:$0xf]
      %v375 = vld [vmem:[%s3 + $0x14] sm:$0xf]
      %v376 = vld [vmem:[%s3 + $0x18] sm:$0xf]
      %v377 = vld [vmem:[%s3 + $0x1c] sm:$0xf]
      %v378 = vld [vmem:[#allocation2 + $0x8] sm:$0xff]
      %v379 = vld [vmem:[#allocation2 + $0x20] sm:$0xff]
      %v380 = vpack.c.bf16 %v379, %v378
      %v381 = vld [vmem:[%s4] sm:$0xf]
      %v382 = vld [vmem:[%s4 + $0x4] sm:$0xf]
      %v383 = vld [vmem:[%s4 + $0x8] sm:$0xf]
      %v384 = vld [vmem:[%s4 + $0xc] sm:$0xf]
      %v389 = vunpack.c.l.b16 %v381
      %v390 = vunpack.c.l.b16 %v382
      %v391 = vunpack.c.l.b16 %v383
      %v392 = vunpack.c.l.b16 %v384
      %v393 = vpack.c.b16 %v390, %v389
      %v394 = vpack.c.b16 %v392, %v391
      %v398 = vsel %vm358, %v380, 0
      %400 = vmatprep.subr.bf16.mxu0 0
      %401 = vmatpush1.bf16.msra.mxu0 0
      %402 = vmatprep.subr.bf16.mxu0 0
      %403 = vmatpush1.bf16.msra.mxu0 0
      %404 = vmatprep.subr.bf16.mxu0 0
      %405 = vmatpush1.bf16.msra.mxu0 0
      %406 = vmatprep.subr.bf16.mxu0 0
      %407 = vmatpush1.bf16.msra.mxu0 0
      %408 = vmatprep.subr.bf16.mxu0 0
      %409 = vmatpush1.bf16.msra.mxu0 0
      %410 = vmatprep.subr.bf16.mxu0 0
      %411 = vmatpush1.bf16.msra.mxu0 0
      %412 = vmatprep.subr.bf16.mxu0 0
      %413 = vmatpush1.bf16.msra.mxu0 %v394
      %414 = vmatprep.subr.bf16.mxu0 0
      %415 = vmatpush1.bf16.msra.mxu0 %v393
      %416 = vmatprep.subr.bf16.mxu0 0
      %417 = vmatpush2.bf16.msra.mxu0 0
      %418 = vmatprep.subr.bf16.mxu0 0
      %419 = vmatpush2.bf16.msra.mxu0 0
      %420 = vmatprep.subr.bf16.mxu0 0
      %421 = vmatpush2.bf16.msra.mxu0 0
      %422 = vmatprep.subr.bf16.mxu0 0
      %423 = vmatpush2.bf16.msra.mxu0 0
      %424 = vmatprep.subr.bf16.mxu0 0
      %425 = vmatpush2.bf16.msra.mxu0 0
      %426 = vmatprep.subr.bf16.mxu0 0
      %427 = vmatpush2.bf16.msra.mxu0 0
      %428 = vmatprep.subr.bf16.mxu0 0
      %429 = vmatpush2.bf16.msra.mxu0 0
      %430 = vmatprep.subr.bf16.mxu0 0
      %431 = vmatpush2.bf16.msra.mxu0 0
      %432 = vmatprep.mubr.bf16.mxu0 0
      %433 = vmatmul.mubr.bf16.gmra.mxu0 %v398
      %v434 = vpop.f32.mrf.mxu0
      %v435 = vadd.f32 0.0, %v434
      %v436 = vpop.f32.mrf.mxu0
      %v437 = vpop.f32.mrf.mxu0
      %v438 = vadd.f32 0.0, %v437
      %v439 = vpop.f32.mrf.mxu0
      %440 = vdwg.mxu0
      %v449 = vunpack.c.l.b16 %v370
      %v450 = vunpack.c.l.b16 %v371
      %v451 = vunpack.c.l.b16 %v372
      %v452 = vunpack.c.l.b16 %v373
      %v453 = vunpack.c.l.b16 %v374
      %v454 = vunpack.c.l.b16 %v375
      %v455 = vunpack.c.l.b16 %v376
      %v456 = vunpack.c.l.b16 %v377
      %v457 = vpack.c.b16 %v450, %v449
      %v458 = vpack.c.b16 %v452, %v451
      %v459 = vpack.c.b16 %v454, %v453
      %v460 = vpack.c.b16 %v456, %v455
      %v466 = vsel %vm351, %v369, 0
      %468 = vmatprep.subr.bf16.mxu0 0
      %469 = vmatpush1.bf16.msra.mxu0 0
      %470 = vmatprep.subr.bf16.mxu0 0
      %471 = vmatpush1.bf16.msra.mxu0 0
      %472 = vmatprep.subr.bf16.mxu0 0
      %473 = vmatpush1.bf16.msra.mxu0 0
      %474 = vmatprep.subr.bf16.mxu0 0
      %475 = vmatpush1.bf16.msra.mxu0 0
      %476 = vmatprep.subr.bf16.mxu0 0
      %477 = vmatpush1.bf16.msra.mxu0 %v460
      %478 = vmatprep.subr.bf16.mxu0 0
      %479 = vmatpush1.bf16.msra.mxu0 %v459
      %480 = vmatprep.subr.bf16.mxu0 0
      %481 = vmatpush1.bf16.msra.mxu0 %v458
      %482 = vmatprep.subr.bf16.mxu0 0
      %483 = vmatpush1.bf16.msra.mxu0 %v457
      %484 = vmatprep.subr.bf16.mxu0 0
      %485 = vmatpush2.bf16.msra.mxu0 0
      %486 = vmatprep.subr.bf16.mxu0 0
      %487 = vmatpush2.bf16.msra.mxu0 0
      %488 = vmatprep.subr.bf16.mxu0 0
      %489 = vmatpush2.bf16.msra.mxu0 0
      %490 = vmatprep.subr.bf16.mxu0 0
      %491 = vmatpush2.bf16.msra.mxu0 0
      %492 = vmatprep.subr.bf16.mxu0 0
      %493 = vmatpush2.bf16.msra.mxu0 0
      %494 = vmatprep.subr.bf16.mxu0 0
      %495 = vmatpush2.bf16.msra.mxu0 0
      %496 = vmatprep.subr.bf16.mxu0 0
      %497 = vmatpush2.bf16.msra.mxu0 0
      %498 = vmatprep.subr.bf16.mxu0 0
      %499 = vmatpush2.bf16.msra.mxu0 0
      %500 = vmatprep.mubr.bf16.mxu0 0
      %501 = vmatmul.mubr.bf16.gmra.mxu0 %v466
      %v502 = vpop.f32.mrf.mxu0
      %v503 = vadd.f32 %v435, %v502
      %v504 = vpop.f32.mrf.mxu0
      %v505 = vpop.f32.mrf.mxu0
      %v506 = vadd.f32 %v438, %v505
      %v507 = vpop.f32.mrf.mxu0
      %508 = vdwg.mxu0
      %v509 = vld [vmem:[#allocation2 + $0x10] sm:$0xff]
      %v510 = vld [vmem:[#allocation2 + $0x28] sm:$0xff]
      %v511 = vpack.c.bf16 %v510, %v509
      %v512 = vld [vmem:[%s5] sm:$0xf]
      %v513 = vld [vmem:[%s5 + $0x4] sm:$0xf]
      %v514 = vld [vmem:[%s5 + $0x8] sm:$0xf]
      %v515 = vld [vmem:[%s5 + $0xc] sm:$0xf]
      %v520 = vunpack.c.l.b16 %v512
      %v521 = vunpack.c.l.b16 %v513
      %v522 = vunpack.c.l.b16 %v514
      %v523 = vunpack.c.l.b16 %v515
      %v524 = vpack.c.b16 %v521, %v520
      %v525 = vpack.c.b16 %v523, %v522
      %v529 = vsel %vm358, %v511, 0
      %531 = vmatprep.subr.bf16.mxu0 0
      %532 = vmatpush1.bf16.msra.mxu0 0
      %533 = vmatprep.subr.bf16.mxu0 0
      %534 = vmatpush1.bf16.msra.mxu0 0
      %535 = vmatprep.subr.bf16.mxu0 0
      %536 = vmatpush1.bf16.msra.mxu0 0
      %537 = vmatprep.subr.bf16.mxu0 0
      %538 = vmatpush1.bf16.msra.mxu0 0
      %539 = vmatprep.subr.bf16.mxu0 0
      %540 = vmatpush1.bf16.msra.mxu0 0
      %541 = vmatprep.subr.bf16.mxu0 0
      %542 = vmatpush1.bf16.msra.mxu0 0
      %543 = vmatprep.subr.bf16.mxu0 0
      %544 = vmatpush1.bf16.msra.mxu0 %v525
      %545 = vmatprep.subr.bf16.mxu0 0
      %546 = vmatpush1.bf16.msra.mxu0 %v524
      %547 = vmatprep.subr.bf16.mxu0 0
      %548 = vmatpush2.bf16.msra.mxu0 0
      %549 = vmatprep.subr.bf16.mxu0 0
      %550 = vmatpush2.bf16.msra.mxu0 0
      %551 = vmatprep.subr.bf16.mxu0 0
      %552 = vmatpush2.bf16.msra.mxu0 0
      %553 = vmatprep.subr.bf16.mxu0 0
      %554 = vmatpush2.bf16.msra.mxu0 0
      %555 = vmatprep.subr.bf16.mxu0 0
      %556 = vmatpush2.bf16.msra.mxu0 0
      %557 = vmatprep.subr.bf16.mxu0 0
      %558 = vmatpush2.bf16.msra.mxu0 0
      %559 = vmatprep.subr.bf16.mxu0 0
      %560 = vmatpush2.bf16.msra.mxu0 0
      %561 = vmatprep.subr.bf16.mxu0 0
      %562 = vmatpush2.bf16.msra.mxu0 0
      %563 = vmatprep.mubr.bf16.mxu0 0
      %564 = vmatmul.mubr.bf16.gmra.mxu0 %v529
      %v565 = vpop.f32.mrf.mxu0
      %v566 = vadd.f32 0.0, %v565
      %v567 = vpop.f32.mrf.mxu0
      %v568 = vpop.f32.mrf.mxu0
      %v569 = vadd.f32 0.0, %v568
      %v570 = vpop.f32.mrf.mxu0
      %571 = vdwg.mxu0
      %v572 = vadd.f32 %v503, %v566
      %v573 = vadd.f32 %v506, %v569
      %v574 = vld [vmem:[%s6] sm:$0x1]
      %v576 = vlaneseq
      %v577 = vshrl.u32 %v576, 7
      %v578 = vsub.s32 0, %v577
      %v579 = vrot.slane %v574, %v578
      %v581 = vmul.f32 %v572, %v579
      %v582 = vmul.f32 %v573, %v579
      %v583 = vld [vmem:[%s7] sm:$0x1]
      %v585 = vlaneseq
      %v586 = vshrl.u32 %v585, 7
      %v587 = vsub.s32 0, %v586
      %v588 = vrot.slane %v583, %v587
      %v590 = vadd.f32 %v581, %v588
      %v591 = vadd.f32 %v582, %v588
      %v592 = vmax.f32 %v590, 0.0
      %v593 = vmax.f32 %v591, 0.0
      %v594 = vpack.c.bf16 %v593, %v592
      %v596 = vunpack.c.l.b16 %v594
      %v597 = vunpack.c.h.b16 %v594
      %v598 = vpack.c.b16 %v596, %v596
      %v599 = vpack.c.b16 %v597, %v597
      %602 = vst [vmem:[%s345] sm:$0xf] %v598
      %603 = vst [vmem:[%s345 + $0x4] sm:$0xf] %v599
      %p604 = scmp.lt.s32.totalorder %s19, 1
      %s605 = scalar_select %p604, %s19, 1
      %s606 = smul.addr %s605, 2
      %s607 = smul.addr %s606, 4
      %s608 = scalar_lea.vmem %s8, %s607
      // Predicated region
      $region53: #{_lambda_.14} parent=51 // pred_check
        %p609 = pneg %p220
      $region54: #{_lambda_.14} parent=51 // pred_check_branch
        %611 = sbr.rel (%p609) target = $region56
      $region55: #{_lambda_.14} parent=51 // pred_region
        _
      $region56: #{_lambda_.14} parent=51 // pred_fallthru
        _
    $region52: #{_lambda_.14} parent=5 // pred_fallthru
      _
    %p612 = scmp.le.s32.totalorder 2, %s14
    // Predicated region
    $region57: #{_lambda_.14} parent=5 // pred_check
      %p613 = pneg %p612
    $region58: #{_lambda_.14} parent=5 // pred_check_branch
      %615 = sbr.rel (%p613) target = $region60
    $region59: #{_lambda_.14} parent=5 // pred_region
      %s616 = ssub.s32 %s14, 2
      // Predicated region
      $region61: #{_lambda_.14} parent=59 // pred_check
        %p617 = pneg %p226
      $region62: #{_lambda_.14} parent=59 // pred_check_branch
        %619 = sbr.rel (%p617) target = $region64
      $region63: #{_lambda_.14} parent=59 // pred_region
        %p620 = scmp.lt.s32.totalorder %s20, 1
        %s621 = scalar_select %p620, %s20, 1
        %s622 = smul.addr %s621, 2
        %s623 = smul.addr %s622, 4
        %s624 = scalar_lea.vmem %s8, %s623
      $region64: #{_lambda_.14} parent=59 // pred_fallthru
        _
    $region60: #{_lambda_.14} parent=5 // pred_fallthru
      _
  $region6: #{_lambda_.14} parent=0 // loop_footer
    %s18 = sadd.s32 1, %s14
  $region7: #{_lambda_.14} parent=0 // loop_footer_branch
    %13 = sbr.rel target = $region3
  $region8: #{_lambda_.14} parent=0 // loop_exit
    _

// kernel: _lambda_.15
$region0: #{_lambda_.15}
  #allocation0 [shape = 'u32[]', space=smem, size = 0x4, offset = 0x4, fixed_abs, tag = 'smem constant byte address 0x4 - core index']
  #allocation1 [shape = 'u32[144,128]{1,0:T(1,128)}', space=vmem, size = 0x12000, scoped, tag = 'internal scratch']
  #allocation2 [shape = 'f32[20,256]{1,0:T(8,128)}', space=vmem, size = 0x6000, scoped, tag = 'scratch operand']
  %s0 = inlined_call_operand.vmem [shape: bf16[2,16,128], index: 0, kind: input, shape index: {}]
  %s1 = inlined_call_operand.vmem [shape: bf16[2,16,128], index: 1, kind: input, shape index: {}]
  %s2 = inlined_call_operand.vmem [shape: bf16[3,128,128], index: 2, kind: input, shape index: {}]
  %s3 = inlined_call_operand.vmem [shape: bf16[3,128,128], index: 3, kind: input, shape index: {}]
  %s4 = inlined_call_operand.vmem [shape: f32[1,128], index: 4, kind: input, shape index: {}]
  %s5 = inlined_call_operand.vmem [shape: f32[1,128], index: 5, kind: input, shape index: {}]
  %s6 = inlined_call_operand.vmem [shape: bf16[2,16,128], index: 6, kind: output, shape index: {}]
  %s7 = sld [smem:[#allocation0]]
  $region57: #{_lambda_.15} parent=0
    _
  %s9 = ssub.s32 1, %s7
  %s10 = scalar_select 0, %s9, %s7
  loop: start=0, step=1, limit=4
  $region2: #{_lambda_.15} parent=0 // loop_pre_header
    _
  $region3: #{_lambda_.15} parent=0 // loop_header
    %s12 = sphi 0, %s16
    %p13 = scmp.ge.s32.totalorder %s12, 4
    %s22 = sphi 0, %s24
    %s25 = sphi 0, %s22
    %s26 = sphi 0, %s25
    %s42 = sphi 0, %s26
    %s48 = sphi 0, %s50
    %s51 = sphi 0, %s48
    %s52 = sphi 0, %s51
    %s68 = sphi 0, %s52
    %s72 = sphi 0, %s72
    %s74 = sphi 0, %s72
    %s75 = sphi 0, %s74
    %s89 = sphi 0, %s75
    %s93 = sphi 0, %s93
    %s95 = sphi 0, %s93
    %s96 = sphi 0, %s95
    %s110 = sphi 0, %s96
    %s114 = sphi 0, %s114
    %s116 = sphi 0, %s114
    %s117 = sphi 0, %s116
    %s131 = sphi 0, %s117
    %s135 = sphi 0, %s135
    %s137 = sphi 0, %s135
    %s138 = sphi 0, %s137
    %s152 = sphi 0, %s138
    %s158 = sphi 0, %s160
    %s161 = sphi 0, %s158
    %s162 = sphi 0, %s161
    %s178 = sphi 0, %s162
  $region4: #{_lambda_.15} parent=0 // loop_header_branch
    %15 = sbr.rel (%p13) target = $region8
  $region5: #{_lambda_.15} parent=0 // loop_body
    %s17 = ssub.s32 %s12, 1
    %s18 = ssub.s32 %s12, 2
    %s19 = sadd.s32 %s12, 1
    %s20 = ssub.s32 %s12, %s19
    %p21 = scmp.eq.s32.totalorder %s20, 0
    %s23 = sadd.s32 %s22, 1
    %s24 = scalar_select %p21, %s22, %s23
    %p27 = pneg %p21
    %p28 = scmp.eq.s32.totalorder %s12, 1
    %p29 = por %p27, %p28
    %p30 = scmp.ne.s32.totalorder %s22, %s25
    %p31 = scmp.eq.s32.totalorder %s12, 0
    %p32 = por %p30, %p31
    %p33 = scmp.ne.s32.totalorder %s22, %s25
    %p34 = scmp.eq.s32.totalorder %s17, 1
    %p35 = por %p33, %p34
    %p36 = scmp.ne.s32.totalorder %s25, %s26
    %p37 = scmp.eq.s32.totalorder %s17, 0
    %p38 = por %p36, %p37
    %p39 = scmp.ne.s32.totalorder %s25, %s26
    %p40 = scmp.eq.s32.totalorder %s18, 1
    %p41 = por %p39, %p40
    %p43 = scmp.ne.s32.totalorder %s26, %s42
    %p44 = scmp.eq.s32.totalorder %s18, 0
    %p45 = por %p43, %p44
    %s46 = ssub.s32 %s12, %s19
    %p47 = scmp.eq.s32.totalorder %s46, 0
    %s49 = sadd.s32 %s48, 1
    %s50 = scalar_select %p47, %s48, %s49
    %p53 = pneg %p47
    %p54 = scmp.eq.s32.totalorder %s12, 1
    %p55 = por %p53, %p54
    %p56 = scmp.ne.s32.totalorder %s48, %s51
    %p57 = scmp.eq.s32.totalorder %s12, 0
    %p58 = por %p56, %p57
    %p59 = scmp.ne.s32.totalorder %s48, %s51
    %p60 = scmp.eq.s32.totalorder %s17, 1
    %p61 = por %p59, %p60
    %p62 = scmp.ne.s32.totalorder %s51, %s52
    %p63 = scmp.eq.s32.totalorder %s17, 0
    %p64 = por %p62, %p63
    %p65 = scmp.ne.s32.totalorder %s51, %s52
    %p66 = scmp.eq.s32.totalorder %s18, 1
    %p67 = por %p65, %p66
    %p69 = scmp.ne.s32.totalorder %s52, %s68
    %p70 = scmp.eq.s32.totalorder %s18, 0
    %p71 = por %p69, %p70
    %s73 = sadd.s32 %s72, 1
    %p76 = scmp.eq.s32.totalorder %s12, 1
    %p77 = scmp.ne.s32.totalorder %s72, %s74
    %p78 = scmp.eq.s32.totalorder %s12, 0
    %p79 = por %p77, %p78
    %p80 = scmp.ne.s32.totalorder %s72, %s74
    %p81 = scmp.eq.s32.totalorder %s17, 1
    %p82 = por %p80, %p81
    %p83 = scmp.ne.s32.totalorder %s74, %s75
    %p84 = scmp.eq.s32.totalorder %s17, 0
    %p85 = por %p83, %p84
    %p86 = scmp.ne.s32.totalorder %s74, %s75
    %p87 = scmp.eq.s32.totalorder %s18, 1
    %p88 = por %p86, %p87
    %p90 = scmp.ne.s32.totalorder %s75, %s89
    %p91 = scmp.eq.s32.totalorder %s18, 0
    %p92 = por %p90, %p91
    %s94 = sadd.s32 %s93, 1
    %p97 = scmp.eq.s32.totalorder %s12, 1
    %p98 = scmp.ne.s32.totalorder %s93, %s95
    %p99 = scmp.eq.s32.totalorder %s12, 0
    %p100 = por %p98, %p99
    %p101 = scmp.ne.s32.totalorder %s93, %s95
    %p102 = scmp.eq.s32.totalorder %s17, 1
    %p103 = por %p101, %p102
    %p104 = scmp.ne.s32.totalorder %s95, %s96
    %p105 = scmp.eq.s32.totalorder %s17, 0
    %p106 = por %p104, %p105
    %p107 = scmp.ne.s32.totalorder %s95, %s96
    %p108 = scmp.eq.s32.totalorder %s18, 1
    %p109 = por %p107, %p108
    %p111 = scmp.ne.s32.totalorder %s96, %s110
    %p112 = scmp.eq.s32.totalorder %s18, 0
    %p113 = por %p111, %p112
    %s115 = sadd.s32 %s114, 1
    %p118 = scmp.eq.s32.totalorder %s12, 1
    %p119 = scmp.ne.s32.totalorder %s114, %s116
    %p120 = scmp.eq.s32.totalorder %s12, 0
    %p121 = por %p119, %p120
    %p122 = scmp.ne.s32.totalorder %s114, %s116
    %p123 = scmp.eq.s32.totalorder %s17, 1
    %p124 = por %p122, %p123
    %p125 = scmp.ne.s32.totalorder %s116, %s117
    %p126 = scmp.eq.s32.totalorder %s17, 0
    %p127 = por %p125, %p126
    %p128 = scmp.ne.s32.totalorder %s116, %s117
    %p129 = scmp.eq.s32.totalorder %s18, 1
    %p130 = por %p128, %p129
    %p132 = scmp.ne.s32.totalorder %s117, %s131
    %p133 = scmp.eq.s32.totalorder %s18, 0
    %p134 = por %p132, %p133
    %s136 = sadd.s32 %s135, 1
    %p139 = scmp.eq.s32.totalorder %s12, 1
    %p140 = scmp.ne.s32.totalorder %s135, %s137
    %p141 = scmp.eq.s32.totalorder %s12, 0
    %p142 = por %p140, %p141
    %p143 = scmp.ne.s32.totalorder %s135, %s137
    %p144 = scmp.eq.s32.totalorder %s17, 1
    %p145 = por %p143, %p144
    %p146 = scmp.ne.s32.totalorder %s137, %s138
    %p147 = scmp.eq.s32.totalorder %s17, 0
    %p148 = por %p146, %p147
    %p149 = scmp.ne.s32.totalorder %s137, %s138
    %p150 = scmp.eq.s32.totalorder %s18, 1
    %p151 = por %p149, %p150
    %p153 = scmp.ne.s32.totalorder %s138, %s152
    %p154 = scmp.eq.s32.totalorder %s18, 0
    %p155 = por %p153, %p154
    %s156 = ssub.s32 %s12, %s19
    %p157 = scmp.eq.s32.totalorder %s156, 0
    %s159 = sadd.s32 %s158, 1
    %s160 = scalar_select %p157, %s158, %s159
    %p163 = pneg %p157
    %p164 = scmp.eq.s32.totalorder %s12, 1
    %p165 = por %p163, %p164
    %p166 = scmp.ne.s32.totalorder %s158, %s161
    %p167 = scmp.eq.s32.totalorder %s12, 0
    %p168 = por %p166, %p167
    %p169 = scmp.ne.s32.totalorder %s158, %s161
    %p170 = scmp.eq.s32.totalorder %s17, 1
    %p171 = por %p169, %p170
    %p172 = scmp.ne.s32.totalorder %s161, %s162
    %p173 = scmp.eq.s32.totalorder %s17, 0
    %p174 = por %p172, %p173
    %p175 = scmp.ne.s32.totalorder %s161, %s162
    %p176 = scmp.eq.s32.totalorder %s18, 1
    %p177 = por %p175, %p176
    %p179 = scmp.ne.s32.totalorder %s162, %s178
    %p180 = scmp.eq.s32.totalorder %s18, 0
    %p181 = por %p179, %p180
    %p182 = scmp.le.s32.totalorder 1, %s12
    %p183 = scmp.lt.s32.totalorder %s12, 3
    %p184 = pnand %p182, %p183
    %p185 = pneg %p184
    // Predicated region
    $region9: #{_lambda_.15} parent=5 // pred_check
      _
    $region10: #{_lambda_.15} parent=5 // pred_check_branch
      %187 = sbr.rel (%p184) target = $region12
    $region11: #{_lambda_.15} parent=5 // pred_region
      %s188 = ssub.s32 %s12, 1
      // Predicated region
      $region13: #{_lambda_.15} parent=11 // pred_check
        %p189 = pneg %p85
      $region14: #{_lambda_.15} parent=11 // pred_check_branch
        %191 = sbr.rel (%p189) target = $region16
      $region15: #{_lambda_.15} parent=11 // pred_region
        _
      $region16: #{_lambda_.15} parent=11 // pred_fallthru
        _
      // Predicated region
      $region17: #{_lambda_.15} parent=11 // pred_check
        %p192 = pneg %p106
      $region18: #{_lambda_.15} parent=11 // pred_check_branch
        %194 = sbr.rel (%p192) target = $region20
      $region19: #{_lambda_.15} parent=11 // pred_region
        _
      $region20: #{_lambda_.15} parent=11 // pred_fallthru
        _
      // Predicated region
      $region21: #{_lambda_.15} parent=11 // pred_check
        %p195 = pneg %p127
      $region22: #{_lambda_.15} parent=11 // pred_check_branch
        %197 = sbr.rel (%p195) target = $region24
      $region23: #{_lambda_.15} parent=11 // pred_region
        _
      $region24: #{_lambda_.15} parent=11 // pred_fallthru
        _
      // Predicated region
      $region25: #{_lambda_.15} parent=11 // pred_check
        %p198 = pneg %p148
      $region26: #{_lambda_.15} parent=11 // pred_check_branch
        %200 = sbr.rel (%p198) target = $region28
      $region27: #{_lambda_.15} parent=11 // pred_region
        _
      $region28: #{_lambda_.15} parent=11 // pred_fallthru
        _
    $region12: #{_lambda_.15} parent=5 // pred_fallthru
      _
    %p201 = scmp.lt.s32.totalorder %s12, 2
    // Predicated region
    $region29: #{_lambda_.15} parent=5 // pred_check
      %p202 = pneg %p201
    $region30: #{_lambda_.15} parent=5 // pred_check_branch
      %204 = sbr.rel (%p202) target = $region32
    $region31: #{_lambda_.15} parent=5 // pred_region
      // Predicated region
      $region33: #{_lambda_.15} parent=31 // pred_check
        %p205 = pneg %p32
      $region34: #{_lambda_.15} parent=31 // pred_check_branch
        %207 = sbr.rel (%p205) target = $region36
      $region35: #{_lambda_.15} parent=31 // pred_region
        %p208 = scmp.lt.s32.totalorder %s12, 1
        %s209 = scalar_select %p208, %s12, 1
        %s210 = smul.addr %s209, 2
        %s211 = smul.addr %s210, 4
        %s212 = scalar_lea.vmem %s0, %s211
      $region36: #{_lambda_.15} parent=31 // pred_fallthru
        _
      // Predicated region
      $region37: #{_lambda_.15} parent=31 // pred_check
        %p213 = pneg %p58
      $region38: #{_lambda_.15} parent=31 // pred_check_branch
        %215 = sbr.rel (%p213) target = $region40
      $region39: #{_lambda_.15} parent=31 // pred_region
        %p216 = scmp.lt.s32.totalorder %s12, 1
        %s217 = scalar_select %p216, %s12, 1
        %s218 = smul.addr %s217, 2
        %s219 = smul.addr %s218, 4
        %s220 = scalar_lea.vmem %s1, %s219
      $region40: #{_lambda_.15} parent=31 // pred_fallthru
        _
    $region32: #{_lambda_.15} parent=5 // pred_fallthru
      _
    %p221 = scmp.le.s32.totalorder 1, %s12
    %p222 = scmp.lt.s32.totalorder %s12, 3
    %p223 = pnand %p221, %p222
    %p224 = pneg %p223
    // Predicated region
    $region41: #{_lambda_.15} parent=5 // pred_check
      _
    $region42: #{_lambda_.15} parent=5 // pred_check_branch
      %226 = sbr.rel (%p223) target = $region44
    $region43: #{_lambda_.15} parent=5 // pred_region
      %s227 = ssub.s32 %s12, 1
      %p228 = scmp.lt.s32.totalorder %s17, 1
      %s229 = scalar_select %p228, %s17, 1
      %s230 = smul.addr %s229, 2
      %s231 = smul.addr %s230, 4
      %s232 = scalar_lea.vmem %s0, %s231
      %p233 = pneg %p38
      %p234 = pneg %p35
      %p235 = scmp.lt.s32.totalorder %s17, 1
      %s236 = scalar_select %p235, %s17, 1
      %s237 = smul.addr %s236, 2
      %s238 = smul.addr %s237, 4
      %s239 = scalar_lea.vmem %s1, %s238
      %p240 = pneg %p64
      %p241 = pneg %p61
      %p242 = pneg %p85
      %p243 = pneg %p82
      %p244 = pneg %p106
      %p245 = pneg %p103
      %p246 = pneg %p127
      %p247 = pneg %p124
      %p248 = pneg %p148
      %p249 = pneg %p145
      %p250 = pneg %p174
      %p251 = pneg %p171
      %p252 = scmp.lt.s32.totalorder %s17, 1
      %s253 = scalar_select %p252, %s17, 1
      %s254 = smul.addr %s253, 2
      %s255 = smul.addr %s254, 4
      %s256 = scalar_lea.vmem %s6, %s255
      %p257 = scmp.lt.s32.totalorder %s17, 1
      %s258 = scalar_select %p257, %s17, 1
      %s259 = smul.addr %s258, 2
      %s260 = smul.addr %s259, 4
      %s261 = scalar_lea.vmem %s0, %s260
      %p262 = scmp.lt.s32.totalorder %s17, 1
      %s263 = scalar_select %p262, %s17, 1
      %s264 = smul.addr %s263, 2
      %s265 = smul.addr %s264, 4
      %s266 = scalar_lea.vmem %s1, %s265
      %p267 = scmp.lt.s32.totalorder %s17, 1
      %s268 = scalar_select %p267, %s17, 1
      %s269 = smul.addr %s268, 2
      %s270 = smul.addr %s269, 4
      %s271 = scalar_lea.vmem %s6, %s270
      %273 = vst [vmem:[#allocation2] sm:$0xff] 0.0
      %274 = vst [vmem:[#allocation2 + $0x8] sm:$0xff] 0.0
      %275 = vst [vmem:[#allocation2 + $0x10] sm:$0xff] 0.0
      %276 = vst [vmem:[#allocation2 + $0x18] sm:$0xff] 0.0
      %277 = vst [vmem:[#allocation2 + $0x20] sm:$0xf] 0.0
      %278 = vst [vmem:[#allocation2 + $0x28] sm:$0xf] 0.0
      %v279 = vld [vmem:[%s261] sm:$0xf]
      %v280 = vld [vmem:[%s261 + $0x4] sm:$0xf]
      %v281 = vunpack.c.l.bf16 %v279
      %v282 = vunpack.c.l.bf16 %v280
      %vm285 = vcmask 1041408
      %v286 = vrot.slane %v281, 6
      %v287 = vrot.slane %v282, 6
      %v288 = vsel %vm285, %v286, %v287
      %292 = vst [vmem:[#allocation2] sm:$0xfc] %v286
      %293 = vst [vmem:[#allocation2 + $0x10] sm:$0xff] %v288
      %294 = vst [vmem:[#allocation2 + $0x20] sm:$0x3] %v287
      %v295 = vld [vmem:[%s266] sm:$0xf]
      %v296 = vld [vmem:[%s266 + $0x4] sm:$0xf]
      %v297 = vunpack.c.l.bf16 %v295
      %v298 = vunpack.c.l.bf16 %v296
      %v301 = vrot.slane %v297, 6
      %v302 = vrot.slane %v298, 6
      %v303 = vsel %vm285, %v301, %v302
      %307 = vst [vmem:[#allocation2 + $0x8] sm:$0xfc] %v301
      %308 = vst [vmem:[#allocation2 + $0x18] sm:$0xff] %v303
      %309 = vst [vmem:[#allocation2 + $0x28] sm:$0x3] %v302
      %v310 = vld [vmem:[#allocation2] sm:$0xff]
      %v311 = vld [vmem:[#allocation2 + $0x10] sm:$0xff]
      %v312 = vpack.c.bf16 %v311, %v310
      %v313 = vld [vmem:[%s2] sm:$0xf]
      %v314 = vld [vmem:[%s2 + $0x4] sm:$0xf]
      %v315 = vld [vmem:[%s2 + $0x8] sm:$0xf]
      %v316 = vld [vmem:[%s2 + $0xc] sm:$0xf]
      %v317 = vld [vmem:[%s2 + $0x10] sm:$0xf]
      %v318 = vld [vmem:[%s2 + $0x14] sm:$0xf]
      %v319 = vld [vmem:[%s2 + $0x18] sm:$0xf]
      %v320 = vld [vmem:[%s2 + $0x1c] sm:$0xf]
      %v321 = vld [vmem:[%s2 + $0x20] sm:$0xf]
      %v322 = vld [vmem:[%s2 + $0x24] sm:$0xf]
      %v323 = vld [vmem:[%s2 + $0x28] sm:$0xf]
      %v324 = vld [vmem:[%s2 + $0x2c] sm:$0xf]
      %v325 = vld [vmem:[%s2 + $0x30] sm:$0xf]
      %v326 = vld [vmem:[%s2 + $0x34] sm:$0xf]
      %v327 = vld [vmem:[%s2 + $0x38] sm:$0xf]
      %v328 = vld [vmem:[%s2 + $0x3c] sm:$0xf]
      %v329 = vld [vmem:[#allocation2 + $0x8] sm:$0xff]
      %v330 = vld [vmem:[#allocation2 + $0x18] sm:$0xff]
      %v331 = vpack.c.bf16 %v330, %v329
      %v332 = vld [vmem:[%s3] sm:$0xf]
      %v333 = vld [vmem:[%s3 + $0x4] sm:$0xf]
      %v334 = vld [vmem:[%s3 + $0x8] sm:$0xf]
      %v335 = vld [vmem:[%s3 + $0xc] sm:$0xf]
      %v336 = vld [vmem:[%s3 + $0x10] sm:$0xf]
      %v337 = vld [vmem:[%s3 + $0x14] sm:$0xf]
      %v338 = vld [vmem:[%s3 + $0x18] sm:$0xf]
      %v339 = vld [vmem:[%s3 + $0x1c] sm:$0xf]
      %v340 = vld [vmem:[%s3 + $0x20] sm:$0xf]
      %v341 = vld [vmem:[%s3 + $0x24] sm:$0xf]
      %v342 = vld [vmem:[%s3 + $0x28] sm:$0xf]
      %v343 = vld [vmem:[%s3 + $0x2c] sm:$0xf]
      %v344 = vld [vmem:[%s3 + $0x30] sm:$0xf]
      %v345 = vld [vmem:[%s3 + $0x34] sm:$0xf]
      %v346 = vld [vmem:[%s3 + $0x38] sm:$0xf]
      %v347 = vld [vmem:[%s3 + $0x3c] sm:$0xf]
      %v364 = vunpack.c.l.b16 %v332
      %v365 = vunpack.c.l.b16 %v333
      %v366 = vunpack.c.l.b16 %v334
      %v367 = vunpack.c.l.b16 %v335
      %v368 = vunpack.c.l.b16 %v336
      %v369 = vunpack.c.l.b16 %v337
      %v370 = vunpack.c.l.b16 %v338
      %v371 = vunpack.c.l.b16 %v339
      %v372 = vunpack.c.l.b16 %v340
      %v373 = vunpack.c.l.b16 %v341
      %v374 = vunpack.c.l.b16 %v342
      %v375 = vunpack.c.l.b16 %v343
      %v376 = vunpack.c.l.b16 %v344
      %v377 = vunpack.c.l.b16 %v345
      %v378 = vunpack.c.l.b16 %v346
      %v379 = vunpack.c.l.b16 %v347
      %v380 = vpack.c.b16 %v365, %v364
      %v381 = vpack.c.b16 %v367, %v366
      %v382 = vpack.c.b16 %v369, %v368
      %v383 = vpack.c.b16 %v371, %v370
      %v384 = vpack.c.b16 %v373, %v372
      %v385 = vpack.c.b16 %v375, %v374
      %v386 = vpack.c.b16 %v377, %v376
      %v387 = vpack.c.b16 %v379, %v378
      %396 = vmatprep.subr.bf16.mxu0 0
      %397 = vmatpush1.bf16.msra.mxu0 %v387
      %398 = vmatprep.subr.bf16.mxu0 0
      %399 = vmatpush1.bf16.msra.mxu0 %v386
      %400 = vmatprep.subr.bf16.mxu0 0
      %401 = vmatpush1.bf16.msra.mxu0 %v385
      %402 = vmatprep.subr.bf16.mxu0 0
      %403 = vmatpush1.bf16.msra.mxu0 %v384
      %404 = vmatprep.subr.bf16.mxu0 0
      %405 = vmatpush1.bf16.msra.mxu0 %v383
      %406 = vmatprep.subr.bf16.mxu0 0
      %407 = vmatpush1.bf16.msra.mxu0 %v382
      %408 = vmatprep.subr.bf16.mxu0 0
      %409 = vmatpush1.bf16.msra.mxu0 %v381
      %410 = vmatprep.subr.bf16.mxu0 0
      %411 = vmatpush1.bf16.msra.mxu0 %v380
      %412 = vmatprep.subr.bf16.mxu0 0
      %413 = vmatpush2.bf16.msra.mxu0 0
      %414 = vmatprep.subr.bf16.mxu0 0
      %415 = vmatpush2.bf16.msra.mxu0 0
      %416 = vmatprep.subr.bf16.mxu0 0
      %417 = vmatpush2.bf16.msra.mxu0 0
      %418 = vmatprep.subr.bf16.mxu0 0
      %419 = vmatpush2.bf16.msra.mxu0 0
      %420 = vmatprep.subr.bf16.mxu0 0
      %421 = vmatpush2.bf16.msra.mxu0 0
      %422 = vmatprep.subr.bf16.mxu0 0
      %423 = vmatpush2.bf16.msra.mxu0 0
      %424 = vmatprep.subr.bf16.mxu0 0
      %425 = vmatpush2.bf16.msra.mxu0 0
      %426 = vmatprep.subr.bf16.mxu0 0
      %427 = vmatpush2.bf16.msra.mxu0 0
      %428 = vmatprep.mubr.bf16.mxu0 0
      %429 = vmatmul.mubr.bf16.gmra.mxu0 %v331
      %v430 = vpop.f32.mrf.mxu0
      %v431 = vadd.f32 0.0, %v430
      %v432 = vpop.f32.mrf.mxu0
      %v433 = vpop.f32.mrf.mxu0
      %v434 = vadd.f32 0.0, %v433
      %v435 = vpop.f32.mrf.mxu0
      %436 = vdwg.mxu0
      %v453 = vunpack.c.l.b16 %v313
      %v454 = vunpack.c.l.b16 %v314
      %v455 = vunpack.c.l.b16 %v315
      %v456 = vunpack.c.l.b16 %v316
      %v457 = vunpack.c.l.b16 %v317
      %v458 = vunpack.c.l.b16 %v318
      %v459 = vunpack.c.l.b16 %v319
      %v460 = vunpack.c.l.b16 %v320
      %v461 = vunpack.c.l.b16 %v321
      %v462 = vunpack.c.l.b16 %v322
      %v463 = vunpack.c.l.b16 %v323
      %v464 = vunpack.c.l.b16 %v324
      %v465 = vunpack.c.l.b16 %v325
      %v466 = vunpack.c.l.b16 %v326
      %v467 = vunpack.c.l.b16 %v327
      %v468 = vunpack.c.l.b16 %v328
      %v469 = vpack.c.b16 %v454, %v453
      %v470 = vpack.c.b16 %v456, %v455
      %v471 = vpack.c.b16 %v458, %v457
      %v472 = vpack.c.b16 %v460, %v459
      %v473 = vpack.c.b16 %v462, %v461
      %v474 = vpack.c.b16 %v464, %v463
      %v475 = vpack.c.b16 %v466, %v465
      %v476 = vpack.c.b16 %v468, %v467
      %485 = vmatprep.subr.bf16.mxu0 0
      %486 = vmatpush1.bf16.msra.mxu0 %v476
      %487 = vmatprep.subr.bf16.mxu0 0
      %488 = vmatpush1.bf16.msra.mxu0 %v475
      %489 = vmatprep.subr.bf16.mxu0 0
      %490 = vmatpush1.bf16.msra.mxu0 %v474
      %491 = vmatprep.subr.bf16.mxu0 0
      %492 = vmatpush1.bf16.msra.mxu0 %v473
      %493 = vmatprep.subr.bf16.mxu0 0
      %494 = vmatpush1.bf16.msra.mxu0 %v472
      %495 = vmatprep.subr.bf16.mxu0 0
      %496 = vmatpush1.bf16.msra.mxu0 %v471
      %497 = vmatprep.subr.bf16.mxu0 0
      %498 = vmatpush1.bf16.msra.mxu0 %v470
      %499 = vmatprep.subr.bf16.mxu0 0
      %500 = vmatpush1.bf16.msra.mxu0 %v469
      %501 = vmatprep.subr.bf16.mxu0 0
      %502 = vmatpush2.bf16.msra.mxu0 0
      %503 = vmatprep.subr.bf16.mxu0 0
      %504 = vmatpush2.bf16.msra.mxu0 0
      %505 = vmatprep.subr.bf16.mxu0 0
      %506 = vmatpush2.bf16.msra.mxu0 0
      %507 = vmatprep.subr.bf16.mxu0 0
      %508 = vmatpush2.bf16.msra.mxu0 0
      %509 = vmatprep.subr.bf16.mxu0 0
      %510 = vmatpush2.bf16.msra.mxu0 0
      %511 = vmatprep.subr.bf16.mxu0 0
      %512 = vmatpush2.bf16.msra.mxu0 0
      %513 = vmatprep.subr.bf16.mxu0 0
      %514 = vmatpush2.bf16.msra.mxu0 0
      %515 = vmatprep.subr.bf16.mxu0 0
      %516 = vmatpush2.bf16.msra.mxu0 0
      %517 = vmatprep.mubr.bf16.mxu0 0
      %518 = vmatmul.mubr.bf16.gmra.mxu0 %v312
      %v519 = vpop.f32.mrf.mxu0
      %v520 = vadd.f32 %v431, %v519
      %v521 = vpop.f32.mrf.mxu0
      %v522 = vpop.f32.mrf.mxu0
      %v523 = vadd.f32 %v434, %v522
      %v524 = vpop.f32.mrf.mxu0
      %525 = vdwg.mxu0
      %v526 = vld [vmem:[#allocation2] sm:$0xfc]
      %v527 = vld [vmem:[#allocation2 + $0x10] sm:$0xff]
      %v528 = vld [vmem:[#allocation2 + $0x20] sm:$0x3]
      %v529 = vpack.c.bf16 %v527, %v526
      %v530 = vpack.c.bf16 %v528, %v528
      %s531 = scalar_lea.vmem %s2, 64
      %v532 = vld [vmem:[%s531] sm:$0xf]
      %v533 = vld [vmem:[%s531 + $0x4] sm:$0xf]
      %v534 = vld [vmem:[%s531 + $0x8] sm:$0xf]
      %v535 = vld [vmem:[%s531 + $0xc] sm:$0xf]
      %v536 = vld [vmem:[%s531 + $0x10] sm:$0xf]
      %v537 = vld [vmem:[%s531 + $0x14] sm:$0xf]
      %v538 = vld [vmem:[%s531 + $0x18] sm:$0xf]
      %v539 = vld [vmem:[%s531 + $0x1c] sm:$0xf]
      %v540 = vld [vmem:[%s531 + $0x20] sm:$0xf]
      %v541 = vld [vmem:[%s531 + $0x24] sm:$0xf]
      %v542 = vld [vmem:[%s531 + $0x28] sm:$0xf]
      %v543 = vld [vmem:[%s531 + $0x2c] sm:$0xf]
      %v544 = vld [vmem:[%s531 + $0x30] sm:$0xf]
      %v545 = vld [vmem:[%s531 + $0x34] sm:$0xf]
      %v546 = vld [vmem:[%s531 + $0x38] sm:$0xf]
      %v547 = vld [vmem:[%s531 + $0x3c] sm:$0xf]
      %vm550 = vcmask 1046528
      %v551 = vrot.slane %v529, 1
      %v552 = vrot.slane %v530, 1
      %v553 = vsel %vm550, %v551, %v552
      %v571 = vunpack.c.l.b16 %v532
      %v572 = vunpack.c.l.b16 %v533
      %v573 = vunpack.c.l.b16 %v534
      %v574 = vunpack.c.l.b16 %v535
      %v575 = vunpack.c.l.b16 %v536
      %v576 = vunpack.c.l.b16 %v537
      %v577 = vunpack.c.l.b16 %v538
      %v578 = vunpack.c.l.b16 %v539
      %v579 = vunpack.c.l.b16 %v540
      %v580 = vunpack.c.l.b16 %v541
      %v581 = vunpack.c.l.b16 %v542
      %v582 = vunpack.c.l.b16 %v543
      %v583 = vunpack.c.l.b16 %v544
      %v584 = vunpack.c.l.b16 %v545
      %v585 = vunpack.c.l.b16 %v546
      %v586 = vunpack.c.l.b16 %v547
      %v587 = vpack.c.b16 %v572, %v571
      %v588 = vpack.c.b16 %v574, %v573
      %v589 = vpack.c.b16 %v576, %v575
      %v590 = vpack.c.b16 %v578, %v577
      %v591 = vpack.c.b16 %v580, %v579
      %v592 = vpack.c.b16 %v582, %v581
      %v593 = vpack.c.b16 %v584, %v583
      %v594 = vpack.c.b16 %v586, %v585
      %603 = vmatprep.subr.bf16.mxu0 0
      %604 = vmatpush1.bf16.msra.mxu0 %v594
      %605 = vmatprep.subr.bf16.mxu0 0
      %606 = vmatpush1.bf16.msra.mxu0 %v593
      %607 = vmatprep.subr.bf16.mxu0 0
      %608 = vmatpush1.bf16.msra.mxu0 %v592
      %609 = vmatprep.subr.bf16.mxu0 0
      %610 = vmatpush1.bf16.msra.mxu0 %v591
      %611 = vmatprep.subr.bf16.mxu0 0
      %612 = vmatpush1.bf16.msra.mxu0 %v590
      %613 = vmatprep.subr.bf16.mxu0 0
      %614 = vmatpush1.bf16.msra.mxu0 %v589
      %615 = vmatprep.subr.bf16.mxu0 0
      %616 = vmatpush1.bf16.msra.mxu0 %v588
      %617 = vmatprep.subr.bf16.mxu0 0
      %618 = vmatpush1.bf16.msra.mxu0 %v587
      %619 = vmatprep.subr.bf16.mxu0 0
      %620 = vmatpush2.bf16.msra.mxu0 0
      %621 = vmatprep.subr.bf16.mxu0 0
      %622 = vmatpush2.bf16.msra.mxu0 0
      %623 = vmatprep.subr.bf16.mxu0 0
      %624 = vmatpush2.bf16.msra.mxu0 0
      %625 = vmatprep.subr.bf16.mxu0 0
      %626 = vmatpush2.bf16.msra.mxu0 0
      %627 = vmatprep.subr.bf16.mxu0 0
      %628 = vmatpush2.bf16.msra.mxu0 0
      %629 = vmatprep.subr.bf16.mxu0 0
      %630 = vmatpush2.bf16.msra.mxu0 0
      %631 = vmatprep.subr.bf16.mxu0 0
      %632 = vmatpush2.bf16.msra.mxu0 0
      %633 = vmatprep.subr.bf16.mxu0 0
      %634 = vmatpush2.bf16.msra.mxu0 0
      %635 = vmatprep.mubr.bf16.mxu0 0
      %636 = vmatmul.mubr.bf16.gmra.mxu0 %v553
      %v637 = vpop.f32.mrf.mxu0
      %v638 = vadd.f32 0.0, %v637
      %v639 = vpop.f32.mrf.mxu0
      %v640 = vpop.f32.mrf.mxu0
      %v641 = vadd.f32 0.0, %v640
      %v642 = vpop.f32.mrf.mxu0
      %643 = vdwg.mxu0
      %v644 = vadd.f32 %v520, %v638
      %v645 = vadd.f32 %v523, %v641
      %v646 = vld [vmem:[#allocation2 + $0x8] sm:$0xfc]
      %v647 = vld [vmem:[#allocation2 + $0x18] sm:$0xff]
      %v648 = vld [vmem:[#allocation2 + $0x28] sm:$0x3]
      %v649 = vpack.c.bf16 %v647, %v646
      %v650 = vpack.c.bf16 %v648, %v648
      %s651 = scalar_lea.vmem %s3, 64
      %v652 = vld [vmem:[%s651] sm:$0xf]
      %v653 = vld [vmem:[%s651 + $0x4] sm:$0xf]
      %v654 = vld [vmem:[%s651 + $0x8] sm:$0xf]
      %v655 = vld [vmem:[%s651 + $0xc] sm:$0xf]
      %v656 = vld [vmem:[%s651 + $0x10] sm:$0xf]
      %v657 = vld [vmem:[%s651 + $0x14] sm:$0xf]
      %v658 = vld [vmem:[%s651 + $0x18] sm:$0xf]
      %v659 = vld [vmem:[%s651 + $0x1c] sm:$0xf]
      %v660 = vld [vmem:[%s651 + $0x20] sm:$0xf]
      %v661 = vld [vmem:[%s651 + $0x24] sm:$0xf]
      %v662 = vld [vmem:[%s651 + $0x28] sm:$0xf]
      %v663 = vld [vmem:[%s651 + $0x2c] sm:$0xf]
      %v664 = vld [vmem:[%s651 + $0x30] sm:$0xf]
      %v665 = vld [vmem:[%s651 + $0x34] sm:$0xf]
      %v666 = vld [vmem:[%s651 + $0x38] sm:$0xf]
      %v667 = vld [vmem:[%s651 + $0x3c] sm:$0xf]
      %v670 = vrot.slane %v649, 1
      %v671 = vrot.slane %v650, 1
      %v672 = vsel %vm550, %v670, %v671
      %v690 = vunpack.c.l.b16 %v652
      %v691 = vunpack.c.l.b16 %v653
      %v692 = vunpack.c.l.b16 %v654
      %v693 = vunpack.c.l.b16 %v655
      %v694 = vunpack.c.l.b16 %v656
      %v695 = vunpack.c.l.b16 %v657
      %v696 = vunpack.c.l.b16 %v658
      %v697 = vunpack.c.l.b16 %v659
      %v698 = vunpack.c.l.b16 %v660
      %v699 = vunpack.c.l.b16 %v661
      %v700 = vunpack.c.l.b16 %v662
      %v701 = vunpack.c.l.b16 %v663
      %v702 = vunpack.c.l.b16 %v664
      %v703 = vunpack.c.l.b16 %v665
      %v704 = vunpack.c.l.b16 %v666
      %v705 = vunpack.c.l.b16 %v667
      %v706 = vpack.c.b16 %v691, %v690
      %v707 = vpack.c.b16 %v693, %v692
      %v708 = vpack.c.b16 %v695, %v694
      %v709 = vpack.c.b16 %v697, %v696
      %v710 = vpack.c.b16 %v699, %v698
      %v711 = vpack.c.b16 %v701, %v700
      %v712 = vpack.c.b16 %v703, %v702
      %v713 = vpack.c.b16 %v705, %v704
      %722 = vmatprep.subr.bf16.mxu0 0
      %723 = vmatpush1.bf16.msra.mxu0 %v713
      %724 = vmatprep.subr.bf16.mxu0 0
      %725 = vmatpush1.bf16.msra.mxu0 %v712
      %726 = vmatprep.subr.bf16.mxu0 0
      %727 = vmatpush1.bf16.msra.mxu0 %v711
      %728 = vmatprep.subr.bf16.mxu0 0
      %729 = vmatpush1.bf16.msra.mxu0 %v710
      %730 = vmatprep.subr.bf16.mxu0 0
      %731 = vmatpush1.bf16.msra.mxu0 %v709
      %732 = vmatprep.subr.bf16.mxu0 0
      %733 = vmatpush1.bf16.msra.mxu0 %v708
      %734 = vmatprep.subr.bf16.mxu0 0
      %735 = vmatpush1.bf16.msra.mxu0 %v707
      %736 = vmatprep.subr.bf16.mxu0 0
      %737 = vmatpush1.bf16.msra.mxu0 %v706
      %738 = vmatprep.subr.bf16.mxu0 0
      %739 = vmatpush2.bf16.msra.mxu0 0
      %740 = vmatprep.subr.bf16.mxu0 0
      %741 = vmatpush2.bf16.msra.mxu0 0
      %742 = vmatprep.subr.bf16.mxu0 0
      %743 = vmatpush2.bf16.msra.mxu0 0
      %744 = vmatprep.subr.bf16.mxu0 0
      %745 = vmatpush2.bf16.msra.mxu0 0
      %746 = vmatprep.subr.bf16.mxu0 0
      %747 = vmatpush2.bf16.msra.mxu0 0
      %748 = vmatprep.subr.bf16.mxu0 0
      %749 = vmatpush2.bf16.msra.mxu0 0
      %750 = vmatprep.subr.bf16.mxu0 0
      %751 = vmatpush2.bf16.msra.mxu0 0
      %752 = vmatprep.subr.bf16.mxu0 0
      %753 = vmatpush2.bf16.msra.mxu0 0
      %754 = vmatprep.mubr.bf16.mxu0 0
      %755 = vmatmul.mubr.bf16.gmra.mxu0 %v672
      %v756 = vpop.f32.mrf.mxu0
      %v757 = vadd.f32 0.0, %v756
      %v758 = vpop.f32.mrf.mxu0
      %v759 = vpop.f32.mrf.mxu0
      %v760 = vadd.f32 0.0, %v759
      %v761 = vpop.f32.mrf.mxu0
      %762 = vdwg.mxu0
      %v763 = vadd.f32 %v644, %v757
      %v764 = vadd.f32 %v645, %v760
      %v765 = vld [vmem:[#allocation2] sm:$0xf0]
      %v766 = vld [vmem:[#allocation2 + $0x20] sm:$0xf]
      %v767 = vpack.c.bf16 %v527, %v765
      %v768 = vpack.c.bf16 %v766, %v766
      %s769 = scalar_lea.vmem %s2, 128
      %v770 = vld [vmem:[%s769] sm:$0xf]
      %v771 = vld [vmem:[%s769 + $0x4] sm:$0xf]
      %v772 = vld [vmem:[%s769 + $0x8] sm:$0xf]
      %v773 = vld [vmem:[%s769 + $0xc] sm:$0xf]
      %v774 = vld [vmem:[%s769 + $0x10] sm:$0xf]
      %v775 = vld [vmem:[%s769 + $0x14] sm:$0xf]
      %v776 = vld [vmem:[%s769 + $0x18] sm:$0xf]
      %v777 = vld [vmem:[%s769 + $0x1c] sm:$0xf]
      %v778 = vld [vmem:[%s769 + $0x20] sm:$0xf]
      %v779 = vld [vmem:[%s769 + $0x24] sm:$0xf]
      %v780 = vld [vmem:[%s769 + $0x28] sm:$0xf]
      %v781 = vld [vmem:[%s769 + $0x2c] sm:$0xf]
      %v782 = vld [vmem:[%s769 + $0x30] sm:$0xf]
      %v783 = vld [vmem:[%s769 + $0x34] sm:$0xf]
      %v784 = vld [vmem:[%s769 + $0x38] sm:$0xf]
      %v785 = vld [vmem:[%s769 + $0x3c] sm:$0xf]
      %vm788 = vcmask 1045504
      %v789 = vrot.slane %v767, 2
      %v790 = vrot.slane %v768, 2
      %v791 = vsel %vm788, %v789, %v790
      %v809 = vunpack.c.l.b16 %v770
      %v810 = vunpack.c.l.b16 %v771
      %v811 = vunpack.c.l.b16 %v772
      %v812 = vunpack.c.l.b16 %v773
      %v813 = vunpack.c.l.b16 %v774
      %v814 = vunpack.c.l.b16 %v775
      %v815 = vunpack.c.l.b16 %v776
      %v816 = vunpack.c.l.b16 %v777
      %v817 = vunpack.c.l.b16 %v778
      %v818 = vunpack.c.l.b16 %v779
      %v819 = vunpack.c.l.b16 %v780
      %v820 = vunpack.c.l.b16 %v781
      %v821 = vunpack.c.l.b16 %v782
      %v822 = vunpack.c.l.b16 %v783
      %v823 = vunpack.c.l.b16 %v784
      %v824 = vunpack.c.l.b16 %v785
      %v825 = vpack.c.b16 %v810, %v809
      %v826 = vpack.c.b16 %v812, %v811
      %v827 = vpack.c.b16 %v814, %v813
      %v828 = vpack.c.b16 %v816, %v815
      %v829 = vpack.c.b16 %v818, %v817
      %v830 = vpack.c.b16 %v820, %v819
      %v831 = vpack.c.b16 %v822, %v821
      %v832 = vpack.c.b16 %v824, %v823
      %841 = vmatprep.subr.bf16.mxu0 0
      %842 = vmatpush1.bf16.msra.mxu0 %v832
      %843 = vmatprep.subr.bf16.mxu0 0
      %844 = vmatpush1.bf16.msra.mxu0 %v831
      %845 = vmatprep.subr.bf16.mxu0 0
      %846 = vmatpush1.bf16.msra.mxu0 %v830
      %847 = vmatprep.subr.bf16.mxu0 0
      %848 = vmatpush1.bf16.msra.mxu0 %v829
      %849 = vmatprep.subr.bf16.mxu0 0
      %850 = vmatpush1.bf16.msra.mxu0 %v828
      %851 = vmatprep.subr.bf16.mxu0 0
      %852 = vmatpush1.bf16.msra.mxu0 %v827
      %853 = vmatprep.subr.bf16.mxu0 0
      %854 = vmatpush1.bf16.msra.mxu0 %v826
      %855 = vmatprep.subr.bf16.mxu0 0
      %856 = vmatpush1.bf16.msra.mxu0 %v825
      %857 = vmatprep.subr.bf16.mxu0 0
      %858 = vmatpush2.bf16.msra.mxu0 0
      %859 = vmatprep.subr.bf16.mxu0 0
      %860 = vmatpush2.bf16.msra.mxu0 0
      %861 = vmatprep.subr.bf16.mxu0 0
      %862 = vmatpush2.bf16.msra.mxu0 0
      %863 = vmatprep.subr.bf16.mxu0 0
      %864 = vmatpush2.bf16.msra.mxu0 0
      %865 = vmatprep.subr.bf16.mxu0 0
      %866 = vmatpush2.bf16.msra.mxu0 0
      %867 = vmatprep.subr.bf16.mxu0 0
      %868 = vmatpush2.bf16.msra.mxu0 0
      %869 = vmatprep.subr.bf16.mxu0 0
      %870 = vmatpush2.bf16.msra.mxu0 0
      %871 = vmatprep.subr.bf16.mxu0 0
      %872 = vmatpush2.bf16.msra.mxu0 0
      %873 = vmatprep.mubr.bf16.mxu0 0
      %874 = vmatmul.mubr.bf16.gmra.mxu0 %v791
      %v875 = vpop.f32.mrf.mxu0
      %v876 = vadd.f32 0.0, %v875
      %v877 = vpop.f32.mrf.mxu0
      %v878 = vpop.f32.mrf.mxu0
      %v879 = vadd.f32 0.0, %v878
      %v880 = vpop.f32.mrf.mxu0
      %881 = vdwg.mxu0
      %v882 = vadd.f32 %v763, %v876
      %v883 = vadd.f32 %v764, %v879
      %v884 = vld [vmem:[#allocation2 + $0x8] sm:$0xf0]
      %v885 = vld [vmem:[#allocation2 + $0x28] sm:$0xf]
      %v886 = vpack.c.bf16 %v647, %v884
      %v887 = vpack.c.bf16 %v885, %v885
      %s888 = scalar_lea.vmem %s3, 128
      %v889 = vld [vmem:[%s888] sm:$0xf]
      %v890 = vld [vmem:[%s888 + $0x4] sm:$0xf]
      %v891 = vld [vmem:[%s888 + $0x8] sm:$0xf]
      %v892 = vld [vmem:[%s888 + $0xc] sm:$0xf]
      %v893 = vld [vmem:[%s888 + $0x10] sm:$0xf]
      %v894 = vld [vmem:[%s888 + $0x14] sm:$0xf]
      %v895 = vld [vmem:[%s888 + $0x18] sm:$0xf]
      %v896 = vld [vmem:[%s888 + $0x1c] sm:$0xf]
      %v897 = vld [vmem:[%s888 + $0x20] sm:$0xf]
      %v898 = vld [vmem:[%s888 + $0x24] sm:$0xf]
      %v899 = vld [vmem:[%s888 + $0x28] sm:$0xf]
      %v900 = vld [vmem:[%s888 + $0x2c] sm:$0xf]
      %v901 = vld [vmem:[%s888 + $0x30] sm:$0xf]
      %v902 = vld [vmem:[%s888 + $0x34] sm:$0xf]
      %v903 = vld [vmem:[%s888 + $0x38] sm:$0xf]
      %v904 = vld [vmem:[%s888 + $0x3c] sm:$0xf]
      %v907 = vrot.slane %v886, 2
      %v908 = vrot.slane %v887, 2
      %v909 = vsel %vm788, %v907, %v908
      %v927 = vunpack.c.l.b16 %v889
      %v928 = vunpack.c.l.b16 %v890
      %v929 = vunpack.c.l.b16 %v891
      %v930 = vunpack.c.l.b16 %v892
      %v931 = vunpack.c.l.b16 %v893
      %v932 = vunpack.c.l.b16 %v894
      %v933 = vunpack.c.l.b16 %v895
      %v934 = vunpack.c.l.b16 %v896
      %v935 = vunpack.c.l.b16 %v897
      %v936 = vunpack.c.l.b16 %v898
      %v937 = vunpack.c.l.b16 %v899
      %v938 = vunpack.c.l.b16 %v900
      %v939 = vunpack.c.l.b16 %v901
      %v940 = vunpack.c.l.b16 %v902
      %v941 = vunpack.c.l.b16 %v903
      %v942 = vunpack.c.l.b16 %v904
      %v943 = vpack.c.b16 %v928, %v927
      %v944 = vpack.c.b16 %v930, %v929
      %v945 = vpack.c.b16 %v932, %v931
      %v946 = vpack.c.b16 %v934, %v933
      %v947 = vpack.c.b16 %v936, %v935
      %v948 = vpack.c.b16 %v938, %v937
      %v949 = vpack.c.b16 %v940, %v939
      %v950 = vpack.c.b16 %v942, %v941
      %959 = vmatprep.subr.bf16.mxu0 0
      %960 = vmatpush1.bf16.msra.mxu0 %v950
      %961 = vmatprep.subr.bf16.mxu0 0
      %962 = vmatpush1.bf16.msra.mxu0 %v949
      %963 = vmatprep.subr.bf16.mxu0 0
      %964 = vmatpush1.bf16.msra.mxu0 %v948
      %965 = vmatprep.subr.bf16.mxu0 0
      %966 = vmatpush1.bf16.msra.mxu0 %v947
      %967 = vmatprep.subr.bf16.mxu0 0
      %968 = vmatpush1.bf16.msra.mxu0 %v946
      %969 = vmatprep.subr.bf16.mxu0 0
      %970 = vmatpush1.bf16.msra.mxu0 %v945
      %971 = vmatprep.subr.bf16.mxu0 0
      %972 = vmatpush1.bf16.msra.mxu0 %v944
      %973 = vmatprep.subr.bf16.mxu0 0
      %974 = vmatpush1.bf16.msra.mxu0 %v943
      %975 = vmatprep.subr.bf16.mxu0 0
      %976 = vmatpush2.bf16.msra.mxu0 0
      %977 = vmatprep.subr.bf16.mxu0 0
      %978 = vmatpush2.bf16.msra.mxu0 0
      %979 = vmatprep.subr.bf16.mxu0 0
      %980 = vmatpush2.bf16.msra.mxu0 0
      %981 = vmatprep.subr.bf16.mxu0 0
      %982 = vmatpush2.bf16.msra.mxu0 0
      %983 = vmatprep.subr.bf16.mxu0 0
      %984 = vmatpush2.bf16.msra.mxu0 0
      %985 = vmatprep.subr.bf16.mxu0 0
      %986 = vmatpush2.bf16.msra.mxu0 0
      %987 = vmatprep.subr.bf16.mxu0 0
      %988 = vmatpush2.bf16.msra.mxu0 0
      %989 = vmatprep.subr.bf16.mxu0 0
      %990 = vmatpush2.bf16.msra.mxu0 0
      %991 = vmatprep.mubr.bf16.mxu0 0
      %992 = vmatmul.mubr.bf16.gmra.mxu0 %v909
      %v993 = vpop.f32.mrf.mxu0
      %v994 = vadd.f32 0.0, %v993
      %v995 = vpop.f32.mrf.mxu0
      %v996 = vpop.f32.mrf.mxu0
      %v997 = vadd.f32 0.0, %v996
      %v998 = vpop.f32.mrf.mxu0
      %999 = vdwg.mxu0
      %v1000 = vadd.f32 %v882, %v994
      %v1001 = vadd.f32 %v883, %v997
      %v1002 = vld [vmem:[%s4] sm:$0x1]
      %v1004 = vlaneseq
      %v1005 = vshrl.u32 %v1004, 7
      %v1006 = vsub.s32 0, %v1005
      %v1007 = vrot.slane %v1002, %v1006
      %v1009 = vmul.f32 %v1000, %v1007
      %v1010 = vmul.f32 %v1001, %v1007
      %v1011 = vld [vmem:[%s5] sm:$0x1]
      %v1013 = vlaneseq
      %v1014 = vshrl.u32 %v1013, 7
      %v1015 = vsub.s32 0, %v1014
      %v1016 = vrot.slane %v1011, %v1015
      %v1018 = vadd.f32 %v1009, %v1016
      %v1019 = vadd.f32 %v1010, %v1016
      %v1020 = vmax.f32 %v1018, 0.0
      %v1021 = vmax.f32 %v1019, 0.0
      %v1022 = vpack.c.bf16 %v1021, %v1020
      %v1024 = vunpack.c.l.b16 %v1022
      %v1025 = vunpack.c.h.b16 %v1022
      %v1026 = vpack.c.b16 %v1024, %v1024
      %v1027 = vpack.c.b16 %v1025, %v1025
      %1030 = vst [vmem:[%s271] sm:$0xf] %v1026
      %1031 = vst [vmem:[%s271 + $0x4] sm:$0xf] %v1027
      %p1032 = scmp.lt.s32.totalorder %s17, 1
      %s1033 = scalar_select %p1032, %s17, 1
      %s1034 = smul.addr %s1033, 2
      %s1035 = smul.addr %s1034, 4
      %s1036 = scalar_lea.vmem %s6, %s1035
      // Predicated region
      $region45: #{_lambda_.15} parent=43 // pred_check
        %p1037 = pneg %p171
      $region46: #{_lambda_.15} parent=43 // pred_check_branch
        %1039 = sbr.rel (%p1037) target = $region48
      $region47: #{_lambda_.15} parent=43 // pred_region
        _
      $region48: #{_lambda_.15} parent=43 // pred_fallthru
        _
    $region44: #{_lambda_.15} parent=5 // pred_fallthru
      _
    %p1040 = scmp.le.s32.totalorder 2, %s12
    // Predicated region
    $region49: #{_lambda_.15} parent=5 // pred_check
      %p1041 = pneg %p1040
    $region50: #{_lambda_.15} parent=5 // pred_check_branch
      %1043 = sbr.rel (%p1041) target = $region52
    $region51: #{_lambda_.15} parent=5 // pred_region
      %s1044 = ssub.s32 %s12, 2
      // Predicated region
      $region53: #{_lambda_.15} parent=51 // pred_check
        %p1045 = pneg %p177
      $region54: #{_lambda_.15} parent=51 // pred_check_branch
        %1047 = sbr.rel (%p1045) target = $region56
      $region55: #{_lambda_.15} parent=51 // pred_region
        %p1048 = scmp.lt.s32.totalorder %s18, 1
        %s1049 = scalar_select %p1048, %s18, 1
        %s1050 = smul.addr %s1049, 2
        %s1051 = smul.addr %s1050, 4
        %s1052 = scalar_lea.vmem %s6, %s1051
      $region56: #{_lambda_.15} parent=51 // pred_fallthru
        _
    $region52: #{_lambda_.15} parent=5 // pred_fallthru
      _
  $region6: #{_lambda_.15} parent=0 // loop_footer
    %s16 = sadd.s32 1, %s12
  $region7: #{_lambda_.15} parent=0 // loop_footer_branch
    %11 = sbr.rel target = $region3
  $region8: #{_lambda_.15} parent=0 // loop_exit
    _

// kernel: _lambda_.16
$region0: #{_lambda_.16}
  #allocation0 [shape = 'u32[]', space=smem, size = 0x4, offset = 0x4, fixed_abs, tag = 'smem constant byte address 0x4 - core index']
  #allocation1 [shape = 'u32[144,128]{1,0:T(1,128)}', space=vmem, size = 0x12000, scoped, tag = 'internal scratch']
  #allocation2 [shape = 'f32[18,256]{1,0:T(8,128)}', space=vmem, size = 0x6000, scoped, tag = 'scratch operand']
  %s0 = inlined_call_operand.vmem [shape: bf16[2,16,128], index: 0, kind: input, shape index: {}]
  %s1 = inlined_call_operand.vmem [shape: bf16[2,16,128], index: 1, kind: input, shape index: {}]
  %s2 = inlined_call_operand.vmem [shape: bf16[3,128,128], index: 2, kind: input, shape index: {}]
  %s3 = inlined_call_operand.vmem [shape: bf16[3,128,128], index: 3, kind: input, shape index: {}]
  %s4 = inlined_call_operand.vmem [shape: f32[1,128], index: 4, kind: input, shape index: {}]
  %s5 = inlined_call_operand.vmem [shape: f32[1,128], index: 5, kind: input, shape index: {}]
  %s6 = inlined_call_operand.vmem [shape: bf16[2,16,128], index: 6, kind: output, shape index: {}]
  %s7 = sld [smem:[#allocation0]]
  $region57: #{_lambda_.16} parent=0
    _
  %s9 = ssub.s32 1, %s7
  %s10 = scalar_select 0, %s9, %s7
  loop: start=0, step=1, limit=4
  $region2: #{_lambda_.16} parent=0 // loop_pre_header
    _
  $region3: #{_lambda_.16} parent=0 // loop_header
    %s12 = sphi 0, %s16
    %p13 = scmp.ge.s32.totalorder %s12, 4
    %s22 = sphi 0, %s24
    %s25 = sphi 0, %s22
    %s26 = sphi 0, %s25
    %s42 = sphi 0, %s26
    %s48 = sphi 0, %s50
    %s51 = sphi 0, %s48
    %s52 = sphi 0, %s51
    %s68 = sphi 0, %s52
    %s72 = sphi 0, %s72
    %s74 = sphi 0, %s72
    %s75 = sphi 0, %s74
    %s89 = sphi 0, %s75
    %s93 = sphi 0, %s93
    %s95 = sphi 0, %s93
    %s96 = sphi 0, %s95
    %s110 = sphi 0, %s96
    %s114 = sphi 0, %s114
    %s116 = sphi 0, %s114
    %s117 = sphi 0, %s116
    %s131 = sphi 0, %s117
    %s135 = sphi 0, %s135
    %s137 = sphi 0, %s135
    %s138 = sphi 0, %s137
    %s152 = sphi 0, %s138
    %s158 = sphi 0, %s160
    %s161 = sphi 0, %s158
    %s162 = sphi 0, %s161
    %s178 = sphi 0, %s162
  $region4: #{_lambda_.16} parent=0 // loop_header_branch
    %15 = sbr.rel (%p13) target = $region8
  $region5: #{_lambda_.16} parent=0 // loop_body
    %s17 = ssub.s32 %s12, 1
    %s18 = ssub.s32 %s12, 2
    %s19 = sadd.s32 %s12, 1
    %s20 = ssub.s32 %s12, %s19
    %p21 = scmp.eq.s32.totalorder %s20, 0
    %s23 = sadd.s32 %s22, 1
    %s24 = scalar_select %p21, %s22, %s23
    %p27 = pneg %p21
    %p28 = scmp.eq.s32.totalorder %s12, 1
    %p29 = por %p27, %p28
    %p30 = scmp.ne.s32.totalorder %s22, %s25
    %p31 = scmp.eq.s32.totalorder %s12, 0
    %p32 = por %p30, %p31
    %p33 = scmp.ne.s32.totalorder %s22, %s25
    %p34 = scmp.eq.s32.totalorder %s17, 1
    %p35 = por %p33, %p34
    %p36 = scmp.ne.s32.totalorder %s25, %s26
    %p37 = scmp.eq.s32.totalorder %s17, 0
    %p38 = por %p36, %p37
    %p39 = scmp.ne.s32.totalorder %s25, %s26
    %p40 = scmp.eq.s32.totalorder %s18, 1
    %p41 = por %p39, %p40
    %p43 = scmp.ne.s32.totalorder %s26, %s42
    %p44 = scmp.eq.s32.totalorder %s18, 0
    %p45 = por %p43, %p44
    %s46 = ssub.s32 %s12, %s19
    %p47 = scmp.eq.s32.totalorder %s46, 0
    %s49 = sadd.s32 %s48, 1
    %s50 = scalar_select %p47, %s48, %s49
    %p53 = pneg %p47
    %p54 = scmp.eq.s32.totalorder %s12, 1
    %p55 = por %p53, %p54
    %p56 = scmp.ne.s32.totalorder %s48, %s51
    %p57 = scmp.eq.s32.totalorder %s12, 0
    %p58 = por %p56, %p57
    %p59 = scmp.ne.s32.totalorder %s48, %s51
    %p60 = scmp.eq.s32.totalorder %s17, 1
    %p61 = por %p59, %p60
    %p62 = scmp.ne.s32.totalorder %s51, %s52
    %p63 = scmp.eq.s32.totalorder %s17, 0
    %p64 = por %p62, %p63
    %p65 = scmp.ne.s32.totalorder %s51, %s52
    %p66 = scmp.eq.s32.totalorder %s18, 1
    %p67 = por %p65, %p66
    %p69 = scmp.ne.s32.totalorder %s52, %s68
    %p70 = scmp.eq.s32.totalorder %s18, 0
    %p71 = por %p69, %p70
    %s73 = sadd.s32 %s72, 1
    %p76 = scmp.eq.s32.totalorder %s12, 1
    %p77 = scmp.ne.s32.totalorder %s72, %s74
    %p78 = scmp.eq.s32.totalorder %s12, 0
    %p79 = por %p77, %p78
    %p80 = scmp.ne.s32.totalorder %s72, %s74
    %p81 = scmp.eq.s32.totalorder %s17, 1
    %p82 = por %p80, %p81
    %p83 = scmp.ne.s32.totalorder %s74, %s75
    %p84 = scmp.eq.s32.totalorder %s17, 0
    %p85 = por %p83, %p84
    %p86 = scmp.ne.s32.totalorder %s74, %s75
    %p87 = scmp.eq.s32.totalorder %s18, 1
    %p88 = por %p86, %p87
    %p90 = scmp.ne.s32.totalorder %s75, %s89
    %p91 = scmp.eq.s32.totalorder %s18, 0
    %p92 = por %p90, %p91
    %s94 = sadd.s32 %s93, 1
    %p97 = scmp.eq.s32.totalorder %s12, 1
    %p98 = scmp.ne.s32.totalorder %s93, %s95
    %p99 = scmp.eq.s32.totalorder %s12, 0
    %p100 = por %p98, %p99
    %p101 = scmp.ne.s32.totalorder %s93, %s95
    %p102 = scmp.eq.s32.totalorder %s17, 1
    %p103 = por %p101, %p102
    %p104 = scmp.ne.s32.totalorder %s95, %s96
    %p105 = scmp.eq.s32.totalorder %s17, 0
    %p106 = por %p104, %p105
    %p107 = scmp.ne.s32.totalorder %s95, %s96
    %p108 = scmp.eq.s32.totalorder %s18, 1
    %p109 = por %p107, %p108
    %p111 = scmp.ne.s32.totalorder %s96, %s110
    %p112 = scmp.eq.s32.totalorder %s18, 0
    %p113 = por %p111, %p112
    %s115 = sadd.s32 %s114, 1
    %p118 = scmp.eq.s32.totalorder %s12, 1
    %p119 = scmp.ne.s32.totalorder %s114, %s116
    %p120 = scmp.eq.s32.totalorder %s12, 0
    %p121 = por %p119, %p120
    %p122 = scmp.ne.s32.totalorder %s114, %s116
    %p123 = scmp.eq.s32.totalorder %s17, 1
    %p124 = por %p122, %p123
    %p125 = scmp.ne.s32.totalorder %s116, %s117
    %p126 = scmp.eq.s32.totalorder %s17, 0
    %p127 = por %p125, %p126
    %p128 = scmp.ne.s32.totalorder %s116, %s117
    %p129 = scmp.eq.s32.totalorder %s18, 1
    %p130 = por %p128, %p129
    %p132 = scmp.ne.s32.totalorder %s117, %s131
    %p133 = scmp.eq.s32.totalorder %s18, 0
    %p134 = por %p132, %p133
    %s136 = sadd.s32 %s135, 1
    %p139 = scmp.eq.s32.totalorder %s12, 1
    %p140 = scmp.ne.s32.totalorder %s135, %s137
    %p141 = scmp.eq.s32.totalorder %s12, 0
    %p142 = por %p140, %p141
    %p143 = scmp.ne.s32.totalorder %s135, %s137
    %p144 = scmp.eq.s32.totalorder %s17, 1
    %p145 = por %p143, %p144
    %p146 = scmp.ne.s32.totalorder %s137, %s138
    %p147 = scmp.eq.s32.totalorder %s17, 0
    %p148 = por %p146, %p147
    %p149 = scmp.ne.s32.totalorder %s137, %s138
    %p150 = scmp.eq.s32.totalorder %s18, 1
    %p151 = por %p149, %p150
    %p153 = scmp.ne.s32.totalorder %s138, %s152
    %p154 = scmp.eq.s32.totalorder %s18, 0
    %p155 = por %p153, %p154
    %s156 = ssub.s32 %s12, %s19
    %p157 = scmp.eq.s32.totalorder %s156, 0
    %s159 = sadd.s32 %s158, 1
    %s160 = scalar_select %p157, %s158, %s159
    %p163 = pneg %p157
    %p164 = scmp.eq.s32.totalorder %s12, 1
    %p165 = por %p163, %p164
    %p166 = scmp.ne.s32.totalorder %s158, %s161
    %p167 = scmp.eq.s32.totalorder %s12, 0
    %p168 = por %p166, %p167
    %p169 = scmp.ne.s32.totalorder %s158, %s161
    %p170 = scmp.eq.s32.totalorder %s17, 1
    %p171 = por %p169, %p170
    %p172 = scmp.ne.s32.totalorder %s161, %s162
    %p173 = scmp.eq.s32.totalorder %s17, 0
    %p174 = por %p172, %p173
    %p175 = scmp.ne.s32.totalorder %s161, %s162
    %p176 = scmp.eq.s32.totalorder %s18, 1
    %p177 = por %p175, %p176
    %p179 = scmp.ne.s32.totalorder %s162, %s178
    %p180 = scmp.eq.s32.totalorder %s18, 0
    %p181 = por %p179, %p180
    %p182 = scmp.le.s32.totalorder 1, %s12
    %p183 = scmp.lt.s32.totalorder %s12, 3
    %p184 = pnand %p182, %p183
    %p185 = pneg %p184
    // Predicated region
    $region9: #{_lambda_.16} parent=5 // pred_check
      _
    $region10: #{_lambda_.16} parent=5 // pred_check_branch
      %187 = sbr.rel (%p184) target = $region12
    $region11: #{_lambda_.16} parent=5 // pred_region
      %s188 = ssub.s32 %s12, 1
      // Predicated region
      $region13: #{_lambda_.16} parent=11 // pred_check
        %p189 = pneg %p85
      $region14: #{_lambda_.16} parent=11 // pred_check_branch
        %191 = sbr.rel (%p189) target = $region16
      $region15: #{_lambda_.16} parent=11 // pred_region
        _
      $region16: #{_lambda_.16} parent=11 // pred_fallthru
        _
      // Predicated region
      $region17: #{_lambda_.16} parent=11 // pred_check
        %p192 = pneg %p106
      $region18: #{_lambda_.16} parent=11 // pred_check_branch
        %194 = sbr.rel (%p192) target = $region20
      $region19: #{_lambda_.16} parent=11 // pred_region
        _
      $region20: #{_lambda_.16} parent=11 // pred_fallthru
        _
      // Predicated region
      $region21: #{_lambda_.16} parent=11 // pred_check
        %p195 = pneg %p127
      $region22: #{_lambda_.16} parent=11 // pred_check_branch
        %197 = sbr.rel (%p195) target = $region24
      $region23: #{_lambda_.16} parent=11 // pred_region
        _
      $region24: #{_lambda_.16} parent=11 // pred_fallthru
        _
      // Predicated region
      $region25: #{_lambda_.16} parent=11 // pred_check
        %p198 = pneg %p148
      $region26: #{_lambda_.16} parent=11 // pred_check_branch
        %200 = sbr.rel (%p198) target = $region28
      $region27: #{_lambda_.16} parent=11 // pred_region
        _
      $region28: #{_lambda_.16} parent=11 // pred_fallthru
        _
    $region12: #{_lambda_.16} parent=5 // pred_fallthru
      _
    %p201 = scmp.lt.s32.totalorder %s12, 2
    // Predicated region
    $region29: #{_lambda_.16} parent=5 // pred_check
      %p202 = pneg %p201
    $region30: #{_lambda_.16} parent=5 // pred_check_branch
      %204 = sbr.rel (%p202) target = $region32
    $region31: #{_lambda_.16} parent=5 // pred_region
      // Predicated region
      $region33: #{_lambda_.16} parent=31 // pred_check
        %p205 = pneg %p32
      $region34: #{_lambda_.16} parent=31 // pred_check_branch
        %207 = sbr.rel (%p205) target = $region36
      $region35: #{_lambda_.16} parent=31 // pred_region
        %p208 = scmp.lt.s32.totalorder %s12, 1
        %s209 = scalar_select %p208, %s12, 1
        %s210 = smul.addr %s209, 2
        %s211 = smul.addr %s210, 4
        %s212 = scalar_lea.vmem %s0, %s211
      $region36: #{_lambda_.16} parent=31 // pred_fallthru
        _
      // Predicated region
      $region37: #{_lambda_.16} parent=31 // pred_check
        %p213 = pneg %p58
      $region38: #{_lambda_.16} parent=31 // pred_check_branch
        %215 = sbr.rel (%p213) target = $region40
      $region39: #{_lambda_.16} parent=31 // pred_region
        %p216 = scmp.lt.s32.totalorder %s12, 1
        %s217 = scalar_select %p216, %s12, 1
        %s218 = smul.addr %s217, 2
        %s219 = smul.addr %s218, 4
        %s220 = scalar_lea.vmem %s1, %s219
      $region40: #{_lambda_.16} parent=31 // pred_fallthru
        _
    $region32: #{_lambda_.16} parent=5 // pred_fallthru
      _
    %p221 = scmp.le.s32.totalorder 1, %s12
    %p222 = scmp.lt.s32.totalorder %s12, 3
    %p223 = pnand %p221, %p222
    %p224 = pneg %p223
    // Predicated region
    $region41: #{_lambda_.16} parent=5 // pred_check
      _
    $region42: #{_lambda_.16} parent=5 // pred_check_branch
      %226 = sbr.rel (%p223) target = $region44
    $region43: #{_lambda_.16} parent=5 // pred_region
      %s227 = ssub.s32 %s12, 1
      %p228 = scmp.lt.s32.totalorder %s17, 1
      %s229 = scalar_select %p228, %s17, 1
      %s230 = smul.addr %s229, 2
      %s231 = smul.addr %s230, 4
      %s232 = scalar_lea.vmem %s0, %s231
      %p233 = pneg %p38
      %p234 = pneg %p35
      %p235 = scmp.lt.s32.totalorder %s17, 1
      %s236 = scalar_select %p235, %s17, 1
      %s237 = smul.addr %s236, 2
      %s238 = smul.addr %s237, 4
      %s239 = scalar_lea.vmem %s1, %s238
      %p240 = pneg %p64
      %p241 = pneg %p61
      %p242 = pneg %p85
      %p243 = pneg %p82
      %p244 = pneg %p106
      %p245 = pneg %p103
      %p246 = pneg %p127
      %p247 = pneg %p124
      %p248 = pneg %p148
      %p249 = pneg %p145
      %p250 = pneg %p174
      %p251 = pneg %p171
      %p252 = scmp.lt.s32.totalorder %s17, 1
      %s253 = scalar_select %p252, %s17, 1
      %s254 = smul.addr %s253, 2
      %s255 = smul.addr %s254, 4
      %s256 = scalar_lea.vmem %s6, %s255
      %p257 = scmp.lt.s32.totalorder %s17, 1
      %s258 = scalar_select %p257, %s17, 1
      %s259 = smul.addr %s258, 2
      %s260 = smul.addr %s259, 4
      %s261 = scalar_lea.vmem %s0, %s260
      %p262 = scmp.lt.s32.totalorder %s17, 1
      %s263 = scalar_select %p262, %s17, 1
      %s264 = smul.addr %s263, 2
      %s265 = smul.addr %s264, 4
      %s266 = scalar_lea.vmem %s1, %s265
      %p267 = scmp.lt.s32.totalorder %s17, 1
      %s268 = scalar_select %p267, %s17, 1
      %s269 = smul.addr %s268, 2
      %s270 = smul.addr %s269, 4
      %s271 = scalar_lea.vmem %s6, %s270
      %273 = vst [vmem:[#allocation2] sm:$0xff] 0.0
      %274 = vst [vmem:[#allocation2 + $0x8] sm:$0xff] 0.0
      %275 = vst [vmem:[#allocation2 + $0x10] sm:$0xff] 0.0
      %276 = vst [vmem:[#allocation2 + $0x18] sm:$0xff] 0.0
      %277 = vst [vmem:[#allocation2 + $0x20] sm:$0x3] 0.0
      %278 = vst [vmem:[#allocation2 + $0x28] sm:$0x3] 0.0
      %v279 = vld [vmem:[%s261] sm:$0xf]
      %v280 = vld [vmem:[%s261 + $0x4] sm:$0xf]
      %v281 = vunpack.c.l.bf16 %v279
      %v282 = vunpack.c.l.bf16 %v280
      %vm285 = vcmask 1040384
      %v286 = vrot.slane %v281, 7
      %v287 = vrot.slane %v282, 7
      %v288 = vsel %vm285, %v286, %v287
      %292 = vst [vmem:[#allocation2] sm:$0xfe] %v286
      %293 = vst [vmem:[#allocation2 + $0x10] sm:$0xff] %v288
      %294 = vst [vmem:[#allocation2 + $0x20] sm:$0x1] %v287
      %v295 = vld [vmem:[%s266] sm:$0xf]
      %v296 = vld [vmem:[%s266 + $0x4] sm:$0xf]
      %v297 = vunpack.c.l.bf16 %v295
      %v298 = vunpack.c.l.bf16 %v296
      %v301 = vrot.slane %v297, 7
      %v302 = vrot.slane %v298, 7
      %v303 = vsel %vm285, %v301, %v302
      %307 = vst [vmem:[#allocation2 + $0x8] sm:$0xfe] %v301
      %308 = vst [vmem:[#allocation2 + $0x18] sm:$0xff] %v303
      %309 = vst [vmem:[#allocation2 + $0x28] sm:$0x1] %v302
      %v310 = vld [vmem:[#allocation2] sm:$0xff]
      %v311 = vld [vmem:[#allocation2 + $0x10] sm:$0xff]
      %v312 = vpack.c.bf16 %v311, %v310
      %v313 = vld [vmem:[%s2] sm:$0xf]
      %v314 = vld [vmem:[%s2 + $0x4] sm:$0xf]
      %v315 = vld [vmem:[%s2 + $0x8] sm:$0xf]
      %v316 = vld [vmem:[%s2 + $0xc] sm:$0xf]
      %v317 = vld [vmem:[%s2 + $0x10] sm:$0xf]
      %v318 = vld [vmem:[%s2 + $0x14] sm:$0xf]
      %v319 = vld [vmem:[%s2 + $0x18] sm:$0xf]
      %v320 = vld [vmem:[%s2 + $0x1c] sm:$0xf]
      %v321 = vld [vmem:[%s2 + $0x20] sm:$0xf]
      %v322 = vld [vmem:[%s2 + $0x24] sm:$0xf]
      %v323 = vld [vmem:[%s2 + $0x28] sm:$0xf]
      %v324 = vld [vmem:[%s2 + $0x2c] sm:$0xf]
      %v325 = vld [vmem:[%s2 + $0x30] sm:$0xf]
      %v326 = vld [vmem:[%s2 + $0x34] sm:$0xf]
      %v327 = vld [vmem:[%s2 + $0x38] sm:$0xf]
      %v328 = vld [vmem:[%s2 + $0x3c] sm:$0xf]
      %v329 = vld [vmem:[#allocation2 + $0x8] sm:$0xff]
      %v330 = vld [vmem:[#allocation2 + $0x18] sm:$0xff]
      %v331 = vpack.c.bf16 %v330, %v329
      %v332 = vld [vmem:[%s3] sm:$0xf]
      %v333 = vld [vmem:[%s3 + $0x4] sm:$0xf]
      %v334 = vld [vmem:[%s3 + $0x8] sm:$0xf]
      %v335 = vld [vmem:[%s3 + $0xc] sm:$0xf]
      %v336 = vld [vmem:[%s3 + $0x10] sm:$0xf]
      %v337 = vld [vmem:[%s3 + $0x14] sm:$0xf]
      %v338 = vld [vmem:[%s3 + $0x18] sm:$0xf]
      %v339 = vld [vmem:[%s3 + $0x1c] sm:$0xf]
      %v340 = vld [vmem:[%s3 + $0x20] sm:$0xf]
      %v341 = vld [vmem:[%s3 + $0x24] sm:$0xf]
      %v342 = vld [vmem:[%s3 + $0x28] sm:$0xf]
      %v343 = vld [vmem:[%s3 + $0x2c] sm:$0xf]
      %v344 = vld [vmem:[%s3 + $0x30] sm:$0xf]
      %v345 = vld [vmem:[%s3 + $0x34] sm:$0xf]
      %v346 = vld [vmem:[%s3 + $0x38] sm:$0xf]
      %v347 = vld [vmem:[%s3 + $0x3c] sm:$0xf]
      %v364 = vunpack.c.l.b16 %v332
      %v365 = vunpack.c.l.b16 %v333
      %v366 = vunpack.c.l.b16 %v334
      %v367 = vunpack.c.l.b16 %v335
      %v368 = vunpack.c.l.b16 %v336
      %v369 = vunpack.c.l.b16 %v337
      %v370 = vunpack.c.l.b16 %v338
      %v371 = vunpack.c.l.b16 %v339
      %v372 = vunpack.c.l.b16 %v340
      %v373 = vunpack.c.l.b16 %v341
      %v374 = vunpack.c.l.b16 %v342
      %v375 = vunpack.c.l.b16 %v343
      %v376 = vunpack.c.l.b16 %v344
      %v377 = vunpack.c.l.b16 %v345
      %v378 = vunpack.c.l.b16 %v346
      %v379 = vunpack.c.l.b16 %v347
      %v380 = vpack.c.b16 %v365, %v364
      %v381 = vpack.c.b16 %v367, %v366
      %v382 = vpack.c.b16 %v369, %v368
      %v383 = vpack.c.b16 %v371, %v370
      %v384 = vpack.c.b16 %v373, %v372
      %v385 = vpack.c.b16 %v375, %v374
      %v386 = vpack.c.b16 %v377, %v376
      %v387 = vpack.c.b16 %v379, %v378
      %396 = vmatprep.subr.bf16.mxu0 0
      %397 = vmatpush1.bf16.msra.mxu0 %v387
      %398 = vmatprep.subr.bf16.mxu0 0
      %399 = vmatpush1.bf16.msra.mxu0 %v386
      %400 = vmatprep.subr.bf16.mxu0 0
      %401 = vmatpush1.bf16.msra.mxu0 %v385
      %402 = vmatprep.subr.bf16.mxu0 0
      %403 = vmatpush1.bf16.msra.mxu0 %v384
      %404 = vmatprep.subr.bf16.mxu0 0
      %405 = vmatpush1.bf16.msra.mxu0 %v383
      %406 = vmatprep.subr.bf16.mxu0 0
      %407 = vmatpush1.bf16.msra.mxu0 %v382
      %408 = vmatprep.subr.bf16.mxu0 0
      %409 = vmatpush1.bf16.msra.mxu0 %v381
      %410 = vmatprep.subr.bf16.mxu0 0
      %411 = vmatpush1.bf16.msra.mxu0 %v380
      %412 = vmatprep.subr.bf16.mxu0 0
      %413 = vmatpush2.bf16.msra.mxu0 0
      %414 = vmatprep.subr.bf16.mxu0 0
      %415 = vmatpush2.bf16.msra.mxu0 0
      %416 = vmatprep.subr.bf16.mxu0 0
      %417 = vmatpush2.bf16.msra.mxu0 0
      %418 = vmatprep.subr.bf16.mxu0 0
      %419 = vmatpush2.bf16.msra.mxu0 0
      %420 = vmatprep.subr.bf16.mxu0 0
      %421 = vmatpush2.bf16.msra.mxu0 0
      %422 = vmatprep.subr.bf16.mxu0 0
      %423 = vmatpush2.bf16.msra.mxu0 0
      %424 = vmatprep.subr.bf16.mxu0 0
      %425 = vmatpush2.bf16.msra.mxu0 0
      %426 = vmatprep.subr.bf16.mxu0 0
      %427 = vmatpush2.bf16.msra.mxu0 0
      %428 = vmatprep.mubr.bf16.mxu0 0
      %429 = vmatmul.mubr.bf16.gmra.mxu0 %v331
      %v430 = vpop.f32.mrf.mxu0
      %v431 = vadd.f32 0.0, %v430
      %v432 = vpop.f32.mrf.mxu0
      %v433 = vpop.f32.mrf.mxu0
      %v434 = vadd.f32 0.0, %v433
      %v435 = vpop.f32.mrf.mxu0
      %436 = vdwg.mxu0
      %v453 = vunpack.c.l.b16 %v313
      %v454 = vunpack.c.l.b16 %v314
      %v455 = vunpack.c.l.b16 %v315
      %v456 = vunpack.c.l.b16 %v316
      %v457 = vunpack.c.l.b16 %v317
      %v458 = vunpack.c.l.b16 %v318
      %v459 = vunpack.c.l.b16 %v319
      %v460 = vunpack.c.l.b16 %v320
      %v461 = vunpack.c.l.b16 %v321
      %v462 = vunpack.c.l.b16 %v322
      %v463 = vunpack.c.l.b16 %v323
      %v464 = vunpack.c.l.b16 %v324
      %v465 = vunpack.c.l.b16 %v325
      %v466 = vunpack.c.l.b16 %v326
      %v467 = vunpack.c.l.b16 %v327
      %v468 = vunpack.c.l.b16 %v328
      %v469 = vpack.c.b16 %v454, %v453
      %v470 = vpack.c.b16 %v456, %v455
      %v471 = vpack.c.b16 %v458, %v457
      %v472 = vpack.c.b16 %v460, %v459
      %v473 = vpack.c.b16 %v462, %v461
      %v474 = vpack.c.b16 %v464, %v463
      %v475 = vpack.c.b16 %v466, %v465
      %v476 = vpack.c.b16 %v468, %v467
      %485 = vmatprep.subr.bf16.mxu0 0
      %486 = vmatpush1.bf16.msra.mxu0 %v476
      %487 = vmatprep.subr.bf16.mxu0 0
      %488 = vmatpush1.bf16.msra.mxu0 %v475
      %489 = vmatprep.subr.bf16.mxu0 0
      %490 = vmatpush1.bf16.msra.mxu0 %v474
      %491 = vmatprep.subr.bf16.mxu0 0
      %492 = vmatpush1.bf16.msra.mxu0 %v473
      %493 = vmatprep.subr.bf16.mxu0 0
      %494 = vmatpush1.bf16.msra.mxu0 %v472
      %495 = vmatprep.subr.bf16.mxu0 0
      %496 = vmatpush1.bf16.msra.mxu0 %v471
      %497 = vmatprep.subr.bf16.mxu0 0
      %498 = vmatpush1.bf16.msra.mxu0 %v470
      %499 = vmatprep.subr.bf16.mxu0 0
      %500 = vmatpush1.bf16.msra.mxu0 %v469
      %501 = vmatprep.subr.bf16.mxu0 0
      %502 = vmatpush2.bf16.msra.mxu0 0
      %503 = vmatprep.subr.bf16.mxu0 0
      %504 = vmatpush2.bf16.msra.mxu0 0
      %505 = vmatprep.subr.bf16.mxu0 0
      %506 = vmatpush2.bf16.msra.mxu0 0
      %507 = vmatprep.subr.bf16.mxu0 0
      %508 = vmatpush2.bf16.msra.mxu0 0
      %509 = vmatprep.subr.bf16.mxu0 0
      %510 = vmatpush2.bf16.msra.mxu0 0
      %511 = vmatprep.subr.bf16.mxu0 0
      %512 = vmatpush2.bf16.msra.mxu0 0
      %513 = vmatprep.subr.bf16.mxu0 0
      %514 = vmatpush2.bf16.msra.mxu0 0
      %515 = vmatprep.subr.bf16.mxu0 0
      %516 = vmatpush2.bf16.msra.mxu0 0
      %517 = vmatprep.mubr.bf16.mxu0 0
      %518 = vmatmul.mubr.bf16.gmra.mxu0 %v312
      %v519 = vpop.f32.mrf.mxu0
      %v520 = vadd.f32 %v431, %v519
      %v521 = vpop.f32.mrf.mxu0
      %v522 = vpop.f32.mrf.mxu0
      %v523 = vadd.f32 %v434, %v522
      %v524 = vpop.f32.mrf.mxu0
      %525 = vdwg.mxu0
      %v526 = vld [vmem:[#allocation2] sm:$0xfe]
      %v527 = vld [vmem:[#allocation2 + $0x10] sm:$0xff]
      %v528 = vld [vmem:[#allocation2 + $0x20] sm:$0x1]
      %v529 = vpack.c.bf16 %v527, %v526
      %v530 = vpack.c.bf16 %v528, %v528
      %s531 = scalar_lea.vmem %s2, 64
      %v532 = vld [vmem:[%s531] sm:$0xf]
      %v533 = vld [vmem:[%s531 + $0x4] sm:$0xf]
      %v534 = vld [vmem:[%s531 + $0x8] sm:$0xf]
      %v535 = vld [vmem:[%s531 + $0xc] sm:$0xf]
      %v536 = vld [vmem:[%s531 + $0x10] sm:$0xf]
      %v537 = vld [vmem:[%s531 + $0x14] sm:$0xf]
      %v538 = vld [vmem:[%s531 + $0x18] sm:$0xf]
      %v539 = vld [vmem:[%s531 + $0x1c] sm:$0xf]
      %v540 = vld [vmem:[%s531 + $0x20] sm:$0xf]
      %v541 = vld [vmem:[%s531 + $0x24] sm:$0xf]
      %v542 = vld [vmem:[%s531 + $0x28] sm:$0xf]
      %v543 = vld [vmem:[%s531 + $0x2c] sm:$0xf]
      %v544 = vld [vmem:[%s531 + $0x30] sm:$0xf]
      %v545 = vld [vmem:[%s531 + $0x34] sm:$0xf]
      %v546 = vld [vmem:[%s531 + $0x38] sm:$0xf]
      %v547 = vld [vmem:[%s531 + $0x3c] sm:$0xf]
      %vm548 = vsmask.f32 7424
      %v550 = vshrl.u32 %v529, 16
      %v552 = vshll.u32 %v529, 16
      %v554 = vrot.slane %v552, 1
      %v555 = vor.u32 %v550, %v554
      %v557 = vshll.u32 %v530, 16
      %v559 = vrot.slane %v557, 1
      %v560 = vsel %vm548, %v555, %v559
      %v578 = vunpack.c.l.b16 %v532
      %v579 = vunpack.c.l.b16 %v533
      %v580 = vunpack.c.l.b16 %v534
      %v581 = vunpack.c.l.b16 %v535
      %v582 = vunpack.c.l.b16 %v536
      %v583 = vunpack.c.l.b16 %v537
      %v584 = vunpack.c.l.b16 %v538
      %v585 = vunpack.c.l.b16 %v539
      %v586 = vunpack.c.l.b16 %v540
      %v587 = vunpack.c.l.b16 %v541
      %v588 = vunpack.c.l.b16 %v542
      %v589 = vunpack.c.l.b16 %v543
      %v590 = vunpack.c.l.b16 %v544
      %v591 = vunpack.c.l.b16 %v545
      %v592 = vunpack.c.l.b16 %v546
      %v593 = vunpack.c.l.b16 %v547
      %v594 = vpack.c.b16 %v579, %v578
      %v595 = vpack.c.b16 %v581, %v580
      %v596 = vpack.c.b16 %v583, %v582
      %v597 = vpack.c.b16 %v585, %v584
      %v598 = vpack.c.b16 %v587, %v586
      %v599 = vpack.c.b16 %v589, %v588
      %v600 = vpack.c.b16 %v591, %v590
      %v601 = vpack.c.b16 %v593, %v592
      %610 = vmatprep.subr.bf16.mxu0 0
      %611 = vmatpush1.bf16.msra.mxu0 %v601
      %612 = vmatprep.subr.bf16.mxu0 0
      %613 = vmatpush1.bf16.msra.mxu0 %v600
      %614 = vmatprep.subr.bf16.mxu0 0
      %615 = vmatpush1.bf16.msra.mxu0 %v599
      %616 = vmatprep.subr.bf16.mxu0 0
      %617 = vmatpush1.bf16.msra.mxu0 %v598
      %618 = vmatprep.subr.bf16.mxu0 0
      %619 = vmatpush1.bf16.msra.mxu0 %v597
      %620 = vmatprep.subr.bf16.mxu0 0
      %621 = vmatpush1.bf16.msra.mxu0 %v596
      %622 = vmatprep.subr.bf16.mxu0 0
      %623 = vmatpush1.bf16.msra.mxu0 %v595
      %624 = vmatprep.subr.bf16.mxu0 0
      %625 = vmatpush1.bf16.msra.mxu0 %v594
      %626 = vmatprep.subr.bf16.mxu0 0
      %627 = vmatpush2.bf16.msra.mxu0 0
      %628 = vmatprep.subr.bf16.mxu0 0
      %629 = vmatpush2.bf16.msra.mxu0 0
      %630 = vmatprep.subr.bf16.mxu0 0
      %631 = vmatpush2.bf16.msra.mxu0 0
      %632 = vmatprep.subr.bf16.mxu0 0
      %633 = vmatpush2.bf16.msra.mxu0 0
      %634 = vmatprep.subr.bf16.mxu0 0
      %635 = vmatpush2.bf16.msra.mxu0 0
      %636 = vmatprep.subr.bf16.mxu0 0
      %637 = vmatpush2.bf16.msra.mxu0 0
      %638 = vmatprep.subr.bf16.mxu0 0
      %639 = vmatpush2.bf16.msra.mxu0 0
      %640 = vmatprep.subr.bf16.mxu0 0
      %641 = vmatpush2.bf16.msra.mxu0 0
      %642 = vmatprep.mubr.bf16.mxu0 0
      %643 = vmatmul.mubr.bf16.gmra.mxu0 %v560
      %v644 = vpop.f32.mrf.mxu0
      %v645 = vadd.f32 0.0, %v644
      %v646 = vpop.f32.mrf.mxu0
      %v647 = vpop.f32.mrf.mxu0
      %v648 = vadd.f32 0.0, %v647
      %v649 = vpop.f32.mrf.mxu0
      %650 = vdwg.mxu0
      %v651 = vadd.f32 %v520, %v645
      %v652 = vadd.f32 %v523, %v648
      %v653 = vld [vmem:[#allocation2 + $0x8] sm:$0xfe]
      %v654 = vld [vmem:[#allocation2 + $0x18] sm:$0xff]
      %v655 = vld [vmem:[#allocation2 + $0x28] sm:$0x1]
      %v656 = vpack.c.bf16 %v654, %v653
      %v657 = vpack.c.bf16 %v655, %v655
      %s658 = scalar_lea.vmem %s3, 64
      %v659 = vld [vmem:[%s658] sm:$0xf]
      %v660 = vld [vmem:[%s658 + $0x4] sm:$0xf]
      %v661 = vld [vmem:[%s658 + $0x8] sm:$0xf]
      %v662 = vld [vmem:[%s658 + $0xc] sm:$0xf]
      %v663 = vld [vmem:[%s658 + $0x10] sm:$0xf]
      %v664 = vld [vmem:[%s658 + $0x14] sm:$0xf]
      %v665 = vld [vmem:[%s658 + $0x18] sm:$0xf]
      %v666 = vld [vmem:[%s658 + $0x1c] sm:$0xf]
      %v667 = vld [vmem:[%s658 + $0x20] sm:$0xf]
      %v668 = vld [vmem:[%s658 + $0x24] sm:$0xf]
      %v669 = vld [vmem:[%s658 + $0x28] sm:$0xf]
      %v670 = vld [vmem:[%s658 + $0x2c] sm:$0xf]
      %v671 = vld [vmem:[%s658 + $0x30] sm:$0xf]
      %v672 = vld [vmem:[%s658 + $0x34] sm:$0xf]
      %v673 = vld [vmem:[%s658 + $0x38] sm:$0xf]
      %v674 = vld [vmem:[%s658 + $0x3c] sm:$0xf]
      %v676 = vshrl.u32 %v656, 16
      %v678 = vshll.u32 %v656, 16
      %v680 = vrot.slane %v678, 1
      %v681 = vor.u32 %v676, %v680
      %v683 = vshll.u32 %v657, 16
      %v685 = vrot.slane %v683, 1
      %v686 = vsel %vm548, %v681, %v685
      %v704 = vunpack.c.l.b16 %v659
      %v705 = vunpack.c.l.b16 %v660
      %v706 = vunpack.c.l.b16 %v661
      %v707 = vunpack.c.l.b16 %v662
      %v708 = vunpack.c.l.b16 %v663
      %v709 = vunpack.c.l.b16 %v664
      %v710 = vunpack.c.l.b16 %v665
      %v711 = vunpack.c.l.b16 %v666
      %v712 = vunpack.c.l.b16 %v667
      %v713 = vunpack.c.l.b16 %v668
      %v714 = vunpack.c.l.b16 %v669
      %v715 = vunpack.c.l.b16 %v670
      %v716 = vunpack.c.l.b16 %v671
      %v717 = vunpack.c.l.b16 %v672
      %v718 = vunpack.c.l.b16 %v673
      %v719 = vunpack.c.l.b16 %v674
      %v720 = vpack.c.b16 %v705, %v704
      %v721 = vpack.c.b16 %v707, %v706
      %v722 = vpack.c.b16 %v709, %v708
      %v723 = vpack.c.b16 %v711, %v710
      %v724 = vpack.c.b16 %v713, %v712
      %v725 = vpack.c.b16 %v715, %v714
      %v726 = vpack.c.b16 %v717, %v716
      %v727 = vpack.c.b16 %v719, %v718
      %736 = vmatprep.subr.bf16.mxu0 0
      %737 = vmatpush1.bf16.msra.mxu0 %v727
      %738 = vmatprep.subr.bf16.mxu0 0
      %739 = vmatpush1.bf16.msra.mxu0 %v726
      %740 = vmatprep.subr.bf16.mxu0 0
      %741 = vmatpush1.bf16.msra.mxu0 %v725
      %742 = vmatprep.subr.bf16.mxu0 0
      %743 = vmatpush1.bf16.msra.mxu0 %v724
      %744 = vmatprep.subr.bf16.mxu0 0
      %745 = vmatpush1.bf16.msra.mxu0 %v723
      %746 = vmatprep.subr.bf16.mxu0 0
      %747 = vmatpush1.bf16.msra.mxu0 %v722
      %748 = vmatprep.subr.bf16.mxu0 0
      %749 = vmatpush1.bf16.msra.mxu0 %v721
      %750 = vmatprep.subr.bf16.mxu0 0
      %751 = vmatpush1.bf16.msra.mxu0 %v720
      %752 = vmatprep.subr.bf16.mxu0 0
      %753 = vmatpush2.bf16.msra.mxu0 0
      %754 = vmatprep.subr.bf16.mxu0 0
      %755 = vmatpush2.bf16.msra.mxu0 0
      %756 = vmatprep.subr.bf16.mxu0 0
      %757 = vmatpush2.bf16.msra.mxu0 0
      %758 = vmatprep.subr.bf16.mxu0 0
      %759 = vmatpush2.bf16.msra.mxu0 0
      %760 = vmatprep.subr.bf16.mxu0 0
      %761 = vmatpush2.bf16.msra.mxu0 0
      %762 = vmatprep.subr.bf16.mxu0 0
      %763 = vmatpush2.bf16.msra.mxu0 0
      %764 = vmatprep.subr.bf16.mxu0 0
      %765 = vmatpush2.bf16.msra.mxu0 0
      %766 = vmatprep.subr.bf16.mxu0 0
      %767 = vmatpush2.bf16.msra.mxu0 0
      %768 = vmatprep.mubr.bf16.mxu0 0
      %769 = vmatmul.mubr.bf16.gmra.mxu0 %v686
      %v770 = vpop.f32.mrf.mxu0
      %v771 = vadd.f32 0.0, %v770
      %v772 = vpop.f32.mrf.mxu0
      %v773 = vpop.f32.mrf.mxu0
      %v774 = vadd.f32 0.0, %v773
      %v775 = vpop.f32.mrf.mxu0
      %776 = vdwg.mxu0
      %v777 = vadd.f32 %v651, %v771
      %v778 = vadd.f32 %v652, %v774
      %v779 = vld [vmem:[#allocation2] sm:$0xfc]
      %v780 = vld [vmem:[#allocation2 + $0x20] sm:$0x3]
      %v781 = vpack.c.bf16 %v527, %v779
      %v782 = vpack.c.bf16 %v780, %v780
      %s783 = scalar_lea.vmem %s2, 128
      %v784 = vld [vmem:[%s783] sm:$0xf]
      %v785 = vld [vmem:[%s783 + $0x4] sm:$0xf]
      %v786 = vld [vmem:[%s783 + $0x8] sm:$0xf]
      %v787 = vld [vmem:[%s783 + $0xc] sm:$0xf]
      %v788 = vld [vmem:[%s783 + $0x10] sm:$0xf]
      %v789 = vld [vmem:[%s783 + $0x14] sm:$0xf]
      %v790 = vld [vmem:[%s783 + $0x18] sm:$0xf]
      %v791 = vld [vmem:[%s783 + $0x1c] sm:$0xf]
      %v792 = vld [vmem:[%s783 + $0x20] sm:$0xf]
      %v793 = vld [vmem:[%s783 + $0x24] sm:$0xf]
      %v794 = vld [vmem:[%s783 + $0x28] sm:$0xf]
      %v795 = vld [vmem:[%s783 + $0x2c] sm:$0xf]
      %v796 = vld [vmem:[%s783 + $0x30] sm:$0xf]
      %v797 = vld [vmem:[%s783 + $0x34] sm:$0xf]
      %v798 = vld [vmem:[%s783 + $0x38] sm:$0xf]
      %v799 = vld [vmem:[%s783 + $0x3c] sm:$0xf]
      %vm802 = vcmask 1046528
      %v803 = vrot.slane %v781, 1
      %v804 = vrot.slane %v782, 1
      %v805 = vsel %vm802, %v803, %v804
      %v823 = vunpack.c.l.b16 %v784
      %v824 = vunpack.c.l.b16 %v785
      %v825 = vunpack.c.l.b16 %v786
      %v826 = vunpack.c.l.b16 %v787
      %v827 = vunpack.c.l.b16 %v788
      %v828 = vunpack.c.l.b16 %v789
      %v829 = vunpack.c.l.b16 %v790
      %v830 = vunpack.c.l.b16 %v791
      %v831 = vunpack.c.l.b16 %v792
      %v832 = vunpack.c.l.b16 %v793
      %v833 = vunpack.c.l.b16 %v794
      %v834 = vunpack.c.l.b16 %v795
      %v835 = vunpack.c.l.b16 %v796
      %v836 = vunpack.c.l.b16 %v797
      %v837 = vunpack.c.l.b16 %v798
      %v838 = vunpack.c.l.b16 %v799
      %v839 = vpack.c.b16 %v824, %v823
      %v840 = vpack.c.b16 %v826, %v825
      %v841 = vpack.c.b16 %v828, %v827
      %v842 = vpack.c.b16 %v830, %v829
      %v843 = vpack.c.b16 %v832, %v831
      %v844 = vpack.c.b16 %v834, %v833
      %v845 = vpack.c.b16 %v836, %v835
      %v846 = vpack.c.b16 %v838, %v837
      %855 = vmatprep.subr.bf16.mxu0 0
      %856 = vmatpush1.bf16.msra.mxu0 %v846
      %857 = vmatprep.subr.bf16.mxu0 0
      %858 = vmatpush1.bf16.msra.mxu0 %v845
      %859 = vmatprep.subr.bf16.mxu0 0
      %860 = vmatpush1.bf16.msra.mxu0 %v844
      %861 = vmatprep.subr.bf16.mxu0 0
      %862 = vmatpush1.bf16.msra.mxu0 %v843
      %863 = vmatprep.subr.bf16.mxu0 0
      %864 = vmatpush1.bf16.msra.mxu0 %v842
      %865 = vmatprep.subr.bf16.mxu0 0
      %866 = vmatpush1.bf16.msra.mxu0 %v841
      %867 = vmatprep.subr.bf16.mxu0 0
      %868 = vmatpush1.bf16.msra.mxu0 %v840
      %869 = vmatprep.subr.bf16.mxu0 0
      %870 = vmatpush1.bf16.msra.mxu0 %v839
      %871 = vmatprep.subr.bf16.mxu0 0
      %872 = vmatpush2.bf16.msra.mxu0 0
      %873 = vmatprep.subr.bf16.mxu0 0
      %874 = vmatpush2.bf16.msra.mxu0 0
      %875 = vmatprep.subr.bf16.mxu0 0
      %876 = vmatpush2.bf16.msra.mxu0 0
      %877 = vmatprep.subr.bf16.mxu0 0
      %878 = vmatpush2.bf16.msra.mxu0 0
      %879 = vmatprep.subr.bf16.mxu0 0
      %880 = vmatpush2.bf16.msra.mxu0 0
      %881 = vmatprep.subr.bf16.mxu0 0
      %882 = vmatpush2.bf16.msra.mxu0 0
      %883 = vmatprep.subr.bf16.mxu0 0
      %884 = vmatpush2.bf16.msra.mxu0 0
      %885 = vmatprep.subr.bf16.mxu0 0
      %886 = vmatpush2.bf16.msra.mxu0 0
      %887 = vmatprep.mubr.bf16.mxu0 0
      %888 = vmatmul.mubr.bf16.gmra.mxu0 %v805
      %v889 = vpop.f32.mrf.mxu0
      %v890 = vadd.f32 0.0, %v889
      %v891 = vpop.f32.mrf.mxu0
      %v892 = vpop.f32.mrf.mxu0
      %v893 = vadd.f32 0.0, %v892
      %v894 = vpop.f32.mrf.mxu0
      %895 = vdwg.mxu0
      %v896 = vadd.f32 %v777, %v890
      %v897 = vadd.f32 %v778, %v893
      %v898 = vld [vmem:[#allocation2 + $0x8] sm:$0xfc]
      %v899 = vld [vmem:[#allocation2 + $0x28] sm:$0x3]
      %v900 = vpack.c.bf16 %v654, %v898
      %v901 = vpack.c.bf16 %v899, %v899
      %s902 = scalar_lea.vmem %s3, 128
      %v903 = vld [vmem:[%s902] sm:$0xf]
      %v904 = vld [vmem:[%s902 + $0x4] sm:$0xf]
      %v905 = vld [vmem:[%s902 + $0x8] sm:$0xf]
      %v906 = vld [vmem:[%s902 + $0xc] sm:$0xf]
      %v907 = vld [vmem:[%s902 + $0x10] sm:$0xf]
      %v908 = vld [vmem:[%s902 + $0x14] sm:$0xf]
      %v909 = vld [vmem:[%s902 + $0x18] sm:$0xf]
      %v910 = vld [vmem:[%s902 + $0x1c] sm:$0xf]
      %v911 = vld [vmem:[%s902 + $0x20] sm:$0xf]
      %v912 = vld [vmem:[%s902 + $0x24] sm:$0xf]
      %v913 = vld [vmem:[%s902 + $0x28] sm:$0xf]
      %v914 = vld [vmem:[%s902 + $0x2c] sm:$0xf]
      %v915 = vld [vmem:[%s902 + $0x30] sm:$0xf]
      %v916 = vld [vmem:[%s902 + $0x34] sm:$0xf]
      %v917 = vld [vmem:[%s902 + $0x38] sm:$0xf]
      %v918 = vld [vmem:[%s902 + $0x3c] sm:$0xf]
      %v921 = vrot.slane %v900, 1
      %v922 = vrot.slane %v901, 1
      %v923 = vsel %vm802, %v921, %v922
      %v941 = vunpack.c.l.b16 %v903
      %v942 = vunpack.c.l.b16 %v904
      %v943 = vunpack.c.l.b16 %v905
      %v944 = vunpack.c.l.b16 %v906
      %v945 = vunpack.c.l.b16 %v907
      %v946 = vunpack.c.l.b16 %v908
      %v947 = vunpack.c.l.b16 %v909
      %v948 = vunpack.c.l.b16 %v910
      %v949 = vunpack.c.l.b16 %v911
      %v950 = vunpack.c.l.b16 %v912
      %v951 = vunpack.c.l.b16 %v913
      %v952 = vunpack.c.l.b16 %v914
      %v953 = vunpack.c.l.b16 %v915
      %v954 = vunpack.c.l.b16 %v916
      %v955 = vunpack.c.l.b16 %v917
      %v956 = vunpack.c.l.b16 %v918
      %v957 = vpack.c.b16 %v942, %v941
      %v958 = vpack.c.b16 %v944, %v943
      %v959 = vpack.c.b16 %v946, %v945
      %v960 = vpack.c.b16 %v948, %v947
      %v961 = vpack.c.b16 %v950, %v949
      %v962 = vpack.c.b16 %v952, %v951
      %v963 = vpack.c.b16 %v954, %v953
      %v964 = vpack.c.b16 %v956, %v955
      %973 = vmatprep.subr.bf16.mxu0 0
      %974 = vmatpush1.bf16.msra.mxu0 %v964
      %975 = vmatprep.subr.bf16.mxu0 0
      %976 = vmatpush1.bf16.msra.mxu0 %v963
      %977 = vmatprep.subr.bf16.mxu0 0
      %978 = vmatpush1.bf16.msra.mxu0 %v962
      %979 = vmatprep.subr.bf16.mxu0 0
      %980 = vmatpush1.bf16.msra.mxu0 %v961
      %981 = vmatprep.subr.bf16.mxu0 0
      %982 = vmatpush1.bf16.msra.mxu0 %v960
      %983 = vmatprep.subr.bf16.mxu0 0
      %984 = vmatpush1.bf16.msra.mxu0 %v959
      %985 = vmatprep.subr.bf16.mxu0 0
      %986 = vmatpush1.bf16.msra.mxu0 %v958
      %987 = vmatprep.subr.bf16.mxu0 0
      %988 = vmatpush1.bf16.msra.mxu0 %v957
      %989 = vmatprep.subr.bf16.mxu0 0
      %990 = vmatpush2.bf16.msra.mxu0 0
      %991 = vmatprep.subr.bf16.mxu0 0
      %992 = vmatpush2.bf16.msra.mxu0 0
      %993 = vmatprep.subr.bf16.mxu0 0
      %994 = vmatpush2.bf16.msra.mxu0 0
      %995 = vmatprep.subr.bf16.mxu0 0
      %996 = vmatpush2.bf16.msra.mxu0 0
      %997 = vmatprep.subr.bf16.mxu0 0
      %998 = vmatpush2.bf16.msra.mxu0 0
      %999 = vmatprep.subr.bf16.mxu0 0
      %1000 = vmatpush2.bf16.msra.mxu0 0
      %1001 = vmatprep.subr.bf16.mxu0 0
      %1002 = vmatpush2.bf16.msra.mxu0 0
      %1003 = vmatprep.subr.bf16.mxu0 0
      %1004 = vmatpush2.bf16.msra.mxu0 0
      %1005 = vmatprep.mubr.bf16.mxu0 0
      %1006 = vmatmul.mubr.bf16.gmra.mxu0 %v923
      %v1007 = vpop.f32.mrf.mxu0
      %v1008 = vadd.f32 0.0, %v1007
      %v1009 = vpop.f32.mrf.mxu0
      %v1010 = vpop.f32.mrf.mxu0
      %v1011 = vadd.f32 0.0, %v1010
      %v1012 = vpop.f32.mrf.mxu0
      %1013 = vdwg.mxu0
      %v1014 = vadd.f32 %v896, %v1008
      %v1015 = vadd.f32 %v897, %v1011
      %v1016 = vld [vmem:[%s4] sm:$0x1]
      %v1018 = vlaneseq
      %v1019 = vshrl.u32 %v1018, 7
      %v1020 = vsub.s32 0, %v1019
      %v1021 = vrot.slane %v1016, %v1020
      %v1023 = vmul.f32 %v1014, %v1021
      %v1024 = vmul.f32 %v1015, %v1021
      %v1025 = vld [vmem:[%s5] sm:$0x1]
      %v1027 = vlaneseq
      %v1028 = vshrl.u32 %v1027, 7
      %v1029 = vsub.s32 0, %v1028
      %v1030 = vrot.slane %v1025, %v1029
      %v1032 = vadd.f32 %v1023, %v1030
      %v1033 = vadd.f32 %v1024, %v1030
      %v1034 = vmax.f32 %v1032, 0.0
      %v1035 = vmax.f32 %v1033, 0.0
      %v1036 = vpack.c.bf16 %v1035, %v1034
      %v1038 = vunpack.c.l.b16 %v1036
      %v1039 = vunpack.c.h.b16 %v1036
      %v1040 = vpack.c.b16 %v1038, %v1038
      %v1041 = vpack.c.b16 %v1039, %v1039
      %1044 = vst [vmem:[%s271] sm:$0xf] %v1040
      %1045 = vst [vmem:[%s271 + $0x4] sm:$0xf] %v1041
      %p1046 = scmp.lt.s32.totalorder %s17, 1
      %s1047 = scalar_select %p1046, %s17, 1
      %s1048 = smul.addr %s1047, 2
      %s1049 = smul.addr %s1048, 4
      %s1050 = scalar_lea.vmem %s6, %s1049
      // Predicated region
      $region45: #{_lambda_.16} parent=43 // pred_check
        %p1051 = pneg %p171
      $region46: #{_lambda_.16} parent=43 // pred_check_branch
        %1053 = sbr.rel (%p1051) target = $region48
      $region47: #{_lambda_.16} parent=43 // pred_region
        _
      $region48: #{_lambda_.16} parent=43 // pred_fallthru
        _
    $region44: #{_lambda_.16} parent=5 // pred_fallthru
      _
    %p1054 = scmp.le.s32.totalorder 2, %s12
    // Predicated region
    $region49: #{_lambda_.16} parent=5 // pred_check
      %p1055 = pneg %p1054
    $region50: #{_lambda_.16} parent=5 // pred_check_branch
      %1057 = sbr.rel (%p1055) target = $region52
    $region51: #{_lambda_.16} parent=5 // pred_region
      %s1058 = ssub.s32 %s12, 2
      // Predicated region
      $region53: #{_lambda_.16} parent=51 // pred_check
        %p1059 = pneg %p177
      $region54: #{_lambda_.16} parent=51 // pred_check_branch
        %1061 = sbr.rel (%p1059) target = $region56
      $region55: #{_lambda_.16} parent=51 // pred_region
        %p1062 = scmp.lt.s32.totalorder %s18, 1
        %s1063 = scalar_select %p1062, %s18, 1
        %s1064 = smul.addr %s1063, 2
        %s1065 = smul.addr %s1064, 4
        %s1066 = scalar_lea.vmem %s6, %s1065
      $region56: #{_lambda_.16} parent=51 // pred_fallthru
        _
    $region52: #{_lambda_.16} parent=5 // pred_fallthru
      _
  $region6: #{_lambda_.16} parent=0 // loop_footer
    %s16 = sadd.s32 1, %s12
  $region7: #{_lambda_.16} parent=0 // loop_footer_branch
    %11 = sbr.rel target = $region3
  $region8: #{_lambda_.16} parent=0 // loop_exit
    _

// kernel: _lambda_.17
$region0: #{_lambda_.17}
  #allocation0 [shape = 'u32[]', space=smem, size = 0x4, offset = 0x4, fixed_abs, tag = 'smem constant byte address 0x4 - core index']
  #allocation1 [shape = 'u32[144,128]{1,0:T(1,128)}', space=vmem, size = 0x12000, scoped, tag = 'internal scratch']
  #allocation2 [shape = 'f32[18,128]{1,0:T(8,128)}', space=vmem, size = 0x3000, scoped, tag = 'scratch operand']
  %s0 = inlined_call_operand.vmem [shape: bf16[2,16,128], index: 0, kind: input, shape index: {}]
  %s1 = inlined_call_operand.vmem [shape: bf16[3,128,128], index: 1, kind: input, shape index: {}]
  %s2 = inlined_call_operand.vmem [shape: f32[1,128], index: 2, kind: input, shape index: {}]
  %s3 = inlined_call_operand.vmem [shape: f32[1,128], index: 3, kind: input, shape index: {}]
  %s4 = inlined_call_operand.hbm [shape: f32[2,16,128], index: 4, kind: output, shape index: {}]
  %s5 = sld [smem:[#allocation0]]
  $region49: #{_lambda_.17} parent=0
    _
  %s7 = ssub.s32 1, %s5
  %s8 = scalar_select 0, %s7, %s5
  $region1: #{_lambda_.17} parent=0
    #allocation3 [shape = 'u8[16384]{0}', space=vmem, size = 0x4000, scoped, tag = 'output window, operand 0']
    #allocation4 [shape = 's32[2]{0}', space=sflag, size = 0x8, scoped, tag = 'scoped memory for _lambda_.17']
    %9 = vsyncpa [#allocation4], 0
    %s10 = scalar_lea.sflag [#allocation4], 1
    %11 = vsyncpa %s10, 0
    loop: start=0, step=1, limit=4
    $region2: #{_lambda_.17} parent=1 // loop_pre_header
      _
    $region3: #{_lambda_.17} parent=1 // loop_header
      %s13 = sphi 0, %s17
      %p14 = scmp.ge.s32.totalorder %s13, 4
      %s23 = sphi 0, %s25
      %s26 = sphi 0, %s23
      %s27 = sphi 0, %s26
      %s43 = sphi 0, %s27
      %s47 = sphi 0, %s47
      %s49 = sphi 0, %s47
      %s50 = sphi 0, %s49
      %s64 = sphi 0, %s50
      %s68 = sphi 0, %s68
      %s70 = sphi 0, %s68
      %s71 = sphi 0, %s70
      %s85 = sphi 0, %s71
      %s89 = sphi 0, %s89
      %s91 = sphi 0, %s89
      %s92 = sphi 0, %s91
      %s106 = sphi 0, %s92
      %s112 = sphi 0, %s114
      %s115 = sphi 0, %s112
      %s116 = sphi 0, %s115
      %s132 = sphi 0, %s116
    $region4: #{_lambda_.17} parent=1 // loop_header_branch
      %16 = sbr.rel (%p14) target = $region8
    $region5: #{_lambda_.17} parent=1 // loop_body
      %s18 = ssub.s32 %s13, 1
      %s19 = ssub.s32 %s13, 2
      %s20 = sadd.s32 %s13, 1
      %s21 = ssub.s32 %s13, %s20
      %p22 = scmp.eq.s32.totalorder %s21, 0
      %s24 = sadd.s32 %s23, 1
      %s25 = scalar_select %p22, %s23, %s24
      %p28 = pneg %p22
      %p29 = scmp.eq.s32.totalorder %s13, 1
      %p30 = por %p28, %p29
      %p31 = scmp.ne.s32.totalorder %s23, %s26
      %p32 = scmp.eq.s32.totalorder %s13, 0
      %p33 = por %p31, %p32
      %p34 = scmp.ne.s32.totalorder %s23, %s26
      %p35 = scmp.eq.s32.totalorder %s18, 1
      %p36 = por %p34, %p35
      %p37 = scmp.ne.s32.totalorder %s26, %s27
      %p38 = scmp.eq.s32.totalorder %s18, 0
      %p39 = por %p37, %p38
      %p40 = scmp.ne.s32.totalorder %s26, %s27
      %p41 = scmp.eq.s32.totalorder %s19, 1
      %p42 = por %p40, %p41
      %p44 = scmp.ne.s32.totalorder %s27, %s43
      %p45 = scmp.eq.s32.totalorder %s19, 0
      %p46 = por %p44, %p45
      %s48 = sadd.s32 %s47, 1
      %p51 = scmp.eq.s32.totalorder %s13, 1
      %p52 = scmp.ne.s32.totalorder %s47, %s49
      %p53 = scmp.eq.s32.totalorder %s13, 0
      %p54 = por %p52, %p53
      %p55 = scmp.ne.s32.totalorder %s47, %s49
      %p56 = scmp.eq.s32.totalorder %s18, 1
      %p57 = por %p55, %p56
      %p58 = scmp.ne.s32.totalorder %s49, %s50
      %p59 = scmp.eq.s32.totalorder %s18, 0
      %p60 = por %p58, %p59
      %p61 = scmp.ne.s32.totalorder %s49, %s50
      %p62 = scmp.eq.s32.totalorder %s19, 1
      %p63 = por %p61, %p62
      %p65 = scmp.ne.s32.totalorder %s50, %s64
      %p66 = scmp.eq.s32.totalorder %s19, 0
      %p67 = por %p65, %p66
      %s69 = sadd.s32 %s68, 1
      %p72 = scmp.eq.s32.totalorder %s13, 1
      %p73 = scmp.ne.s32.totalorder %s68, %s70
      %p74 = scmp.eq.s32.totalorder %s13, 0
      %p75 = por %p73, %p74
      %p76 = scmp.ne.s32.totalorder %s68, %s70
      %p77 = scmp.eq.s32.totalorder %s18, 1
      %p78 = por %p76, %p77
      %p79 = scmp.ne.s32.totalorder %s70, %s71
      %p80 = scmp.eq.s32.totalorder %s18, 0
      %p81 = por %p79, %p80
      %p82 = scmp.ne.s32.totalorder %s70, %s71
      %p83 = scmp.eq.s32.totalorder %s19, 1
      %p84 = por %p82, %p83
      %p86 = scmp.ne.s32.totalorder %s71, %s85
      %p87 = scmp.eq.s32.totalorder %s19, 0
      %p88 = por %p86, %p87
      %s90 = sadd.s32 %s89, 1
      %p93 = scmp.eq.s32.totalorder %s13, 1
      %p94 = scmp.ne.s32.totalorder %s89, %s91
      %p95 = scmp.eq.s32.totalorder %s13, 0
      %p96 = por %p94, %p95
      %p97 = scmp.ne.s32.totalorder %s89, %s91
      %p98 = scmp.eq.s32.totalorder %s18, 1
      %p99 = por %p97, %p98
      %p100 = scmp.ne.s32.totalorder %s91, %s92
      %p101 = scmp.eq.s32.totalorder %s18, 0
      %p102 = por %p100, %p101
      %p103 = scmp.ne.s32.totalorder %s91, %s92
      %p104 = scmp.eq.s32.totalorder %s19, 1
      %p105 = por %p103, %p104
      %p107 = scmp.ne.s32.totalorder %s92, %s106
      %p108 = scmp.eq.s32.totalorder %s19, 0
      %p109 = por %p107, %p108
      %s110 = ssub.s32 %s13, %s20
      %p111 = scmp.eq.s32.totalorder %s110, 0
      %s113 = sadd.s32 %s112, 1
      %s114 = scalar_select %p111, %s112, %s113
      %p117 = pneg %p111
      %p118 = scmp.eq.s32.totalorder %s13, 1
      %p119 = por %p117, %p118
      %p120 = scmp.ne.s32.totalorder %s112, %s115
      %p121 = scmp.eq.s32.totalorder %s13, 0
      %p122 = por %p120, %p121
      %p123 = scmp.ne.s32.totalorder %s112, %s115
      %p124 = scmp.eq.s32.totalorder %s18, 1
      %p125 = por %p123, %p124
      %p126 = scmp.ne.s32.totalorder %s115, %s116
      %p127 = scmp.eq.s32.totalorder %s18, 0
      %p128 = por %p126, %p127
      %p129 = scmp.ne.s32.totalorder %s115, %s116
      %p130 = scmp.eq.s32.totalorder %s19, 1
      %p131 = por %p129, %p130
      %p133 = scmp.ne.s32.totalorder %s116, %s132
      %p134 = scmp.eq.s32.totalorder %s19, 0
      %p135 = por %p133, %p134
      %p136 = scmp.le.s32.totalorder 1, %s13
      %p137 = scmp.lt.s32.totalorder %s13, 3
      %p138 = pnand %p136, %p137
      %p139 = pneg %p138
      // Predicated region
      $region9: #{_lambda_.17} parent=5 // pred_check
        _
      $region10: #{_lambda_.17} parent=5 // pred_check_branch
        %141 = sbr.rel (%p138) target = $region12
      $region11: #{_lambda_.17} parent=5 // pred_region
        %s142 = ssub.s32 %s13, 1
        // Predicated region
        $region13: #{_lambda_.17} parent=11 // pred_check
          %p143 = pneg %p60
        $region14: #{_lambda_.17} parent=11 // pred_check_branch
          %145 = sbr.rel (%p143) target = $region16
        $region15: #{_lambda_.17} parent=11 // pred_region
          _
        $region16: #{_lambda_.17} parent=11 // pred_fallthru
          _
        // Predicated region
        $region17: #{_lambda_.17} parent=11 // pred_check
          %p146 = pneg %p81
        $region18: #{_lambda_.17} parent=11 // pred_check_branch
          %148 = sbr.rel (%p146) target = $region20
        $region19: #{_lambda_.17} parent=11 // pred_region
          _
        $region20: #{_lambda_.17} parent=11 // pred_fallthru
          _
        // Predicated region
        $region21: #{_lambda_.17} parent=11 // pred_check
          %p149 = pneg %p102
        $region22: #{_lambda_.17} parent=11 // pred_check_branch
          %151 = sbr.rel (%p149) target = $region24
        $region23: #{_lambda_.17} parent=11 // pred_region
          _
        $region24: #{_lambda_.17} parent=11 // pred_fallthru
          _
      $region12: #{_lambda_.17} parent=5 // pred_fallthru
        _
      %p152 = scmp.lt.s32.totalorder %s13, 2
      // Predicated region
      $region25: #{_lambda_.17} parent=5 // pred_check
        %p153 = pneg %p152
      $region26: #{_lambda_.17} parent=5 // pred_check_branch
        %155 = sbr.rel (%p153) target = $region28
      $region27: #{_lambda_.17} parent=5 // pred_region
        // Predicated region
        $region29: #{_lambda_.17} parent=27 // pred_check
          %p156 = pneg %p33
        $region30: #{_lambda_.17} parent=27 // pred_check_branch
          %158 = sbr.rel (%p156) target = $region32
        $region31: #{_lambda_.17} parent=27 // pred_region
          %p159 = scmp.lt.s32.totalorder %s13, 1
          %s160 = scalar_select %p159, %s13, 1
          %s161 = smul.addr %s160, 2
          %s162 = smul.addr %s161, 4
          %s163 = scalar_lea.vmem %s0, %s162
        $region32: #{_lambda_.17} parent=27 // pred_fallthru
          _
      $region28: #{_lambda_.17} parent=5 // pred_fallthru
        _
      %p164 = scmp.le.s32.totalorder 1, %s13
      %p165 = scmp.lt.s32.totalorder %s13, 3
      %p166 = pnand %p164, %p165
      %p167 = pneg %p166
      // Predicated region
      $region33: #{_lambda_.17} parent=5 // pred_check
        _
      $region34: #{_lambda_.17} parent=5 // pred_check_branch
        %169 = sbr.rel (%p166) target = $region36
      $region35: #{_lambda_.17} parent=5 // pred_region
        %s170 = ssub.s32 %s13, 1
        %p171 = scmp.lt.s32.totalorder %s18, 1
        %s172 = scalar_select %p171, %s18, 1
        %s173 = smul.addr %s172, 2
        %s174 = smul.addr %s173, 4
        %s175 = scalar_lea.vmem %s0, %s174
        %p176 = pneg %p39
        %p177 = pneg %p36
        %p178 = pneg %p60
        %p179 = pneg %p57
        %p180 = pneg %p81
        %p181 = pneg %p78
        %p182 = pneg %p102
        %p183 = pneg %p99
        %p184 = pneg %p128
        %p185 = pneg %p125
        %s186 = sand.u32 %s115, 1
        %s187 = scalar_lea.sflag [#allocation4], %s186
        %s188 = sand.u32 %s115, 1
        %s189 = smul.addr %s188, 16
        %s190 = scalar_lea.vmem [#allocation3], %s189
        %p191 = scmp.lt.s32.totalorder %s18, 1
        %s192 = scalar_select %p191, %s18, 1
        %s193 = smul.addr %s192, 2
        %s194 = smul.addr %s193, 4
        %s195 = scalar_lea.vmem %s0, %s194
        %197 = vst [vmem:[#allocation2] sm:$0xff] 0.0
        %198 = vst [vmem:[#allocation2 + $0x8] sm:$0xff] 0.0
        %199 = vst [vmem:[#allocation2 + $0x10] sm:$0x3] 0.0
        %v200 = vld [vmem:[%s195] sm:$0xf]
        %v201 = vld [vmem:[%s195 + $0x4] sm:$0xf]
        %v202 = vunpack.c.l.bf16 %v200
        %v203 = vunpack.c.l.bf16 %v201
        %204 = vst [vmem:[#allocation2 + $0x1] sm:$0xff] %v202
        %205 = vst [vmem:[#allocation2 + $0x9] sm:$0xff] %v203
        %v206 = vld [vmem:[#allocation2] sm:$0xff]
        %v207 = vld [vmem:[#allocation2 + $0x8] sm:$0xff]
        %v208 = vpack.c.bf16 %v207, %v206
        %v209 = vld [vmem:[%s1] sm:$0xf]
        %v210 = vld [vmem:[%s1 + $0x4] sm:$0xf]
        %v211 = vld [vmem:[%s1 + $0x8] sm:$0xf]
        %v212 = vld [vmem:[%s1 + $0xc] sm:$0xf]
        %v213 = vld [vmem:[%s1 + $0x10] sm:$0xf]
        %v214 = vld [vmem:[%s1 + $0x14] sm:$0xf]
        %v215 = vld [vmem:[%s1 + $0x18] sm:$0xf]
        %v216 = vld [vmem:[%s1 + $0x1c] sm:$0xf]
        %v217 = vld [vmem:[%s1 + $0x20] sm:$0xf]
        %v218 = vld [vmem:[%s1 + $0x24] sm:$0xf]
        %v219 = vld [vmem:[%s1 + $0x28] sm:$0xf]
        %v220 = vld [vmem:[%s1 + $0x2c] sm:$0xf]
        %v221 = vld [vmem:[%s1 + $0x30] sm:$0xf]
        %v222 = vld [vmem:[%s1 + $0x34] sm:$0xf]
        %v223 = vld [vmem:[%s1 + $0x38] sm:$0xf]
        %v224 = vld [vmem:[%s1 + $0x3c] sm:$0xf]
        %v225 = vld [vmem:[#allocation2 + $0x1] sm:$0xff]
        %v226 = vld [vmem:[#allocation2 + $0x9] sm:$0xff]
        %v227 = vpack.c.bf16 %v226, %v225
        %s228 = scalar_lea.vmem %s1, 64
        %v229 = vld [vmem:[%s228] sm:$0xf]
        %v230 = vld [vmem:[%s228 + $0x4] sm:$0xf]
        %v231 = vld [vmem:[%s228 + $0x8] sm:$0xf]
        %v232 = vld [vmem:[%s228 + $0xc] sm:$0xf]
        %v233 = vld [vmem:[%s228 + $0x10] sm:$0xf]
        %v234 = vld [vmem:[%s228 + $0x14] sm:$0xf]
        %v235 = vld [vmem:[%s228 + $0x18] sm:$0xf]
        %v236 = vld [vmem:[%s228 + $0x1c] sm:$0xf]
        %v237 = vld [vmem:[%s228 + $0x20] sm:$0xf]
        %v238 = vld [vmem:[%s228 + $0x24] sm:$0xf]
        %v239 = vld [vmem:[%s228 + $0x28] sm:$0xf]
        %v240 = vld [vmem:[%s228 + $0x2c] sm:$0xf]
        %v241 = vld [vmem:[%s228 + $0x30] sm:$0xf]
        %v242 = vld [vmem:[%s228 + $0x34] sm:$0xf]
        %v243 = vld [vmem:[%s228 + $0x38] sm:$0xf]
        %v244 = vld [vmem:[%s228 + $0x3c] sm:$0xf]
        %v261 = vunpack.c.l.b16 %v229
        %v262 = vunpack.c.l.b16 %v230
        %v263 = vunpack.c.l.b16 %v231
        %v264 = vunpack.c.l.b16 %v232
        %v265 = vunpack.c.l.b16 %v233
        %v266 = vunpack.c.l.b16 %v234
        %v267 = vunpack.c.l.b16 %v235
        %v268 = vunpack.c.l.b16 %v236
        %v269 = vunpack.c.l.b16 %v237
        %v270 = vunpack.c.l.b16 %v238
        %v271 = vunpack.c.l.b16 %v239
        %v272 = vunpack.c.l.b16 %v240
        %v273 = vunpack.c.l.b16 %v241
        %v274 = vunpack.c.l.b16 %v242
        %v275 = vunpack.c.l.b16 %v243
        %v276 = vunpack.c.l.b16 %v244
        %v277 = vpack.c.b16 %v262, %v261
        %v278 = vpack.c.b16 %v264, %v263
        %v279 = vpack.c.b16 %v266, %v265
        %v280 = vpack.c.b16 %v268, %v267
        %v281 = vpack.c.b16 %v270, %v269
        %v282 = vpack.c.b16 %v272, %v271
        %v283 = vpack.c.b16 %v274, %v273
        %v284 = vpack.c.b16 %v276, %v275
        %293 = vmatprep.subr.bf16.mxu0 0
        %294 = vmatpush1.bf16.msra.mxu0 %v284
        %295 = vmatprep.subr.bf16.mxu0 0
        %296 = vmatpush1.bf16.msra.mxu0 %v283
        %297 = vmatprep.subr.bf16.mxu0 0
        %298 = vmatpush1.bf16.msra.mxu0 %v282
        %299 = vmatprep.subr.bf16.mxu0 0
        %300 = vmatpush1.bf16.msra.mxu0 %v281
        %301 = vmatprep.subr.bf16.mxu0 0
        %302 = vmatpush1.bf16.msra.mxu0 %v280
        %303 = vmatprep.subr.bf16.mxu0 0
        %304 = vmatpush1.bf16.msra.mxu0 %v279
        %305 = vmatprep.subr.bf16.mxu0 0
        %306 = vmatpush1.bf16.msra.mxu0 %v278
        %307 = vmatprep.subr.bf16.mxu0 0
        %308 = vmatpush1.bf16.msra.mxu0 %v277
        %309 = vmatprep.subr.bf16.mxu0 0
        %310 = vmatpush2.bf16.msra.mxu0 0
        %311 = vmatprep.subr.bf16.mxu0 0
        %312 = vmatpush2.bf16.msra.mxu0 0
        %313 = vmatprep.subr.bf16.mxu0 0
        %314 = vmatpush2.bf16.msra.mxu0 0
        %315 = vmatprep.subr.bf16.mxu0 0
        %316 = vmatpush2.bf16.msra.mxu0 0
        %317 = vmatprep.subr.bf16.mxu0 0
        %318 = vmatpush2.bf16.msra.mxu0 0
        %319 = vmatprep.subr.bf16.mxu0 0
        %320 = vmatpush2.bf16.msra.mxu0 0
        %321 = vmatprep.subr.bf16.mxu0 0
        %322 = vmatpush2.bf16.msra.mxu0 0
        %323 = vmatprep.subr.bf16.mxu0 0
        %324 = vmatpush2.bf16.msra.mxu0 0
        %325 = vmatprep.mubr.bf16.mxu0 0
        %326 = vmatmul.mubr.bf16.gmra.mxu0 %v227
        %v327 = vpop.f32.mrf.mxu0
        %v328 = vadd.f32 0.0, %v327
        %v329 = vpop.f32.mrf.mxu0
        %v330 = vpop.f32.mrf.mxu0
        %v331 = vadd.f32 0.0, %v330
        %v332 = vpop.f32.mrf.mxu0
        %333 = vdwg.mxu0
        %v350 = vunpack.c.l.b16 %v209
        %v351 = vunpack.c.l.b16 %v210
        %v352 = vunpack.c.l.b16 %v211
        %v353 = vunpack.c.l.b16 %v212
        %v354 = vunpack.c.l.b16 %v213
        %v355 = vunpack.c.l.b16 %v214
        %v356 = vunpack.c.l.b16 %v215
        %v357 = vunpack.c.l.b16 %v216
        %v358 = vunpack.c.l.b16 %v217
        %v359 = vunpack.c.l.b16 %v218
        %v360 = vunpack.c.l.b16 %v219
        %v361 = vunpack.c.l.b16 %v220
        %v362 = vunpack.c.l.b16 %v221
        %v363 = vunpack.c.l.b16 %v222
        %v364 = vunpack.c.l.b16 %v223
        %v365 = vunpack.c.l.b16 %v224
        %v366 = vpack.c.b16 %v351, %v350
        %v367 = vpack.c.b16 %v353, %v352
        %v368 = vpack.c.b16 %v355, %v354
        %v369 = vpack.c.b16 %v357, %v356
        %v370 = vpack.c.b16 %v359, %v358
        %v371 = vpack.c.b16 %v361, %v360
        %v372 = vpack.c.b16 %v363, %v362
        %v373 = vpack.c.b16 %v365, %v364
        %382 = vmatprep.subr.bf16.mxu0 0
        %383 = vmatpush1.bf16.msra.mxu0 %v373
        %384 = vmatprep.subr.bf16.mxu0 0
        %385 = vmatpush1.bf16.msra.mxu0 %v372
        %386 = vmatprep.subr.bf16.mxu0 0
        %387 = vmatpush1.bf16.msra.mxu0 %v371
        %388 = vmatprep.subr.bf16.mxu0 0
        %389 = vmatpush1.bf16.msra.mxu0 %v370
        %390 = vmatprep.subr.bf16.mxu0 0
        %391 = vmatpush1.bf16.msra.mxu0 %v369
        %392 = vmatprep.subr.bf16.mxu0 0
        %393 = vmatpush1.bf16.msra.mxu0 %v368
        %394 = vmatprep.subr.bf16.mxu0 0
        %395 = vmatpush1.bf16.msra.mxu0 %v367
        %396 = vmatprep.subr.bf16.mxu0 0
        %397 = vmatpush1.bf16.msra.mxu0 %v366
        %398 = vmatprep.subr.bf16.mxu0 0
        %399 = vmatpush2.bf16.msra.mxu0 0
        %400 = vmatprep.subr.bf16.mxu0 0
        %401 = vmatpush2.bf16.msra.mxu0 0
        %402 = vmatprep.subr.bf16.mxu0 0
        %403 = vmatpush2.bf16.msra.mxu0 0
        %404 = vmatprep.subr.bf16.mxu0 0
        %405 = vmatpush2.bf16.msra.mxu0 0
        %406 = vmatprep.subr.bf16.mxu0 0
        %407 = vmatpush2.bf16.msra.mxu0 0
        %408 = vmatprep.subr.bf16.mxu0 0
        %409 = vmatpush2.bf16.msra.mxu0 0
        %410 = vmatprep.subr.bf16.mxu0 0
        %411 = vmatpush2.bf16.msra.mxu0 0
        %412 = vmatprep.subr.bf16.mxu0 0
        %413 = vmatpush2.bf16.msra.mxu0 0
        %414 = vmatprep.mubr.bf16.mxu0 0
        %415 = vmatmul.mubr.bf16.gmra.mxu0 %v208
        %v416 = vpop.f32.mrf.mxu0
        %v417 = vadd.f32 %v328, %v416
        %v418 = vpop.f32.mrf.mxu0
        %v419 = vpop.f32.mrf.mxu0
        %v420 = vadd.f32 %v331, %v419
        %v421 = vpop.f32.mrf.mxu0
        %422 = vdwg.mxu0
        %v423 = vld [vmem:[#allocation2 + $0x2] sm:$0xff]
        %v424 = vld [vmem:[#allocation2 + $0xa] sm:$0xff]
        %v425 = vpack.c.bf16 %v424, %v423
        %s426 = scalar_lea.vmem %s1, 128
        %v427 = vld [vmem:[%s426] sm:$0xf]
        %v428 = vld [vmem:[%s426 + $0x4] sm:$0xf]
        %v429 = vld [vmem:[%s426 + $0x8] sm:$0xf]
        %v430 = vld [vmem:[%s426 + $0xc] sm:$0xf]
        %v431 = vld [vmem:[%s426 + $0x10] sm:$0xf]
        %v432 = vld [vmem:[%s426 + $0x14] sm:$0xf]
        %v433 = vld [vmem:[%s426 + $0x18] sm:$0xf]
        %v434 = vld [vmem:[%s426 + $0x1c] sm:$0xf]
        %v435 = vld [vmem:[%s426 + $0x20] sm:$0xf]
        %v436 = vld [vmem:[%s426 + $0x24] sm:$0xf]
        %v437 = vld [vmem:[%s426 + $0x28] sm:$0xf]
        %v438 = vld [vmem:[%s426 + $0x2c] sm:$0xf]
        %v439 = vld [vmem:[%s426 + $0x30] sm:$0xf]
        %v440 = vld [vmem:[%s426 + $0x34] sm:$0xf]
        %v441 = vld [vmem:[%s426 + $0x38] sm:$0xf]
        %v442 = vld [vmem:[%s426 + $0x3c] sm:$0xf]
        %v459 = vunpack.c.l.b16 %v427
        %v460 = vunpack.c.l.b16 %v428
        %v461 = vunpack.c.l.b16 %v429
        %v462 = vunpack.c.l.b16 %v430
        %v463 = vunpack.c.l.b16 %v431
        %v464 = vunpack.c.l.b16 %v432
        %v465 = vunpack.c.l.b16 %v433
        %v466 = vunpack.c.l.b16 %v434
        %v467 = vunpack.c.l.b16 %v435
        %v468 = vunpack.c.l.b16 %v436
        %v469 = vunpack.c.l.b16 %v437
        %v470 = vunpack.c.l.b16 %v438
        %v471 = vunpack.c.l.b16 %v439
        %v472 = vunpack.c.l.b16 %v440
        %v473 = vunpack.c.l.b16 %v441
        %v474 = vunpack.c.l.b16 %v442
        %v475 = vpack.c.b16 %v460, %v459
        %v476 = vpack.c.b16 %v462, %v461
        %v477 = vpack.c.b16 %v464, %v463
        %v478 = vpack.c.b16 %v466, %v465
        %v479 = vpack.c.b16 %v468, %v467
        %v480 = vpack.c.b16 %v470, %v469
        %v481 = vpack.c.b16 %v472, %v471
        %v482 = vpack.c.b16 %v474, %v473
        %491 = vmatprep.subr.bf16.mxu0 0
        %492 = vmatpush1.bf16.msra.mxu0 %v482
        %493 = vmatprep.subr.bf16.mxu0 0
        %494 = vmatpush1.bf16.msra.mxu0 %v481
        %495 = vmatprep.subr.bf16.mxu0 0
        %496 = vmatpush1.bf16.msra.mxu0 %v480
        %497 = vmatprep.subr.bf16.mxu0 0
        %498 = vmatpush1.bf16.msra.mxu0 %v479
        %499 = vmatprep.subr.bf16.mxu0 0
        %500 = vmatpush1.bf16.msra.mxu0 %v478
        %501 = vmatprep.subr.bf16.mxu0 0
        %502 = vmatpush1.bf16.msra.mxu0 %v477
        %503 = vmatprep.subr.bf16.mxu0 0
        %504 = vmatpush1.bf16.msra.mxu0 %v476
        %505 = vmatprep.subr.bf16.mxu0 0
        %506 = vmatpush1.bf16.msra.mxu0 %v475
        %507 = vmatprep.subr.bf16.mxu0 0
        %508 = vmatpush2.bf16.msra.mxu0 0
        %509 = vmatprep.subr.bf16.mxu0 0
        %510 = vmatpush2.bf16.msra.mxu0 0
        %511 = vmatprep.subr.bf16.mxu0 0
        %512 = vmatpush2.bf16.msra.mxu0 0
        %513 = vmatprep.subr.bf16.mxu0 0
        %514 = vmatpush2.bf16.msra.mxu0 0
        %515 = vmatprep.subr.bf16.mxu0 0
        %516 = vmatpush2.bf16.msra.mxu0 0
        %517 = vmatprep.subr.bf16.mxu0 0
        %518 = vmatpush2.bf16.msra.mxu0 0
        %519 = vmatprep.subr.bf16.mxu0 0
        %520 = vmatpush2.bf16.msra.mxu0 0
        %521 = vmatprep.subr.bf16.mxu0 0
        %522 = vmatpush2.bf16.msra.mxu0 0
        %523 = vmatprep.mubr.bf16.mxu0 0
        %524 = vmatmul.mubr.bf16.gmra.mxu0 %v425
        %v525 = vpop.f32.mrf.mxu0
        %v526 = vadd.f32 0.0, %v525
        %v527 = vpop.f32.mrf.mxu0
        %v528 = vpop.f32.mrf.mxu0
        %v529 = vadd.f32 0.0, %v528
        %v530 = vpop.f32.mrf.mxu0
        %531 = vdwg.mxu0
        %v532 = vadd.f32 %v417, %v526
        %v533 = vadd.f32 %v420, %v529
        %v534 = vld [vmem:[%s2] sm:$0x1]
        %v536 = vlaneseq
        %v537 = vshrl.u32 %v536, 7
        %v538 = vsub.s32 0, %v537
        %v539 = vrot.slane %v534, %v538
        %v541 = vmul.f32 %v532, %v539
        %v542 = vmul.f32 %v533, %v539
        %v543 = vld [vmem:[%s3] sm:$0x1]
        %v545 = vlaneseq
        %v546 = vshrl.u32 %v545, 7
        %v547 = vsub.s32 0, %v546
        %v548 = vrot.slane %v543, %v547
        %v550 = vadd.f32 %v541, %v548
        %v551 = vadd.f32 %v542, %v548
        %v552 = vmax.f32 %v550, 0.0
        %v553 = vmax.f32 %v551, 0.0
        %554 = vst [vmem:[%s190] sm:$0xff] %v552
        %555 = vst [vmem:[%s190 + $0x8] sm:$0xff] %v553
        %s556 = sand.u32 %s115, 1
        %s557 = scalar_lea.sflag [#allocation4], %s556
        %s558 = sand.u32 %s115, 1
        %s559 = smul.addr %s558, 16
        %s560 = scalar_lea.vmem [#allocation3], %s559
        // Predicated region
        $region37: #{_lambda_.17} parent=35 // pred_check
          %p561 = pneg %p125
        $region38: #{_lambda_.17} parent=35 // pred_check_branch
          %563 = sbr.rel (%p561) target = $region40
        $region39: #{_lambda_.17} parent=35 // pred_region
          %s565 = ssub.s32 256, 256
          %566 = vsyncadd %s557, %s565
          %s567 = smul.addr %s18, 2
          %s568 = smul.addr %s567, 128
          %s569 = scalar_lea.hbm %s4, %s568
          %s570 = sshll.u32 %s560, 4
          %s571 = int_to_ptr.vmem [resolvable:$true] %s570
          %576 = dma.vmem_to_hbm [thread:$0]  %s571, 256, %s569, %s557, 128, 128, 8
        $region40: #{_lambda_.17} parent=35 // pred_fallthru
          _
      $region36: #{_lambda_.17} parent=5 // pred_fallthru
        _
      %p577 = scmp.le.s32.totalorder 2, %s13
      // Predicated region
      $region41: #{_lambda_.17} parent=5 // pred_check
        %p578 = pneg %p577
      $region42: #{_lambda_.17} parent=5 // pred_check_branch
        %580 = sbr.rel (%p578) target = $region44
      $region43: #{_lambda_.17} parent=5 // pred_region
        %s581 = ssub.s32 %s13, 2
        // Predicated region
        $region45: #{_lambda_.17} parent=43 // pred_check
          %p582 = pneg %p131
        $region46: #{_lambda_.17} parent=43 // pred_check_branch
          %584 = sbr.rel (%p582) target = $region48
        $region47: #{_lambda_.17} parent=43 // pred_region
          %s585 = sand.u32 %s116, 1
          %s586 = scalar_lea.sflag [#allocation4], %s585
          %s587 = sand.u32 %s116, 1
          %s588 = smul.addr %s587, 16
          %s589 = scalar_lea.vmem [#allocation3], %s588
          %590 = dma.done %s586, 256
        $region48: #{_lambda_.17} parent=43 // pred_fallthru
          _
      $region44: #{_lambda_.17} parent=5 // pred_fallthru
        _
    $region6: #{_lambda_.17} parent=1 // loop_footer
      %s17 = sadd.s32 1, %s13
    $region7: #{_lambda_.17} parent=1 // loop_footer_branch
      %12 = sbr.rel target = $region3
    $region8: #{_lambda_.17} parent=1 // loop_exit
      _
    %591 = vsyncpa [#allocation4], 1
    %s592 = scalar_lea.sflag [#allocation4], 1
    %593 = vsyncpa %s592, 1

</llo_original>
